<compile_context>
chip_gen: v6e
topology: v6e:2x2x1
jax: 0.10.0
libtpu: 0.0.40
codegen_flags: <defaults>
</compile_context>

<pallas_src>
import functools

import jax
import jax.numpy as jnp
from jax import lax
from jax.experimental import pallas as pl
from jax.experimental.pallas import tpu as pltpu


# ----------------------------------------------------------------------------
# Fused 2-layer LSTM recurrence + label head, single grid point, VMEM-resident.
# ----------------------------------------------------------------------------
def _char_lstm_kernel(g0_ref,      # (T, Bp, 4H)  precomputed x @ Wih0^T + b0
                      whh0_ref,    # (H, 4H)      Whh0^T
                      w1_ref,      # (2H, 4H)     [Wih1^T ; Whh1^T]
                      b1_ref,      # (1, 4H)      b_ih1 + b_hh1
                      wl_ref,      # (H, Lp)      label weight (lane-padded)
                      bl_ref,      # (1, Lp)      label bias   (lane-padded)
                      out_ref,     # (Bp, Lp)     padded logits
                      h0_scr, c0_scr, h1_scr, c1_scr):
    T = g0_ref.shape[0]
    H = whh0_ref.shape[0]

    h0_scr[...] = jnp.zeros_like(h0_scr)
    c0_scr[...] = jnp.zeros_like(c0_scr)
    h1_scr[...] = jnp.zeros_like(h1_scr)
    c1_scr[...] = jnp.zeros_like(c1_scr)

    def cell(gates, c_prev):
        i = jax.nn.sigmoid(gates[:, 0 * H:1 * H])
        f = jax.nn.sigmoid(gates[:, 1 * H:2 * H])
        g = jnp.tanh(gates[:, 2 * H:3 * H])
        o = jax.nn.sigmoid(gates[:, 3 * H:4 * H])
        c_new = f * c_prev + i * g
        h_new = o * jnp.tanh(c_new)
        return h_new, c_new

    def step(t, carry):
        # Layer 0: input projection hoisted out of the loop -> only the small
        # h @ Whh0 matmul sits on the serial critical path.
        gates0 = g0_ref[t] + jnp.dot(
            h0_scr[...], whh0_ref[...], preferred_element_type=jnp.float32)
        h0, c0 = cell(gates0, c0_scr[...])
        h0_scr[...] = h0
        c0_scr[...] = c0

        # Layer 1 (wave-front fused with layer 0): one concat-fused matmul,
        # K = 2H = 256, instead of two separate K=128 matmuls.
        # TODO(synk): inter-layer dropout (p=0.2) omitted -- eval-mode
        # (inference) semantics of nn.LSTM.
        xin = jnp.concatenate([h0, h1_scr[...]], axis=1)          # (Bp, 2H)
        gates1 = jnp.dot(xin, w1_ref[...],
                         preferred_element_type=jnp.float32) + b1_ref[...]
        h1, c1 = cell(gates1, c1_scr[...])
        h1_scr[...] = h1
        c1_scr[...] = c1
        return carry

    lax.fori_loop(0, T, step, 0, unroll=True)

    # Label head folded into the kernel; output lane-padded -> dense stores.
    out_ref[...] = jnp.dot(h1_scr[...], wl_ref[...],
                           preferred_element_type=jnp.float32) + bl_ref[...]


def fused_char_lstm(g0, w_hh0_t, w1_stack, b1_row, wl_pad, bl_pad):
    T, Bp, _ = g0.shape
    H = w_hh0_t.shape[0]
    Lp = wl_pad.shape[1]
    vmem = pl.BlockSpec(memory_space=pltpu.MemorySpace.VMEM)
    return pl.pallas_call(
        _char_lstm_kernel,
        out_shape=jax.ShapeDtypeStruct((Bp, Lp), jnp.float32),
        in_specs=[vmem] * 6,
        out_specs=vmem,
        scratch_shapes=[
            pltpu.VMEM((Bp, H), jnp.float32),   # h0
            pltpu.VMEM((Bp, H), jnp.float32),   # c0
            pltpu.VMEM((Bp, H), jnp.float32),   # h1
            pltpu.VMEM((Bp, H), jnp.float32),   # c1
        ],
    )(g0, w_hh0_t, w1_stack, b1_row, wl_pad, bl_pad)


# ----------------------------------------------------------------------------
# Parameter init (PyTorch-layout shapes, deterministic) + one-time prep into
# the kernel-friendly (pre-transposed / pre-stacked / pre-padded) layout.
# ----------------------------------------------------------------------------
def init_params(key, num_chars=38, embedding_dim=128, labels=2, n_layers=2,
                hidden_dim=128):
    keys = jax.random.split(key, 2 + 4 * n_layers + 2)
    k = 1.0 / jnp.sqrt(hidden_dim)
    params = {
        "embedding": jax.random.normal(keys[0], (num_chars, embedding_dim),
                                       jnp.float32),
        "lstm": [],
        "label_w": jax.random.uniform(keys[1], (labels, hidden_dim),
                                      jnp.float32, -k, k),
        "label_b": jax.random.uniform(keys[2], (labels,), jnp.float32, -k, k),
    }
    for layer in range(n_layers):
        d_in = embedding_dim if layer == 0 else hidden_dim
        kk = keys[3 + 4 * layer: 3 + 4 * (layer + 1)]
        params["lstm"].append({
            "w_ih": jax.random.uniform(kk[0], (4 * hidden_dim, d_in),
                                       jnp.float32, -k, k),
            "w_hh": jax.random.uniform(kk[1], (4 * hidden_dim, hidden_dim),
                                       jnp.float32, -k, k),
            "b_ih": jax.random.uniform(kk[2], (4 * hidden_dim,),
                                       jnp.float32, -k, k),
            "b_hh": jax.random.uniform(kk[3], (4 * hidden_dim,),
                                       jnp.float32, -k, k),
        })
    return params


def prepare_params(params, lane_pad=128):
    """One-time conversion to the MXU-friendly layout used by the kernel."""
    l0, l1 = params["lstm"]
    H = l0["w_hh"].shape[1]
    L = params["label_w"].shape[0]
    Lp = max(lane_pad, L)
    wl_pad = jnp.zeros((H, Lp), jnp.float32).at[:, :L].set(params["label_w"].T)
    bl_pad = jnp.zeros((1, Lp), jnp.float32).at[0, :L].set(params["label_b"])
    return {
        "embedding": params["embedding"],
        "w_ih0_t": jnp.transpose(l0["w_ih"]),                     # (E, 4H)
        "b0": (l0["b_ih"] + l0["b_hh"])[None, :],                 # (1, 4H)
        "w_hh0_t": jnp.transpose(l0["w_hh"]),                     # (H, 4H)
        "w1_stack": jnp.concatenate(
            [jnp.transpose(l1["w_ih"]), jnp.transpose(l1["w_hh"])], axis=0),
        "b1": (l1["b_ih"] + l1["b_hh"])[None, :],                 # (1, 4H)
        "wl_pad": wl_pad,                                         # (H, Lp)
        "bl_pad": bl_pad,                                         # (1, Lp)
    }


# ----------------------------------------------------------------------------
# Forward pass.
# ----------------------------------------------------------------------------
@functools.partial(jax.jit, static_argnames=("num_labels",))
def char_lstm_forward(prepped, x_ids, num_labels=2):
    # x_ids: (B, T) int32 token indices
    B, T = x_ids.shape
    H = prepped["w_hh0_t"].shape[0]
    Bp = max(8, -(-B // 8) * 8)                 # pad batch to sublane width

    emb = prepped["embedding"][x_ids]           # (B, T, E) gather in JAX glue
    x = jnp.transpose(emb, (1, 0, 2))           # time-major (T, B, E)
    if Bp != B:
        x = jnp.pad(x, ((0, 0), (0, Bp - B), (0, 0)))

    # Hoisted layer-0 input projection: one big (T*Bp, E) @ (E, 4H) matmul
    # (plain XLA; embarrassingly parallel, no recurrence dependency).
    g0 = (x.reshape(T * Bp, -1) @ prepped["w_ih0_t"]
          + prepped["b0"]).reshape(T, Bp, 4 * H)

    # TODO(synk): for large batches on v7x, add a "parallel" batch-tile grid
    # axis so the recurrence is sharded across both TensorCores.
    logits_pad = fused_char_lstm(g0, prepped["w_hh0_t"], prepped["w1_stack"],
                                 prepped["b1"], prepped["wl_pad"],
                                 prepped["bl_pad"])
    return logits_pad[:B, :num_labels]


# ----------------------------------------------------------------------------
# Pure-JAX reference for the correctness check.
# ----------------------------------------------------------------------------
def reference_forward(params, x_ids):
    emb = params["embedding"][x_ids]            # (B, T, E)
    B, T, _ = emb.shape
    H = params["lstm"][0]["w_hh"].shape[1]
    x = emb
    for layer in params["lstm"]:
        h = jnp.zeros((B, H), jnp.float32)
        c = jnp.zeros((B, H), jnp.float32)
        outs = []
        for t in range(T):
            gates = (x[:, t, :] @ layer["w_ih"].T + layer["b_ih"]
                     + h @ layer["w_hh"].T + layer["b_hh"])
            i = jax.nn.sigmoid(gates[:, 0 * H:1 * H])
            f = jax.nn.sigmoid(gates[:, 1 * H:2 * H])
            g = jnp.tanh(gates[:, 2 * H:3 * H])
            o = jax.nn.sigmoid(gates[:, 3 * H:4 * H])
            c = f * c + i * g
            h = o * jnp.tanh(c)
            outs.append(h)
        x = jnp.stack(outs, axis=1)             # (B, T, H)
    return x[:, -1, :] @ params["label_w"].T + params["label_b"]


if __name__ == "__main__":
    key = jax.random.PRNGKey(0)
    pkey, xkey = jax.random.split(key)

    batch, seq = 2, 8
    params = init_params(pkey)
    prepped = prepare_params(params)
    x_ids = jax.random.randint(xkey, (batch, seq), 0, 38, dtype=jnp.int32)

    out = char_lstm_forward(prepped, x_ids, num_labels=2)   # (2, 2) logits
    out = jax.block_until_ready(out)

    ref = reference_forward(params, x_ids)
    assert out.shape == (batch, 2), out.shape
    assert jnp.allclose(out, ref, rtol=1e-3, atol=1e-3), (out, ref)

    print("KERNEL_OK")
</pallas_src>

<mosaic_0001>
module attributes {stable_mosaic.version = 11 : i64} {
  func.func @_char_lstm_kernel(%arg0: memref<8x8x512xf32, #tpu.memory_space<vmem>>, %arg1: memref<128x512xf32, #tpu.memory_space<vmem>>, %arg2: memref<256x512xf32, #tpu.memory_space<vmem>>, %arg3: memref<1x512xf32, #tpu.memory_space<vmem>>, %arg4: memref<128x128xf32, #tpu.memory_space<vmem>>, %arg5: memref<1x128xf32, #tpu.memory_space<vmem>>, %arg6: memref<8x128xf32, #tpu.memory_space<vmem>>, %arg7: memref<8x128xf32, #tpu.memory_space<vmem>>, %arg8: memref<8x128xf32, #tpu.memory_space<vmem>>, %arg9: memref<8x128xf32, #tpu.memory_space<vmem>>, %arg10: memref<8x128xf32, #tpu.memory_space<vmem>>) attributes {dimension_semantics = [], scalar_prefetch = 0 : i64, scratch_operands = 4 : i64, tpu.core_type = #tpu.core_type<tc>} {
    %cst = arith.constant 0.000000e+00 : f32
    %0 = vector.broadcast %cst : f32 to vector<8x128xf32>
    %c0 = arith.constant 0 : index
    %c0_0 = arith.constant 0 : index
    %1 = vector.load %arg7[%c0, %c0_0] : memref<8x128xf32, #tpu.memory_space<vmem>>, vector<8x128xf32>
    tpu.vector_store %arg7[%c0, %c0_0], %0 {strides = array<i32>} : memref<8x128xf32, #tpu.memory_space<vmem>>, vector<8x128xf32>,
    %cst_1 = arith.constant 0.000000e+00 : f32
    %2 = vector.broadcast %cst_1 : f32 to vector<8x128xf32>
    %c0_2 = arith.constant 0 : index
    %c0_3 = arith.constant 0 : index
    %3 = vector.load %arg8[%c0_2, %c0_3] : memref<8x128xf32, #tpu.memory_space<vmem>>, vector<8x128xf32>
    tpu.vector_store %arg8[%c0_2, %c0_3], %2 {strides = array<i32>} : memref<8x128xf32, #tpu.memory_space<vmem>>, vector<8x128xf32>,
    %cst_4 = arith.constant 0.000000e+00 : f32
    %4 = vector.broadcast %cst_4 : f32 to vector<8x128xf32>
    %c0_5 = arith.constant 0 : index
    %c0_6 = arith.constant 0 : index
    %5 = vector.load %arg9[%c0_5, %c0_6] : memref<8x128xf32, #tpu.memory_space<vmem>>, vector<8x128xf32>
    tpu.vector_store %arg9[%c0_5, %c0_6], %4 {strides = array<i32>} : memref<8x128xf32, #tpu.memory_space<vmem>>, vector<8x128xf32>,
    %cst_7 = arith.constant 0.000000e+00 : f32
    %6 = vector.broadcast %cst_7 : f32 to vector<8x128xf32>
    %c0_8 = arith.constant 0 : index
    %c0_9 = arith.constant 0 : index
    %7 = vector.load %arg10[%c0_8, %c0_9] : memref<8x128xf32, #tpu.memory_space<vmem>>, vector<8x128xf32>
    tpu.vector_store %arg10[%c0_8, %c0_9], %6 {strides = array<i32>} : memref<8x128xf32, #tpu.memory_space<vmem>>, vector<8x128xf32>,
    %c0_i32 = arith.constant 0 : i32
    %8 = arith.index_cast %c0_i32 : i32 to index
    %c0_10 = arith.constant 0 : index
    %c0_11 = arith.constant 0 : index
    %9 = vector.load %arg0[%8, %c0_10, %c0_11] : memref<8x8x512xf32, #tpu.memory_space<vmem>>, vector<1x8x512xf32>
    %10 = vector.shape_cast %9 : vector<1x8x512xf32> to vector<8x512xf32>
    %c0_12 = arith.constant 0 : index
    %c0_13 = arith.constant 0 : index
    %11 = vector.load %arg7[%c0_12, %c0_13] : memref<8x128xf32, #tpu.memory_space<vmem>>, vector<8x128xf32>
    %c0_14 = arith.constant 0 : index
    %c0_15 = arith.constant 0 : index
    %12 = vector.load %arg1[%c0_14, %c0_15] : memref<128x512xf32, #tpu.memory_space<vmem>>, vector<128x512xf32>
    %cst_16 = arith.constant dense<0.000000e+00> : vector<8x512xf32>
    %13 = tpu.matmul %11, %12, %cst_16 {dimension_numbers = #tpu.dot_dimension_numbers<[1], [0], [0], [1], [0, 0, 1, 1], [], []>} : vector<8x128xf32>, vector<128x512xf32>, vector<8x512xf32> -> vector<8x512xf32>
    %14 = arith.addf %10, %13 : vector<8x512xf32>
    %c0_17 = arith.constant 0 : index
    %c0_18 = arith.constant 0 : index
    %15 = vector.load %arg8[%c0_17, %c0_18] : memref<8x128xf32, #tpu.memory_space<vmem>>, vector<8x128xf32>
    %16 = vector.extract_strided_slice %14 {offsets = [0, 0], sizes = [8, 128], strides = [1, 1]} : vector<8x512xf32> to vector<8x128xf32>
    %17 = arith.negf %16 : vector<8x128xf32>
    %18 = math.exp %17 : vector<8x128xf32>
    %cst_19 = arith.constant 1.000000e+00 : f32
    %19 = vector.broadcast %cst_19 : f32 to vector<8x128xf32>
    %20 = arith.addf %19, %18 : vector<8x128xf32>
    %21 = arith.divf %19, %20 : vector<8x128xf32>
    %22 = vector.extract_strided_slice %14 {offsets = [0, 128], sizes = [8, 128], strides = [1, 1]} : vector<8x512xf32> to vector<8x128xf32>
    %23 = arith.negf %22 : vector<8x128xf32>
    %24 = math.exp %23 : vector<8x128xf32>
    %cst_20 = arith.constant 1.000000e+00 : f32
    %25 = vector.broadcast %cst_20 : f32 to vector<8x128xf32>
    %26 = arith.addf %25, %24 : vector<8x128xf32>
    %27 = arith.divf %25, %26 : vector<8x128xf32>
    %28 = vector.extract_strided_slice %14 {offsets = [0, 256], sizes = [8, 128], strides = [1, 1]} : vector<8x512xf32> to vector<8x128xf32>
    %29 = math.tanh %28 : vector<8x128xf32>
    %30 = vector.extract_strided_slice %14 {offsets = [0, 384], sizes = [8, 128], strides = [1, 1]} : vector<8x512xf32> to vector<8x128xf32>
    %31 = arith.negf %30 : vector<8x128xf32>
    %32 = math.exp %31 : vector<8x128xf32>
    %cst_21 = arith.constant 1.000000e+00 : f32
    %33 = vector.broadcast %cst_21 : f32 to vector<8x128xf32>
    %34 = arith.addf %33, %32 : vector<8x128xf32>
    %35 = arith.divf %33, %34 : vector<8x128xf32>
    %36 = arith.mulf %27, %15 : vector<8x128xf32>
    %37 = arith.mulf %21, %29 : vector<8x128xf32>
    %38 = arith.addf %36, %37 : vector<8x128xf32>
    %39 = math.tanh %38 : vector<8x128xf32>
    %40 = arith.mulf %35, %39 : vector<8x128xf32>
    %c0_22 = arith.constant 0 : index
    %c0_23 = arith.constant 0 : index
    %41 = vector.load %arg7[%c0_22, %c0_23] : memref<8x128xf32, #tpu.memory_space<vmem>>, vector<8x128xf32>
    tpu.vector_store %arg7[%c0_22, %c0_23], %40 {strides = array<i32>} : memref<8x128xf32, #tpu.memory_space<vmem>>, vector<8x128xf32>,
    %c0_24 = arith.constant 0 : index
    %c0_25 = arith.constant 0 : index
    %42 = vector.load %arg8[%c0_24, %c0_25] : memref<8x128xf32, #tpu.memory_space<vmem>>, vector<8x128xf32>
    tpu.vector_store %arg8[%c0_24, %c0_25], %38 {strides = array<i32>} : memref<8x128xf32, #tpu.memory_space<vmem>>, vector<8x128xf32>,
    %c0_26 = arith.constant 0 : index
    %c0_27 = arith.constant 0 : index
    %43 = vector.load %arg9[%c0_26, %c0_27] : memref<8x128xf32, #tpu.memory_space<vmem>>, vector<8x128xf32>
    %44 = tpu.concatenate %40, %43 in 1 : vector<8x128xf32>, vector<8x128xf32> -> vector<8x256xf32>
    %c0_28 = arith.constant 0 : index
    %c0_29 = arith.constant 0 : index
    %45 = vector.load %arg2[%c0_28, %c0_29] : memref<256x512xf32, #tpu.memory_space<vmem>>, vector<256x512xf32>
    %cst_30 = arith.constant dense<0.000000e+00> : vector<8x512xf32>
    %46 = tpu.matmul %44, %45, %cst_30 {dimension_numbers = #tpu.dot_dimension_numbers<[1], [0], [0], [1], [0, 0, 1, 1], [], []>} : vector<8x256xf32>, vector<256x512xf32>, vector<8x512xf32> -> vector<8x512xf32>
    %c0_31 = arith.constant 0 : index
    %c0_32 = arith.constant 0 : index
    %47 = vector.load %arg3[%c0_31, %c0_32] : memref<1x512xf32, #tpu.memory_space<vmem>>, vector<1x512xf32>
    %48 = vector.broadcast %47 : vector<1x512xf32> to vector<8x512xf32>
    %49 = arith.addf %46, %48 : vector<8x512xf32>
    %c0_33 = arith.constant 0 : index
    %c0_34 = arith.constant 0 : index
    %50 = vector.load %arg10[%c0_33, %c0_34] : memref<8x128xf32, #tpu.memory_space<vmem>>, vector<8x128xf32>
    %51 = vector.extract_strided_slice %49 {offsets = [0, 0], sizes = [8, 128], strides = [1, 1]} : vector<8x512xf32> to vector<8x128xf32>
    %52 = arith.negf %51 : vector<8x128xf32>
    %53 = math.exp %52 : vector<8x128xf32>
    %cst_35 = arith.constant 1.000000e+00 : f32
    %54 = vector.broadcast %cst_35 : f32 to vector<8x128xf32>
    %55 = arith.addf %54, %53 : vector<8x128xf32>
    %56 = arith.divf %54, %55 : vector<8x128xf32>
    %57 = vector.extract_strided_slice %49 {offsets = [0, 128], sizes = [8, 128], strides = [1, 1]} : vector<8x512xf32> to vector<8x128xf32>
    %58 = arith.negf %57 : vector<8x128xf32>
    %59 = math.exp %58 : vector<8x128xf32>
    %cst_36 = arith.constant 1.000000e+00 : f32
    %60 = vector.broadcast %cst_36 : f32 to vector<8x128xf32>
    %61 = arith.addf %60, %59 : vector<8x128xf32>
    %62 = arith.divf %60, %61 : vector<8x128xf32>
    %63 = vector.extract_strided_slice %49 {offsets = [0, 256], sizes = [8, 128], strides = [1, 1]} : vector<8x512xf32> to vector<8x128xf32>
    %64 = math.tanh %63 : vector<8x128xf32>
    %65 = vector.extract_strided_slice %49 {offsets = [0, 384], sizes = [8, 128], strides = [1, 1]} : vector<8x512xf32> to vector<8x128xf32>
    %66 = arith.negf %65 : vector<8x128xf32>
    %67 = math.exp %66 : vector<8x128xf32>
    %cst_37 = arith.constant 1.000000e+00 : f32
    %68 = vector.broadcast %cst_37 : f32 to vector<8x128xf32>
    %69 = arith.addf %68, %67 : vector<8x128xf32>
    %70 = arith.divf %68, %69 : vector<8x128xf32>
    %71 = arith.mulf %62, %50 : vector<8x128xf32>
    %72 = arith.mulf %56, %64 : vector<8x128xf32>
    %73 = arith.addf %71, %72 : vector<8x128xf32>
    %74 = math.tanh %73 : vector<8x128xf32>
    %75 = arith.mulf %70, %74 : vector<8x128xf32>
    %c0_38 = arith.constant 0 : index
    %c0_39 = arith.constant 0 : index
    %76 = vector.load %arg9[%c0_38, %c0_39] : memref<8x128xf32, #tpu.memory_space<vmem>>, vector<8x128xf32>
    tpu.vector_store %arg9[%c0_38, %c0_39], %75 {strides = array<i32>} : memref<8x128xf32, #tpu.memory_space<vmem>>, vector<8x128xf32>,
    %c0_40 = arith.constant 0 : index
    %c0_41 = arith.constant 0 : index
    %77 = vector.load %arg10[%c0_40, %c0_41] : memref<8x128xf32, #tpu.memory_space<vmem>>, vector<8x128xf32>
    tpu.vector_store %arg10[%c0_40, %c0_41], %73 {strides = array<i32>} : memref<8x128xf32, #tpu.memory_space<vmem>>, vector<8x128xf32>,
    %c1_i32 = arith.constant 1 : i32
    %78 = arith.index_cast %c1_i32 : i32 to index
    %c0_42 = arith.constant 0 : index
    %c0_43 = arith.constant 0 : index
    %79 = vector.load %arg0[%78, %c0_42, %c0_43] : memref<8x8x512xf32, #tpu.memory_space<vmem>>, vector<1x8x512xf32>
    %80 = vector.shape_cast %79 : vector<1x8x512xf32> to vector<8x512xf32>
    %c0_44 = arith.constant 0 : index
    %c0_45 = arith.constant 0 : index
    %81 = vector.load %arg7[%c0_44, %c0_45] : memref<8x128xf32, #tpu.memory_space<vmem>>, vector<8x128xf32>
    %c0_46 = arith.constant 0 : index
    %c0_47 = arith.constant 0 : index
    %82 = vector.load %arg1[%c0_46, %c0_47] : memref<128x512xf32, #tpu.memory_space<vmem>>, vector<128x512xf32>
    %cst_48 = arith.constant dense<0.000000e+00> : vector<8x512xf32>
    %83 = tpu.matmul %81, %82, %cst_48 {dimension_numbers = #tpu.dot_dimension_numbers<[1], [0], [0], [1], [0, 0, 1, 1], [], []>} : vector<8x128xf32>, vector<128x512xf32>, vector<8x512xf32> -> vector<8x512xf32>
    %84 = arith.addf %80, %83 : vector<8x512xf32>
    %c0_49 = arith.constant 0 : index
    %c0_50 = arith.constant 0 : index
    %85 = vector.load %arg8[%c0_49, %c0_50] : memref<8x128xf32, #tpu.memory_space<vmem>>, vector<8x128xf32>
    %86 = vector.extract_strided_slice %84 {offsets = [0, 0], sizes = [8, 128], strides = [1, 1]} : vector<8x512xf32> to vector<8x128xf32>
    %87 = arith.negf %86 : vector<8x128xf32>
    %88 = math.exp %87 : vector<8x128xf32>
    %cst_51 = arith.constant 1.000000e+00 : f32
    %89 = vector.broadcast %cst_51 : f32 to vector<8x128xf32>
    %90 = arith.addf %89, %88 : vector<8x128xf32>
    %91 = arith.divf %89, %90 : vector<8x128xf32>
    %92 = vector.extract_strided_slice %84 {offsets = [0, 128], sizes = [8, 128], strides = [1, 1]} : vector<8x512xf32> to vector<8x128xf32>
    %93 = arith.negf %92 : vector<8x128xf32>
    %94 = math.exp %93 : vector<8x128xf32>
    %cst_52 = arith.constant 1.000000e+00 : f32
    %95 = vector.broadcast %cst_52 : f32 to vector<8x128xf32>
    %96 = arith.addf %95, %94 : vector<8x128xf32>
    %97 = arith.divf %95, %96 : vector<8x128xf32>
    %98 = vector.extract_strided_slice %84 {offsets = [0, 256], sizes = [8, 128], strides = [1, 1]} : vector<8x512xf32> to vector<8x128xf32>
    %99 = math.tanh %98 : vector<8x128xf32>
    %100 = vector.extract_strided_slice %84 {offsets = [0, 384], sizes = [8, 128], strides = [1, 1]} : vector<8x512xf32> to vector<8x128xf32>
    %101 = arith.negf %100 : vector<8x128xf32>
    %102 = math.exp %101 : vector<8x128xf32>
    %cst_53 = arith.constant 1.000000e+00 : f32
    %103 = vector.broadcast %cst_53 : f32 to vector<8x128xf32>
    %104 = arith.addf %103, %102 : vector<8x128xf32>
    %105 = arith.divf %103, %104 : vector<8x128xf32>
    %106 = arith.mulf %97, %85 : vector<8x128xf32>
    %107 = arith.mulf %91, %99 : vector<8x128xf32>
    %108 = arith.addf %106, %107 : vector<8x128xf32>
    %109 = math.tanh %108 : vector<8x128xf32>
    %110 = arith.mulf %105, %109 : vector<8x128xf32>
    %c0_54 = arith.constant 0 : index
    %c0_55 = arith.constant 0 : index
    %111 = vector.load %arg7[%c0_54, %c0_55] : memref<8x128xf32, #tpu.memory_space<vmem>>, vector<8x128xf32>
    tpu.vector_store %arg7[%c0_54, %c0_55], %110 {strides = array<i32>} : memref<8x128xf32, #tpu.memory_space<vmem>>, vector<8x128xf32>,
    %c0_56 = arith.constant 0 : index
    %c0_57 = arith.constant 0 : index
    %112 = vector.load %arg8[%c0_56, %c0_57] : memref<8x128xf32, #tpu.memory_space<vmem>>, vector<8x128xf32>
    tpu.vector_store %arg8[%c0_56, %c0_57], %108 {strides = array<i32>} : memref<8x128xf32, #tpu.memory_space<vmem>>, vector<8x128xf32>,
    %c0_58 = arith.constant 0 : index
    %c0_59 = arith.constant 0 : index
    %113 = vector.load %arg9[%c0_58, %c0_59] : memref<8x128xf32, #tpu.memory_space<vmem>>, vector<8x128xf32>
    %114 = tpu.concatenate %110, %113 in 1 : vector<8x128xf32>, vector<8x128xf32> -> vector<8x256xf32>
    %c0_60 = arith.constant 0 : index
    %c0_61 = arith.constant 0 : index
    %115 = vector.load %arg2[%c0_60, %c0_61] : memref<256x512xf32, #tpu.memory_space<vmem>>, vector<256x512xf32>
    %cst_62 = arith.constant dense<0.000000e+00> : vector<8x512xf32>
    %116 = tpu.matmul %114, %115, %cst_62 {dimension_numbers = #tpu.dot_dimension_numbers<[1], [0], [0], [1], [0, 0, 1, 1], [], []>} : vector<8x256xf32>, vector<256x512xf32>, vector<8x512xf32> -> vector<8x512xf32>
    %c0_63 = arith.constant 0 : index
    %c0_64 = arith.constant 0 : index
    %117 = vector.load %arg3[%c0_63, %c0_64] : memref<1x512xf32, #tpu.memory_space<vmem>>, vector<1x512xf32>
    %118 = vector.broadcast %117 : vector<1x512xf32> to vector<8x512xf32>
    %119 = arith.addf %116, %118 : vector<8x512xf32>
    %c0_65 = arith.constant 0 : index
    %c0_66 = arith.constant 0 : index
    %120 = vector.load %arg10[%c0_65, %c0_66] : memref<8x128xf32, #tpu.memory_space<vmem>>, vector<8x128xf32>
    %121 = vector.extract_strided_slice %119 {offsets = [0, 0], sizes = [8, 128], strides = [1, 1]} : vector<8x512xf32> to vector<8x128xf32>
    %122 = arith.negf %121 : vector<8x128xf32>
    %123 = math.exp %122 : vector<8x128xf32>
    %cst_67 = arith.constant 1.000000e+00 : f32
    %124 = vector.broadcast %cst_67 : f32 to vector<8x128xf32>
    %125 = arith.addf %124, %123 : vector<8x128xf32>
    %126 = arith.divf %124, %125 : vector<8x128xf32>
    %127 = vector.extract_strided_slice %119 {offsets = [0, 128], sizes = [8, 128], strides = [1, 1]} : vector<8x512xf32> to vector<8x128xf32>
    %128 = arith.negf %127 : vector<8x128xf32>
    %129 = math.exp %128 : vector<8x128xf32>
    %cst_68 = arith.constant 1.000000e+00 : f32
    %130 = vector.broadcast %cst_68 : f32 to vector<8x128xf32>
    %131 = arith.addf %130, %129 : vector<8x128xf32>
    %132 = arith.divf %130, %131 : vector<8x128xf32>
    %133 = vector.extract_strided_slice %119 {offsets = [0, 256], sizes = [8, 128], strides = [1, 1]} : vector<8x512xf32> to vector<8x128xf32>
    %134 = math.tanh %133 : vector<8x128xf32>
    %135 = vector.extract_strided_slice %119 {offsets = [0, 384], sizes = [8, 128], strides = [1, 1]} : vector<8x512xf32> to vector<8x128xf32>
    %136 = arith.negf %135 : vector<8x128xf32>
    %137 = math.exp %136 : vector<8x128xf32>
    %cst_69 = arith.constant 1.000000e+00 : f32
    %138 = vector.broadcast %cst_69 : f32 to vector<8x128xf32>
    %139 = arith.addf %138, %137 : vector<8x128xf32>
    %140 = arith.divf %138, %139 : vector<8x128xf32>
    %141 = arith.mulf %132, %120 : vector<8x128xf32>
    %142 = arith.mulf %126, %134 : vector<8x128xf32>
    %143 = arith.addf %141, %142 : vector<8x128xf32>
    %144 = math.tanh %143 : vector<8x128xf32>
    %145 = arith.mulf %140, %144 : vector<8x128xf32>
    %c0_70 = arith.constant 0 : index
    %c0_71 = arith.constant 0 : index
    %146 = vector.load %arg9[%c0_70, %c0_71] : memref<8x128xf32, #tpu.memory_space<vmem>>, vector<8x128xf32>
    tpu.vector_store %arg9[%c0_70, %c0_71], %145 {strides = array<i32>} : memref<8x128xf32, #tpu.memory_space<vmem>>, vector<8x128xf32>,
    %c0_72 = arith.constant 0 : index
    %c0_73 = arith.constant 0 : index
    %147 = vector.load %arg10[%c0_72, %c0_73] : memref<8x128xf32, #tpu.memory_space<vmem>>, vector<8x128xf32>
    tpu.vector_store %arg10[%c0_72, %c0_73], %143 {strides = array<i32>} : memref<8x128xf32, #tpu.memory_space<vmem>>, vector<8x128xf32>,
    %c2_i32 = arith.constant 2 : i32
    %148 = arith.index_cast %c2_i32 : i32 to index
    %c0_74 = arith.constant 0 : index
    %c0_75 = arith.constant 0 : index
    %149 = vector.load %arg0[%148, %c0_74, %c0_75] : memref<8x8x512xf32, #tpu.memory_space<vmem>>, vector<1x8x512xf32>
    %150 = vector.shape_cast %149 : vector<1x8x512xf32> to vector<8x512xf32>
    %c0_76 = arith.constant 0 : index
    %c0_77 = arith.constant 0 : index
    %151 = vector.load %arg7[%c0_76, %c0_77] : memref<8x128xf32, #tpu.memory_space<vmem>>, vector<8x128xf32>
    %c0_78 = arith.constant 0 : index
    %c0_79 = arith.constant 0 : index
    %152 = vector.load %arg1[%c0_78, %c0_79] : memref<128x512xf32, #tpu.memory_space<vmem>>, vector<128x512xf32>
    %cst_80 = arith.constant dense<0.000000e+00> : vector<8x512xf32>
    %153 = tpu.matmul %151, %152, %cst_80 {dimension_numbers = #tpu.dot_dimension_numbers<[1], [0], [0], [1], [0, 0, 1, 1], [], []>} : vector<8x128xf32>, vector<128x512xf32>, vector<8x512xf32> -> vector<8x512xf32>
    %154 = arith.addf %150, %153 : vector<8x512xf32>
    %c0_81 = arith.constant 0 : index
    %c0_82 = arith.constant 0 : index
    %155 = vector.load %arg8[%c0_81, %c0_82] : memref<8x128xf32, #tpu.memory_space<vmem>>, vector<8x128xf32>
    %156 = vector.extract_strided_slice %154 {offsets = [0, 0], sizes = [8, 128], strides = [1, 1]} : vector<8x512xf32> to vector<8x128xf32>
    %157 = arith.negf %156 : vector<8x128xf32>
    %158 = math.exp %157 : vector<8x128xf32>
    %cst_83 = arith.constant 1.000000e+00 : f32
    %159 = vector.broadcast %cst_83 : f32 to vector<8x128xf32>
    %160 = arith.addf %159, %158 : vector<8x128xf32>
    %161 = arith.divf %159, %160 : vector<8x128xf32>
    %162 = vector.extract_strided_slice %154 {offsets = [0, 128], sizes = [8, 128], strides = [1, 1]} : vector<8x512xf32> to vector<8x128xf32>
    %163 = arith.negf %162 : vector<8x128xf32>
    %164 = math.exp %163 : vector<8x128xf32>
    %cst_84 = arith.constant 1.000000e+00 : f32
    %165 = vector.broadcast %cst_84 : f32 to vector<8x128xf32>
    %166 = arith.addf %165, %164 : vector<8x128xf32>
    %167 = arith.divf %165, %166 : vector<8x128xf32>
    %168 = vector.extract_strided_slice %154 {offsets = [0, 256], sizes = [8, 128], strides = [1, 1]} : vector<8x512xf32> to vector<8x128xf32>
    %169 = math.tanh %168 : vector<8x128xf32>
    %170 = vector.extract_strided_slice %154 {offsets = [0, 384], sizes = [8, 128], strides = [1, 1]} : vector<8x512xf32> to vector<8x128xf32>
    %171 = arith.negf %170 : vector<8x128xf32>
    %172 = math.exp %171 : vector<8x128xf32>
    %cst_85 = arith.constant 1.000000e+00 : f32
    %173 = vector.broadcast %cst_85 : f32 to vector<8x128xf32>
    %174 = arith.addf %173, %172 : vector<8x128xf32>
    %175 = arith.divf %173, %174 : vector<8x128xf32>
    %176 = arith.mulf %167, %155 : vector<8x128xf32>
    %177 = arith.mulf %161, %169 : vector<8x128xf32>
    %178 = arith.addf %176, %177 : vector<8x128xf32>
    %179 = math.tanh %178 : vector<8x128xf32>
    %180 = arith.mulf %175, %179 : vector<8x128xf32>
    %c0_86 = arith.constant 0 : index
    %c0_87 = arith.constant 0 : index
    %181 = vector.load %arg7[%c0_86, %c0_87] : memref<8x128xf32, #tpu.memory_space<vmem>>, vector<8x128xf32>
    tpu.vector_store %arg7[%c0_86, %c0_87], %180 {strides = array<i32>} : memref<8x128xf32, #tpu.memory_space<vmem>>, vector<8x128xf32>,
    %c0_88 = arith.constant 0 : index
    %c0_89 = arith.constant 0 : index
    %182 = vector.load %arg8[%c0_88, %c0_89] : memref<8x128xf32, #tpu.memory_space<vmem>>, vector<8x128xf32>
    tpu.vector_store %arg8[%c0_88, %c0_89], %178 {strides = array<i32>} : memref<8x128xf32, #tpu.memory_space<vmem>>, vector<8x128xf32>,
    %c0_90 = arith.constant 0 : index
    %c0_91 = arith.constant 0 : index
    %183 = vector.load %arg9[%c0_90, %c0_91] : memref<8x128xf32, #tpu.memory_space<vmem>>, vector<8x128xf32>
    %184 = tpu.concatenate %180, %183 in 1 : vector<8x128xf32>, vector<8x128xf32> -> vector<8x256xf32>
    %c0_92 = arith.constant 0 : index
    %c0_93 = arith.constant 0 : index
    %185 = vector.load %arg2[%c0_92, %c0_93] : memref<256x512xf32, #tpu.memory_space<vmem>>, vector<256x512xf32>
    %cst_94 = arith.constant dense<0.000000e+00> : vector<8x512xf32>
    %186 = tpu.matmul %184, %185, %cst_94 {dimension_numbers = #tpu.dot_dimension_numbers<[1], [0], [0], [1], [0, 0, 1, 1], [], []>} : vector<8x256xf32>, vector<256x512xf32>, vector<8x512xf32> -> vector<8x512xf32>
    %c0_95 = arith.constant 0 : index
    %c0_96 = arith.constant 0 : index
    %187 = vector.load %arg3[%c0_95, %c0_96] : memref<1x512xf32, #tpu.memory_space<vmem>>, vector<1x512xf32>
    %188 = vector.broadcast %187 : vector<1x512xf32> to vector<8x512xf32>
    %189 = arith.addf %186, %188 : vector<8x512xf32>
    %c0_97 = arith.constant 0 : index
    %c0_98 = arith.constant 0 : index
    %190 = vector.load %arg10[%c0_97, %c0_98] : memref<8x128xf32, #tpu.memory_space<vmem>>, vector<8x128xf32>
    %191 = vector.extract_strided_slice %189 {offsets = [0, 0], sizes = [8, 128], strides = [1, 1]} : vector<8x512xf32> to vector<8x128xf32>
    %192 = arith.negf %191 : vector<8x128xf32>
    %193 = math.exp %192 : vector<8x128xf32>
    %cst_99 = arith.constant 1.000000e+00 : f32
    %194 = vector.broadcast %cst_99 : f32 to vector<8x128xf32>
    %195 = arith.addf %194, %193 : vector<8x128xf32>
    %196 = arith.divf %194, %195 : vector<8x128xf32>
    %197 = vector.extract_strided_slice %189 {offsets = [0, 128], sizes = [8, 128], strides = [1, 1]} : vector<8x512xf32> to vector<8x128xf32>
    %198 = arith.negf %197 : vector<8x128xf32>
    %199 = math.exp %198 : vector<8x128xf32>
    %cst_100 = arith.constant 1.000000e+00 : f32
    %200 = vector.broadcast %cst_100 : f32 to vector<8x128xf32>
    %201 = arith.addf %200, %199 : vector<8x128xf32>
    %202 = arith.divf %200, %201 : vector<8x128xf32>
    %203 = vector.extract_strided_slice %189 {offsets = [0, 256], sizes = [8, 128], strides = [1, 1]} : vector<8x512xf32> to vector<8x128xf32>
    %204 = math.tanh %203 : vector<8x128xf32>
    %205 = vector.extract_strided_slice %189 {offsets = [0, 384], sizes = [8, 128], strides = [1, 1]} : vector<8x512xf32> to vector<8x128xf32>
    %206 = arith.negf %205 : vector<8x128xf32>
    %207 = math.exp %206 : vector<8x128xf32>
    %cst_101 = arith.constant 1.000000e+00 : f32
    %208 = vector.broadcast %cst_101 : f32 to vector<8x128xf32>
    %209 = arith.addf %208, %207 : vector<8x128xf32>
    %210 = arith.divf %208, %209 : vector<8x128xf32>
    %211 = arith.mulf %202, %190 : vector<8x128xf32>
    %212 = arith.mulf %196, %204 : vector<8x128xf32>
    %213 = arith.addf %211, %212 : vector<8x128xf32>
    %214 = math.tanh %213 : vector<8x128xf32>
    %215 = arith.mulf %210, %214 : vector<8x128xf32>
    %c0_102 = arith.constant 0 : index
    %c0_103 = arith.constant 0 : index
    %216 = vector.load %arg9[%c0_102, %c0_103] : memref<8x128xf32, #tpu.memory_space<vmem>>, vector<8x128xf32>
    tpu.vector_store %arg9[%c0_102, %c0_103], %215 {strides = array<i32>} : memref<8x128xf32, #tpu.memory_space<vmem>>, vector<8x128xf32>,
    %c0_104 = arith.constant 0 : index
    %c0_105 = arith.constant 0 : index
    %217 = vector.load %arg10[%c0_104, %c0_105] : memref<8x128xf32, #tpu.memory_space<vmem>>, vector<8x128xf32>
    tpu.vector_store %arg10[%c0_104, %c0_105], %213 {strides = array<i32>} : memref<8x128xf32, #tpu.memory_space<vmem>>, vector<8x128xf32>,
    %c3_i32 = arith.constant 3 : i32
    %218 = arith.index_cast %c3_i32 : i32 to index
    %c0_106 = arith.constant 0 : index
    %c0_107 = arith.constant 0 : index
    %219 = vector.load %arg0[%218, %c0_106, %c0_107] : memref<8x8x512xf32, #tpu.memory_space<vmem>>, vector<1x8x512xf32>
    %220 = vector.shape_cast %219 : vector<1x8x512xf32> to vector<8x512xf32>
    %c0_108 = arith.constant 0 : index
    %c0_109 = arith.constant 0 : index
    %221 = vector.load %arg7[%c0_108, %c0_109] : memref<8x128xf32, #tpu.memory_space<vmem>>, vector<8x128xf32>
    %c0_110 = arith.constant 0 : index
    %c0_111 = arith.constant 0 : index
    %222 = vector.load %arg1[%c0_110, %c0_111] : memref<128x512xf32, #tpu.memory_space<vmem>>, vector<128x512xf32>
    %cst_112 = arith.constant dense<0.000000e+00> : vector<8x512xf32>
    %223 = tpu.matmul %221, %222, %cst_112 {dimension_numbers = #tpu.dot_dimension_numbers<[1], [0], [0], [1], [0, 0, 1, 1], [], []>} : vector<8x128xf32>, vector<128x512xf32>, vector<8x512xf32> -> vector<8x512xf32>
    %224 = arith.addf %220, %223 : vector<8x512xf32>
    %c0_113 = arith.constant 0 : index
    %c0_114 = arith.constant 0 : index
    %225 = vector.load %arg8[%c0_113, %c0_114] : memref<8x128xf32, #tpu.memory_space<vmem>>, vector<8x128xf32>
    %226 = vector.extract_strided_slice %224 {offsets = [0, 0], sizes = [8, 128], strides = [1, 1]} : vector<8x512xf32> to vector<8x128xf32>
    %227 = arith.negf %226 : vector<8x128xf32>
    %228 = math.exp %227 : vector<8x128xf32>
    %cst_115 = arith.constant 1.000000e+00 : f32
    %229 = vector.broadcast %cst_115 : f32 to vector<8x128xf32>
    %230 = arith.addf %229, %228 : vector<8x128xf32>
    %231 = arith.divf %229, %230 : vector<8x128xf32>
    %232 = vector.extract_strided_slice %224 {offsets = [0, 128], sizes = [8, 128], strides = [1, 1]} : vector<8x512xf32> to vector<8x128xf32>
    %233 = arith.negf %232 : vector<8x128xf32>
    %234 = math.exp %233 : vector<8x128xf32>
    %cst_116 = arith.constant 1.000000e+00 : f32
    %235 = vector.broadcast %cst_116 : f32 to vector<8x128xf32>
    %236 = arith.addf %235, %234 : vector<8x128xf32>
    %237 = arith.divf %235, %236 : vector<8x128xf32>
    %238 = vector.extract_strided_slice %224 {offsets = [0, 256], sizes = [8, 128], strides = [1, 1]} : vector<8x512xf32> to vector<8x128xf32>
    %239 = math.tanh %238 : vector<8x128xf32>
    %240 = vector.extract_strided_slice %224 {offsets = [0, 384], sizes = [8, 128], strides = [1, 1]} : vector<8x512xf32> to vector<8x128xf32>
    %241 = arith.negf %240 : vector<8x128xf32>
    %242 = math.exp %241 : vector<8x128xf32>
    %cst_117 = arith.constant 1.000000e+00 : f32
    %243 = vector.broadcast %cst_117 : f32 to vector<8x128xf32>
    %244 = arith.addf %243, %242 : vector<8x128xf32>
    %245 = arith.divf %243, %244 : vector<8x128xf32>
    %246 = arith.mulf %237, %225 : vector<8x128xf32>
    %247 = arith.mulf %231, %239 : vector<8x128xf32>
    %248 = arith.addf %246, %247 : vector<8x128xf32>
    %249 = math.tanh %248 : vector<8x128xf32>
    %250 = arith.mulf %245, %249 : vector<8x128xf32>
    %c0_118 = arith.constant 0 : index
    %c0_119 = arith.constant 0 : index
    %251 = vector.load %arg7[%c0_118, %c0_119] : memref<8x128xf32, #tpu.memory_space<vmem>>, vector<8x128xf32>
    tpu.vector_store %arg7[%c0_118, %c0_119], %250 {strides = array<i32>} : memref<8x128xf32, #tpu.memory_space<vmem>>, vector<8x128xf32>,
    %c0_120 = arith.constant 0 : index
    %c0_121 = arith.constant 0 : index
    %252 = vector.load %arg8[%c0_120, %c0_121] : memref<8x128xf32, #tpu.memory_space<vmem>>, vector<8x128xf32>
    tpu.vector_store %arg8[%c0_120, %c0_121], %248 {strides = array<i32>} : memref<8x128xf32, #tpu.memory_space<vmem>>, vector<8x128xf32>,
    %c0_122 = arith.constant 0 : index
    %c0_123 = arith.constant 0 : index
    %253 = vector.load %arg9[%c0_122, %c0_123] : memref<8x128xf32, #tpu.memory_space<vmem>>, vector<8x128xf32>
    %254 = tpu.concatenate %250, %253 in 1 : vector<8x128xf32>, vector<8x128xf32> -> vector<8x256xf32>
    %c0_124 = arith.constant 0 : index
    %c0_125 = arith.constant 0 : index
    %255 = vector.load %arg2[%c0_124, %c0_125] : memref<256x512xf32, #tpu.memory_space<vmem>>, vector<256x512xf32>
    %cst_126 = arith.constant dense<0.000000e+00> : vector<8x512xf32>
    %256 = tpu.matmul %254, %255, %cst_126 {dimension_numbers = #tpu.dot_dimension_numbers<[1], [0], [0], [1], [0, 0, 1, 1], [], []>} : vector<8x256xf32>, vector<256x512xf32>, vector<8x512xf32> -> vector<8x512xf32>
    %c0_127 = arith.constant 0 : index
    %c0_128 = arith.constant 0 : index
    %257 = vector.load %arg3[%c0_127, %c0_128] : memref<1x512xf32, #tpu.memory_space<vmem>>, vector<1x512xf32>
    %258 = vector.broadcast %257 : vector<1x512xf32> to vector<8x512xf32>
    %259 = arith.addf %256, %258 : vector<8x512xf32>
    %c0_129 = arith.constant 0 : index
    %c0_130 = arith.constant 0 : index
    %260 = vector.load %arg10[%c0_129, %c0_130] : memref<8x128xf32, #tpu.memory_space<vmem>>, vector<8x128xf32>
    %261 = vector.extract_strided_slice %259 {offsets = [0, 0], sizes = [8, 128], strides = [1, 1]} : vector<8x512xf32> to vector<8x128xf32>
    %262 = arith.negf %261 : vector<8x128xf32>
    %263 = math.exp %262 : vector<8x128xf32>
    %cst_131 = arith.constant 1.000000e+00 : f32
    %264 = vector.broadcast %cst_131 : f32 to vector<8x128xf32>
    %265 = arith.addf %264, %263 : vector<8x128xf32>
    %266 = arith.divf %264, %265 : vector<8x128xf32>
    %267 = vector.extract_strided_slice %259 {offsets = [0, 128], sizes = [8, 128], strides = [1, 1]} : vector<8x512xf32> to vector<8x128xf32>
    %268 = arith.negf %267 : vector<8x128xf32>
    %269 = math.exp %268 : vector<8x128xf32>
    %cst_132 = arith.constant 1.000000e+00 : f32
    %270 = vector.broadcast %cst_132 : f32 to vector<8x128xf32>
    %271 = arith.addf %270, %269 : vector<8x128xf32>
    %272 = arith.divf %270, %271 : vector<8x128xf32>
    %273 = vector.extract_strided_slice %259 {offsets = [0, 256], sizes = [8, 128], strides = [1, 1]} : vector<8x512xf32> to vector<8x128xf32>
    %274 = math.tanh %273 : vector<8x128xf32>
    %275 = vector.extract_strided_slice %259 {offsets = [0, 384], sizes = [8, 128], strides = [1, 1]} : vector<8x512xf32> to vector<8x128xf32>
    %276 = arith.negf %275 : vector<8x128xf32>
    %277 = math.exp %276 : vector<8x128xf32>
    %cst_133 = arith.constant 1.000000e+00 : f32
    %278 = vector.broadcast %cst_133 : f32 to vector<8x128xf32>
    %279 = arith.addf %278, %277 : vector<8x128xf32>
    %280 = arith.divf %278, %279 : vector<8x128xf32>
    %281 = arith.mulf %272, %260 : vector<8x128xf32>
    %282 = arith.mulf %266, %274 : vector<8x128xf32>
    %283 = arith.addf %281, %282 : vector<8x128xf32>
    %284 = math.tanh %283 : vector<8x128xf32>
    %285 = arith.mulf %280, %284 : vector<8x128xf32>
    %c0_134 = arith.constant 0 : index
    %c0_135 = arith.constant 0 : index
    %286 = vector.load %arg9[%c0_134, %c0_135] : memref<8x128xf32, #tpu.memory_space<vmem>>, vector<8x128xf32>
    tpu.vector_store %arg9[%c0_134, %c0_135], %285 {strides = array<i32>} : memref<8x128xf32, #tpu.memory_space<vmem>>, vector<8x128xf32>,
    %c0_136 = arith.constant 0 : index
    %c0_137 = arith.constant 0 : index
    %287 = vector.load %arg10[%c0_136, %c0_137] : memref<8x128xf32, #tpu.memory_space<vmem>>, vector<8x128xf32>
    tpu.vector_store %arg10[%c0_136, %c0_137], %283 {strides = array<i32>} : memref<8x128xf32, #tpu.memory_space<vmem>>, vector<8x128xf32>,
    %c4_i32 = arith.constant 4 : i32
    %288 = arith.index_cast %c4_i32 : i32 to index
    %c0_138 = arith.constant 0 : index
    %c0_139 = arith.constant 0 : index
    %289 = vector.load %arg0[%288, %c0_138, %c0_139] : memref<8x8x512xf32, #tpu.memory_space<vmem>>, vector<1x8x512xf32>
    %290 = vector.shape_cast %289 : vector<1x8x512xf32> to vector<8x512xf32>
    %c0_140 = arith.constant 0 : index
    %c0_141 = arith.constant 0 : index
    %291 = vector.load %arg7[%c0_140, %c0_141] : memref<8x128xf32, #tpu.memory_space<vmem>>, vector<8x128xf32>
    %c0_142 = arith.constant 0 : index
    %c0_143 = arith.constant 0 : index
    %292 = vector.load %arg1[%c0_142, %c0_143] : memref<128x512xf32, #tpu.memory_space<vmem>>, vector<128x512xf32>
    %cst_144 = arith.constant dense<0.000000e+00> : vector<8x512xf32>
    %293 = tpu.matmul %291, %292, %cst_144 {dimension_numbers = #tpu.dot_dimension_numbers<[1], [0], [0], [1], [0, 0, 1, 1], [], []>} : vector<8x128xf32>, vector<128x512xf32>, vector<8x512xf32> -> vector<8x512xf32>
    %294 = arith.addf %290, %293 : vector<8x512xf32>
    %c0_145 = arith.constant 0 : index
    %c0_146 = arith.constant 0 : index
    %295 = vector.load %arg8[%c0_145, %c0_146] : memref<8x128xf32, #tpu.memory_space<vmem>>, vector<8x128xf32>
    %296 = vector.extract_strided_slice %294 {offsets = [0, 0], sizes = [8, 128], strides = [1, 1]} : vector<8x512xf32> to vector<8x128xf32>
    %297 = arith.negf %296 : vector<8x128xf32>
    %298 = math.exp %297 : vector<8x128xf32>
    %cst_147 = arith.constant 1.000000e+00 : f32
    %299 = vector.broadcast %cst_147 : f32 to vector<8x128xf32>
    %300 = arith.addf %299, %298 : vector<8x128xf32>
    %301 = arith.divf %299, %300 : vector<8x128xf32>
    %302 = vector.extract_strided_slice %294 {offsets = [0, 128], sizes = [8, 128], strides = [1, 1]} : vector<8x512xf32> to vector<8x128xf32>
    %303 = arith.negf %302 : vector<8x128xf32>
    %304 = math.exp %303 : vector<8x128xf32>
    %cst_148 = arith.constant 1.000000e+00 : f32
    %305 = vector.broadcast %cst_148 : f32 to vector<8x128xf32>
    %306 = arith.addf %305, %304 : vector<8x128xf32>
    %307 = arith.divf %305, %306 : vector<8x128xf32>
    %308 = vector.extract_strided_slice %294 {offsets = [0, 256], sizes = [8, 128], strides = [1, 1]} : vector<8x512xf32> to vector<8x128xf32>
    %309 = math.tanh %308 : vector<8x128xf32>
    %310 = vector.extract_strided_slice %294 {offsets = [0, 384], sizes = [8, 128], strides = [1, 1]} : vector<8x512xf32> to vector<8x128xf32>
    %311 = arith.negf %310 : vector<8x128xf32>
    %312 = math.exp %311 : vector<8x128xf32>
    %cst_149 = arith.constant 1.000000e+00 : f32
    %313 = vector.broadcast %cst_149 : f32 to vector<8x128xf32>
    %314 = arith.addf %313, %312 : vector<8x128xf32>
    %315 = arith.divf %313, %314 : vector<8x128xf32>
    %316 = arith.mulf %307, %295 : vector<8x128xf32>
    %317 = arith.mulf %301, %309 : vector<8x128xf32>
    %318 = arith.addf %316, %317 : vector<8x128xf32>
    %319 = math.tanh %318 : vector<8x128xf32>
    %320 = arith.mulf %315, %319 : vector<8x128xf32>
    %c0_150 = arith.constant 0 : index
    %c0_151 = arith.constant 0 : index
    %321 = vector.load %arg7[%c0_150, %c0_151] : memref<8x128xf32, #tpu.memory_space<vmem>>, vector<8x128xf32>
    tpu.vector_store %arg7[%c0_150, %c0_151], %320 {strides = array<i32>} : memref<8x128xf32, #tpu.memory_space<vmem>>, vector<8x128xf32>,
    %c0_152 = arith.constant 0 : index
    %c0_153 = arith.constant 0 : index
    %322 = vector.load %arg8[%c0_152, %c0_153] : memref<8x128xf32, #tpu.memory_space<vmem>>, vector<8x128xf32>
    tpu.vector_store %arg8[%c0_152, %c0_153], %318 {strides = array<i32>} : memref<8x128xf32, #tpu.memory_space<vmem>>, vector<8x128xf32>,
    %c0_154 = arith.constant 0 : index
    %c0_155 = arith.constant 0 : index
    %323 = vector.load %arg9[%c0_154, %c0_155] : memref<8x128xf32, #tpu.memory_space<vmem>>, vector<8x128xf32>
    %324 = tpu.concatenate %320, %323 in 1 : vector<8x128xf32>, vector<8x128xf32> -> vector<8x256xf32>
    %c0_156 = arith.constant 0 : index
    %c0_157 = arith.constant 0 : index
    %325 = vector.load %arg2[%c0_156, %c0_157] : memref<256x512xf32, #tpu.memory_space<vmem>>, vector<256x512xf32>
    %cst_158 = arith.constant dense<0.000000e+00> : vector<8x512xf32>
    %326 = tpu.matmul %324, %325, %cst_158 {dimension_numbers = #tpu.dot_dimension_numbers<[1], [0], [0], [1], [0, 0, 1, 1], [], []>} : vector<8x256xf32>, vector<256x512xf32>, vector<8x512xf32> -> vector<8x512xf32>
    %c0_159 = arith.constant 0 : index
    %c0_160 = arith.constant 0 : index
    %327 = vector.load %arg3[%c0_159, %c0_160] : memref<1x512xf32, #tpu.memory_space<vmem>>, vector<1x512xf32>
    %328 = vector.broadcast %327 : vector<1x512xf32> to vector<8x512xf32>
    %329 = arith.addf %326, %328 : vector<8x512xf32>
    %c0_161 = arith.constant 0 : index
    %c0_162 = arith.constant 0 : index
    %330 = vector.load %arg10[%c0_161, %c0_162] : memref<8x128xf32, #tpu.memory_space<vmem>>, vector<8x128xf32>
    %331 = vector.extract_strided_slice %329 {offsets = [0, 0], sizes = [8, 128], strides = [1, 1]} : vector<8x512xf32> to vector<8x128xf32>
    %332 = arith.negf %331 : vector<8x128xf32>
    %333 = math.exp %332 : vector<8x128xf32>
    %cst_163 = arith.constant 1.000000e+00 : f32
    %334 = vector.broadcast %cst_163 : f32 to vector<8x128xf32>
    %335 = arith.addf %334, %333 : vector<8x128xf32>
    %336 = arith.divf %334, %335 : vector<8x128xf32>
    %337 = vector.extract_strided_slice %329 {offsets = [0, 128], sizes = [8, 128], strides = [1, 1]} : vector<8x512xf32> to vector<8x128xf32>
    %338 = arith.negf %337 : vector<8x128xf32>
    %339 = math.exp %338 : vector<8x128xf32>
    %cst_164 = arith.constant 1.000000e+00 : f32
    %340 = vector.broadcast %cst_164 : f32 to vector<8x128xf32>
    %341 = arith.addf %340, %339 : vector<8x128xf32>
    %342 = arith.divf %340, %341 : vector<8x128xf32>
    %343 = vector.extract_strided_slice %329 {offsets = [0, 256], sizes = [8, 128], strides = [1, 1]} : vector<8x512xf32> to vector<8x128xf32>
    %344 = math.tanh %343 : vector<8x128xf32>
    %345 = vector.extract_strided_slice %329 {offsets = [0, 384], sizes = [8, 128], strides = [1, 1]} : vector<8x512xf32> to vector<8x128xf32>
    %346 = arith.negf %345 : vector<8x128xf32>
    %347 = math.exp %346 : vector<8x128xf32>
    %cst_165 = arith.constant 1.000000e+00 : f32
    %348 = vector.broadcast %cst_165 : f32 to vector<8x128xf32>
    %349 = arith.addf %348, %347 : vector<8x128xf32>
    %350 = arith.divf %348, %349 : vector<8x128xf32>
    %351 = arith.mulf %342, %330 : vector<8x128xf32>
    %352 = arith.mulf %336, %344 : vector<8x128xf32>
    %353 = arith.addf %351, %352 : vector<8x128xf32>
    %354 = math.tanh %353 : vector<8x128xf32>
    %355 = arith.mulf %350, %354 : vector<8x128xf32>
    %c0_166 = arith.constant 0 : index
    %c0_167 = arith.constant 0 : index
    %356 = vector.load %arg9[%c0_166, %c0_167] : memref<8x128xf32, #tpu.memory_space<vmem>>, vector<8x128xf32>
    tpu.vector_store %arg9[%c0_166, %c0_167], %355 {strides = array<i32>} : memref<8x128xf32, #tpu.memory_space<vmem>>, vector<8x128xf32>,
    %c0_168 = arith.constant 0 : index
    %c0_169 = arith.constant 0 : index
    %357 = vector.load %arg10[%c0_168, %c0_169] : memref<8x128xf32, #tpu.memory_space<vmem>>, vector<8x128xf32>
    tpu.vector_store %arg10[%c0_168, %c0_169], %353 {strides = array<i32>} : memref<8x128xf32, #tpu.memory_space<vmem>>, vector<8x128xf32>,
    %c5_i32 = arith.constant 5 : i32
    %358 = arith.index_cast %c5_i32 : i32 to index
    %c0_170 = arith.constant 0 : index
    %c0_171 = arith.constant 0 : index
    %359 = vector.load %arg0[%358, %c0_170, %c0_171] : memref<8x8x512xf32, #tpu.memory_space<vmem>>, vector<1x8x512xf32>
    %360 = vector.shape_cast %359 : vector<1x8x512xf32> to vector<8x512xf32>
    %c0_172 = arith.constant 0 : index
    %c0_173 = arith.constant 0 : index
    %361 = vector.load %arg7[%c0_172, %c0_173] : memref<8x128xf32, #tpu.memory_space<vmem>>, vector<8x128xf32>
    %c0_174 = arith.constant 0 : index
    %c0_175 = arith.constant 0 : index
    %362 = vector.load %arg1[%c0_174, %c0_175] : memref<128x512xf32, #tpu.memory_space<vmem>>, vector<128x512xf32>
    %cst_176 = arith.constant dense<0.000000e+00> : vector<8x512xf32>
    %363 = tpu.matmul %361, %362, %cst_176 {dimension_numbers = #tpu.dot_dimension_numbers<[1], [0], [0], [1], [0, 0, 1, 1], [], []>} : vector<8x128xf32>, vector<128x512xf32>, vector<8x512xf32> -> vector<8x512xf32>
    %364 = arith.addf %360, %363 : vector<8x512xf32>
    %c0_177 = arith.constant 0 : index
    %c0_178 = arith.constant 0 : index
    %365 = vector.load %arg8[%c0_177, %c0_178] : memref<8x128xf32, #tpu.memory_space<vmem>>, vector<8x128xf32>
    %366 = vector.extract_strided_slice %364 {offsets = [0, 0], sizes = [8, 128], strides = [1, 1]} : vector<8x512xf32> to vector<8x128xf32>
    %367 = arith.negf %366 : vector<8x128xf32>
    %368 = math.exp %367 : vector<8x128xf32>
    %cst_179 = arith.constant 1.000000e+00 : f32
    %369 = vector.broadcast %cst_179 : f32 to vector<8x128xf32>
    %370 = arith.addf %369, %368 : vector<8x128xf32>
    %371 = arith.divf %369, %370 : vector<8x128xf32>
    %372 = vector.extract_strided_slice %364 {offsets = [0, 128], sizes = [8, 128], strides = [1, 1]} : vector<8x512xf32> to vector<8x128xf32>
    %373 = arith.negf %372 : vector<8x128xf32>
    %374 = math.exp %373 : vector<8x128xf32>
    %cst_180 = arith.constant 1.000000e+00 : f32
    %375 = vector.broadcast %cst_180 : f32 to vector<8x128xf32>
    %376 = arith.addf %375, %374 : vector<8x128xf32>
    %377 = arith.divf %375, %376 : vector<8x128xf32>
    %378 = vector.extract_strided_slice %364 {offsets = [0, 256], sizes = [8, 128], strides = [1, 1]} : vector<8x512xf32> to vector<8x128xf32>
    %379 = math.tanh %378 : vector<8x128xf32>
    %380 = vector.extract_strided_slice %364 {offsets = [0, 384], sizes = [8, 128], strides = [1, 1]} : vector<8x512xf32> to vector<8x128xf32>
    %381 = arith.negf %380 : vector<8x128xf32>
    %382 = math.exp %381 : vector<8x128xf32>
    %cst_181 = arith.constant 1.000000e+00 : f32
    %383 = vector.broadcast %cst_181 : f32 to vector<8x128xf32>
    %384 = arith.addf %383, %382 : vector<8x128xf32>
    %385 = arith.divf %383, %384 : vector<8x128xf32>
    %386 = arith.mulf %377, %365 : vector<8x128xf32>
    %387 = arith.mulf %371, %379 : vector<8x128xf32>
    %388 = arith.addf %386, %387 : vector<8x128xf32>
    %389 = math.tanh %388 : vector<8x128xf32>
    %390 = arith.mulf %385, %389 : vector<8x128xf32>
    %c0_182 = arith.constant 0 : index
    %c0_183 = arith.constant 0 : index
    %391 = vector.load %arg7[%c0_182, %c0_183] : memref<8x128xf32, #tpu.memory_space<vmem>>, vector<8x128xf32>
    tpu.vector_store %arg7[%c0_182, %c0_183], %390 {strides = array<i32>} : memref<8x128xf32, #tpu.memory_space<vmem>>, vector<8x128xf32>,
    %c0_184 = arith.constant 0 : index
    %c0_185 = arith.constant 0 : index
    %392 = vector.load %arg8[%c0_184, %c0_185] : memref<8x128xf32, #tpu.memory_space<vmem>>, vector<8x128xf32>
    tpu.vector_store %arg8[%c0_184, %c0_185], %388 {strides = array<i32>} : memref<8x128xf32, #tpu.memory_space<vmem>>, vector<8x128xf32>,
    %c0_186 = arith.constant 0 : index
    %c0_187 = arith.constant 0 : index
    %393 = vector.load %arg9[%c0_186, %c0_187] : memref<8x128xf32, #tpu.memory_space<vmem>>, vector<8x128xf32>
    %394 = tpu.concatenate %390, %393 in 1 : vector<8x128xf32>, vector<8x128xf32> -> vector<8x256xf32>
    %c0_188 = arith.constant 0 : index
    %c0_189 = arith.constant 0 : index
    %395 = vector.load %arg2[%c0_188, %c0_189] : memref<256x512xf32, #tpu.memory_space<vmem>>, vector<256x512xf32>
    %cst_190 = arith.constant dense<0.000000e+00> : vector<8x512xf32>
    %396 = tpu.matmul %394, %395, %cst_190 {dimension_numbers = #tpu.dot_dimension_numbers<[1], [0], [0], [1], [0, 0, 1, 1], [], []>} : vector<8x256xf32>, vector<256x512xf32>, vector<8x512xf32> -> vector<8x512xf32>
    %c0_191 = arith.constant 0 : index
    %c0_192 = arith.constant 0 : index
    %397 = vector.load %arg3[%c0_191, %c0_192] : memref<1x512xf32, #tpu.memory_space<vmem>>, vector<1x512xf32>
    %398 = vector.broadcast %397 : vector<1x512xf32> to vector<8x512xf32>
    %399 = arith.addf %396, %398 : vector<8x512xf32>
    %c0_193 = arith.constant 0 : index
    %c0_194 = arith.constant 0 : index
    %400 = vector.load %arg10[%c0_193, %c0_194] : memref<8x128xf32, #tpu.memory_space<vmem>>, vector<8x128xf32>
    %401 = vector.extract_strided_slice %399 {offsets = [0, 0], sizes = [8, 128], strides = [1, 1]} : vector<8x512xf32> to vector<8x128xf32>
    %402 = arith.negf %401 : vector<8x128xf32>
    %403 = math.exp %402 : vector<8x128xf32>
    %cst_195 = arith.constant 1.000000e+00 : f32
    %404 = vector.broadcast %cst_195 : f32 to vector<8x128xf32>
    %405 = arith.addf %404, %403 : vector<8x128xf32>
    %406 = arith.divf %404, %405 : vector<8x128xf32>
    %407 = vector.extract_strided_slice %399 {offsets = [0, 128], sizes = [8, 128], strides = [1, 1]} : vector<8x512xf32> to vector<8x128xf32>
    %408 = arith.negf %407 : vector<8x128xf32>
    %409 = math.exp %408 : vector<8x128xf32>
    %cst_196 = arith.constant 1.000000e+00 : f32
    %410 = vector.broadcast %cst_196 : f32 to vector<8x128xf32>
    %411 = arith.addf %410, %409 : vector<8x128xf32>
    %412 = arith.divf %410, %411 : vector<8x128xf32>
    %413 = vector.extract_strided_slice %399 {offsets = [0, 256], sizes = [8, 128], strides = [1, 1]} : vector<8x512xf32> to vector<8x128xf32>
    %414 = math.tanh %413 : vector<8x128xf32>
    %415 = vector.extract_strided_slice %399 {offsets = [0, 384], sizes = [8, 128], strides = [1, 1]} : vector<8x512xf32> to vector<8x128xf32>
    %416 = arith.negf %415 : vector<8x128xf32>
    %417 = math.exp %416 : vector<8x128xf32>
    %cst_197 = arith.constant 1.000000e+00 : f32
    %418 = vector.broadcast %cst_197 : f32 to vector<8x128xf32>
    %419 = arith.addf %418, %417 : vector<8x128xf32>
    %420 = arith.divf %418, %419 : vector<8x128xf32>
    %421 = arith.mulf %412, %400 : vector<8x128xf32>
    %422 = arith.mulf %406, %414 : vector<8x128xf32>
    %423 = arith.addf %421, %422 : vector<8x128xf32>
    %424 = math.tanh %423 : vector<8x128xf32>
    %425 = arith.mulf %420, %424 : vector<8x128xf32>
    %c0_198 = arith.constant 0 : index
    %c0_199 = arith.constant 0 : index
    %426 = vector.load %arg9[%c0_198, %c0_199] : memref<8x128xf32, #tpu.memory_space<vmem>>, vector<8x128xf32>
    tpu.vector_store %arg9[%c0_198, %c0_199], %425 {strides = array<i32>} : memref<8x128xf32, #tpu.memory_space<vmem>>, vector<8x128xf32>,
    %c0_200 = arith.constant 0 : index
    %c0_201 = arith.constant 0 : index
    %427 = vector.load %arg10[%c0_200, %c0_201] : memref<8x128xf32, #tpu.memory_space<vmem>>, vector<8x128xf32>
    tpu.vector_store %arg10[%c0_200, %c0_201], %423 {strides = array<i32>} : memref<8x128xf32, #tpu.memory_space<vmem>>, vector<8x128xf32>,
    %c6_i32 = arith.constant 6 : i32
    %428 = arith.index_cast %c6_i32 : i32 to index
    %c0_202 = arith.constant 0 : index
    %c0_203 = arith.constant 0 : index
    %429 = vector.load %arg0[%428, %c0_202, %c0_203] : memref<8x8x512xf32, #tpu.memory_space<vmem>>, vector<1x8x512xf32>
    %430 = vector.shape_cast %429 : vector<1x8x512xf32> to vector<8x512xf32>
    %c0_204 = arith.constant 0 : index
    %c0_205 = arith.constant 0 : index
    %431 = vector.load %arg7[%c0_204, %c0_205] : memref<8x128xf32, #tpu.memory_space<vmem>>, vector<8x128xf32>
    %c0_206 = arith.constant 0 : index
    %c0_207 = arith.constant 0 : index
    %432 = vector.load %arg1[%c0_206, %c0_207] : memref<128x512xf32, #tpu.memory_space<vmem>>, vector<128x512xf32>
    %cst_208 = arith.constant dense<0.000000e+00> : vector<8x512xf32>
    %433 = tpu.matmul %431, %432, %cst_208 {dimension_numbers = #tpu.dot_dimension_numbers<[1], [0], [0], [1], [0, 0, 1, 1], [], []>} : vector<8x128xf32>, vector<128x512xf32>, vector<8x512xf32> -> vector<8x512xf32>
    %434 = arith.addf %430, %433 : vector<8x512xf32>
    %c0_209 = arith.constant 0 : index
    %c0_210 = arith.constant 0 : index
    %435 = vector.load %arg8[%c0_209, %c0_210] : memref<8x128xf32, #tpu.memory_space<vmem>>, vector<8x128xf32>
    %436 = vector.extract_strided_slice %434 {offsets = [0, 0], sizes = [8, 128], strides = [1, 1]} : vector<8x512xf32> to vector<8x128xf32>
    %437 = arith.negf %436 : vector<8x128xf32>
    %438 = math.exp %437 : vector<8x128xf32>
    %cst_211 = arith.constant 1.000000e+00 : f32
    %439 = vector.broadcast %cst_211 : f32 to vector<8x128xf32>
    %440 = arith.addf %439, %438 : vector<8x128xf32>
    %441 = arith.divf %439, %440 : vector<8x128xf32>
    %442 = vector.extract_strided_slice %434 {offsets = [0, 128], sizes = [8, 128], strides = [1, 1]} : vector<8x512xf32> to vector<8x128xf32>
    %443 = arith.negf %442 : vector<8x128xf32>
    %444 = math.exp %443 : vector<8x128xf32>
    %cst_212 = arith.constant 1.000000e+00 : f32
    %445 = vector.broadcast %cst_212 : f32 to vector<8x128xf32>
    %446 = arith.addf %445, %444 : vector<8x128xf32>
    %447 = arith.divf %445, %446 : vector<8x128xf32>
    %448 = vector.extract_strided_slice %434 {offsets = [0, 256], sizes = [8, 128], strides = [1, 1]} : vector<8x512xf32> to vector<8x128xf32>
    %449 = math.tanh %448 : vector<8x128xf32>
    %450 = vector.extract_strided_slice %434 {offsets = [0, 384], sizes = [8, 128], strides = [1, 1]} : vector<8x512xf32> to vector<8x128xf32>
    %451 = arith.negf %450 : vector<8x128xf32>
    %452 = math.exp %451 : vector<8x128xf32>
    %cst_213 = arith.constant 1.000000e+00 : f32
    %453 = vector.broadcast %cst_213 : f32 to vector<8x128xf32>
    %454 = arith.addf %453, %452 : vector<8x128xf32>
    %455 = arith.divf %453, %454 : vector<8x128xf32>
    %456 = arith.mulf %447, %435 : vector<8x128xf32>
    %457 = arith.mulf %441, %449 : vector<8x128xf32>
    %458 = arith.addf %456, %457 : vector<8x128xf32>
    %459 = math.tanh %458 : vector<8x128xf32>
    %460 = arith.mulf %455, %459 : vector<8x128xf32>
    %c0_214 = arith.constant 0 : index
    %c0_215 = arith.constant 0 : index
    %461 = vector.load %arg7[%c0_214, %c0_215] : memref<8x128xf32, #tpu.memory_space<vmem>>, vector<8x128xf32>
    tpu.vector_store %arg7[%c0_214, %c0_215], %460 {strides = array<i32>} : memref<8x128xf32, #tpu.memory_space<vmem>>, vector<8x128xf32>,
    %c0_216 = arith.constant 0 : index
    %c0_217 = arith.constant 0 : index
    %462 = vector.load %arg8[%c0_216, %c0_217] : memref<8x128xf32, #tpu.memory_space<vmem>>, vector<8x128xf32>
    tpu.vector_store %arg8[%c0_216, %c0_217], %458 {strides = array<i32>} : memref<8x128xf32, #tpu.memory_space<vmem>>, vector<8x128xf32>,
    %c0_218 = arith.constant 0 : index
    %c0_219 = arith.constant 0 : index
    %463 = vector.load %arg9[%c0_218, %c0_219] : memref<8x128xf32, #tpu.memory_space<vmem>>, vector<8x128xf32>
    %464 = tpu.concatenate %460, %463 in 1 : vector<8x128xf32>, vector<8x128xf32> -> vector<8x256xf32>
    %c0_220 = arith.constant 0 : index
    %c0_221 = arith.constant 0 : index
    %465 = vector.load %arg2[%c0_220, %c0_221] : memref<256x512xf32, #tpu.memory_space<vmem>>, vector<256x512xf32>
    %cst_222 = arith.constant dense<0.000000e+00> : vector<8x512xf32>
    %466 = tpu.matmul %464, %465, %cst_222 {dimension_numbers = #tpu.dot_dimension_numbers<[1], [0], [0], [1], [0, 0, 1, 1], [], []>} : vector<8x256xf32>, vector<256x512xf32>, vector<8x512xf32> -> vector<8x512xf32>
    %c0_223 = arith.constant 0 : index
    %c0_224 = arith.constant 0 : index
    %467 = vector.load %arg3[%c0_223, %c0_224] : memref<1x512xf32, #tpu.memory_space<vmem>>, vector<1x512xf32>
    %468 = vector.broadcast %467 : vector<1x512xf32> to vector<8x512xf32>
    %469 = arith.addf %466, %468 : vector<8x512xf32>
    %c0_225 = arith.constant 0 : index
    %c0_226 = arith.constant 0 : index
    %470 = vector.load %arg10[%c0_225, %c0_226] : memref<8x128xf32, #tpu.memory_space<vmem>>, vector<8x128xf32>
    %471 = vector.extract_strided_slice %469 {offsets = [0, 0], sizes = [8, 128], strides = [1, 1]} : vector<8x512xf32> to vector<8x128xf32>
    %472 = arith.negf %471 : vector<8x128xf32>
    %473 = math.exp %472 : vector<8x128xf32>
    %cst_227 = arith.constant 1.000000e+00 : f32
    %474 = vector.broadcast %cst_227 : f32 to vector<8x128xf32>
    %475 = arith.addf %474, %473 : vector<8x128xf32>
    %476 = arith.divf %474, %475 : vector<8x128xf32>
    %477 = vector.extract_strided_slice %469 {offsets = [0, 128], sizes = [8, 128], strides = [1, 1]} : vector<8x512xf32> to vector<8x128xf32>
    %478 = arith.negf %477 : vector<8x128xf32>
    %479 = math.exp %478 : vector<8x128xf32>
    %cst_228 = arith.constant 1.000000e+00 : f32
    %480 = vector.broadcast %cst_228 : f32 to vector<8x128xf32>
    %481 = arith.addf %480, %479 : vector<8x128xf32>
    %482 = arith.divf %480, %481 : vector<8x128xf32>
    %483 = vector.extract_strided_slice %469 {offsets = [0, 256], sizes = [8, 128], strides = [1, 1]} : vector<8x512xf32> to vector<8x128xf32>
    %484 = math.tanh %483 : vector<8x128xf32>
    %485 = vector.extract_strided_slice %469 {offsets = [0, 384], sizes = [8, 128], strides = [1, 1]} : vector<8x512xf32> to vector<8x128xf32>
    %486 = arith.negf %485 : vector<8x128xf32>
    %487 = math.exp %486 : vector<8x128xf32>
    %cst_229 = arith.constant 1.000000e+00 : f32
    %488 = vector.broadcast %cst_229 : f32 to vector<8x128xf32>
    %489 = arith.addf %488, %487 : vector<8x128xf32>
    %490 = arith.divf %488, %489 : vector<8x128xf32>
    %491 = arith.mulf %482, %470 : vector<8x128xf32>
    %492 = arith.mulf %476, %484 : vector<8x128xf32>
    %493 = arith.addf %491, %492 : vector<8x128xf32>
    %494 = math.tanh %493 : vector<8x128xf32>
    %495 = arith.mulf %490, %494 : vector<8x128xf32>
    %c0_230 = arith.constant 0 : index
    %c0_231 = arith.constant 0 : index
    %496 = vector.load %arg9[%c0_230, %c0_231] : memref<8x128xf32, #tpu.memory_space<vmem>>, vector<8x128xf32>
    tpu.vector_store %arg9[%c0_230, %c0_231], %495 {strides = array<i32>} : memref<8x128xf32, #tpu.memory_space<vmem>>, vector<8x128xf32>,
    %c0_232 = arith.constant 0 : index
    %c0_233 = arith.constant 0 : index
    %497 = vector.load %arg10[%c0_232, %c0_233] : memref<8x128xf32, #tpu.memory_space<vmem>>, vector<8x128xf32>
    tpu.vector_store %arg10[%c0_232, %c0_233], %493 {strides = array<i32>} : memref<8x128xf32, #tpu.memory_space<vmem>>, vector<8x128xf32>,
    %c7_i32 = arith.constant 7 : i32
    %498 = arith.index_cast %c7_i32 : i32 to index
    %c0_234 = arith.constant 0 : index
    %c0_235 = arith.constant 0 : index
    %499 = vector.load %arg0[%498, %c0_234, %c0_235] : memref<8x8x512xf32, #tpu.memory_space<vmem>>, vector<1x8x512xf32>
    %500 = vector.shape_cast %499 : vector<1x8x512xf32> to vector<8x512xf32>
    %c0_236 = arith.constant 0 : index
    %c0_237 = arith.constant 0 : index
    %501 = vector.load %arg7[%c0_236, %c0_237] : memref<8x128xf32, #tpu.memory_space<vmem>>, vector<8x128xf32>
    %c0_238 = arith.constant 0 : index
    %c0_239 = arith.constant 0 : index
    %502 = vector.load %arg1[%c0_238, %c0_239] : memref<128x512xf32, #tpu.memory_space<vmem>>, vector<128x512xf32>
    %cst_240 = arith.constant dense<0.000000e+00> : vector<8x512xf32>
    %503 = tpu.matmul %501, %502, %cst_240 {dimension_numbers = #tpu.dot_dimension_numbers<[1], [0], [0], [1], [0, 0, 1, 1], [], []>} : vector<8x128xf32>, vector<128x512xf32>, vector<8x512xf32> -> vector<8x512xf32>
    %504 = arith.addf %500, %503 : vector<8x512xf32>
    %c0_241 = arith.constant 0 : index
    %c0_242 = arith.constant 0 : index
    %505 = vector.load %arg8[%c0_241, %c0_242] : memref<8x128xf32, #tpu.memory_space<vmem>>, vector<8x128xf32>
    %506 = vector.extract_strided_slice %504 {offsets = [0, 0], sizes = [8, 128], strides = [1, 1]} : vector<8x512xf32> to vector<8x128xf32>
    %507 = arith.negf %506 : vector<8x128xf32>
    %508 = math.exp %507 : vector<8x128xf32>
    %cst_243 = arith.constant 1.000000e+00 : f32
    %509 = vector.broadcast %cst_243 : f32 to vector<8x128xf32>
    %510 = arith.addf %509, %508 : vector<8x128xf32>
    %511 = arith.divf %509, %510 : vector<8x128xf32>
    %512 = vector.extract_strided_slice %504 {offsets = [0, 128], sizes = [8, 128], strides = [1, 1]} : vector<8x512xf32> to vector<8x128xf32>
    %513 = arith.negf %512 : vector<8x128xf32>
    %514 = math.exp %513 : vector<8x128xf32>
    %cst_244 = arith.constant 1.000000e+00 : f32
    %515 = vector.broadcast %cst_244 : f32 to vector<8x128xf32>
    %516 = arith.addf %515, %514 : vector<8x128xf32>
    %517 = arith.divf %515, %516 : vector<8x128xf32>
    %518 = vector.extract_strided_slice %504 {offsets = [0, 256], sizes = [8, 128], strides = [1, 1]} : vector<8x512xf32> to vector<8x128xf32>
    %519 = math.tanh %518 : vector<8x128xf32>
    %520 = vector.extract_strided_slice %504 {offsets = [0, 384], sizes = [8, 128], strides = [1, 1]} : vector<8x512xf32> to vector<8x128xf32>
    %521 = arith.negf %520 : vector<8x128xf32>
    %522 = math.exp %521 : vector<8x128xf32>
    %cst_245 = arith.constant 1.000000e+00 : f32
    %523 = vector.broadcast %cst_245 : f32 to vector<8x128xf32>
    %524 = arith.addf %523, %522 : vector<8x128xf32>
    %525 = arith.divf %523, %524 : vector<8x128xf32>
    %526 = arith.mulf %517, %505 : vector<8x128xf32>
    %527 = arith.mulf %511, %519 : vector<8x128xf32>
    %528 = arith.addf %526, %527 : vector<8x128xf32>
    %529 = math.tanh %528 : vector<8x128xf32>
    %530 = arith.mulf %525, %529 : vector<8x128xf32>
    %c0_246 = arith.constant 0 : index
    %c0_247 = arith.constant 0 : index
    %531 = vector.load %arg7[%c0_246, %c0_247] : memref<8x128xf32, #tpu.memory_space<vmem>>, vector<8x128xf32>
    tpu.vector_store %arg7[%c0_246, %c0_247], %530 {strides = array<i32>} : memref<8x128xf32, #tpu.memory_space<vmem>>, vector<8x128xf32>,
    %c0_248 = arith.constant 0 : index
    %c0_249 = arith.constant 0 : index
    %532 = vector.load %arg8[%c0_248, %c0_249] : memref<8x128xf32, #tpu.memory_space<vmem>>, vector<8x128xf32>
    tpu.vector_store %arg8[%c0_248, %c0_249], %528 {strides = array<i32>} : memref<8x128xf32, #tpu.memory_space<vmem>>, vector<8x128xf32>,
    %c0_250 = arith.constant 0 : index
    %c0_251 = arith.constant 0 : index
    %533 = vector.load %arg9[%c0_250, %c0_251] : memref<8x128xf32, #tpu.memory_space<vmem>>, vector<8x128xf32>
    %534 = tpu.concatenate %530, %533 in 1 : vector<8x128xf32>, vector<8x128xf32> -> vector<8x256xf32>
    %c0_252 = arith.constant 0 : index
    %c0_253 = arith.constant 0 : index
    %535 = vector.load %arg2[%c0_252, %c0_253] : memref<256x512xf32, #tpu.memory_space<vmem>>, vector<256x512xf32>
    %cst_254 = arith.constant dense<0.000000e+00> : vector<8x512xf32>
    %536 = tpu.matmul %534, %535, %cst_254 {dimension_numbers = #tpu.dot_dimension_numbers<[1], [0], [0], [1], [0, 0, 1, 1], [], []>} : vector<8x256xf32>, vector<256x512xf32>, vector<8x512xf32> -> vector<8x512xf32>
    %c0_255 = arith.constant 0 : index
    %c0_256 = arith.constant 0 : index
    %537 = vector.load %arg3[%c0_255, %c0_256] : memref<1x512xf32, #tpu.memory_space<vmem>>, vector<1x512xf32>
    %538 = vector.broadcast %537 : vector<1x512xf32> to vector<8x512xf32>
    %539 = arith.addf %536, %538 : vector<8x512xf32>
    %c0_257 = arith.constant 0 : index
    %c0_258 = arith.constant 0 : index
    %540 = vector.load %arg10[%c0_257, %c0_258] : memref<8x128xf32, #tpu.memory_space<vmem>>, vector<8x128xf32>
    %541 = vector.extract_strided_slice %539 {offsets = [0, 0], sizes = [8, 128], strides = [1, 1]} : vector<8x512xf32> to vector<8x128xf32>
    %542 = arith.negf %541 : vector<8x128xf32>
    %543 = math.exp %542 : vector<8x128xf32>
    %cst_259 = arith.constant 1.000000e+00 : f32
    %544 = vector.broadcast %cst_259 : f32 to vector<8x128xf32>
    %545 = arith.addf %544, %543 : vector<8x128xf32>
    %546 = arith.divf %544, %545 : vector<8x128xf32>
    %547 = vector.extract_strided_slice %539 {offsets = [0, 128], sizes = [8, 128], strides = [1, 1]} : vector<8x512xf32> to vector<8x128xf32>
    %548 = arith.negf %547 : vector<8x128xf32>
    %549 = math.exp %548 : vector<8x128xf32>
    %cst_260 = arith.constant 1.000000e+00 : f32
    %550 = vector.broadcast %cst_260 : f32 to vector<8x128xf32>
    %551 = arith.addf %550, %549 : vector<8x128xf32>
    %552 = arith.divf %550, %551 : vector<8x128xf32>
    %553 = vector.extract_strided_slice %539 {offsets = [0, 256], sizes = [8, 128], strides = [1, 1]} : vector<8x512xf32> to vector<8x128xf32>
    %554 = math.tanh %553 : vector<8x128xf32>
    %555 = vector.extract_strided_slice %539 {offsets = [0, 384], sizes = [8, 128], strides = [1, 1]} : vector<8x512xf32> to vector<8x128xf32>
    %556 = arith.negf %555 : vector<8x128xf32>
    %557 = math.exp %556 : vector<8x128xf32>
    %cst_261 = arith.constant 1.000000e+00 : f32
    %558 = vector.broadcast %cst_261 : f32 to vector<8x128xf32>
    %559 = arith.addf %558, %557 : vector<8x128xf32>
    %560 = arith.divf %558, %559 : vector<8x128xf32>
    %561 = arith.mulf %552, %540 : vector<8x128xf32>
    %562 = arith.mulf %546, %554 : vector<8x128xf32>
    %563 = arith.addf %561, %562 : vector<8x128xf32>
    %564 = math.tanh %563 : vector<8x128xf32>
    %565 = arith.mulf %560, %564 : vector<8x128xf32>
    %c0_262 = arith.constant 0 : index
    %c0_263 = arith.constant 0 : index
    %566 = vector.load %arg9[%c0_262, %c0_263] : memref<8x128xf32, #tpu.memory_space<vmem>>, vector<8x128xf32>
    tpu.vector_store %arg9[%c0_262, %c0_263], %565 {strides = array<i32>} : memref<8x128xf32, #tpu.memory_space<vmem>>, vector<8x128xf32>,
    %c0_264 = arith.constant 0 : index
    %c0_265 = arith.constant 0 : index
    %567 = vector.load %arg10[%c0_264, %c0_265] : memref<8x128xf32, #tpu.memory_space<vmem>>, vector<8x128xf32>
    tpu.vector_store %arg10[%c0_264, %c0_265], %563 {strides = array<i32>} : memref<8x128xf32, #tpu.memory_space<vmem>>, vector<8x128xf32>,
    %c8_i32 = arith.constant 8 : i32
    %c0_266 = arith.constant 0 : index
    %c0_267 = arith.constant 0 : index
    %568 = vector.load %arg9[%c0_266, %c0_267] : memref<8x128xf32, #tpu.memory_space<vmem>>, vector<8x128xf32>
    %c0_268 = arith.constant 0 : index
    %c0_269 = arith.constant 0 : index
    %569 = vector.load %arg4[%c0_268, %c0_269] : memref<128x128xf32, #tpu.memory_space<vmem>>, vector<128x128xf32>
    %cst_270 = arith.constant dense<0.000000e+00> : vector<8x128xf32>
    %570 = tpu.matmul %568, %569, %cst_270 {dimension_numbers = #tpu.dot_dimension_numbers<[1], [0], [0], [1], [0, 0, 1, 1], [], []>} : vector<8x128xf32>, vector<128x128xf32>, vector<8x128xf32> -> vector<8x128xf32>
    %c0_271 = arith.constant 0 : index
    %c0_272 = arith.constant 0 : index
    %571 = vector.load %arg5[%c0_271, %c0_272] : memref<1x128xf32, #tpu.memory_space<vmem>>, vector<1x128xf32>
    %572 = vector.broadcast %571 : vector<1x128xf32> to vector<8x128xf32>
    %573 = arith.addf %570, %572 : vector<8x128xf32>
    %c0_273 = arith.constant 0 : index
    %c0_274 = arith.constant 0 : index
    %574 = vector.load %arg6[%c0_273, %c0_274] : memref<8x128xf32, #tpu.memory_space<vmem>>, vector<8x128xf32>
    tpu.vector_store %arg6[%c0_273, %c0_274], %573 {strides = array<i32>} : memref<8x128xf32, #tpu.memory_space<vmem>>, vector<8x128xf32>,
    return
  }
}

</mosaic_0001>

<llo_original>
// kernel: char_lstm_forward.1
$region0: #{char_lstm_forward.1}
  #allocation0 [shape = 'u32[]', space=smem, size = 0x4, offset = 0x4, fixed_abs, tag = 'smem constant byte address 0x4 - core index']
  #allocation1 [shape = 'u32[144,128]{1,0:T(1,128)}', space=vmem, size = 0x12000, scoped, tag = 'internal scratch']
  #allocation2 [shape = 'f32[8,128]{1,0:T(8,128)}', space=vmem, size = 0x1000, scoped, tag = 'scratch operand']
  #allocation3 [shape = 'f32[8,128]{1,0:T(8,128)}', space=vmem, size = 0x1000, scoped, tag = 'scratch operand']
  #allocation4 [shape = 'f32[8,128]{1,0:T(8,128)}', space=vmem, size = 0x1000, scoped, tag = 'scratch operand']
  #allocation5 [shape = 'f32[8,128]{1,0:T(8,128)}', space=vmem, size = 0x1000, scoped, tag = 'scratch operand']
  %s0 = inlined_call_operand.vmem [shape: f32[8,8,512], index: 0, kind: input, shape index: {}]
  %s1 = inlined_call_operand.vmem [shape: f32[128,512], index: 1, kind: input, shape index: {}]
  %s2 = inlined_call_operand.hbm [shape: f32[256,512], index: 2, kind: input, shape index: {}]
  %s3 = inlined_call_operand.vmem [shape: f32[1,512], index: 3, kind: input, shape index: {}]
  %s4 = inlined_call_operand.vmem [shape: f32[128,128], index: 4, kind: input, shape index: {}]
  %s5 = inlined_call_operand.vmem [shape: f32[1,128], index: 5, kind: input, shape index: {}]
  %s6 = inlined_call_operand.vmem [shape: f32[8,128], index: 6, kind: output, shape index: {}]
  %s7 = sld [smem:[#allocation0]]
  $region38: #{char_lstm_forward.1} parent=0
    _
  %s9 = ssub.s32 1, %s7
  %s10 = scalar_select 0, %s9, %s7
  $region1: #{char_lstm_forward.1} parent=0
    #allocation6 [shape = 'u8[524288]{0}', space=vmem, size = 0x80000, scoped, tag = 'input window, operand 2, single buffered']
    #allocation7 [shape = 's32[1]{0}', space=sflag, size = 0x4, scoped, tag = 'scoped memory for char_lstm_forward.1']
    %11 = vsyncpa [#allocation7], 0
    // Predicated region
    $region2: #{char_lstm_forward.1} parent=1 // pred_check
      _
    $region3: #{char_lstm_forward.1} parent=1 // pred_check_branch
      %13 = sbr.rel (0) target = $region5
    $region4: #{char_lstm_forward.1} parent=1 // pred_region
      _
    $region5: #{char_lstm_forward.1} parent=1 // pred_fallthru
      _
    // Predicated region
    $region6: #{char_lstm_forward.1} parent=1 // pred_check
      _
    $region7: #{char_lstm_forward.1} parent=1 // pred_check_branch
      %15 = sbr.rel (0) target = $region9
    $region8: #{char_lstm_forward.1} parent=1 // pred_region
      _
    $region9: #{char_lstm_forward.1} parent=1 // pred_fallthru
      _
    // Predicated region
    $region10: #{char_lstm_forward.1} parent=1 // pred_check
      _
    $region11: #{char_lstm_forward.1} parent=1 // pred_check_branch
      %17 = sbr.rel (0) target = $region13
    $region12: #{char_lstm_forward.1} parent=1 // pred_region
      %s19 = ssub.s32 16384, 16384
      %20 = vsyncadd [#allocation7], %s19
      %s21 = sshll.u32 [#allocation6], 4
      %s22 = int_to_ptr.vmem [resolvable:$true] %s21
      %27 = dma.hbm_to_vmem [thread:$0]  %s2, 16384, %s22, [#allocation7], 512, 512, 32
    $region13: #{char_lstm_forward.1} parent=1 // pred_fallthru
      _
    // Predicated region
    $region14: #{char_lstm_forward.1} parent=1 // pred_check
      _
    $region15: #{char_lstm_forward.1} parent=1 // pred_check_branch
      %29 = sbr.rel (0) target = $region17
    $region16: #{char_lstm_forward.1} parent=1 // pred_region
      _
    $region17: #{char_lstm_forward.1} parent=1 // pred_fallthru
      _
    // Predicated region
    $region18: #{char_lstm_forward.1} parent=1 // pred_check
      _
    $region19: #{char_lstm_forward.1} parent=1 // pred_check_branch
      %31 = sbr.rel (0) target = $region21
    $region20: #{char_lstm_forward.1} parent=1 // pred_region
      _
    $region21: #{char_lstm_forward.1} parent=1 // pred_fallthru
      _
    // Predicated region
    $region22: #{char_lstm_forward.1} parent=1 // pred_check
      _
    $region23: #{char_lstm_forward.1} parent=1 // pred_check_branch
      %33 = sbr.rel (0) target = $region25
    $region24: #{char_lstm_forward.1} parent=1 // pred_region
      _
    $region25: #{char_lstm_forward.1} parent=1 // pred_fallthru
      _
    // Predicated region
    $region26: #{char_lstm_forward.1} parent=1 // pred_check
      _
    $region27: #{char_lstm_forward.1} parent=1 // pred_check_branch
      %35 = sbr.rel (0) target = $region29
    $region28: #{char_lstm_forward.1} parent=1 // pred_region
      %36 = dma.done [#allocation7], 16384
    $region29: #{char_lstm_forward.1} parent=1 // pred_fallthru
      _
    %37 = vst [vmem:[#allocation2] sm:$0xff] 0.0
    %38 = vst [vmem:[#allocation3] sm:$0xff] 0.0
    %39 = vst [vmem:[#allocation4] sm:$0xff] 0.0
    %40 = vst [vmem:[#allocation5] sm:$0xff] 0.0
    %v41 = vld [vmem:[%s0] sm:$0xff]
    %v42 = vld [vmem:[%s0 + $0x8] sm:$0xff]
    %v43 = vld [vmem:[%s0 + $0x10] sm:$0xff]
    %v44 = vld [vmem:[%s0 + $0x18] sm:$0xff]
    %v45 = vld [vmem:[#allocation2] sm:$0xff]
    %v46 = vld [vmem:[%s1] sm:$0xff]
    %v47 = vld [vmem:[%s1 + $0x8] sm:$0xff]
    %v48 = vld [vmem:[%s1 + $0x10] sm:$0xff]
    %v49 = vld [vmem:[%s1 + $0x18] sm:$0xff]
    %v50 = vld [vmem:[%s1 + $0x20] sm:$0xff]
    %v51 = vld [vmem:[%s1 + $0x28] sm:$0xff]
    %v52 = vld [vmem:[%s1 + $0x30] sm:$0xff]
    %v53 = vld [vmem:[%s1 + $0x38] sm:$0xff]
    %v54 = vld [vmem:[%s1 + $0x40] sm:$0xff]
    %v55 = vld [vmem:[%s1 + $0x48] sm:$0xff]
    %v56 = vld [vmem:[%s1 + $0x50] sm:$0xff]
    %v57 = vld [vmem:[%s1 + $0x58] sm:$0xff]
    %v58 = vld [vmem:[%s1 + $0x60] sm:$0xff]
    %v59 = vld [vmem:[%s1 + $0x68] sm:$0xff]
    %v60 = vld [vmem:[%s1 + $0x70] sm:$0xff]
    %v61 = vld [vmem:[%s1 + $0x78] sm:$0xff]
    %v62 = vld [vmem:[%s1 + $0x80] sm:$0xff]
    %v63 = vld [vmem:[%s1 + $0x88] sm:$0xff]
    %v64 = vld [vmem:[%s1 + $0x90] sm:$0xff]
    %v65 = vld [vmem:[%s1 + $0x98] sm:$0xff]
    %v66 = vld [vmem:[%s1 + $0xa0] sm:$0xff]
    %v67 = vld [vmem:[%s1 + $0xa8] sm:$0xff]
    %v68 = vld [vmem:[%s1 + $0xb0] sm:$0xff]
    %v69 = vld [vmem:[%s1 + $0xb8] sm:$0xff]
    %v70 = vld [vmem:[%s1 + $0xc0] sm:$0xff]
    %v71 = vld [vmem:[%s1 + $0xc8] sm:$0xff]
    %v72 = vld [vmem:[%s1 + $0xd0] sm:$0xff]
    %v73 = vld [vmem:[%s1 + $0xd8] sm:$0xff]
    %v74 = vld [vmem:[%s1 + $0xe0] sm:$0xff]
    %v75 = vld [vmem:[%s1 + $0xe8] sm:$0xff]
    %v76 = vld [vmem:[%s1 + $0xf0] sm:$0xff]
    %v77 = vld [vmem:[%s1 + $0xf8] sm:$0xff]
    %v78 = vld [vmem:[%s1 + $0x100] sm:$0xff]
    %v79 = vld [vmem:[%s1 + $0x108] sm:$0xff]
    %v80 = vld [vmem:[%s1 + $0x110] sm:$0xff]
    %v81 = vld [vmem:[%s1 + $0x118] sm:$0xff]
    %v82 = vld [vmem:[%s1 + $0x120] sm:$0xff]
    %v83 = vld [vmem:[%s1 + $0x128] sm:$0xff]
    %v84 = vld [vmem:[%s1 + $0x130] sm:$0xff]
    %v85 = vld [vmem:[%s1 + $0x138] sm:$0xff]
    %v86 = vld [vmem:[%s1 + $0x140] sm:$0xff]
    %v87 = vld [vmem:[%s1 + $0x148] sm:$0xff]
    %v88 = vld [vmem:[%s1 + $0x150] sm:$0xff]
    %v89 = vld [vmem:[%s1 + $0x158] sm:$0xff]
    %v90 = vld [vmem:[%s1 + $0x160] sm:$0xff]
    %v91 = vld [vmem:[%s1 + $0x168] sm:$0xff]
    %v92 = vld [vmem:[%s1 + $0x170] sm:$0xff]
    %v93 = vld [vmem:[%s1 + $0x178] sm:$0xff]
    %v94 = vld [vmem:[%s1 + $0x180] sm:$0xff]
    %v95 = vld [vmem:[%s1 + $0x188] sm:$0xff]
    %v96 = vld [vmem:[%s1 + $0x190] sm:$0xff]
    %v97 = vld [vmem:[%s1 + $0x198] sm:$0xff]
    %v98 = vld [vmem:[%s1 + $0x1a0] sm:$0xff]
    %v99 = vld [vmem:[%s1 + $0x1a8] sm:$0xff]
    %v100 = vld [vmem:[%s1 + $0x1b0] sm:$0xff]
    %v101 = vld [vmem:[%s1 + $0x1b8] sm:$0xff]
    %v102 = vld [vmem:[%s1 + $0x1c0] sm:$0xff]
    %v103 = vld [vmem:[%s1 + $0x1c8] sm:$0xff]
    %v104 = vld [vmem:[%s1 + $0x1d0] sm:$0xff]
    %v105 = vld [vmem:[%s1 + $0x1d8] sm:$0xff]
    %v106 = vld [vmem:[%s1 + $0x1e0] sm:$0xff]
    %v107 = vld [vmem:[%s1 + $0x1e8] sm:$0xff]
    %v108 = vld [vmem:[%s1 + $0x1f0] sm:$0xff]
    %v109 = vld [vmem:[%s1 + $0x1f8] sm:$0xff]
    %110 = vmatprep.subr.mxu0 %v107
    %111 = vmatpush1.msra.mxu0 %v106
    %112 = vmatprep.subr.mxu0 %v103
    %113 = vmatpush1.msra.mxu0 %v102
    %114 = vmatprep.subr.mxu0 %v99
    %115 = vmatpush1.msra.mxu0 %v98
    %116 = vmatprep.subr.mxu0 %v95
    %117 = vmatpush1.msra.mxu0 %v94
    %118 = vmatprep.subr.mxu0 %v91
    %119 = vmatpush1.msra.mxu0 %v90
    %120 = vmatprep.subr.mxu0 %v87
    %121 = vmatpush1.msra.mxu0 %v86
    %122 = vmatprep.subr.mxu0 %v83
    %123 = vmatpush1.msra.mxu0 %v82
    %124 = vmatprep.subr.mxu0 %v79
    %125 = vmatpush1.msra.mxu0 %v78
    %126 = vmatprep.subr.mxu0 %v75
    %127 = vmatpush1.msra.mxu0 %v74
    %128 = vmatprep.subr.mxu0 %v71
    %129 = vmatpush1.msra.mxu0 %v70
    %130 = vmatprep.subr.mxu0 %v67
    %131 = vmatpush1.msra.mxu0 %v66
    %132 = vmatprep.subr.mxu0 %v63
    %133 = vmatpush1.msra.mxu0 %v62
    %134 = vmatprep.subr.mxu0 %v59
    %135 = vmatpush1.msra.mxu0 %v58
    %136 = vmatprep.subr.mxu0 %v55
    %137 = vmatpush1.msra.mxu0 %v54
    %138 = vmatprep.subr.mxu0 %v51
    %139 = vmatpush1.msra.mxu0 %v50
    %140 = vmatprep.subr.mxu0 %v47
    %141 = vmatpush1.msra.mxu0 %v46
    %142 = vmatprep.subr.mxu0 0.0
    %143 = vmatpush2.msra.mxu0 0.0
    %144 = vmatprep.subr.mxu0 0.0
    %145 = vmatpush2.msra.mxu0 0.0
    %146 = vmatprep.subr.mxu0 0.0
    %147 = vmatpush2.msra.mxu0 0.0
    %148 = vmatprep.subr.mxu0 0.0
    %149 = vmatpush2.msra.mxu0 0.0
    %150 = vmatprep.subr.mxu0 0.0
    %151 = vmatpush2.msra.mxu0 0.0
    %152 = vmatprep.subr.mxu0 0.0
    %153 = vmatpush2.msra.mxu0 0.0
    %154 = vmatprep.subr.mxu0 0.0
    %155 = vmatpush2.msra.mxu0 0.0
    %156 = vmatprep.subr.mxu0 0.0
    %157 = vmatpush2.msra.mxu0 0.0
    %158 = vmatprep.subr.mxu0 0.0
    %159 = vmatpush2.msra.mxu0 0.0
    %160 = vmatprep.subr.mxu0 0.0
    %161 = vmatpush2.msra.mxu0 0.0
    %162 = vmatprep.subr.mxu0 0.0
    %163 = vmatpush2.msra.mxu0 0.0
    %164 = vmatprep.subr.mxu0 0.0
    %165 = vmatpush2.msra.mxu0 0.0
    %166 = vmatprep.subr.mxu0 0.0
    %167 = vmatpush2.msra.mxu0 0.0
    %168 = vmatprep.subr.mxu0 0.0
    %169 = vmatpush2.msra.mxu0 0.0
    %170 = vmatprep.subr.mxu0 0.0
    %171 = vmatpush2.msra.mxu0 0.0
    %172 = vmatprep.subr.mxu0 0.0
    %173 = vmatpush2.msra.mxu0 0.0
    %174 = vmatprep.mubr.f32.mxu0 0.0
    %175 = vmatmul.mubr.f32.gmra.mxu0 %v45
    %v176 = vpop.f32.mrf.mxu0
    %v177 = vadd.f32 0.0, %v176
    %v178 = vpop.f32.mrf.mxu0
    %v179 = vadd.f32 0.0, %v178
    %180 = vdwg.mxu0
    %181 = vmatprep.subr.mxu0 %v109
    %182 = vmatpush1.msra.mxu0 %v108
    %183 = vmatprep.subr.mxu0 %v105
    %184 = vmatpush1.msra.mxu0 %v104
    %185 = vmatprep.subr.mxu0 %v101
    %186 = vmatpush1.msra.mxu0 %v100
    %187 = vmatprep.subr.mxu0 %v97
    %188 = vmatpush1.msra.mxu0 %v96
    %189 = vmatprep.subr.mxu0 %v93
    %190 = vmatpush1.msra.mxu0 %v92
    %191 = vmatprep.subr.mxu0 %v89
    %192 = vmatpush1.msra.mxu0 %v88
    %193 = vmatprep.subr.mxu0 %v85
    %194 = vmatpush1.msra.mxu0 %v84
    %195 = vmatprep.subr.mxu0 %v81
    %196 = vmatpush1.msra.mxu0 %v80
    %197 = vmatprep.subr.mxu0 %v77
    %198 = vmatpush1.msra.mxu0 %v76
    %199 = vmatprep.subr.mxu0 %v73
    %200 = vmatpush1.msra.mxu0 %v72
    %201 = vmatprep.subr.mxu0 %v69
    %202 = vmatpush1.msra.mxu0 %v68
    %203 = vmatprep.subr.mxu0 %v65
    %204 = vmatpush1.msra.mxu0 %v64
    %205 = vmatprep.subr.mxu0 %v61
    %206 = vmatpush1.msra.mxu0 %v60
    %207 = vmatprep.subr.mxu0 %v57
    %208 = vmatpush1.msra.mxu0 %v56
    %209 = vmatprep.subr.mxu0 %v53
    %210 = vmatpush1.msra.mxu0 %v52
    %211 = vmatprep.subr.mxu0 %v49
    %212 = vmatpush1.msra.mxu0 %v48
    %213 = vmatprep.subr.mxu0 0.0
    %214 = vmatpush2.msra.mxu0 0.0
    %215 = vmatprep.subr.mxu0 0.0
    %216 = vmatpush2.msra.mxu0 0.0
    %217 = vmatprep.subr.mxu0 0.0
    %218 = vmatpush2.msra.mxu0 0.0
    %219 = vmatprep.subr.mxu0 0.0
    %220 = vmatpush2.msra.mxu0 0.0
    %221 = vmatprep.subr.mxu0 0.0
    %222 = vmatpush2.msra.mxu0 0.0
    %223 = vmatprep.subr.mxu0 0.0
    %224 = vmatpush2.msra.mxu0 0.0
    %225 = vmatprep.subr.mxu0 0.0
    %226 = vmatpush2.msra.mxu0 0.0
    %227 = vmatprep.subr.mxu0 0.0
    %228 = vmatpush2.msra.mxu0 0.0
    %229 = vmatprep.subr.mxu0 0.0
    %230 = vmatpush2.msra.mxu0 0.0
    %231 = vmatprep.subr.mxu0 0.0
    %232 = vmatpush2.msra.mxu0 0.0
    %233 = vmatprep.subr.mxu0 0.0
    %234 = vmatpush2.msra.mxu0 0.0
    %235 = vmatprep.subr.mxu0 0.0
    %236 = vmatpush2.msra.mxu0 0.0
    %237 = vmatprep.subr.mxu0 0.0
    %238 = vmatpush2.msra.mxu0 0.0
    %239 = vmatprep.subr.mxu0 0.0
    %240 = vmatpush2.msra.mxu0 0.0
    %241 = vmatprep.subr.mxu0 0.0
    %242 = vmatpush2.msra.mxu0 0.0
    %243 = vmatprep.subr.mxu0 0.0
    %244 = vmatpush2.msra.mxu0 0.0
    %245 = vmatprep.mubr.f32.mxu0 0.0
    %246 = vmatmul.mubr.f32.gmra.mxu0 %v45
    %v247 = vpop.f32.mrf.mxu0
    %v248 = vadd.f32 0.0, %v247
    %v249 = vpop.f32.mrf.mxu0
    %v250 = vadd.f32 0.0, %v249
    %251 = vdwg.mxu0
    %v252 = vadd.f32 %v41, %v177
    %v253 = vadd.f32 %v42, %v179
    %v254 = vadd.f32 %v43, %v248
    %v255 = vadd.f32 %v44, %v250
    %v256 = vld [vmem:[#allocation3] sm:$0xff]
    %v257 = vxor.u32 %v252, 2147483648
    %v258 = vmul.f32 %v257, 1.442695
    %v259 = vpow.pop %v258
    %v260 = vadd.f32 %v259, 1.0
    %v261 = vrcp.pop %v260
    %v262 = vmul.f32 1.0, %v261
    %v263 = vxor.u32 %v253, 2147483648
    %v264 = vmul.f32 %v263, 1.442695
    %v265 = vpow.pop %v264
    %v266 = vadd.f32 %v265, 1.0
    %v267 = vrcp.pop %v266
    %v268 = vmul.f32 1.0, %v267
    %v269 = vtanh.pop %v254
    %v270 = vxor.u32 %v255, 2147483648
    %v271 = vmul.f32 %v270, 1.442695
    %v272 = vpow.pop %v271
    %v273 = vadd.f32 %v272, 1.0
    %v274 = vrcp.pop %v273
    %v275 = vmul.f32 1.0, %v274
    %v276 = vmul.f32 %v268, %v256
    %v277 = vmul.f32 %v262, %v269
    %v278 = vadd.f32 %v276, %v277
    %v279 = vtanh.pop %v278
    %v280 = vmul.f32 %v275, %v279
    %281 = vst [vmem:[#allocation2] sm:$0xff] %v280
    %282 = vst [vmem:[#allocation3] sm:$0xff] %v278
    %v283 = vld [vmem:[#allocation4] sm:$0xff]
    %v284 = vld [vmem:[#allocation6] sm:$0xff]
    %v285 = vld [vmem:[#allocation6 + $0x8] sm:$0xff]
    %v286 = vld [vmem:[#allocation6 + $0x10] sm:$0xff]
    %v287 = vld [vmem:[#allocation6 + $0x18] sm:$0xff]
    %v288 = vld [vmem:[#allocation6 + $0x20] sm:$0xff]
    %v289 = vld [vmem:[#allocation6 + $0x28] sm:$0xff]
    %v290 = vld [vmem:[#allocation6 + $0x30] sm:$0xff]
    %v291 = vld [vmem:[#allocation6 + $0x38] sm:$0xff]
    %v292 = vld [vmem:[#allocation6 + $0x40] sm:$0xff]
    %v293 = vld [vmem:[#allocation6 + $0x48] sm:$0xff]
    %v294 = vld [vmem:[#allocation6 + $0x50] sm:$0xff]
    %v295 = vld [vmem:[#allocation6 + $0x58] sm:$0xff]
    %v296 = vld [vmem:[#allocation6 + $0x60] sm:$0xff]
    %v297 = vld [vmem:[#allocation6 + $0x68] sm:$0xff]
    %v298 = vld [vmem:[#allocation6 + $0x70] sm:$0xff]
    %v299 = vld [vmem:[#allocation6 + $0x78] sm:$0xff]
    %v300 = vld [vmem:[#allocation6 + $0x80] sm:$0xff]
    %v301 = vld [vmem:[#allocation6 + $0x88] sm:$0xff]
    %v302 = vld [vmem:[#allocation6 + $0x90] sm:$0xff]
    %v303 = vld [vmem:[#allocation6 + $0x98] sm:$0xff]
    %v304 = vld [vmem:[#allocation6 + $0xa0] sm:$0xff]
    %v305 = vld [vmem:[#allocation6 + $0xa8] sm:$0xff]
    %v306 = vld [vmem:[#allocation6 + $0xb0] sm:$0xff]
    %v307 = vld [vmem:[#allocation6 + $0xb8] sm:$0xff]
    %v308 = vld [vmem:[#allocation6 + $0xc0] sm:$0xff]
    %v309 = vld [vmem:[#allocation6 + $0xc8] sm:$0xff]
    %v310 = vld [vmem:[#allocation6 + $0xd0] sm:$0xff]
    %v311 = vld [vmem:[#allocation6 + $0xd8] sm:$0xff]
    %v312 = vld [vmem:[#allocation6 + $0xe0] sm:$0xff]
    %v313 = vld [vmem:[#allocation6 + $0xe8] sm:$0xff]
    %v314 = vld [vmem:[#allocation6 + $0xf0] sm:$0xff]
    %v315 = vld [vmem:[#allocation6 + $0xf8] sm:$0xff]
    %v316 = vld [vmem:[#allocation6 + $0x100] sm:$0xff]
    %v317 = vld [vmem:[#allocation6 + $0x108] sm:$0xff]
    %v318 = vld [vmem:[#allocation6 + $0x110] sm:$0xff]
    %v319 = vld [vmem:[#allocation6 + $0x118] sm:$0xff]
    %v320 = vld [vmem:[#allocation6 + $0x120] sm:$0xff]
    %v321 = vld [vmem:[#allocation6 + $0x128] sm:$0xff]
    %v322 = vld [vmem:[#allocation6 + $0x130] sm:$0xff]
    %v323 = vld [vmem:[#allocation6 + $0x138] sm:$0xff]
    %v324 = vld [vmem:[#allocation6 + $0x140] sm:$0xff]
    %v325 = vld [vmem:[#allocation6 + $0x148] sm:$0xff]
    %v326 = vld [vmem:[#allocation6 + $0x150] sm:$0xff]
    %v327 = vld [vmem:[#allocation6 + $0x158] sm:$0xff]
    %v328 = vld [vmem:[#allocation6 + $0x160] sm:$0xff]
    %v329 = vld [vmem:[#allocation6 + $0x168] sm:$0xff]
    %v330 = vld [vmem:[#allocation6 + $0x170] sm:$0xff]
    %v331 = vld [vmem:[#allocation6 + $0x178] sm:$0xff]
    %v332 = vld [vmem:[#allocation6 + $0x180] sm:$0xff]
    %v333 = vld [vmem:[#allocation6 + $0x188] sm:$0xff]
    %v334 = vld [vmem:[#allocation6 + $0x190] sm:$0xff]
    %v335 = vld [vmem:[#allocation6 + $0x198] sm:$0xff]
    %v336 = vld [vmem:[#allocation6 + $0x1a0] sm:$0xff]
    %v337 = vld [vmem:[#allocation6 + $0x1a8] sm:$0xff]
    %v338 = vld [vmem:[#allocation6 + $0x1b0] sm:$0xff]
    %v339 = vld [vmem:[#allocation6 + $0x1b8] sm:$0xff]
    %v340 = vld [vmem:[#allocation6 + $0x1c0] sm:$0xff]
    %v341 = vld [vmem:[#allocation6 + $0x1c8] sm:$0xff]
    %v342 = vld [vmem:[#allocation6 + $0x1d0] sm:$0xff]
    %v343 = vld [vmem:[#allocation6 + $0x1d8] sm:$0xff]
    %v344 = vld [vmem:[#allocation6 + $0x1e0] sm:$0xff]
    %v345 = vld [vmem:[#allocation6 + $0x1e8] sm:$0xff]
    %v346 = vld [vmem:[#allocation6 + $0x1f0] sm:$0xff]
    %v347 = vld [vmem:[#allocation6 + $0x1f8] sm:$0xff]
    %v348 = vld [vmem:[#allocation6 + $0x200] sm:$0xff]
    %v349 = vld [vmem:[#allocation6 + $0x208] sm:$0xff]
    %v350 = vld [vmem:[#allocation6 + $0x210] sm:$0xff]
    %v351 = vld [vmem:[#allocation6 + $0x218] sm:$0xff]
    %v352 = vld [vmem:[#allocation6 + $0x220] sm:$0xff]
    %v353 = vld [vmem:[#allocation6 + $0x228] sm:$0xff]
    %v354 = vld [vmem:[#allocation6 + $0x230] sm:$0xff]
    %v355 = vld [vmem:[#allocation6 + $0x238] sm:$0xff]
    %v356 = vld [vmem:[#allocation6 + $0x240] sm:$0xff]
    %v357 = vld [vmem:[#allocation6 + $0x248] sm:$0xff]
    %v358 = vld [vmem:[#allocation6 + $0x250] sm:$0xff]
    %v359 = vld [vmem:[#allocation6 + $0x258] sm:$0xff]
    %v360 = vld [vmem:[#allocation6 + $0x260] sm:$0xff]
    %v361 = vld [vmem:[#allocation6 + $0x268] sm:$0xff]
    %v362 = vld [vmem:[#allocation6 + $0x270] sm:$0xff]
    %v363 = vld [vmem:[#allocation6 + $0x278] sm:$0xff]
    %v364 = vld [vmem:[#allocation6 + $0x280] sm:$0xff]
    %v365 = vld [vmem:[#allocation6 + $0x288] sm:$0xff]
    %v366 = vld [vmem:[#allocation6 + $0x290] sm:$0xff]
    %v367 = vld [vmem:[#allocation6 + $0x298] sm:$0xff]
    %v368 = vld [vmem:[#allocation6 + $0x2a0] sm:$0xff]
    %v369 = vld [vmem:[#allocation6 + $0x2a8] sm:$0xff]
    %v370 = vld [vmem:[#allocation6 + $0x2b0] sm:$0xff]
    %v371 = vld [vmem:[#allocation6 + $0x2b8] sm:$0xff]
    %v372 = vld [vmem:[#allocation6 + $0x2c0] sm:$0xff]
    %v373 = vld [vmem:[#allocation6 + $0x2c8] sm:$0xff]
    %v374 = vld [vmem:[#allocation6 + $0x2d0] sm:$0xff]
    %v375 = vld [vmem:[#allocation6 + $0x2d8] sm:$0xff]
    %v376 = vld [vmem:[#allocation6 + $0x2e0] sm:$0xff]
    %v377 = vld [vmem:[#allocation6 + $0x2e8] sm:$0xff]
    %v378 = vld [vmem:[#allocation6 + $0x2f0] sm:$0xff]
    %v379 = vld [vmem:[#allocation6 + $0x2f8] sm:$0xff]
    %v380 = vld [vmem:[#allocation6 + $0x300] sm:$0xff]
    %v381 = vld [vmem:[#allocation6 + $0x308] sm:$0xff]
    %v382 = vld [vmem:[#allocation6 + $0x310] sm:$0xff]
    %v383 = vld [vmem:[#allocation6 + $0x318] sm:$0xff]
    %v384 = vld [vmem:[#allocation6 + $0x320] sm:$0xff]
    %v385 = vld [vmem:[#allocation6 + $0x328] sm:$0xff]
    %v386 = vld [vmem:[#allocation6 + $0x330] sm:$0xff]
    %v387 = vld [vmem:[#allocation6 + $0x338] sm:$0xff]
    %v388 = vld [vmem:[#allocation6 + $0x340] sm:$0xff]
    %v389 = vld [vmem:[#allocation6 + $0x348] sm:$0xff]
    %v390 = vld [vmem:[#allocation6 + $0x350] sm:$0xff]
    %v391 = vld [vmem:[#allocation6 + $0x358] sm:$0xff]
    %v392 = vld [vmem:[#allocation6 + $0x360] sm:$0xff]
    %v393 = vld [vmem:[#allocation6 + $0x368] sm:$0xff]
    %v394 = vld [vmem:[#allocation6 + $0x370] sm:$0xff]
    %v395 = vld [vmem:[#allocation6 + $0x378] sm:$0xff]
    %v396 = vld [vmem:[#allocation6 + $0x380] sm:$0xff]
    %v397 = vld [vmem:[#allocation6 + $0x388] sm:$0xff]
    %v398 = vld [vmem:[#allocation6 + $0x390] sm:$0xff]
    %v399 = vld [vmem:[#allocation6 + $0x398] sm:$0xff]
    %v400 = vld [vmem:[#allocation6 + $0x3a0] sm:$0xff]
    %v401 = vld [vmem:[#allocation6 + $0x3a8] sm:$0xff]
    %v402 = vld [vmem:[#allocation6 + $0x3b0] sm:$0xff]
    %v403 = vld [vmem:[#allocation6 + $0x3b8] sm:$0xff]
    %v404 = vld [vmem:[#allocation6 + $0x3c0] sm:$0xff]
    %v405 = vld [vmem:[#allocation6 + $0x3c8] sm:$0xff]
    %v406 = vld [vmem:[#allocation6 + $0x3d0] sm:$0xff]
    %v407 = vld [vmem:[#allocation6 + $0x3d8] sm:$0xff]
    %v408 = vld [vmem:[#allocation6 + $0x3e0] sm:$0xff]
    %v409 = vld [vmem:[#allocation6 + $0x3e8] sm:$0xff]
    %v410 = vld [vmem:[#allocation6 + $0x3f0] sm:$0xff]
    %v411 = vld [vmem:[#allocation6 + $0x3f8] sm:$0xff]
    %v412 = vld [vmem:[%s3] sm:$0xf]
    %v414 = vlaneseq
    %v415 = vshrl.u32 %v414, 7
    %v416 = vsub.s32 0, %v415
    %v417 = vrot.slane %v412, %v416
    %v418 = vlaneseq
    %v419 = vshrl.u32 %v418, 7
    %v420 = vsub.s32 1, %v419
    %v421 = vrot.slane %v412, %v420
    %v422 = vlaneseq
    %v423 = vshrl.u32 %v422, 7
    %v424 = vsub.s32 2, %v423
    %v425 = vrot.slane %v412, %v424
    %v426 = vlaneseq
    %v427 = vshrl.u32 %v426, 7
    %v428 = vsub.s32 3, %v427
    %v429 = vrot.slane %v412, %v428
    %434 = vmatprep.subr.mxu0 %v345
    %435 = vmatpush1.msra.mxu0 %v344
    %436 = vmatprep.subr.mxu0 %v341
    %437 = vmatpush1.msra.mxu0 %v340
    %438 = vmatprep.subr.mxu0 %v337
    %439 = vmatpush1.msra.mxu0 %v336
    %440 = vmatprep.subr.mxu0 %v333
    %441 = vmatpush1.msra.mxu0 %v332
    %442 = vmatprep.subr.mxu0 %v329
    %443 = vmatpush1.msra.mxu0 %v328
    %444 = vmatprep.subr.mxu0 %v325
    %445 = vmatpush1.msra.mxu0 %v324
    %446 = vmatprep.subr.mxu0 %v321
    %447 = vmatpush1.msra.mxu0 %v320
    %448 = vmatprep.subr.mxu0 %v317
    %449 = vmatpush1.msra.mxu0 %v316
    %450 = vmatprep.subr.mxu0 %v313
    %451 = vmatpush1.msra.mxu0 %v312
    %452 = vmatprep.subr.mxu0 %v309
    %453 = vmatpush1.msra.mxu0 %v308
    %454 = vmatprep.subr.mxu0 %v305
    %455 = vmatpush1.msra.mxu0 %v304
    %456 = vmatprep.subr.mxu0 %v301
    %457 = vmatpush1.msra.mxu0 %v300
    %458 = vmatprep.subr.mxu0 %v297
    %459 = vmatpush1.msra.mxu0 %v296
    %460 = vmatprep.subr.mxu0 %v293
    %461 = vmatpush1.msra.mxu0 %v292
    %462 = vmatprep.subr.mxu0 %v289
    %463 = vmatpush1.msra.mxu0 %v288
    %464 = vmatprep.subr.mxu0 %v285
    %465 = vmatpush1.msra.mxu0 %v284
    %466 = vmatprep.subr.mxu0 %v409
    %467 = vmatpush2.msra.mxu0 %v408
    %468 = vmatprep.subr.mxu0 %v405
    %469 = vmatpush2.msra.mxu0 %v404
    %470 = vmatprep.subr.mxu0 %v401
    %471 = vmatpush2.msra.mxu0 %v400
    %472 = vmatprep.subr.mxu0 %v397
    %473 = vmatpush2.msra.mxu0 %v396
    %474 = vmatprep.subr.mxu0 %v393
    %475 = vmatpush2.msra.mxu0 %v392
    %476 = vmatprep.subr.mxu0 %v389
    %477 = vmatpush2.msra.mxu0 %v388
    %478 = vmatprep.subr.mxu0 %v385
    %479 = vmatpush2.msra.mxu0 %v384
    %480 = vmatprep.subr.mxu0 %v381
    %481 = vmatpush2.msra.mxu0 %v380
    %482 = vmatprep.subr.mxu0 %v377
    %483 = vmatpush2.msra.mxu0 %v376
    %484 = vmatprep.subr.mxu0 %v373
    %485 = vmatpush2.msra.mxu0 %v372
    %486 = vmatprep.subr.mxu0 %v369
    %487 = vmatpush2.msra.mxu0 %v368
    %488 = vmatprep.subr.mxu0 %v365
    %489 = vmatpush2.msra.mxu0 %v364
    %490 = vmatprep.subr.mxu0 %v361
    %491 = vmatpush2.msra.mxu0 %v360
    %492 = vmatprep.subr.mxu0 %v357
    %493 = vmatpush2.msra.mxu0 %v356
    %494 = vmatprep.subr.mxu0 %v353
    %495 = vmatpush2.msra.mxu0 %v352
    %496 = vmatprep.subr.mxu0 %v349
    %497 = vmatpush2.msra.mxu0 %v348
    %498 = vmatprep.mubr.f32.mxu0 %v283
    %499 = vmatmul.mubr.f32.gmra.mxu0 %v280
    %v500 = vpop.f32.mrf.mxu0
    %v501 = vadd.f32 %v417, %v500
    %v502 = vpop.f32.mrf.mxu0
    %v503 = vadd.f32 %v421, %v502
    %504 = vdwg.mxu0
    %505 = vmatprep.subr.mxu0 %v347
    %506 = vmatpush1.msra.mxu0 %v346
    %507 = vmatprep.subr.mxu0 %v343
    %508 = vmatpush1.msra.mxu0 %v342
    %509 = vmatprep.subr.mxu0 %v339
    %510 = vmatpush1.msra.mxu0 %v338
    %511 = vmatprep.subr.mxu0 %v335
    %512 = vmatpush1.msra.mxu0 %v334
    %513 = vmatprep.subr.mxu0 %v331
    %514 = vmatpush1.msra.mxu0 %v330
    %515 = vmatprep.subr.mxu0 %v327
    %516 = vmatpush1.msra.mxu0 %v326
    %517 = vmatprep.subr.mxu0 %v323
    %518 = vmatpush1.msra.mxu0 %v322
    %519 = vmatprep.subr.mxu0 %v319
    %520 = vmatpush1.msra.mxu0 %v318
    %521 = vmatprep.subr.mxu0 %v315
    %522 = vmatpush1.msra.mxu0 %v314
    %523 = vmatprep.subr.mxu0 %v311
    %524 = vmatpush1.msra.mxu0 %v310
    %525 = vmatprep.subr.mxu0 %v307
    %526 = vmatpush1.msra.mxu0 %v306
    %527 = vmatprep.subr.mxu0 %v303
    %528 = vmatpush1.msra.mxu0 %v302
    %529 = vmatprep.subr.mxu0 %v299
    %530 = vmatpush1.msra.mxu0 %v298
    %531 = vmatprep.subr.mxu0 %v295
    %532 = vmatpush1.msra.mxu0 %v294
    %533 = vmatprep.subr.mxu0 %v291
    %534 = vmatpush1.msra.mxu0 %v290
    %535 = vmatprep.subr.mxu0 %v287
    %536 = vmatpush1.msra.mxu0 %v286
    %537 = vmatprep.subr.mxu0 %v411
    %538 = vmatpush2.msra.mxu0 %v410
    %539 = vmatprep.subr.mxu0 %v407
    %540 = vmatpush2.msra.mxu0 %v406
    %541 = vmatprep.subr.mxu0 %v403
    %542 = vmatpush2.msra.mxu0 %v402
    %543 = vmatprep.subr.mxu0 %v399
    %544 = vmatpush2.msra.mxu0 %v398
    %545 = vmatprep.subr.mxu0 %v395
    %546 = vmatpush2.msra.mxu0 %v394
    %547 = vmatprep.subr.mxu0 %v391
    %548 = vmatpush2.msra.mxu0 %v390
    %549 = vmatprep.subr.mxu0 %v387
    %550 = vmatpush2.msra.mxu0 %v386
    %551 = vmatprep.subr.mxu0 %v383
    %552 = vmatpush2.msra.mxu0 %v382
    %553 = vmatprep.subr.mxu0 %v379
    %554 = vmatpush2.msra.mxu0 %v378
    %555 = vmatprep.subr.mxu0 %v375
    %556 = vmatpush2.msra.mxu0 %v374
    %557 = vmatprep.subr.mxu0 %v371
    %558 = vmatpush2.msra.mxu0 %v370
    %559 = vmatprep.subr.mxu0 %v367
    %560 = vmatpush2.msra.mxu0 %v366
    %561 = vmatprep.subr.mxu0 %v363
    %562 = vmatpush2.msra.mxu0 %v362
    %563 = vmatprep.subr.mxu0 %v359
    %564 = vmatpush2.msra.mxu0 %v358
    %565 = vmatprep.subr.mxu0 %v355
    %566 = vmatpush2.msra.mxu0 %v354
    %567 = vmatprep.subr.mxu0 %v351
    %568 = vmatpush2.msra.mxu0 %v350
    %569 = vmatprep.mubr.f32.mxu0 %v283
    %570 = vmatmul.mubr.f32.gmra.mxu0 %v280
    %v571 = vpop.f32.mrf.mxu0
    %v572 = vadd.f32 %v425, %v571
    %v573 = vpop.f32.mrf.mxu0
    %v574 = vadd.f32 %v429, %v573
    %575 = vdwg.mxu0
    %v576 = vld [vmem:[#allocation5] sm:$0xff]
    %v577 = vxor.u32 %v501, 2147483648
    %v578 = vmul.f32 %v577, 1.442695
    %v579 = vpow.pop %v578
    %v580 = vadd.f32 %v579, 1.0
    %v581 = vrcp.pop %v580
    %v582 = vmul.f32 1.0, %v581
    %v583 = vxor.u32 %v503, 2147483648
    %v584 = vmul.f32 %v583, 1.442695
    %v585 = vpow.pop %v584
    %v586 = vadd.f32 %v585, 1.0
    %v587 = vrcp.pop %v586
    %v588 = vmul.f32 1.0, %v587
    %v589 = vtanh.pop %v572
    %v590 = vxor.u32 %v574, 2147483648
    %v591 = vmul.f32 %v590, 1.442695
    %v592 = vpow.pop %v591
    %v593 = vadd.f32 %v592, 1.0
    %v594 = vrcp.pop %v593
    %v595 = vmul.f32 1.0, %v594
    %v596 = vmul.f32 %v588, %v576
    %v597 = vmul.f32 %v582, %v589
    %v598 = vadd.f32 %v596, %v597
    %v599 = vtanh.pop %v598
    %v600 = vmul.f32 %v595, %v599
    %601 = vst [vmem:[#allocation4] sm:$0xff] %v600
    %602 = vst [vmem:[#allocation5] sm:$0xff] %v598
    %s603 = scalar_lea.vmem %s0, 32
    %v604 = vld [vmem:[%s603] sm:$0xff]
    %v605 = vld [vmem:[%s603 + $0x8] sm:$0xff]
    %v606 = vld [vmem:[%s603 + $0x10] sm:$0xff]
    %v607 = vld [vmem:[%s603 + $0x18] sm:$0xff]
    %v608 = vld [vmem:[#allocation2] sm:$0xff]
    %v609 = vld [vmem:[%s1] sm:$0xff]
    %v610 = vld [vmem:[%s1 + $0x8] sm:$0xff]
    %v611 = vld [vmem:[%s1 + $0x10] sm:$0xff]
    %v612 = vld [vmem:[%s1 + $0x18] sm:$0xff]
    %v613 = vld [vmem:[%s1 + $0x20] sm:$0xff]
    %v614 = vld [vmem:[%s1 + $0x28] sm:$0xff]
    %v615 = vld [vmem:[%s1 + $0x30] sm:$0xff]
    %v616 = vld [vmem:[%s1 + $0x38] sm:$0xff]
    %v617 = vld [vmem:[%s1 + $0x40] sm:$0xff]
    %v618 = vld [vmem:[%s1 + $0x48] sm:$0xff]
    %v619 = vld [vmem:[%s1 + $0x50] sm:$0xff]
    %v620 = vld [vmem:[%s1 + $0x58] sm:$0xff]
    %v621 = vld [vmem:[%s1 + $0x60] sm:$0xff]
    %v622 = vld [vmem:[%s1 + $0x68] sm:$0xff]
    %v623 = vld [vmem:[%s1 + $0x70] sm:$0xff]
    %v624 = vld [vmem:[%s1 + $0x78] sm:$0xff]
    %v625 = vld [vmem:[%s1 + $0x80] sm:$0xff]
    %v626 = vld [vmem:[%s1 + $0x88] sm:$0xff]
    %v627 = vld [vmem:[%s1 + $0x90] sm:$0xff]
    %v628 = vld [vmem:[%s1 + $0x98] sm:$0xff]
    %v629 = vld [vmem:[%s1 + $0xa0] sm:$0xff]
    %v630 = vld [vmem:[%s1 + $0xa8] sm:$0xff]
    %v631 = vld [vmem:[%s1 + $0xb0] sm:$0xff]
    %v632 = vld [vmem:[%s1 + $0xb8] sm:$0xff]
    %v633 = vld [vmem:[%s1 + $0xc0] sm:$0xff]
    %v634 = vld [vmem:[%s1 + $0xc8] sm:$0xff]
    %v635 = vld [vmem:[%s1 + $0xd0] sm:$0xff]
    %v636 = vld [vmem:[%s1 + $0xd8] sm:$0xff]
    %v637 = vld [vmem:[%s1 + $0xe0] sm:$0xff]
    %v638 = vld [vmem:[%s1 + $0xe8] sm:$0xff]
    %v639 = vld [vmem:[%s1 + $0xf0] sm:$0xff]
    %v640 = vld [vmem:[%s1 + $0xf8] sm:$0xff]
    %v641 = vld [vmem:[%s1 + $0x100] sm:$0xff]
    %v642 = vld [vmem:[%s1 + $0x108] sm:$0xff]
    %v643 = vld [vmem:[%s1 + $0x110] sm:$0xff]
    %v644 = vld [vmem:[%s1 + $0x118] sm:$0xff]
    %v645 = vld [vmem:[%s1 + $0x120] sm:$0xff]
    %v646 = vld [vmem:[%s1 + $0x128] sm:$0xff]
    %v647 = vld [vmem:[%s1 + $0x130] sm:$0xff]
    %v648 = vld [vmem:[%s1 + $0x138] sm:$0xff]
    %v649 = vld [vmem:[%s1 + $0x140] sm:$0xff]
    %v650 = vld [vmem:[%s1 + $0x148] sm:$0xff]
    %v651 = vld [vmem:[%s1 + $0x150] sm:$0xff]
    %v652 = vld [vmem:[%s1 + $0x158] sm:$0xff]
    %v653 = vld [vmem:[%s1 + $0x160] sm:$0xff]
    %v654 = vld [vmem:[%s1 + $0x168] sm:$0xff]
    %v655 = vld [vmem:[%s1 + $0x170] sm:$0xff]
    %v656 = vld [vmem:[%s1 + $0x178] sm:$0xff]
    %v657 = vld [vmem:[%s1 + $0x180] sm:$0xff]
    %v658 = vld [vmem:[%s1 + $0x188] sm:$0xff]
    %v659 = vld [vmem:[%s1 + $0x190] sm:$0xff]
    %v660 = vld [vmem:[%s1 + $0x198] sm:$0xff]
    %v661 = vld [vmem:[%s1 + $0x1a0] sm:$0xff]
    %v662 = vld [vmem:[%s1 + $0x1a8] sm:$0xff]
    %v663 = vld [vmem:[%s1 + $0x1b0] sm:$0xff]
    %v664 = vld [vmem:[%s1 + $0x1b8] sm:$0xff]
    %v665 = vld [vmem:[%s1 + $0x1c0] sm:$0xff]
    %v666 = vld [vmem:[%s1 + $0x1c8] sm:$0xff]
    %v667 = vld [vmem:[%s1 + $0x1d0] sm:$0xff]
    %v668 = vld [vmem:[%s1 + $0x1d8] sm:$0xff]
    %v669 = vld [vmem:[%s1 + $0x1e0] sm:$0xff]
    %v670 = vld [vmem:[%s1 + $0x1e8] sm:$0xff]
    %v671 = vld [vmem:[%s1 + $0x1f0] sm:$0xff]
    %v672 = vld [vmem:[%s1 + $0x1f8] sm:$0xff]
    %673 = vmatprep.subr.mxu0 %v670
    %674 = vmatpush1.msra.mxu0 %v669
    %675 = vmatprep.subr.mxu0 %v666
    %676 = vmatpush1.msra.mxu0 %v665
    %677 = vmatprep.subr.mxu0 %v662
    %678 = vmatpush1.msra.mxu0 %v661
    %679 = vmatprep.subr.mxu0 %v658
    %680 = vmatpush1.msra.mxu0 %v657
    %681 = vmatprep.subr.mxu0 %v654
    %682 = vmatpush1.msra.mxu0 %v653
    %683 = vmatprep.subr.mxu0 %v650
    %684 = vmatpush1.msra.mxu0 %v649
    %685 = vmatprep.subr.mxu0 %v646
    %686 = vmatpush1.msra.mxu0 %v645
    %687 = vmatprep.subr.mxu0 %v642
    %688 = vmatpush1.msra.mxu0 %v641
    %689 = vmatprep.subr.mxu0 %v638
    %690 = vmatpush1.msra.mxu0 %v637
    %691 = vmatprep.subr.mxu0 %v634
    %692 = vmatpush1.msra.mxu0 %v633
    %693 = vmatprep.subr.mxu0 %v630
    %694 = vmatpush1.msra.mxu0 %v629
    %695 = vmatprep.subr.mxu0 %v626
    %696 = vmatpush1.msra.mxu0 %v625
    %697 = vmatprep.subr.mxu0 %v622
    %698 = vmatpush1.msra.mxu0 %v621
    %699 = vmatprep.subr.mxu0 %v618
    %700 = vmatpush1.msra.mxu0 %v617
    %701 = vmatprep.subr.mxu0 %v614
    %702 = vmatpush1.msra.mxu0 %v613
    %703 = vmatprep.subr.mxu0 %v610
    %704 = vmatpush1.msra.mxu0 %v609
    %705 = vmatprep.subr.mxu0 0.0
    %706 = vmatpush2.msra.mxu0 0.0
    %707 = vmatprep.subr.mxu0 0.0
    %708 = vmatpush2.msra.mxu0 0.0
    %709 = vmatprep.subr.mxu0 0.0
    %710 = vmatpush2.msra.mxu0 0.0
    %711 = vmatprep.subr.mxu0 0.0
    %712 = vmatpush2.msra.mxu0 0.0
    %713 = vmatprep.subr.mxu0 0.0
    %714 = vmatpush2.msra.mxu0 0.0
    %715 = vmatprep.subr.mxu0 0.0
    %716 = vmatpush2.msra.mxu0 0.0
    %717 = vmatprep.subr.mxu0 0.0
    %718 = vmatpush2.msra.mxu0 0.0
    %719 = vmatprep.subr.mxu0 0.0
    %720 = vmatpush2.msra.mxu0 0.0
    %721 = vmatprep.subr.mxu0 0.0
    %722 = vmatpush2.msra.mxu0 0.0
    %723 = vmatprep.subr.mxu0 0.0
    %724 = vmatpush2.msra.mxu0 0.0
    %725 = vmatprep.subr.mxu0 0.0
    %726 = vmatpush2.msra.mxu0 0.0
    %727 = vmatprep.subr.mxu0 0.0
    %728 = vmatpush2.msra.mxu0 0.0
    %729 = vmatprep.subr.mxu0 0.0
    %730 = vmatpush2.msra.mxu0 0.0
    %731 = vmatprep.subr.mxu0 0.0
    %732 = vmatpush2.msra.mxu0 0.0
    %733 = vmatprep.subr.mxu0 0.0
    %734 = vmatpush2.msra.mxu0 0.0
    %735 = vmatprep.subr.mxu0 0.0
    %736 = vmatpush2.msra.mxu0 0.0
    %737 = vmatprep.mubr.f32.mxu0 0.0
    %738 = vmatmul.mubr.f32.gmra.mxu0 %v608
    %v739 = vpop.f32.mrf.mxu0
    %v740 = vadd.f32 0.0, %v739
    %v741 = vpop.f32.mrf.mxu0
    %v742 = vadd.f32 0.0, %v741
    %743 = vdwg.mxu0
    %744 = vmatprep.subr.mxu0 %v672
    %745 = vmatpush1.msra.mxu0 %v671
    %746 = vmatprep.subr.mxu0 %v668
    %747 = vmatpush1.msra.mxu0 %v667
    %748 = vmatprep.subr.mxu0 %v664
    %749 = vmatpush1.msra.mxu0 %v663
    %750 = vmatprep.subr.mxu0 %v660
    %751 = vmatpush1.msra.mxu0 %v659
    %752 = vmatprep.subr.mxu0 %v656
    %753 = vmatpush1.msra.mxu0 %v655
    %754 = vmatprep.subr.mxu0 %v652
    %755 = vmatpush1.msra.mxu0 %v651
    %756 = vmatprep.subr.mxu0 %v648
    %757 = vmatpush1.msra.mxu0 %v647
    %758 = vmatprep.subr.mxu0 %v644
    %759 = vmatpush1.msra.mxu0 %v643
    %760 = vmatprep.subr.mxu0 %v640
    %761 = vmatpush1.msra.mxu0 %v639
    %762 = vmatprep.subr.mxu0 %v636
    %763 = vmatpush1.msra.mxu0 %v635
    %764 = vmatprep.subr.mxu0 %v632
    %765 = vmatpush1.msra.mxu0 %v631
    %766 = vmatprep.subr.mxu0 %v628
    %767 = vmatpush1.msra.mxu0 %v627
    %768 = vmatprep.subr.mxu0 %v624
    %769 = vmatpush1.msra.mxu0 %v623
    %770 = vmatprep.subr.mxu0 %v620
    %771 = vmatpush1.msra.mxu0 %v619
    %772 = vmatprep.subr.mxu0 %v616
    %773 = vmatpush1.msra.mxu0 %v615
    %774 = vmatprep.subr.mxu0 %v612
    %775 = vmatpush1.msra.mxu0 %v611
    %776 = vmatprep.subr.mxu0 0.0
    %777 = vmatpush2.msra.mxu0 0.0
    %778 = vmatprep.subr.mxu0 0.0
    %779 = vmatpush2.msra.mxu0 0.0
    %780 = vmatprep.subr.mxu0 0.0
    %781 = vmatpush2.msra.mxu0 0.0
    %782 = vmatprep.subr.mxu0 0.0
    %783 = vmatpush2.msra.mxu0 0.0
    %784 = vmatprep.subr.mxu0 0.0
    %785 = vmatpush2.msra.mxu0 0.0
    %786 = vmatprep.subr.mxu0 0.0
    %787 = vmatpush2.msra.mxu0 0.0
    %788 = vmatprep.subr.mxu0 0.0
    %789 = vmatpush2.msra.mxu0 0.0
    %790 = vmatprep.subr.mxu0 0.0
    %791 = vmatpush2.msra.mxu0 0.0
    %792 = vmatprep.subr.mxu0 0.0
    %793 = vmatpush2.msra.mxu0 0.0
    %794 = vmatprep.subr.mxu0 0.0
    %795 = vmatpush2.msra.mxu0 0.0
    %796 = vmatprep.subr.mxu0 0.0
    %797 = vmatpush2.msra.mxu0 0.0
    %798 = vmatprep.subr.mxu0 0.0
    %799 = vmatpush2.msra.mxu0 0.0
    %800 = vmatprep.subr.mxu0 0.0
    %801 = vmatpush2.msra.mxu0 0.0
    %802 = vmatprep.subr.mxu0 0.0
    %803 = vmatpush2.msra.mxu0 0.0
    %804 = vmatprep.subr.mxu0 0.0
    %805 = vmatpush2.msra.mxu0 0.0
    %806 = vmatprep.subr.mxu0 0.0
    %807 = vmatpush2.msra.mxu0 0.0
    %808 = vmatprep.mubr.f32.mxu0 0.0
    %809 = vmatmul.mubr.f32.gmra.mxu0 %v608
    %v810 = vpop.f32.mrf.mxu0
    %v811 = vadd.f32 0.0, %v810
    %v812 = vpop.f32.mrf.mxu0
    %v813 = vadd.f32 0.0, %v812
    %814 = vdwg.mxu0
    %v815 = vadd.f32 %v604, %v740
    %v816 = vadd.f32 %v605, %v742
    %v817 = vadd.f32 %v606, %v811
    %v818 = vadd.f32 %v607, %v813
    %v819 = vld [vmem:[#allocation3] sm:$0xff]
    %v820 = vxor.u32 %v815, 2147483648
    %v821 = vmul.f32 %v820, 1.442695
    %v822 = vpow.pop %v821
    %v823 = vadd.f32 %v822, 1.0
    %v824 = vrcp.pop %v823
    %v825 = vmul.f32 1.0, %v824
    %v826 = vxor.u32 %v816, 2147483648
    %v827 = vmul.f32 %v826, 1.442695
    %v828 = vpow.pop %v827
    %v829 = vadd.f32 %v828, 1.0
    %v830 = vrcp.pop %v829
    %v831 = vmul.f32 1.0, %v830
    %v832 = vtanh.pop %v817
    %v833 = vxor.u32 %v818, 2147483648
    %v834 = vmul.f32 %v833, 1.442695
    %v835 = vpow.pop %v834
    %v836 = vadd.f32 %v835, 1.0
    %v837 = vrcp.pop %v836
    %v838 = vmul.f32 1.0, %v837
    %v839 = vmul.f32 %v831, %v819
    %v840 = vmul.f32 %v825, %v832
    %v841 = vadd.f32 %v839, %v840
    %v842 = vtanh.pop %v841
    %v843 = vmul.f32 %v838, %v842
    %844 = vst [vmem:[#allocation2] sm:$0xff] %v843
    %845 = vst [vmem:[#allocation3] sm:$0xff] %v841
    %v846 = vld [vmem:[#allocation4] sm:$0xff]
    %v847 = vld [vmem:[#allocation6] sm:$0xff]
    %v848 = vld [vmem:[#allocation6 + $0x8] sm:$0xff]
    %v849 = vld [vmem:[#allocation6 + $0x10] sm:$0xff]
    %v850 = vld [vmem:[#allocation6 + $0x18] sm:$0xff]
    %v851 = vld [vmem:[#allocation6 + $0x20] sm:$0xff]
    %v852 = vld [vmem:[#allocation6 + $0x28] sm:$0xff]
    %v853 = vld [vmem:[#allocation6 + $0x30] sm:$0xff]
    %v854 = vld [vmem:[#allocation6 + $0x38] sm:$0xff]
    %v855 = vld [vmem:[#allocation6 + $0x40] sm:$0xff]
    %v856 = vld [vmem:[#allocation6 + $0x48] sm:$0xff]
    %v857 = vld [vmem:[#allocation6 + $0x50] sm:$0xff]
    %v858 = vld [vmem:[#allocation6 + $0x58] sm:$0xff]
    %v859 = vld [vmem:[#allocation6 + $0x60] sm:$0xff]
    %v860 = vld [vmem:[#allocation6 + $0x68] sm:$0xff]
    %v861 = vld [vmem:[#allocation6 + $0x70] sm:$0xff]
    %v862 = vld [vmem:[#allocation6 + $0x78] sm:$0xff]
    %v863 = vld [vmem:[#allocation6 + $0x80] sm:$0xff]
    %v864 = vld [vmem:[#allocation6 + $0x88] sm:$0xff]
    %v865 = vld [vmem:[#allocation6 + $0x90] sm:$0xff]
    %v866 = vld [vmem:[#allocation6 + $0x98] sm:$0xff]
    %v867 = vld [vmem:[#allocation6 + $0xa0] sm:$0xff]
    %v868 = vld [vmem:[#allocation6 + $0xa8] sm:$0xff]
    %v869 = vld [vmem:[#allocation6 + $0xb0] sm:$0xff]
    %v870 = vld [vmem:[#allocation6 + $0xb8] sm:$0xff]
    %v871 = vld [vmem:[#allocation6 + $0xc0] sm:$0xff]
    %v872 = vld [vmem:[#allocation6 + $0xc8] sm:$0xff]
    %v873 = vld [vmem:[#allocation6 + $0xd0] sm:$0xff]
    %v874 = vld [vmem:[#allocation6 + $0xd8] sm:$0xff]
    %v875 = vld [vmem:[#allocation6 + $0xe0] sm:$0xff]
    %v876 = vld [vmem:[#allocation6 + $0xe8] sm:$0xff]
    %v877 = vld [vmem:[#allocation6 + $0xf0] sm:$0xff]
    %v878 = vld [vmem:[#allocation6 + $0xf8] sm:$0xff]
    %v879 = vld [vmem:[#allocation6 + $0x100] sm:$0xff]
    %v880 = vld [vmem:[#allocation6 + $0x108] sm:$0xff]
    %v881 = vld [vmem:[#allocation6 + $0x110] sm:$0xff]
    %v882 = vld [vmem:[#allocation6 + $0x118] sm:$0xff]
    %v883 = vld [vmem:[#allocation6 + $0x120] sm:$0xff]
    %v884 = vld [vmem:[#allocation6 + $0x128] sm:$0xff]
    %v885 = vld [vmem:[#allocation6 + $0x130] sm:$0xff]
    %v886 = vld [vmem:[#allocation6 + $0x138] sm:$0xff]
    %v887 = vld [vmem:[#allocation6 + $0x140] sm:$0xff]
    %v888 = vld [vmem:[#allocation6 + $0x148] sm:$0xff]
    %v889 = vld [vmem:[#allocation6 + $0x150] sm:$0xff]
    %v890 = vld [vmem:[#allocation6 + $0x158] sm:$0xff]
    %v891 = vld [vmem:[#allocation6 + $0x160] sm:$0xff]
    %v892 = vld [vmem:[#allocation6 + $0x168] sm:$0xff]
    %v893 = vld [vmem:[#allocation6 + $0x170] sm:$0xff]
    %v894 = vld [vmem:[#allocation6 + $0x178] sm:$0xff]
    %v895 = vld [vmem:[#allocation6 + $0x180] sm:$0xff]
    %v896 = vld [vmem:[#allocation6 + $0x188] sm:$0xff]
    %v897 = vld [vmem:[#allocation6 + $0x190] sm:$0xff]
    %v898 = vld [vmem:[#allocation6 + $0x198] sm:$0xff]
    %v899 = vld [vmem:[#allocation6 + $0x1a0] sm:$0xff]
    %v900 = vld [vmem:[#allocation6 + $0x1a8] sm:$0xff]
    %v901 = vld [vmem:[#allocation6 + $0x1b0] sm:$0xff]
    %v902 = vld [vmem:[#allocation6 + $0x1b8] sm:$0xff]
    %v903 = vld [vmem:[#allocation6 + $0x1c0] sm:$0xff]
    %v904 = vld [vmem:[#allocation6 + $0x1c8] sm:$0xff]
    %v905 = vld [vmem:[#allocation6 + $0x1d0] sm:$0xff]
    %v906 = vld [vmem:[#allocation6 + $0x1d8] sm:$0xff]
    %v907 = vld [vmem:[#allocation6 + $0x1e0] sm:$0xff]
    %v908 = vld [vmem:[#allocation6 + $0x1e8] sm:$0xff]
    %v909 = vld [vmem:[#allocation6 + $0x1f0] sm:$0xff]
    %v910 = vld [vmem:[#allocation6 + $0x1f8] sm:$0xff]
    %v911 = vld [vmem:[#allocation6 + $0x200] sm:$0xff]
    %v912 = vld [vmem:[#allocation6 + $0x208] sm:$0xff]
    %v913 = vld [vmem:[#allocation6 + $0x210] sm:$0xff]
    %v914 = vld [vmem:[#allocation6 + $0x218] sm:$0xff]
    %v915 = vld [vmem:[#allocation6 + $0x220] sm:$0xff]
    %v916 = vld [vmem:[#allocation6 + $0x228] sm:$0xff]
    %v917 = vld [vmem:[#allocation6 + $0x230] sm:$0xff]
    %v918 = vld [vmem:[#allocation6 + $0x238] sm:$0xff]
    %v919 = vld [vmem:[#allocation6 + $0x240] sm:$0xff]
    %v920 = vld [vmem:[#allocation6 + $0x248] sm:$0xff]
    %v921 = vld [vmem:[#allocation6 + $0x250] sm:$0xff]
    %v922 = vld [vmem:[#allocation6 + $0x258] sm:$0xff]
    %v923 = vld [vmem:[#allocation6 + $0x260] sm:$0xff]
    %v924 = vld [vmem:[#allocation6 + $0x268] sm:$0xff]
    %v925 = vld [vmem:[#allocation6 + $0x270] sm:$0xff]
    %v926 = vld [vmem:[#allocation6 + $0x278] sm:$0xff]
    %v927 = vld [vmem:[#allocation6 + $0x280] sm:$0xff]
    %v928 = vld [vmem:[#allocation6 + $0x288] sm:$0xff]
    %v929 = vld [vmem:[#allocation6 + $0x290] sm:$0xff]
    %v930 = vld [vmem:[#allocation6 + $0x298] sm:$0xff]
    %v931 = vld [vmem:[#allocation6 + $0x2a0] sm:$0xff]
    %v932 = vld [vmem:[#allocation6 + $0x2a8] sm:$0xff]
    %v933 = vld [vmem:[#allocation6 + $0x2b0] sm:$0xff]
    %v934 = vld [vmem:[#allocation6 + $0x2b8] sm:$0xff]
    %v935 = vld [vmem:[#allocation6 + $0x2c0] sm:$0xff]
    %v936 = vld [vmem:[#allocation6 + $0x2c8] sm:$0xff]
    %v937 = vld [vmem:[#allocation6 + $0x2d0] sm:$0xff]
    %v938 = vld [vmem:[#allocation6 + $0x2d8] sm:$0xff]
    %v939 = vld [vmem:[#allocation6 + $0x2e0] sm:$0xff]
    %v940 = vld [vmem:[#allocation6 + $0x2e8] sm:$0xff]
    %v941 = vld [vmem:[#allocation6 + $0x2f0] sm:$0xff]
    %v942 = vld [vmem:[#allocation6 + $0x2f8] sm:$0xff]
    %v943 = vld [vmem:[#allocation6 + $0x300] sm:$0xff]
    %v944 = vld [vmem:[#allocation6 + $0x308] sm:$0xff]
    %v945 = vld [vmem:[#allocation6 + $0x310] sm:$0xff]
    %v946 = vld [vmem:[#allocation6 + $0x318] sm:$0xff]
    %v947 = vld [vmem:[#allocation6 + $0x320] sm:$0xff]
    %v948 = vld [vmem:[#allocation6 + $0x328] sm:$0xff]
    %v949 = vld [vmem:[#allocation6 + $0x330] sm:$0xff]
    %v950 = vld [vmem:[#allocation6 + $0x338] sm:$0xff]
    %v951 = vld [vmem:[#allocation6 + $0x340] sm:$0xff]
    %v952 = vld [vmem:[#allocation6 + $0x348] sm:$0xff]
    %v953 = vld [vmem:[#allocation6 + $0x350] sm:$0xff]
    %v954 = vld [vmem:[#allocation6 + $0x358] sm:$0xff]
    %v955 = vld [vmem:[#allocation6 + $0x360] sm:$0xff]
    %v956 = vld [vmem:[#allocation6 + $0x368] sm:$0xff]
    %v957 = vld [vmem:[#allocation6 + $0x370] sm:$0xff]
    %v958 = vld [vmem:[#allocation6 + $0x378] sm:$0xff]
    %v959 = vld [vmem:[#allocation6 + $0x380] sm:$0xff]
    %v960 = vld [vmem:[#allocation6 + $0x388] sm:$0xff]
    %v961 = vld [vmem:[#allocation6 + $0x390] sm:$0xff]
    %v962 = vld [vmem:[#allocation6 + $0x398] sm:$0xff]
    %v963 = vld [vmem:[#allocation6 + $0x3a0] sm:$0xff]
    %v964 = vld [vmem:[#allocation6 + $0x3a8] sm:$0xff]
    %v965 = vld [vmem:[#allocation6 + $0x3b0] sm:$0xff]
    %v966 = vld [vmem:[#allocation6 + $0x3b8] sm:$0xff]
    %v967 = vld [vmem:[#allocation6 + $0x3c0] sm:$0xff]
    %v968 = vld [vmem:[#allocation6 + $0x3c8] sm:$0xff]
    %v969 = vld [vmem:[#allocation6 + $0x3d0] sm:$0xff]
    %v970 = vld [vmem:[#allocation6 + $0x3d8] sm:$0xff]
    %v971 = vld [vmem:[#allocation6 + $0x3e0] sm:$0xff]
    %v972 = vld [vmem:[#allocation6 + $0x3e8] sm:$0xff]
    %v973 = vld [vmem:[#allocation6 + $0x3f0] sm:$0xff]
    %v974 = vld [vmem:[#allocation6 + $0x3f8] sm:$0xff]
    %v975 = vld [vmem:[%s3] sm:$0xf]
    %v977 = vlaneseq
    %v978 = vshrl.u32 %v977, 7
    %v979 = vsub.s32 0, %v978
    %v980 = vrot.slane %v975, %v979
    %v981 = vlaneseq
    %v982 = vshrl.u32 %v981, 7
    %v983 = vsub.s32 1, %v982
    %v984 = vrot.slane %v975, %v983
    %v985 = vlaneseq
    %v986 = vshrl.u32 %v985, 7
    %v987 = vsub.s32 2, %v986
    %v988 = vrot.slane %v975, %v987
    %v989 = vlaneseq
    %v990 = vshrl.u32 %v989, 7
    %v991 = vsub.s32 3, %v990
    %v992 = vrot.slane %v975, %v991
    %997 = vmatprep.subr.mxu0 %v908
    %998 = vmatpush1.msra.mxu0 %v907
    %999 = vmatprep.subr.mxu0 %v904
    %1000 = vmatpush1.msra.mxu0 %v903
    %1001 = vmatprep.subr.mxu0 %v900
    %1002 = vmatpush1.msra.mxu0 %v899
    %1003 = vmatprep.subr.mxu0 %v896
    %1004 = vmatpush1.msra.mxu0 %v895
    %1005 = vmatprep.subr.mxu0 %v892
    %1006 = vmatpush1.msra.mxu0 %v891
    %1007 = vmatprep.subr.mxu0 %v888
    %1008 = vmatpush1.msra.mxu0 %v887
    %1009 = vmatprep.subr.mxu0 %v884
    %1010 = vmatpush1.msra.mxu0 %v883
    %1011 = vmatprep.subr.mxu0 %v880
    %1012 = vmatpush1.msra.mxu0 %v879
    %1013 = vmatprep.subr.mxu0 %v876
    %1014 = vmatpush1.msra.mxu0 %v875
    %1015 = vmatprep.subr.mxu0 %v872
    %1016 = vmatpush1.msra.mxu0 %v871
    %1017 = vmatprep.subr.mxu0 %v868
    %1018 = vmatpush1.msra.mxu0 %v867
    %1019 = vmatprep.subr.mxu0 %v864
    %1020 = vmatpush1.msra.mxu0 %v863
    %1021 = vmatprep.subr.mxu0 %v860
    %1022 = vmatpush1.msra.mxu0 %v859
    %1023 = vmatprep.subr.mxu0 %v856
    %1024 = vmatpush1.msra.mxu0 %v855
    %1025 = vmatprep.subr.mxu0 %v852
    %1026 = vmatpush1.msra.mxu0 %v851
    %1027 = vmatprep.subr.mxu0 %v848
    %1028 = vmatpush1.msra.mxu0 %v847
    %1029 = vmatprep.subr.mxu0 %v972
    %1030 = vmatpush2.msra.mxu0 %v971
    %1031 = vmatprep.subr.mxu0 %v968
    %1032 = vmatpush2.msra.mxu0 %v967
    %1033 = vmatprep.subr.mxu0 %v964
    %1034 = vmatpush2.msra.mxu0 %v963
    %1035 = vmatprep.subr.mxu0 %v960
    %1036 = vmatpush2.msra.mxu0 %v959
    %1037 = vmatprep.subr.mxu0 %v956
    %1038 = vmatpush2.msra.mxu0 %v955
    %1039 = vmatprep.subr.mxu0 %v952
    %1040 = vmatpush2.msra.mxu0 %v951
    %1041 = vmatprep.subr.mxu0 %v948
    %1042 = vmatpush2.msra.mxu0 %v947
    %1043 = vmatprep.subr.mxu0 %v944
    %1044 = vmatpush2.msra.mxu0 %v943
    %1045 = vmatprep.subr.mxu0 %v940
    %1046 = vmatpush2.msra.mxu0 %v939
    %1047 = vmatprep.subr.mxu0 %v936
    %1048 = vmatpush2.msra.mxu0 %v935
    %1049 = vmatprep.subr.mxu0 %v932
    %1050 = vmatpush2.msra.mxu0 %v931
    %1051 = vmatprep.subr.mxu0 %v928
    %1052 = vmatpush2.msra.mxu0 %v927
    %1053 = vmatprep.subr.mxu0 %v924
    %1054 = vmatpush2.msra.mxu0 %v923
    %1055 = vmatprep.subr.mxu0 %v920
    %1056 = vmatpush2.msra.mxu0 %v919
    %1057 = vmatprep.subr.mxu0 %v916
    %1058 = vmatpush2.msra.mxu0 %v915
    %1059 = vmatprep.subr.mxu0 %v912
    %1060 = vmatpush2.msra.mxu0 %v911
    %1061 = vmatprep.mubr.f32.mxu0 %v846
    %1062 = vmatmul.mubr.f32.gmra.mxu0 %v843
    %v1063 = vpop.f32.mrf.mxu0
    %v1064 = vadd.f32 %v980, %v1063
    %v1065 = vpop.f32.mrf.mxu0
    %v1066 = vadd.f32 %v984, %v1065
    %1067 = vdwg.mxu0
    %1068 = vmatprep.subr.mxu0 %v910
    %1069 = vmatpush1.msra.mxu0 %v909
    %1070 = vmatprep.subr.mxu0 %v906
    %1071 = vmatpush1.msra.mxu0 %v905
    %1072 = vmatprep.subr.mxu0 %v902
    %1073 = vmatpush1.msra.mxu0 %v901
    %1074 = vmatprep.subr.mxu0 %v898
    %1075 = vmatpush1.msra.mxu0 %v897
    %1076 = vmatprep.subr.mxu0 %v894
    %1077 = vmatpush1.msra.mxu0 %v893
    %1078 = vmatprep.subr.mxu0 %v890
    %1079 = vmatpush1.msra.mxu0 %v889
    %1080 = vmatprep.subr.mxu0 %v886
    %1081 = vmatpush1.msra.mxu0 %v885
    %1082 = vmatprep.subr.mxu0 %v882
    %1083 = vmatpush1.msra.mxu0 %v881
    %1084 = vmatprep.subr.mxu0 %v878
    %1085 = vmatpush1.msra.mxu0 %v877
    %1086 = vmatprep.subr.mxu0 %v874
    %1087 = vmatpush1.msra.mxu0 %v873
    %1088 = vmatprep.subr.mxu0 %v870
    %1089 = vmatpush1.msra.mxu0 %v869
    %1090 = vmatprep.subr.mxu0 %v866
    %1091 = vmatpush1.msra.mxu0 %v865
    %1092 = vmatprep.subr.mxu0 %v862
    %1093 = vmatpush1.msra.mxu0 %v861
    %1094 = vmatprep.subr.mxu0 %v858
    %1095 = vmatpush1.msra.mxu0 %v857
    %1096 = vmatprep.subr.mxu0 %v854
    %1097 = vmatpush1.msra.mxu0 %v853
    %1098 = vmatprep.subr.mxu0 %v850
    %1099 = vmatpush1.msra.mxu0 %v849
    %1100 = vmatprep.subr.mxu0 %v974
    %1101 = vmatpush2.msra.mxu0 %v973
    %1102 = vmatprep.subr.mxu0 %v970
    %1103 = vmatpush2.msra.mxu0 %v969
    %1104 = vmatprep.subr.mxu0 %v966
    %1105 = vmatpush2.msra.mxu0 %v965
    %1106 = vmatprep.subr.mxu0 %v962
    %1107 = vmatpush2.msra.mxu0 %v961
    %1108 = vmatprep.subr.mxu0 %v958
    %1109 = vmatpush2.msra.mxu0 %v957
    %1110 = vmatprep.subr.mxu0 %v954
    %1111 = vmatpush2.msra.mxu0 %v953
    %1112 = vmatprep.subr.mxu0 %v950
    %1113 = vmatpush2.msra.mxu0 %v949
    %1114 = vmatprep.subr.mxu0 %v946
    %1115 = vmatpush2.msra.mxu0 %v945
    %1116 = vmatprep.subr.mxu0 %v942
    %1117 = vmatpush2.msra.mxu0 %v941
    %1118 = vmatprep.subr.mxu0 %v938
    %1119 = vmatpush2.msra.mxu0 %v937
    %1120 = vmatprep.subr.mxu0 %v934
    %1121 = vmatpush2.msra.mxu0 %v933
    %1122 = vmatprep.subr.mxu0 %v930
    %1123 = vmatpush2.msra.mxu0 %v929
    %1124 = vmatprep.subr.mxu0 %v926
    %1125 = vmatpush2.msra.mxu0 %v925
    %1126 = vmatprep.subr.mxu0 %v922
    %1127 = vmatpush2.msra.mxu0 %v921
    %1128 = vmatprep.subr.mxu0 %v918
    %1129 = vmatpush2.msra.mxu0 %v917
    %1130 = vmatprep.subr.mxu0 %v914
    %1131 = vmatpush2.msra.mxu0 %v913
    %1132 = vmatprep.mubr.f32.mxu0 %v846
    %1133 = vmatmul.mubr.f32.gmra.mxu0 %v843
    %v1134 = vpop.f32.mrf.mxu0
    %v1135 = vadd.f32 %v988, %v1134
    %v1136 = vpop.f32.mrf.mxu0
    %v1137 = vadd.f32 %v992, %v1136
    %1138 = vdwg.mxu0
    %v1139 = vld [vmem:[#allocation5] sm:$0xff]
    %v1140 = vxor.u32 %v1064, 2147483648
    %v1141 = vmul.f32 %v1140, 1.442695
    %v1142 = vpow.pop %v1141
    %v1143 = vadd.f32 %v1142, 1.0
    %v1144 = vrcp.pop %v1143
    %v1145 = vmul.f32 1.0, %v1144
    %v1146 = vxor.u32 %v1066, 2147483648
    %v1147 = vmul.f32 %v1146, 1.442695
    %v1148 = vpow.pop %v1147
    %v1149 = vadd.f32 %v1148, 1.0
    %v1150 = vrcp.pop %v1149
    %v1151 = vmul.f32 1.0, %v1150
    %v1152 = vtanh.pop %v1135
    %v1153 = vxor.u32 %v1137, 2147483648
    %v1154 = vmul.f32 %v1153, 1.442695
    %v1155 = vpow.pop %v1154
    %v1156 = vadd.f32 %v1155, 1.0
    %v1157 = vrcp.pop %v1156
    %v1158 = vmul.f32 1.0, %v1157
    %v1159 = vmul.f32 %v1151, %v1139
    %v1160 = vmul.f32 %v1145, %v1152
    %v1161 = vadd.f32 %v1159, %v1160
    %v1162 = vtanh.pop %v1161
    %v1163 = vmul.f32 %v1158, %v1162
    %1164 = vst [vmem:[#allocation4] sm:$0xff] %v1163
    %1165 = vst [vmem:[#allocation5] sm:$0xff] %v1161
    %s1166 = scalar_lea.vmem %s0, 64
    %v1167 = vld [vmem:[%s1166] sm:$0xff]
    %v1168 = vld [vmem:[%s1166 + $0x8] sm:$0xff]
    %v1169 = vld [vmem:[%s1166 + $0x10] sm:$0xff]
    %v1170 = vld [vmem:[%s1166 + $0x18] sm:$0xff]
    %v1171 = vld [vmem:[#allocation2] sm:$0xff]
    %v1172 = vld [vmem:[%s1] sm:$0xff]
    %v1173 = vld [vmem:[%s1 + $0x8] sm:$0xff]
    %v1174 = vld [vmem:[%s1 + $0x10] sm:$0xff]
    %v1175 = vld [vmem:[%s1 + $0x18] sm:$0xff]
    %v1176 = vld [vmem:[%s1 + $0x20] sm:$0xff]
    %v1177 = vld [vmem:[%s1 + $0x28] sm:$0xff]
    %v1178 = vld [vmem:[%s1 + $0x30] sm:$0xff]
    %v1179 = vld [vmem:[%s1 + $0x38] sm:$0xff]
    %v1180 = vld [vmem:[%s1 + $0x40] sm:$0xff]
    %v1181 = vld [vmem:[%s1 + $0x48] sm:$0xff]
    %v1182 = vld [vmem:[%s1 + $0x50] sm:$0xff]
    %v1183 = vld [vmem:[%s1 + $0x58] sm:$0xff]
    %v1184 = vld [vmem:[%s1 + $0x60] sm:$0xff]
    %v1185 = vld [vmem:[%s1 + $0x68] sm:$0xff]
    %v1186 = vld [vmem:[%s1 + $0x70] sm:$0xff]
    %v1187 = vld [vmem:[%s1 + $0x78] sm:$0xff]
    %v1188 = vld [vmem:[%s1 + $0x80] sm:$0xff]
    %v1189 = vld [vmem:[%s1 + $0x88] sm:$0xff]
    %v1190 = vld [vmem:[%s1 + $0x90] sm:$0xff]
    %v1191 = vld [vmem:[%s1 + $0x98] sm:$0xff]
    %v1192 = vld [vmem:[%s1 + $0xa0] sm:$0xff]
    %v1193 = vld [vmem:[%s1 + $0xa8] sm:$0xff]
    %v1194 = vld [vmem:[%s1 + $0xb0] sm:$0xff]
    %v1195 = vld [vmem:[%s1 + $0xb8] sm:$0xff]
    %v1196 = vld [vmem:[%s1 + $0xc0] sm:$0xff]
    %v1197 = vld [vmem:[%s1 + $0xc8] sm:$0xff]
    %v1198 = vld [vmem:[%s1 + $0xd0] sm:$0xff]
    %v1199 = vld [vmem:[%s1 + $0xd8] sm:$0xff]
    %v1200 = vld [vmem:[%s1 + $0xe0] sm:$0xff]
    %v1201 = vld [vmem:[%s1 + $0xe8] sm:$0xff]
    %v1202 = vld [vmem:[%s1 + $0xf0] sm:$0xff]
    %v1203 = vld [vmem:[%s1 + $0xf8] sm:$0xff]
    %v1204 = vld [vmem:[%s1 + $0x100] sm:$0xff]
    %v1205 = vld [vmem:[%s1 + $0x108] sm:$0xff]
    %v1206 = vld [vmem:[%s1 + $0x110] sm:$0xff]
    %v1207 = vld [vmem:[%s1 + $0x118] sm:$0xff]
    %v1208 = vld [vmem:[%s1 + $0x120] sm:$0xff]
    %v1209 = vld [vmem:[%s1 + $0x128] sm:$0xff]
    %v1210 = vld [vmem:[%s1 + $0x130] sm:$0xff]
    %v1211 = vld [vmem:[%s1 + $0x138] sm:$0xff]
    %v1212 = vld [vmem:[%s1 + $0x140] sm:$0xff]
    %v1213 = vld [vmem:[%s1 + $0x148] sm:$0xff]
    %v1214 = vld [vmem:[%s1 + $0x150] sm:$0xff]
    %v1215 = vld [vmem:[%s1 + $0x158] sm:$0xff]
    %v1216 = vld [vmem:[%s1 + $0x160] sm:$0xff]
    %v1217 = vld [vmem:[%s1 + $0x168] sm:$0xff]
    %v1218 = vld [vmem:[%s1 + $0x170] sm:$0xff]
    %v1219 = vld [vmem:[%s1 + $0x178] sm:$0xff]
    %v1220 = vld [vmem:[%s1 + $0x180] sm:$0xff]
    %v1221 = vld [vmem:[%s1 + $0x188] sm:$0xff]
    %v1222 = vld [vmem:[%s1 + $0x190] sm:$0xff]
    %v1223 = vld [vmem:[%s1 + $0x198] sm:$0xff]
    %v1224 = vld [vmem:[%s1 + $0x1a0] sm:$0xff]
    %v1225 = vld [vmem:[%s1 + $0x1a8] sm:$0xff]
    %v1226 = vld [vmem:[%s1 + $0x1b0] sm:$0xff]
    %v1227 = vld [vmem:[%s1 + $0x1b8] sm:$0xff]
    %v1228 = vld [vmem:[%s1 + $0x1c0] sm:$0xff]
    %v1229 = vld [vmem:[%s1 + $0x1c8] sm:$0xff]
    %v1230 = vld [vmem:[%s1 + $0x1d0] sm:$0xff]
    %v1231 = vld [vmem:[%s1 + $0x1d8] sm:$0xff]
    %v1232 = vld [vmem:[%s1 + $0x1e0] sm:$0xff]
    %v1233 = vld [vmem:[%s1 + $0x1e8] sm:$0xff]
    %v1234 = vld [vmem:[%s1 + $0x1f0] sm:$0xff]
    %v1235 = vld [vmem:[%s1 + $0x1f8] sm:$0xff]
    %1236 = vmatprep.subr.mxu0 %v1233
    %1237 = vmatpush1.msra.mxu0 %v1232
    %1238 = vmatprep.subr.mxu0 %v1229
    %1239 = vmatpush1.msra.mxu0 %v1228
    %1240 = vmatprep.subr.mxu0 %v1225
    %1241 = vmatpush1.msra.mxu0 %v1224
    %1242 = vmatprep.subr.mxu0 %v1221
    %1243 = vmatpush1.msra.mxu0 %v1220
    %1244 = vmatprep.subr.mxu0 %v1217
    %1245 = vmatpush1.msra.mxu0 %v1216
    %1246 = vmatprep.subr.mxu0 %v1213
    %1247 = vmatpush1.msra.mxu0 %v1212
    %1248 = vmatprep.subr.mxu0 %v1209
    %1249 = vmatpush1.msra.mxu0 %v1208
    %1250 = vmatprep.subr.mxu0 %v1205
    %1251 = vmatpush1.msra.mxu0 %v1204
    %1252 = vmatprep.subr.mxu0 %v1201
    %1253 = vmatpush1.msra.mxu0 %v1200
    %1254 = vmatprep.subr.mxu0 %v1197
    %1255 = vmatpush1.msra.mxu0 %v1196
    %1256 = vmatprep.subr.mxu0 %v1193
    %1257 = vmatpush1.msra.mxu0 %v1192
    %1258 = vmatprep.subr.mxu0 %v1189
    %1259 = vmatpush1.msra.mxu0 %v1188
    %1260 = vmatprep.subr.mxu0 %v1185
    %1261 = vmatpush1.msra.mxu0 %v1184
    %1262 = vmatprep.subr.mxu0 %v1181
    %1263 = vmatpush1.msra.mxu0 %v1180
    %1264 = vmatprep.subr.mxu0 %v1177
    %1265 = vmatpush1.msra.mxu0 %v1176
    %1266 = vmatprep.subr.mxu0 %v1173
    %1267 = vmatpush1.msra.mxu0 %v1172
    %1268 = vmatprep.subr.mxu0 0.0
    %1269 = vmatpush2.msra.mxu0 0.0
    %1270 = vmatprep.subr.mxu0 0.0
    %1271 = vmatpush2.msra.mxu0 0.0
    %1272 = vmatprep.subr.mxu0 0.0
    %1273 = vmatpush2.msra.mxu0 0.0
    %1274 = vmatprep.subr.mxu0 0.0
    %1275 = vmatpush2.msra.mxu0 0.0
    %1276 = vmatprep.subr.mxu0 0.0
    %1277 = vmatpush2.msra.mxu0 0.0
    %1278 = vmatprep.subr.mxu0 0.0
    %1279 = vmatpush2.msra.mxu0 0.0
    %1280 = vmatprep.subr.mxu0 0.0
    %1281 = vmatpush2.msra.mxu0 0.0
    %1282 = vmatprep.subr.mxu0 0.0
    %1283 = vmatpush2.msra.mxu0 0.0
    %1284 = vmatprep.subr.mxu0 0.0
    %1285 = vmatpush2.msra.mxu0 0.0
    %1286 = vmatprep.subr.mxu0 0.0
    %1287 = vmatpush2.msra.mxu0 0.0
    %1288 = vmatprep.subr.mxu0 0.0
    %1289 = vmatpush2.msra.mxu0 0.0
    %1290 = vmatprep.subr.mxu0 0.0
    %1291 = vmatpush2.msra.mxu0 0.0
    %1292 = vmatprep.subr.mxu0 0.0
    %1293 = vmatpush2.msra.mxu0 0.0
    %1294 = vmatprep.subr.mxu0 0.0
    %1295 = vmatpush2.msra.mxu0 0.0
    %1296 = vmatprep.subr.mxu0 0.0
    %1297 = vmatpush2.msra.mxu0 0.0
    %1298 = vmatprep.subr.mxu0 0.0
    %1299 = vmatpush2.msra.mxu0 0.0
    %1300 = vmatprep.mubr.f32.mxu0 0.0
    %1301 = vmatmul.mubr.f32.gmra.mxu0 %v1171
    %v1302 = vpop.f32.mrf.mxu0
    %v1303 = vadd.f32 0.0, %v1302
    %v1304 = vpop.f32.mrf.mxu0
    %v1305 = vadd.f32 0.0, %v1304
    %1306 = vdwg.mxu0
    %1307 = vmatprep.subr.mxu0 %v1235
    %1308 = vmatpush1.msra.mxu0 %v1234
    %1309 = vmatprep.subr.mxu0 %v1231
    %1310 = vmatpush1.msra.mxu0 %v1230
    %1311 = vmatprep.subr.mxu0 %v1227
    %1312 = vmatpush1.msra.mxu0 %v1226
    %1313 = vmatprep.subr.mxu0 %v1223
    %1314 = vmatpush1.msra.mxu0 %v1222
    %1315 = vmatprep.subr.mxu0 %v1219
    %1316 = vmatpush1.msra.mxu0 %v1218
    %1317 = vmatprep.subr.mxu0 %v1215
    %1318 = vmatpush1.msra.mxu0 %v1214
    %1319 = vmatprep.subr.mxu0 %v1211
    %1320 = vmatpush1.msra.mxu0 %v1210
    %1321 = vmatprep.subr.mxu0 %v1207
    %1322 = vmatpush1.msra.mxu0 %v1206
    %1323 = vmatprep.subr.mxu0 %v1203
    %1324 = vmatpush1.msra.mxu0 %v1202
    %1325 = vmatprep.subr.mxu0 %v1199
    %1326 = vmatpush1.msra.mxu0 %v1198
    %1327 = vmatprep.subr.mxu0 %v1195
    %1328 = vmatpush1.msra.mxu0 %v1194
    %1329 = vmatprep.subr.mxu0 %v1191
    %1330 = vmatpush1.msra.mxu0 %v1190
    %1331 = vmatprep.subr.mxu0 %v1187
    %1332 = vmatpush1.msra.mxu0 %v1186
    %1333 = vmatprep.subr.mxu0 %v1183
    %1334 = vmatpush1.msra.mxu0 %v1182
    %1335 = vmatprep.subr.mxu0 %v1179
    %1336 = vmatpush1.msra.mxu0 %v1178
    %1337 = vmatprep.subr.mxu0 %v1175
    %1338 = vmatpush1.msra.mxu0 %v1174
    %1339 = vmatprep.subr.mxu0 0.0
    %1340 = vmatpush2.msra.mxu0 0.0
    %1341 = vmatprep.subr.mxu0 0.0
    %1342 = vmatpush2.msra.mxu0 0.0
    %1343 = vmatprep.subr.mxu0 0.0
    %1344 = vmatpush2.msra.mxu0 0.0
    %1345 = vmatprep.subr.mxu0 0.0
    %1346 = vmatpush2.msra.mxu0 0.0
    %1347 = vmatprep.subr.mxu0 0.0
    %1348 = vmatpush2.msra.mxu0 0.0
    %1349 = vmatprep.subr.mxu0 0.0
    %1350 = vmatpush2.msra.mxu0 0.0
    %1351 = vmatprep.subr.mxu0 0.0
    %1352 = vmatpush2.msra.mxu0 0.0
    %1353 = vmatprep.subr.mxu0 0.0
    %1354 = vmatpush2.msra.mxu0 0.0
    %1355 = vmatprep.subr.mxu0 0.0
    %1356 = vmatpush2.msra.mxu0 0.0
    %1357 = vmatprep.subr.mxu0 0.0
    %1358 = vmatpush2.msra.mxu0 0.0
    %1359 = vmatprep.subr.mxu0 0.0
    %1360 = vmatpush2.msra.mxu0 0.0
    %1361 = vmatprep.subr.mxu0 0.0
    %1362 = vmatpush2.msra.mxu0 0.0
    %1363 = vmatprep.subr.mxu0 0.0
    %1364 = vmatpush2.msra.mxu0 0.0
    %1365 = vmatprep.subr.mxu0 0.0
    %1366 = vmatpush2.msra.mxu0 0.0
    %1367 = vmatprep.subr.mxu0 0.0
    %1368 = vmatpush2.msra.mxu0 0.0
    %1369 = vmatprep.subr.mxu0 0.0
    %1370 = vmatpush2.msra.mxu0 0.0
    %1371 = vmatprep.mubr.f32.mxu0 0.0
    %1372 = vmatmul.mubr.f32.gmra.mxu0 %v1171
    %v1373 = vpop.f32.mrf.mxu0
    %v1374 = vadd.f32 0.0, %v1373
    %v1375 = vpop.f32.mrf.mxu0
    %v1376 = vadd.f32 0.0, %v1375
    %1377 = vdwg.mxu0
    %v1378 = vadd.f32 %v1167, %v1303
    %v1379 = vadd.f32 %v1168, %v1305
    %v1380 = vadd.f32 %v1169, %v1374
    %v1381 = vadd.f32 %v1170, %v1376
    %v1382 = vld [vmem:[#allocation3] sm:$0xff]
    %v1383 = vxor.u32 %v1378, 2147483648
    %v1384 = vmul.f32 %v1383, 1.442695
    %v1385 = vpow.pop %v1384
    %v1386 = vadd.f32 %v1385, 1.0
    %v1387 = vrcp.pop %v1386
    %v1388 = vmul.f32 1.0, %v1387
    %v1389 = vxor.u32 %v1379, 2147483648
    %v1390 = vmul.f32 %v1389, 1.442695
    %v1391 = vpow.pop %v1390
    %v1392 = vadd.f32 %v1391, 1.0
    %v1393 = vrcp.pop %v1392
    %v1394 = vmul.f32 1.0, %v1393
    %v1395 = vtanh.pop %v1380
    %v1396 = vxor.u32 %v1381, 2147483648
    %v1397 = vmul.f32 %v1396, 1.442695
    %v1398 = vpow.pop %v1397
    %v1399 = vadd.f32 %v1398, 1.0
    %v1400 = vrcp.pop %v1399
    %v1401 = vmul.f32 1.0, %v1400
    %v1402 = vmul.f32 %v1394, %v1382
    %v1403 = vmul.f32 %v1388, %v1395
    %v1404 = vadd.f32 %v1402, %v1403
    %v1405 = vtanh.pop %v1404
    %v1406 = vmul.f32 %v1401, %v1405
    %1407 = vst [vmem:[#allocation2] sm:$0xff] %v1406
    %1408 = vst [vmem:[#allocation3] sm:$0xff] %v1404
    %v1409 = vld [vmem:[#allocation4] sm:$0xff]
    %v1410 = vld [vmem:[#allocation6] sm:$0xff]
    %v1411 = vld [vmem:[#allocation6 + $0x8] sm:$0xff]
    %v1412 = vld [vmem:[#allocation6 + $0x10] sm:$0xff]
    %v1413 = vld [vmem:[#allocation6 + $0x18] sm:$0xff]
    %v1414 = vld [vmem:[#allocation6 + $0x20] sm:$0xff]
    %v1415 = vld [vmem:[#allocation6 + $0x28] sm:$0xff]
    %v1416 = vld [vmem:[#allocation6 + $0x30] sm:$0xff]
    %v1417 = vld [vmem:[#allocation6 + $0x38] sm:$0xff]
    %v1418 = vld [vmem:[#allocation6 + $0x40] sm:$0xff]
    %v1419 = vld [vmem:[#allocation6 + $0x48] sm:$0xff]
    %v1420 = vld [vmem:[#allocation6 + $0x50] sm:$0xff]
    %v1421 = vld [vmem:[#allocation6 + $0x58] sm:$0xff]
    %v1422 = vld [vmem:[#allocation6 + $0x60] sm:$0xff]
    %v1423 = vld [vmem:[#allocation6 + $0x68] sm:$0xff]
    %v1424 = vld [vmem:[#allocation6 + $0x70] sm:$0xff]
    %v1425 = vld [vmem:[#allocation6 + $0x78] sm:$0xff]
    %v1426 = vld [vmem:[#allocation6 + $0x80] sm:$0xff]
    %v1427 = vld [vmem:[#allocation6 + $0x88] sm:$0xff]
    %v1428 = vld [vmem:[#allocation6 + $0x90] sm:$0xff]
    %v1429 = vld [vmem:[#allocation6 + $0x98] sm:$0xff]
    %v1430 = vld [vmem:[#allocation6 + $0xa0] sm:$0xff]
    %v1431 = vld [vmem:[#allocation6 + $0xa8] sm:$0xff]
    %v1432 = vld [vmem:[#allocation6 + $0xb0] sm:$0xff]
    %v1433 = vld [vmem:[#allocation6 + $0xb8] sm:$0xff]
    %v1434 = vld [vmem:[#allocation6 + $0xc0] sm:$0xff]
    %v1435 = vld [vmem:[#allocation6 + $0xc8] sm:$0xff]
    %v1436 = vld [vmem:[#allocation6 + $0xd0] sm:$0xff]
    %v1437 = vld [vmem:[#allocation6 + $0xd8] sm:$0xff]
    %v1438 = vld [vmem:[#allocation6 + $0xe0] sm:$0xff]
    %v1439 = vld [vmem:[#allocation6 + $0xe8] sm:$0xff]
    %v1440 = vld [vmem:[#allocation6 + $0xf0] sm:$0xff]
    %v1441 = vld [vmem:[#allocation6 + $0xf8] sm:$0xff]
    %v1442 = vld [vmem:[#allocation6 + $0x100] sm:$0xff]
    %v1443 = vld [vmem:[#allocation6 + $0x108] sm:$0xff]
    %v1444 = vld [vmem:[#allocation6 + $0x110] sm:$0xff]
    %v1445 = vld [vmem:[#allocation6 + $0x118] sm:$0xff]
    %v1446 = vld [vmem:[#allocation6 + $0x120] sm:$0xff]
    %v1447 = vld [vmem:[#allocation6 + $0x128] sm:$0xff]
    %v1448 = vld [vmem:[#allocation6 + $0x130] sm:$0xff]
    %v1449 = vld [vmem:[#allocation6 + $0x138] sm:$0xff]
    %v1450 = vld [vmem:[#allocation6 + $0x140] sm:$0xff]
    %v1451 = vld [vmem:[#allocation6 + $0x148] sm:$0xff]
    %v1452 = vld [vmem:[#allocation6 + $0x150] sm:$0xff]
    %v1453 = vld [vmem:[#allocation6 + $0x158] sm:$0xff]
    %v1454 = vld [vmem:[#allocation6 + $0x160] sm:$0xff]
    %v1455 = vld [vmem:[#allocation6 + $0x168] sm:$0xff]
    %v1456 = vld [vmem:[#allocation6 + $0x170] sm:$0xff]
    %v1457 = vld [vmem:[#allocation6 + $0x178] sm:$0xff]
    %v1458 = vld [vmem:[#allocation6 + $0x180] sm:$0xff]
    %v1459 = vld [vmem:[#allocation6 + $0x188] sm:$0xff]
    %v1460 = vld [vmem:[#allocation6 + $0x190] sm:$0xff]
    %v1461 = vld [vmem:[#allocation6 + $0x198] sm:$0xff]
    %v1462 = vld [vmem:[#allocation6 + $0x1a0] sm:$0xff]
    %v1463 = vld [vmem:[#allocation6 + $0x1a8] sm:$0xff]
    %v1464 = vld [vmem:[#allocation6 + $0x1b0] sm:$0xff]
    %v1465 = vld [vmem:[#allocation6 + $0x1b8] sm:$0xff]
    %v1466 = vld [vmem:[#allocation6 + $0x1c0] sm:$0xff]
    %v1467 = vld [vmem:[#allocation6 + $0x1c8] sm:$0xff]
    %v1468 = vld [vmem:[#allocation6 + $0x1d0] sm:$0xff]
    %v1469 = vld [vmem:[#allocation6 + $0x1d8] sm:$0xff]
    %v1470 = vld [vmem:[#allocation6 + $0x1e0] sm:$0xff]
    %v1471 = vld [vmem:[#allocation6 + $0x1e8] sm:$0xff]
    %v1472 = vld [vmem:[#allocation6 + $0x1f0] sm:$0xff]
    %v1473 = vld [vmem:[#allocation6 + $0x1f8] sm:$0xff]
    %v1474 = vld [vmem:[#allocation6 + $0x200] sm:$0xff]
    %v1475 = vld [vmem:[#allocation6 + $0x208] sm:$0xff]
    %v1476 = vld [vmem:[#allocation6 + $0x210] sm:$0xff]
    %v1477 = vld [vmem:[#allocation6 + $0x218] sm:$0xff]
    %v1478 = vld [vmem:[#allocation6 + $0x220] sm:$0xff]
    %v1479 = vld [vmem:[#allocation6 + $0x228] sm:$0xff]
    %v1480 = vld [vmem:[#allocation6 + $0x230] sm:$0xff]
    %v1481 = vld [vmem:[#allocation6 + $0x238] sm:$0xff]
    %v1482 = vld [vmem:[#allocation6 + $0x240] sm:$0xff]
    %v1483 = vld [vmem:[#allocation6 + $0x248] sm:$0xff]
    %v1484 = vld [vmem:[#allocation6 + $0x250] sm:$0xff]
    %v1485 = vld [vmem:[#allocation6 + $0x258] sm:$0xff]
    %v1486 = vld [vmem:[#allocation6 + $0x260] sm:$0xff]
    %v1487 = vld [vmem:[#allocation6 + $0x268] sm:$0xff]
    %v1488 = vld [vmem:[#allocation6 + $0x270] sm:$0xff]
    %v1489 = vld [vmem:[#allocation6 + $0x278] sm:$0xff]
    %v1490 = vld [vmem:[#allocation6 + $0x280] sm:$0xff]
    %v1491 = vld [vmem:[#allocation6 + $0x288] sm:$0xff]
    %v1492 = vld [vmem:[#allocation6 + $0x290] sm:$0xff]
    %v1493 = vld [vmem:[#allocation6 + $0x298] sm:$0xff]
    %v1494 = vld [vmem:[#allocation6 + $0x2a0] sm:$0xff]
    %v1495 = vld [vmem:[#allocation6 + $0x2a8] sm:$0xff]
    %v1496 = vld [vmem:[#allocation6 + $0x2b0] sm:$0xff]
    %v1497 = vld [vmem:[#allocation6 + $0x2b8] sm:$0xff]
    %v1498 = vld [vmem:[#allocation6 + $0x2c0] sm:$0xff]
    %v1499 = vld [vmem:[#allocation6 + $0x2c8] sm:$0xff]
    %v1500 = vld [vmem:[#allocation6 + $0x2d0] sm:$0xff]
    %v1501 = vld [vmem:[#allocation6 + $0x2d8] sm:$0xff]
    %v1502 = vld [vmem:[#allocation6 + $0x2e0] sm:$0xff]
    %v1503 = vld [vmem:[#allocation6 + $0x2e8] sm:$0xff]
    %v1504 = vld [vmem:[#allocation6 + $0x2f0] sm:$0xff]
    %v1505 = vld [vmem:[#allocation6 + $0x2f8] sm:$0xff]
    %v1506 = vld [vmem:[#allocation6 + $0x300] sm:$0xff]
    %v1507 = vld [vmem:[#allocation6 + $0x308] sm:$0xff]
    %v1508 = vld [vmem:[#allocation6 + $0x310] sm:$0xff]
    %v1509 = vld [vmem:[#allocation6 + $0x318] sm:$0xff]
    %v1510 = vld [vmem:[#allocation6 + $0x320] sm:$0xff]
    %v1511 = vld [vmem:[#allocation6 + $0x328] sm:$0xff]
    %v1512 = vld [vmem:[#allocation6 + $0x330] sm:$0xff]
    %v1513 = vld [vmem:[#allocation6 + $0x338] sm:$0xff]
    %v1514 = vld [vmem:[#allocation6 + $0x340] sm:$0xff]
    %v1515 = vld [vmem:[#allocation6 + $0x348] sm:$0xff]
    %v1516 = vld [vmem:[#allocation6 + $0x350] sm:$0xff]
    %v1517 = vld [vmem:[#allocation6 + $0x358] sm:$0xff]
    %v1518 = vld [vmem:[#allocation6 + $0x360] sm:$0xff]
    %v1519 = vld [vmem:[#allocation6 + $0x368] sm:$0xff]
    %v1520 = vld [vmem:[#allocation6 + $0x370] sm:$0xff]
    %v1521 = vld [vmem:[#allocation6 + $0x378] sm:$0xff]
    %v1522 = vld [vmem:[#allocation6 + $0x380] sm:$0xff]
    %v1523 = vld [vmem:[#allocation6 + $0x388] sm:$0xff]
    %v1524 = vld [vmem:[#allocation6 + $0x390] sm:$0xff]
    %v1525 = vld [vmem:[#allocation6 + $0x398] sm:$0xff]
    %v1526 = vld [vmem:[#allocation6 + $0x3a0] sm:$0xff]
    %v1527 = vld [vmem:[#allocation6 + $0x3a8] sm:$0xff]
    %v1528 = vld [vmem:[#allocation6 + $0x3b0] sm:$0xff]
    %v1529 = vld [vmem:[#allocation6 + $0x3b8] sm:$0xff]
    %v1530 = vld [vmem:[#allocation6 + $0x3c0] sm:$0xff]
    %v1531 = vld [vmem:[#allocation6 + $0x3c8] sm:$0xff]
    %v1532 = vld [vmem:[#allocation6 + $0x3d0] sm:$0xff]
    %v1533 = vld [vmem:[#allocation6 + $0x3d8] sm:$0xff]
    %v1534 = vld [vmem:[#allocation6 + $0x3e0] sm:$0xff]
    %v1535 = vld [vmem:[#allocation6 + $0x3e8] sm:$0xff]
    %v1536 = vld [vmem:[#allocation6 + $0x3f0] sm:$0xff]
    %v1537 = vld [vmem:[#allocation6 + $0x3f8] sm:$0xff]
    %v1538 = vld [vmem:[%s3] sm:$0xf]
    %v1540 = vlaneseq
    %v1541 = vshrl.u32 %v1540, 7
    %v1542 = vsub.s32 0, %v1541
    %v1543 = vrot.slane %v1538, %v1542
    %v1544 = vlaneseq
    %v1545 = vshrl.u32 %v1544, 7
    %v1546 = vsub.s32 1, %v1545
    %v1547 = vrot.slane %v1538, %v1546
    %v1548 = vlaneseq
    %v1549 = vshrl.u32 %v1548, 7
    %v1550 = vsub.s32 2, %v1549
    %v1551 = vrot.slane %v1538, %v1550
    %v1552 = vlaneseq
    %v1553 = vshrl.u32 %v1552, 7
    %v1554 = vsub.s32 3, %v1553
    %v1555 = vrot.slane %v1538, %v1554
    %1560 = vmatprep.subr.mxu0 %v1471
    %1561 = vmatpush1.msra.mxu0 %v1470
    %1562 = vmatprep.subr.mxu0 %v1467
    %1563 = vmatpush1.msra.mxu0 %v1466
    %1564 = vmatprep.subr.mxu0 %v1463
    %1565 = vmatpush1.msra.mxu0 %v1462
    %1566 = vmatprep.subr.mxu0 %v1459
    %1567 = vmatpush1.msra.mxu0 %v1458
    %1568 = vmatprep.subr.mxu0 %v1455
    %1569 = vmatpush1.msra.mxu0 %v1454
    %1570 = vmatprep.subr.mxu0 %v1451
    %1571 = vmatpush1.msra.mxu0 %v1450
    %1572 = vmatprep.subr.mxu0 %v1447
    %1573 = vmatpush1.msra.mxu0 %v1446
    %1574 = vmatprep.subr.mxu0 %v1443
    %1575 = vmatpush1.msra.mxu0 %v1442
    %1576 = vmatprep.subr.mxu0 %v1439
    %1577 = vmatpush1.msra.mxu0 %v1438
    %1578 = vmatprep.subr.mxu0 %v1435
    %1579 = vmatpush1.msra.mxu0 %v1434
    %1580 = vmatprep.subr.mxu0 %v1431
    %1581 = vmatpush1.msra.mxu0 %v1430
    %1582 = vmatprep.subr.mxu0 %v1427
    %1583 = vmatpush1.msra.mxu0 %v1426
    %1584 = vmatprep.subr.mxu0 %v1423
    %1585 = vmatpush1.msra.mxu0 %v1422
    %1586 = vmatprep.subr.mxu0 %v1419
    %1587 = vmatpush1.msra.mxu0 %v1418
    %1588 = vmatprep.subr.mxu0 %v1415
    %1589 = vmatpush1.msra.mxu0 %v1414
    %1590 = vmatprep.subr.mxu0 %v1411
    %1591 = vmatpush1.msra.mxu0 %v1410
    %1592 = vmatprep.subr.mxu0 %v1535
    %1593 = vmatpush2.msra.mxu0 %v1534
    %1594 = vmatprep.subr.mxu0 %v1531
    %1595 = vmatpush2.msra.mxu0 %v1530
    %1596 = vmatprep.subr.mxu0 %v1527
    %1597 = vmatpush2.msra.mxu0 %v1526
    %1598 = vmatprep.subr.mxu0 %v1523
    %1599 = vmatpush2.msra.mxu0 %v1522
    %1600 = vmatprep.subr.mxu0 %v1519
    %1601 = vmatpush2.msra.mxu0 %v1518
    %1602 = vmatprep.subr.mxu0 %v1515
    %1603 = vmatpush2.msra.mxu0 %v1514
    %1604 = vmatprep.subr.mxu0 %v1511
    %1605 = vmatpush2.msra.mxu0 %v1510
    %1606 = vmatprep.subr.mxu0 %v1507
    %1607 = vmatpush2.msra.mxu0 %v1506
    %1608 = vmatprep.subr.mxu0 %v1503
    %1609 = vmatpush2.msra.mxu0 %v1502
    %1610 = vmatprep.subr.mxu0 %v1499
    %1611 = vmatpush2.msra.mxu0 %v1498
    %1612 = vmatprep.subr.mxu0 %v1495
    %1613 = vmatpush2.msra.mxu0 %v1494
    %1614 = vmatprep.subr.mxu0 %v1491
    %1615 = vmatpush2.msra.mxu0 %v1490
    %1616 = vmatprep.subr.mxu0 %v1487
    %1617 = vmatpush2.msra.mxu0 %v1486
    %1618 = vmatprep.subr.mxu0 %v1483
    %1619 = vmatpush2.msra.mxu0 %v1482
    %1620 = vmatprep.subr.mxu0 %v1479
    %1621 = vmatpush2.msra.mxu0 %v1478
    %1622 = vmatprep.subr.mxu0 %v1475
    %1623 = vmatpush2.msra.mxu0 %v1474
    %1624 = vmatprep.mubr.f32.mxu0 %v1409
    %1625 = vmatmul.mubr.f32.gmra.mxu0 %v1406
    %v1626 = vpop.f32.mrf.mxu0
    %v1627 = vadd.f32 %v1543, %v1626
    %v1628 = vpop.f32.mrf.mxu0
    %v1629 = vadd.f32 %v1547, %v1628
    %1630 = vdwg.mxu0
    %1631 = vmatprep.subr.mxu0 %v1473
    %1632 = vmatpush1.msra.mxu0 %v1472
    %1633 = vmatprep.subr.mxu0 %v1469
    %1634 = vmatpush1.msra.mxu0 %v1468
    %1635 = vmatprep.subr.mxu0 %v1465
    %1636 = vmatpush1.msra.mxu0 %v1464
    %1637 = vmatprep.subr.mxu0 %v1461
    %1638 = vmatpush1.msra.mxu0 %v1460
    %1639 = vmatprep.subr.mxu0 %v1457
    %1640 = vmatpush1.msra.mxu0 %v1456
    %1641 = vmatprep.subr.mxu0 %v1453
    %1642 = vmatpush1.msra.mxu0 %v1452
    %1643 = vmatprep.subr.mxu0 %v1449
    %1644 = vmatpush1.msra.mxu0 %v1448
    %1645 = vmatprep.subr.mxu0 %v1445
    %1646 = vmatpush1.msra.mxu0 %v1444
    %1647 = vmatprep.subr.mxu0 %v1441
    %1648 = vmatpush1.msra.mxu0 %v1440
    %1649 = vmatprep.subr.mxu0 %v1437
    %1650 = vmatpush1.msra.mxu0 %v1436
    %1651 = vmatprep.subr.mxu0 %v1433
    %1652 = vmatpush1.msra.mxu0 %v1432
    %1653 = vmatprep.subr.mxu0 %v1429
    %1654 = vmatpush1.msra.mxu0 %v1428
    %1655 = vmatprep.subr.mxu0 %v1425
    %1656 = vmatpush1.msra.mxu0 %v1424
    %1657 = vmatprep.subr.mxu0 %v1421
    %1658 = vmatpush1.msra.mxu0 %v1420
    %1659 = vmatprep.subr.mxu0 %v1417
    %1660 = vmatpush1.msra.mxu0 %v1416
    %1661 = vmatprep.subr.mxu0 %v1413
    %1662 = vmatpush1.msra.mxu0 %v1412
    %1663 = vmatprep.subr.mxu0 %v1537
    %1664 = vmatpush2.msra.mxu0 %v1536
    %1665 = vmatprep.subr.mxu0 %v1533
    %1666 = vmatpush2.msra.mxu0 %v1532
    %1667 = vmatprep.subr.mxu0 %v1529
    %1668 = vmatpush2.msra.mxu0 %v1528
    %1669 = vmatprep.subr.mxu0 %v1525
    %1670 = vmatpush2.msra.mxu0 %v1524
    %1671 = vmatprep.subr.mxu0 %v1521
    %1672 = vmatpush2.msra.mxu0 %v1520
    %1673 = vmatprep.subr.mxu0 %v1517
    %1674 = vmatpush2.msra.mxu0 %v1516
    %1675 = vmatprep.subr.mxu0 %v1513
    %1676 = vmatpush2.msra.mxu0 %v1512
    %1677 = vmatprep.subr.mxu0 %v1509
    %1678 = vmatpush2.msra.mxu0 %v1508
    %1679 = vmatprep.subr.mxu0 %v1505
    %1680 = vmatpush2.msra.mxu0 %v1504
    %1681 = vmatprep.subr.mxu0 %v1501
    %1682 = vmatpush2.msra.mxu0 %v1500
    %1683 = vmatprep.subr.mxu0 %v1497
    %1684 = vmatpush2.msra.mxu0 %v1496
    %1685 = vmatprep.subr.mxu0 %v1493
    %1686 = vmatpush2.msra.mxu0 %v1492
    %1687 = vmatprep.subr.mxu0 %v1489
    %1688 = vmatpush2.msra.mxu0 %v1488
    %1689 = vmatprep.subr.mxu0 %v1485
    %1690 = vmatpush2.msra.mxu0 %v1484
    %1691 = vmatprep.subr.mxu0 %v1481
    %1692 = vmatpush2.msra.mxu0 %v1480
    %1693 = vmatprep.subr.mxu0 %v1477
    %1694 = vmatpush2.msra.mxu0 %v1476
    %1695 = vmatprep.mubr.f32.mxu0 %v1409
    %1696 = vmatmul.mubr.f32.gmra.mxu0 %v1406
    %v1697 = vpop.f32.mrf.mxu0
    %v1698 = vadd.f32 %v1551, %v1697
    %v1699 = vpop.f32.mrf.mxu0
    %v1700 = vadd.f32 %v1555, %v1699
    %1701 = vdwg.mxu0
    %v1702 = vld [vmem:[#allocation5] sm:$0xff]
    %v1703 = vxor.u32 %v1627, 2147483648
    %v1704 = vmul.f32 %v1703, 1.442695
    %v1705 = vpow.pop %v1704
    %v1706 = vadd.f32 %v1705, 1.0
    %v1707 = vrcp.pop %v1706
    %v1708 = vmul.f32 1.0, %v1707
    %v1709 = vxor.u32 %v1629, 2147483648
    %v1710 = vmul.f32 %v1709, 1.442695
    %v1711 = vpow.pop %v1710
    %v1712 = vadd.f32 %v1711, 1.0
    %v1713 = vrcp.pop %v1712
    %v1714 = vmul.f32 1.0, %v1713
    %v1715 = vtanh.pop %v1698
    %v1716 = vxor.u32 %v1700, 2147483648
    %v1717 = vmul.f32 %v1716, 1.442695
    %v1718 = vpow.pop %v1717
    %v1719 = vadd.f32 %v1718, 1.0
    %v1720 = vrcp.pop %v1719
    %v1721 = vmul.f32 1.0, %v1720
    %v1722 = vmul.f32 %v1714, %v1702
    %v1723 = vmul.f32 %v1708, %v1715
    %v1724 = vadd.f32 %v1722, %v1723
    %v1725 = vtanh.pop %v1724
    %v1726 = vmul.f32 %v1721, %v1725
    %1727 = vst [vmem:[#allocation4] sm:$0xff] %v1726
    %1728 = vst [vmem:[#allocation5] sm:$0xff] %v1724
    %s1729 = scalar_lea.vmem %s0, 96
    %v1730 = vld [vmem:[%s1729] sm:$0xff]
    %v1731 = vld [vmem:[%s1729 + $0x8] sm:$0xff]
    %v1732 = vld [vmem:[%s1729 + $0x10] sm:$0xff]
    %v1733 = vld [vmem:[%s1729 + $0x18] sm:$0xff]
    %v1734 = vld [vmem:[#allocation2] sm:$0xff]
    %v1735 = vld [vmem:[%s1] sm:$0xff]
    %v1736 = vld [vmem:[%s1 + $0x8] sm:$0xff]
    %v1737 = vld [vmem:[%s1 + $0x10] sm:$0xff]
    %v1738 = vld [vmem:[%s1 + $0x18] sm:$0xff]
    %v1739 = vld [vmem:[%s1 + $0x20] sm:$0xff]
    %v1740 = vld [vmem:[%s1 + $0x28] sm:$0xff]
    %v1741 = vld [vmem:[%s1 + $0x30] sm:$0xff]
    %v1742 = vld [vmem:[%s1 + $0x38] sm:$0xff]
    %v1743 = vld [vmem:[%s1 + $0x40] sm:$0xff]
    %v1744 = vld [vmem:[%s1 + $0x48] sm:$0xff]
    %v1745 = vld [vmem:[%s1 + $0x50] sm:$0xff]
    %v1746 = vld [vmem:[%s1 + $0x58] sm:$0xff]
    %v1747 = vld [vmem:[%s1 + $0x60] sm:$0xff]
    %v1748 = vld [vmem:[%s1 + $0x68] sm:$0xff]
    %v1749 = vld [vmem:[%s1 + $0x70] sm:$0xff]
    %v1750 = vld [vmem:[%s1 + $0x78] sm:$0xff]
    %v1751 = vld [vmem:[%s1 + $0x80] sm:$0xff]
    %v1752 = vld [vmem:[%s1 + $0x88] sm:$0xff]
    %v1753 = vld [vmem:[%s1 + $0x90] sm:$0xff]
    %v1754 = vld [vmem:[%s1 + $0x98] sm:$0xff]
    %v1755 = vld [vmem:[%s1 + $0xa0] sm:$0xff]
    %v1756 = vld [vmem:[%s1 + $0xa8] sm:$0xff]
    %v1757 = vld [vmem:[%s1 + $0xb0] sm:$0xff]
    %v1758 = vld [vmem:[%s1 + $0xb8] sm:$0xff]
    %v1759 = vld [vmem:[%s1 + $0xc0] sm:$0xff]
    %v1760 = vld [vmem:[%s1 + $0xc8] sm:$0xff]
    %v1761 = vld [vmem:[%s1 + $0xd0] sm:$0xff]
    %v1762 = vld [vmem:[%s1 + $0xd8] sm:$0xff]
    %v1763 = vld [vmem:[%s1 + $0xe0] sm:$0xff]
    %v1764 = vld [vmem:[%s1 + $0xe8] sm:$0xff]
    %v1765 = vld [vmem:[%s1 + $0xf0] sm:$0xff]
    %v1766 = vld [vmem:[%s1 + $0xf8] sm:$0xff]
    %v1767 = vld [vmem:[%s1 + $0x100] sm:$0xff]
    %v1768 = vld [vmem:[%s1 + $0x108] sm:$0xff]
    %v1769 = vld [vmem:[%s1 + $0x110] sm:$0xff]
    %v1770 = vld [vmem:[%s1 + $0x118] sm:$0xff]
    %v1771 = vld [vmem:[%s1 + $0x120] sm:$0xff]
    %v1772 = vld [vmem:[%s1 + $0x128] sm:$0xff]
    %v1773 = vld [vmem:[%s1 + $0x130] sm:$0xff]
    %v1774 = vld [vmem:[%s1 + $0x138] sm:$0xff]
    %v1775 = vld [vmem:[%s1 + $0x140] sm:$0xff]
    %v1776 = vld [vmem:[%s1 + $0x148] sm:$0xff]
    %v1777 = vld [vmem:[%s1 + $0x150] sm:$0xff]
    %v1778 = vld [vmem:[%s1 + $0x158] sm:$0xff]
    %v1779 = vld [vmem:[%s1 + $0x160] sm:$0xff]
    %v1780 = vld [vmem:[%s1 + $0x168] sm:$0xff]
    %v1781 = vld [vmem:[%s1 + $0x170] sm:$0xff]
    %v1782 = vld [vmem:[%s1 + $0x178] sm:$0xff]
    %v1783 = vld [vmem:[%s1 + $0x180] sm:$0xff]
    %v1784 = vld [vmem:[%s1 + $0x188] sm:$0xff]
    %v1785 = vld [vmem:[%s1 + $0x190] sm:$0xff]
    %v1786 = vld [vmem:[%s1 + $0x198] sm:$0xff]
    %v1787 = vld [vmem:[%s1 + $0x1a0] sm:$0xff]
    %v1788 = vld [vmem:[%s1 + $0x1a8] sm:$0xff]
    %v1789 = vld [vmem:[%s1 + $0x1b0] sm:$0xff]
    %v1790 = vld [vmem:[%s1 + $0x1b8] sm:$0xff]
    %v1791 = vld [vmem:[%s1 + $0x1c0] sm:$0xff]
    %v1792 = vld [vmem:[%s1 + $0x1c8] sm:$0xff]
    %v1793 = vld [vmem:[%s1 + $0x1d0] sm:$0xff]
    %v1794 = vld [vmem:[%s1 + $0x1d8] sm:$0xff]
    %v1795 = vld [vmem:[%s1 + $0x1e0] sm:$0xff]
    %v1796 = vld [vmem:[%s1 + $0x1e8] sm:$0xff]
    %v1797 = vld [vmem:[%s1 + $0x1f0] sm:$0xff]
    %v1798 = vld [vmem:[%s1 + $0x1f8] sm:$0xff]
    %1799 = vmatprep.subr.mxu0 %v1796
    %1800 = vmatpush1.msra.mxu0 %v1795
    %1801 = vmatprep.subr.mxu0 %v1792
    %1802 = vmatpush1.msra.mxu0 %v1791
    %1803 = vmatprep.subr.mxu0 %v1788
    %1804 = vmatpush1.msra.mxu0 %v1787
    %1805 = vmatprep.subr.mxu0 %v1784
    %1806 = vmatpush1.msra.mxu0 %v1783
    %1807 = vmatprep.subr.mxu0 %v1780
    %1808 = vmatpush1.msra.mxu0 %v1779
    %1809 = vmatprep.subr.mxu0 %v1776
    %1810 = vmatpush1.msra.mxu0 %v1775
    %1811 = vmatprep.subr.mxu0 %v1772
    %1812 = vmatpush1.msra.mxu0 %v1771
    %1813 = vmatprep.subr.mxu0 %v1768
    %1814 = vmatpush1.msra.mxu0 %v1767
    %1815 = vmatprep.subr.mxu0 %v1764
    %1816 = vmatpush1.msra.mxu0 %v1763
    %1817 = vmatprep.subr.mxu0 %v1760
    %1818 = vmatpush1.msra.mxu0 %v1759
    %1819 = vmatprep.subr.mxu0 %v1756
    %1820 = vmatpush1.msra.mxu0 %v1755
    %1821 = vmatprep.subr.mxu0 %v1752
    %1822 = vmatpush1.msra.mxu0 %v1751
    %1823 = vmatprep.subr.mxu0 %v1748
    %1824 = vmatpush1.msra.mxu0 %v1747
    %1825 = vmatprep.subr.mxu0 %v1744
    %1826 = vmatpush1.msra.mxu0 %v1743
    %1827 = vmatprep.subr.mxu0 %v1740
    %1828 = vmatpush1.msra.mxu0 %v1739
    %1829 = vmatprep.subr.mxu0 %v1736
    %1830 = vmatpush1.msra.mxu0 %v1735
    %1831 = vmatprep.subr.mxu0 0.0
    %1832 = vmatpush2.msra.mxu0 0.0
    %1833 = vmatprep.subr.mxu0 0.0
    %1834 = vmatpush2.msra.mxu0 0.0
    %1835 = vmatprep.subr.mxu0 0.0
    %1836 = vmatpush2.msra.mxu0 0.0
    %1837 = vmatprep.subr.mxu0 0.0
    %1838 = vmatpush2.msra.mxu0 0.0
    %1839 = vmatprep.subr.mxu0 0.0
    %1840 = vmatpush2.msra.mxu0 0.0
    %1841 = vmatprep.subr.mxu0 0.0
    %1842 = vmatpush2.msra.mxu0 0.0
    %1843 = vmatprep.subr.mxu0 0.0
    %1844 = vmatpush2.msra.mxu0 0.0
    %1845 = vmatprep.subr.mxu0 0.0
    %1846 = vmatpush2.msra.mxu0 0.0
    %1847 = vmatprep.subr.mxu0 0.0
    %1848 = vmatpush2.msra.mxu0 0.0
    %1849 = vmatprep.subr.mxu0 0.0
    %1850 = vmatpush2.msra.mxu0 0.0
    %1851 = vmatprep.subr.mxu0 0.0
    %1852 = vmatpush2.msra.mxu0 0.0
    %1853 = vmatprep.subr.mxu0 0.0
    %1854 = vmatpush2.msra.mxu0 0.0
    %1855 = vmatprep.subr.mxu0 0.0
    %1856 = vmatpush2.msra.mxu0 0.0
    %1857 = vmatprep.subr.mxu0 0.0
    %1858 = vmatpush2.msra.mxu0 0.0
    %1859 = vmatprep.subr.mxu0 0.0
    %1860 = vmatpush2.msra.mxu0 0.0
    %1861 = vmatprep.subr.mxu0 0.0
    %1862 = vmatpush2.msra.mxu0 0.0
    %1863 = vmatprep.mubr.f32.mxu0 0.0
    %1864 = vmatmul.mubr.f32.gmra.mxu0 %v1734
    %v1865 = vpop.f32.mrf.mxu0
    %v1866 = vadd.f32 0.0, %v1865
    %v1867 = vpop.f32.mrf.mxu0
    %v1868 = vadd.f32 0.0, %v1867
    %1869 = vdwg.mxu0
    %1870 = vmatprep.subr.mxu0 %v1798
    %1871 = vmatpush1.msra.mxu0 %v1797
    %1872 = vmatprep.subr.mxu0 %v1794
    %1873 = vmatpush1.msra.mxu0 %v1793
    %1874 = vmatprep.subr.mxu0 %v1790
    %1875 = vmatpush1.msra.mxu0 %v1789
    %1876 = vmatprep.subr.mxu0 %v1786
    %1877 = vmatpush1.msra.mxu0 %v1785
    %1878 = vmatprep.subr.mxu0 %v1782
    %1879 = vmatpush1.msra.mxu0 %v1781
    %1880 = vmatprep.subr.mxu0 %v1778
    %1881 = vmatpush1.msra.mxu0 %v1777
    %1882 = vmatprep.subr.mxu0 %v1774
    %1883 = vmatpush1.msra.mxu0 %v1773
    %1884 = vmatprep.subr.mxu0 %v1770
    %1885 = vmatpush1.msra.mxu0 %v1769
    %1886 = vmatprep.subr.mxu0 %v1766
    %1887 = vmatpush1.msra.mxu0 %v1765
    %1888 = vmatprep.subr.mxu0 %v1762
    %1889 = vmatpush1.msra.mxu0 %v1761
    %1890 = vmatprep.subr.mxu0 %v1758
    %1891 = vmatpush1.msra.mxu0 %v1757
    %1892 = vmatprep.subr.mxu0 %v1754
    %1893 = vmatpush1.msra.mxu0 %v1753
    %1894 = vmatprep.subr.mxu0 %v1750
    %1895 = vmatpush1.msra.mxu0 %v1749
    %1896 = vmatprep.subr.mxu0 %v1746
    %1897 = vmatpush1.msra.mxu0 %v1745
    %1898 = vmatprep.subr.mxu0 %v1742
    %1899 = vmatpush1.msra.mxu0 %v1741
    %1900 = vmatprep.subr.mxu0 %v1738
    %1901 = vmatpush1.msra.mxu0 %v1737
    %1902 = vmatprep.subr.mxu0 0.0
    %1903 = vmatpush2.msra.mxu0 0.0
    %1904 = vmatprep.subr.mxu0 0.0
    %1905 = vmatpush2.msra.mxu0 0.0
    %1906 = vmatprep.subr.mxu0 0.0
    %1907 = vmatpush2.msra.mxu0 0.0
    %1908 = vmatprep.subr.mxu0 0.0
    %1909 = vmatpush2.msra.mxu0 0.0
    %1910 = vmatprep.subr.mxu0 0.0
    %1911 = vmatpush2.msra.mxu0 0.0
    %1912 = vmatprep.subr.mxu0 0.0
    %1913 = vmatpush2.msra.mxu0 0.0
    %1914 = vmatprep.subr.mxu0 0.0
    %1915 = vmatpush2.msra.mxu0 0.0
    %1916 = vmatprep.subr.mxu0 0.0
    %1917 = vmatpush2.msra.mxu0 0.0
    %1918 = vmatprep.subr.mxu0 0.0
    %1919 = vmatpush2.msra.mxu0 0.0
    %1920 = vmatprep.subr.mxu0 0.0
    %1921 = vmatpush2.msra.mxu0 0.0
    %1922 = vmatprep.subr.mxu0 0.0
    %1923 = vmatpush2.msra.mxu0 0.0
    %1924 = vmatprep.subr.mxu0 0.0
    %1925 = vmatpush2.msra.mxu0 0.0
    %1926 = vmatprep.subr.mxu0 0.0
    %1927 = vmatpush2.msra.mxu0 0.0
    %1928 = vmatprep.subr.mxu0 0.0
    %1929 = vmatpush2.msra.mxu0 0.0
    %1930 = vmatprep.subr.mxu0 0.0
    %1931 = vmatpush2.msra.mxu0 0.0
    %1932 = vmatprep.subr.mxu0 0.0
    %1933 = vmatpush2.msra.mxu0 0.0
    %1934 = vmatprep.mubr.f32.mxu0 0.0
    %1935 = vmatmul.mubr.f32.gmra.mxu0 %v1734
    %v1936 = vpop.f32.mrf.mxu0
    %v1937 = vadd.f32 0.0, %v1936
    %v1938 = vpop.f32.mrf.mxu0
    %v1939 = vadd.f32 0.0, %v1938
    %1940 = vdwg.mxu0
    %v1941 = vadd.f32 %v1730, %v1866
    %v1942 = vadd.f32 %v1731, %v1868
    %v1943 = vadd.f32 %v1732, %v1937
    %v1944 = vadd.f32 %v1733, %v1939
    %v1945 = vld [vmem:[#allocation3] sm:$0xff]
    %v1946 = vxor.u32 %v1941, 2147483648
    %v1947 = vmul.f32 %v1946, 1.442695
    %v1948 = vpow.pop %v1947
    %v1949 = vadd.f32 %v1948, 1.0
    %v1950 = vrcp.pop %v1949
    %v1951 = vmul.f32 1.0, %v1950
    %v1952 = vxor.u32 %v1942, 2147483648
    %v1953 = vmul.f32 %v1952, 1.442695
    %v1954 = vpow.pop %v1953
    %v1955 = vadd.f32 %v1954, 1.0
    %v1956 = vrcp.pop %v1955
    %v1957 = vmul.f32 1.0, %v1956
    %v1958 = vtanh.pop %v1943
    %v1959 = vxor.u32 %v1944, 2147483648
    %v1960 = vmul.f32 %v1959, 1.442695
    %v1961 = vpow.pop %v1960
    %v1962 = vadd.f32 %v1961, 1.0
    %v1963 = vrcp.pop %v1962
    %v1964 = vmul.f32 1.0, %v1963
    %v1965 = vmul.f32 %v1957, %v1945
    %v1966 = vmul.f32 %v1951, %v1958
    %v1967 = vadd.f32 %v1965, %v1966
    %v1968 = vtanh.pop %v1967
    %v1969 = vmul.f32 %v1964, %v1968
    %1970 = vst [vmem:[#allocation2] sm:$0xff] %v1969
    %1971 = vst [vmem:[#allocation3] sm:$0xff] %v1967
    %v1972 = vld [vmem:[#allocation4] sm:$0xff]
    %v1973 = vld [vmem:[#allocation6] sm:$0xff]
    %v1974 = vld [vmem:[#allocation6 + $0x8] sm:$0xff]
    %v1975 = vld [vmem:[#allocation6 + $0x10] sm:$0xff]
    %v1976 = vld [vmem:[#allocation6 + $0x18] sm:$0xff]
    %v1977 = vld [vmem:[#allocation6 + $0x20] sm:$0xff]
    %v1978 = vld [vmem:[#allocation6 + $0x28] sm:$0xff]
    %v1979 = vld [vmem:[#allocation6 + $0x30] sm:$0xff]
    %v1980 = vld [vmem:[#allocation6 + $0x38] sm:$0xff]
    %v1981 = vld [vmem:[#allocation6 + $0x40] sm:$0xff]
    %v1982 = vld [vmem:[#allocation6 + $0x48] sm:$0xff]
    %v1983 = vld [vmem:[#allocation6 + $0x50] sm:$0xff]
    %v1984 = vld [vmem:[#allocation6 + $0x58] sm:$0xff]
    %v1985 = vld [vmem:[#allocation6 + $0x60] sm:$0xff]
    %v1986 = vld [vmem:[#allocation6 + $0x68] sm:$0xff]
    %v1987 = vld [vmem:[#allocation6 + $0x70] sm:$0xff]
    %v1988 = vld [vmem:[#allocation6 + $0x78] sm:$0xff]
    %v1989 = vld [vmem:[#allocation6 + $0x80] sm:$0xff]
    %v1990 = vld [vmem:[#allocation6 + $0x88] sm:$0xff]
    %v1991 = vld [vmem:[#allocation6 + $0x90] sm:$0xff]
    %v1992 = vld [vmem:[#allocation6 + $0x98] sm:$0xff]
    %v1993 = vld [vmem:[#allocation6 + $0xa0] sm:$0xff]
    %v1994 = vld [vmem:[#allocation6 + $0xa8] sm:$0xff]
    %v1995 = vld [vmem:[#allocation6 + $0xb0] sm:$0xff]
    %v1996 = vld [vmem:[#allocation6 + $0xb8] sm:$0xff]
    %v1997 = vld [vmem:[#allocation6 + $0xc0] sm:$0xff]
    %v1998 = vld [vmem:[#allocation6 + $0xc8] sm:$0xff]
    %v1999 = vld [vmem:[#allocation6 + $0xd0] sm:$0xff]
    %v2000 = vld [vmem:[#allocation6 + $0xd8] sm:$0xff]
    %v2001 = vld [vmem:[#allocation6 + $0xe0] sm:$0xff]
    %v2002 = vld [vmem:[#allocation6 + $0xe8] sm:$0xff]
    %v2003 = vld [vmem:[#allocation6 + $0xf0] sm:$0xff]
    %v2004 = vld [vmem:[#allocation6 + $0xf8] sm:$0xff]
    %v2005 = vld [vmem:[#allocation6 + $0x100] sm:$0xff]
    %v2006 = vld [vmem:[#allocation6 + $0x108] sm:$0xff]
    %v2007 = vld [vmem:[#allocation6 + $0x110] sm:$0xff]
    %v2008 = vld [vmem:[#allocation6 + $0x118] sm:$0xff]
    %v2009 = vld [vmem:[#allocation6 + $0x120] sm:$0xff]
    %v2010 = vld [vmem:[#allocation6 + $0x128] sm:$0xff]
    %v2011 = vld [vmem:[#allocation6 + $0x130] sm:$0xff]
    %v2012 = vld [vmem:[#allocation6 + $0x138] sm:$0xff]
    %v2013 = vld [vmem:[#allocation6 + $0x140] sm:$0xff]
    %v2014 = vld [vmem:[#allocation6 + $0x148] sm:$0xff]
    %v2015 = vld [vmem:[#allocation6 + $0x150] sm:$0xff]
    %v2016 = vld [vmem:[#allocation6 + $0x158] sm:$0xff]
    %v2017 = vld [vmem:[#allocation6 + $0x160] sm:$0xff]
    %v2018 = vld [vmem:[#allocation6 + $0x168] sm:$0xff]
    %v2019 = vld [vmem:[#allocation6 + $0x170] sm:$0xff]
    %v2020 = vld [vmem:[#allocation6 + $0x178] sm:$0xff]
    %v2021 = vld [vmem:[#allocation6 + $0x180] sm:$0xff]
    %v2022 = vld [vmem:[#allocation6 + $0x188] sm:$0xff]
    %v2023 = vld [vmem:[#allocation6 + $0x190] sm:$0xff]
    %v2024 = vld [vmem:[#allocation6 + $0x198] sm:$0xff]
    %v2025 = vld [vmem:[#allocation6 + $0x1a0] sm:$0xff]
    %v2026 = vld [vmem:[#allocation6 + $0x1a8] sm:$0xff]
    %v2027 = vld [vmem:[#allocation6 + $0x1b0] sm:$0xff]
    %v2028 = vld [vmem:[#allocation6 + $0x1b8] sm:$0xff]
    %v2029 = vld [vmem:[#allocation6 + $0x1c0] sm:$0xff]
    %v2030 = vld [vmem:[#allocation6 + $0x1c8] sm:$0xff]
    %v2031 = vld [vmem:[#allocation6 + $0x1d0] sm:$0xff]
    %v2032 = vld [vmem:[#allocation6 + $0x1d8] sm:$0xff]
    %v2033 = vld [vmem:[#allocation6 + $0x1e0] sm:$0xff]
    %v2034 = vld [vmem:[#allocation6 + $0x1e8] sm:$0xff]
    %v2035 = vld [vmem:[#allocation6 + $0x1f0] sm:$0xff]
    %v2036 = vld [vmem:[#allocation6 + $0x1f8] sm:$0xff]
    %v2037 = vld [vmem:[#allocation6 + $0x200] sm:$0xff]
    %v2038 = vld [vmem:[#allocation6 + $0x208] sm:$0xff]
    %v2039 = vld [vmem:[#allocation6 + $0x210] sm:$0xff]
    %v2040 = vld [vmem:[#allocation6 + $0x218] sm:$0xff]
    %v2041 = vld [vmem:[#allocation6 + $0x220] sm:$0xff]
    %v2042 = vld [vmem:[#allocation6 + $0x228] sm:$0xff]
    %v2043 = vld [vmem:[#allocation6 + $0x230] sm:$0xff]
    %v2044 = vld [vmem:[#allocation6 + $0x238] sm:$0xff]
    %v2045 = vld [vmem:[#allocation6 + $0x240] sm:$0xff]
    %v2046 = vld [vmem:[#allocation6 + $0x248] sm:$0xff]
    %v2047 = vld [vmem:[#allocation6 + $0x250] sm:$0xff]
    %v2048 = vld [vmem:[#allocation6 + $0x258] sm:$0xff]
    %v2049 = vld [vmem:[#allocation6 + $0x260] sm:$0xff]
    %v2050 = vld [vmem:[#allocation6 + $0x268] sm:$0xff]
    %v2051 = vld [vmem:[#allocation6 + $0x270] sm:$0xff]
    %v2052 = vld [vmem:[#allocation6 + $0x278] sm:$0xff]
    %v2053 = vld [vmem:[#allocation6 + $0x280] sm:$0xff]
    %v2054 = vld [vmem:[#allocation6 + $0x288] sm:$0xff]
    %v2055 = vld [vmem:[#allocation6 + $0x290] sm:$0xff]
    %v2056 = vld [vmem:[#allocation6 + $0x298] sm:$0xff]
    %v2057 = vld [vmem:[#allocation6 + $0x2a0] sm:$0xff]
    %v2058 = vld [vmem:[#allocation6 + $0x2a8] sm:$0xff]
    %v2059 = vld [vmem:[#allocation6 + $0x2b0] sm:$0xff]
    %v2060 = vld [vmem:[#allocation6 + $0x2b8] sm:$0xff]
    %v2061 = vld [vmem:[#allocation6 + $0x2c0] sm:$0xff]
    %v2062 = vld [vmem:[#allocation6 + $0x2c8] sm:$0xff]
    %v2063 = vld [vmem:[#allocation6 + $0x2d0] sm:$0xff]
    %v2064 = vld [vmem:[#allocation6 + $0x2d8] sm:$0xff]
    %v2065 = vld [vmem:[#allocation6 + $0x2e0] sm:$0xff]
    %v2066 = vld [vmem:[#allocation6 + $0x2e8] sm:$0xff]
    %v2067 = vld [vmem:[#allocation6 + $0x2f0] sm:$0xff]
    %v2068 = vld [vmem:[#allocation6 + $0x2f8] sm:$0xff]
    %v2069 = vld [vmem:[#allocation6 + $0x300] sm:$0xff]
    %v2070 = vld [vmem:[#allocation6 + $0x308] sm:$0xff]
    %v2071 = vld [vmem:[#allocation6 + $0x310] sm:$0xff]
    %v2072 = vld [vmem:[#allocation6 + $0x318] sm:$0xff]
    %v2073 = vld [vmem:[#allocation6 + $0x320] sm:$0xff]
    %v2074 = vld [vmem:[#allocation6 + $0x328] sm:$0xff]
    %v2075 = vld [vmem:[#allocation6 + $0x330] sm:$0xff]
    %v2076 = vld [vmem:[#allocation6 + $0x338] sm:$0xff]
    %v2077 = vld [vmem:[#allocation6 + $0x340] sm:$0xff]
    %v2078 = vld [vmem:[#allocation6 + $0x348] sm:$0xff]
    %v2079 = vld [vmem:[#allocation6 + $0x350] sm:$0xff]
    %v2080 = vld [vmem:[#allocation6 + $0x358] sm:$0xff]
    %v2081 = vld [vmem:[#allocation6 + $0x360] sm:$0xff]
    %v2082 = vld [vmem:[#allocation6 + $0x368] sm:$0xff]
    %v2083 = vld [vmem:[#allocation6 + $0x370] sm:$0xff]
    %v2084 = vld [vmem:[#allocation6 + $0x378] sm:$0xff]
    %v2085 = vld [vmem:[#allocation6 + $0x380] sm:$0xff]
    %v2086 = vld [vmem:[#allocation6 + $0x388] sm:$0xff]
    %v2087 = vld [vmem:[#allocation6 + $0x390] sm:$0xff]
    %v2088 = vld [vmem:[#allocation6 + $0x398] sm:$0xff]
    %v2089 = vld [vmem:[#allocation6 + $0x3a0] sm:$0xff]
    %v2090 = vld [vmem:[#allocation6 + $0x3a8] sm:$0xff]
    %v2091 = vld [vmem:[#allocation6 + $0x3b0] sm:$0xff]
    %v2092 = vld [vmem:[#allocation6 + $0x3b8] sm:$0xff]
    %v2093 = vld [vmem:[#allocation6 + $0x3c0] sm:$0xff]
    %v2094 = vld [vmem:[#allocation6 + $0x3c8] sm:$0xff]
    %v2095 = vld [vmem:[#allocation6 + $0x3d0] sm:$0xff]
    %v2096 = vld [vmem:[#allocation6 + $0x3d8] sm:$0xff]
    %v2097 = vld [vmem:[#allocation6 + $0x3e0] sm:$0xff]
    %v2098 = vld [vmem:[#allocation6 + $0x3e8] sm:$0xff]
    %v2099 = vld [vmem:[#allocation6 + $0x3f0] sm:$0xff]
    %v2100 = vld [vmem:[#allocation6 + $0x3f8] sm:$0xff]
    %v2101 = vld [vmem:[%s3] sm:$0xf]
    %v2103 = vlaneseq
    %v2104 = vshrl.u32 %v2103, 7
    %v2105 = vsub.s32 0, %v2104
    %v2106 = vrot.slane %v2101, %v2105
    %v2107 = vlaneseq
    %v2108 = vshrl.u32 %v2107, 7
    %v2109 = vsub.s32 1, %v2108
    %v2110 = vrot.slane %v2101, %v2109
    %v2111 = vlaneseq
    %v2112 = vshrl.u32 %v2111, 7
    %v2113 = vsub.s32 2, %v2112
    %v2114 = vrot.slane %v2101, %v2113
    %v2115 = vlaneseq
    %v2116 = vshrl.u32 %v2115, 7
    %v2117 = vsub.s32 3, %v2116
    %v2118 = vrot.slane %v2101, %v2117
    %2123 = vmatprep.subr.mxu0 %v2034
    %2124 = vmatpush1.msra.mxu0 %v2033
    %2125 = vmatprep.subr.mxu0 %v2030
    %2126 = vmatpush1.msra.mxu0 %v2029
    %2127 = vmatprep.subr.mxu0 %v2026
    %2128 = vmatpush1.msra.mxu0 %v2025
    %2129 = vmatprep.subr.mxu0 %v2022
    %2130 = vmatpush1.msra.mxu0 %v2021
    %2131 = vmatprep.subr.mxu0 %v2018
    %2132 = vmatpush1.msra.mxu0 %v2017
    %2133 = vmatprep.subr.mxu0 %v2014
    %2134 = vmatpush1.msra.mxu0 %v2013
    %2135 = vmatprep.subr.mxu0 %v2010
    %2136 = vmatpush1.msra.mxu0 %v2009
    %2137 = vmatprep.subr.mxu0 %v2006
    %2138 = vmatpush1.msra.mxu0 %v2005
    %2139 = vmatprep.subr.mxu0 %v2002
    %2140 = vmatpush1.msra.mxu0 %v2001
    %2141 = vmatprep.subr.mxu0 %v1998
    %2142 = vmatpush1.msra.mxu0 %v1997
    %2143 = vmatprep.subr.mxu0 %v1994
    %2144 = vmatpush1.msra.mxu0 %v1993
    %2145 = vmatprep.subr.mxu0 %v1990
    %2146 = vmatpush1.msra.mxu0 %v1989
    %2147 = vmatprep.subr.mxu0 %v1986
    %2148 = vmatpush1.msra.mxu0 %v1985
    %2149 = vmatprep.subr.mxu0 %v1982
    %2150 = vmatpush1.msra.mxu0 %v1981
    %2151 = vmatprep.subr.mxu0 %v1978
    %2152 = vmatpush1.msra.mxu0 %v1977
    %2153 = vmatprep.subr.mxu0 %v1974
    %2154 = vmatpush1.msra.mxu0 %v1973
    %2155 = vmatprep.subr.mxu0 %v2098
    %2156 = vmatpush2.msra.mxu0 %v2097
    %2157 = vmatprep.subr.mxu0 %v2094
    %2158 = vmatpush2.msra.mxu0 %v2093
    %2159 = vmatprep.subr.mxu0 %v2090
    %2160 = vmatpush2.msra.mxu0 %v2089
    %2161 = vmatprep.subr.mxu0 %v2086
    %2162 = vmatpush2.msra.mxu0 %v2085
    %2163 = vmatprep.subr.mxu0 %v2082
    %2164 = vmatpush2.msra.mxu0 %v2081
    %2165 = vmatprep.subr.mxu0 %v2078
    %2166 = vmatpush2.msra.mxu0 %v2077
    %2167 = vmatprep.subr.mxu0 %v2074
    %2168 = vmatpush2.msra.mxu0 %v2073
    %2169 = vmatprep.subr.mxu0 %v2070
    %2170 = vmatpush2.msra.mxu0 %v2069
    %2171 = vmatprep.subr.mxu0 %v2066
    %2172 = vmatpush2.msra.mxu0 %v2065
    %2173 = vmatprep.subr.mxu0 %v2062
    %2174 = vmatpush2.msra.mxu0 %v2061
    %2175 = vmatprep.subr.mxu0 %v2058
    %2176 = vmatpush2.msra.mxu0 %v2057
    %2177 = vmatprep.subr.mxu0 %v2054
    %2178 = vmatpush2.msra.mxu0 %v2053
    %2179 = vmatprep.subr.mxu0 %v2050
    %2180 = vmatpush2.msra.mxu0 %v2049
    %2181 = vmatprep.subr.mxu0 %v2046
    %2182 = vmatpush2.msra.mxu0 %v2045
    %2183 = vmatprep.subr.mxu0 %v2042
    %2184 = vmatpush2.msra.mxu0 %v2041
    %2185 = vmatprep.subr.mxu0 %v2038
    %2186 = vmatpush2.msra.mxu0 %v2037
    %2187 = vmatprep.mubr.f32.mxu0 %v1972
    %2188 = vmatmul.mubr.f32.gmra.mxu0 %v1969
    %v2189 = vpop.f32.mrf.mxu0
    %v2190 = vadd.f32 %v2106, %v2189
    %v2191 = vpop.f32.mrf.mxu0
    %v2192 = vadd.f32 %v2110, %v2191
    %2193 = vdwg.mxu0
    %2194 = vmatprep.subr.mxu0 %v2036
    %2195 = vmatpush1.msra.mxu0 %v2035
    %2196 = vmatprep.subr.mxu0 %v2032
    %2197 = vmatpush1.msra.mxu0 %v2031
    %2198 = vmatprep.subr.mxu0 %v2028
    %2199 = vmatpush1.msra.mxu0 %v2027
    %2200 = vmatprep.subr.mxu0 %v2024
    %2201 = vmatpush1.msra.mxu0 %v2023
    %2202 = vmatprep.subr.mxu0 %v2020
    %2203 = vmatpush1.msra.mxu0 %v2019
    %2204 = vmatprep.subr.mxu0 %v2016
    %2205 = vmatpush1.msra.mxu0 %v2015
    %2206 = vmatprep.subr.mxu0 %v2012
    %2207 = vmatpush1.msra.mxu0 %v2011
    %2208 = vmatprep.subr.mxu0 %v2008
    %2209 = vmatpush1.msra.mxu0 %v2007
    %2210 = vmatprep.subr.mxu0 %v2004
    %2211 = vmatpush1.msra.mxu0 %v2003
    %2212 = vmatprep.subr.mxu0 %v2000
    %2213 = vmatpush1.msra.mxu0 %v1999
    %2214 = vmatprep.subr.mxu0 %v1996
    %2215 = vmatpush1.msra.mxu0 %v1995
    %2216 = vmatprep.subr.mxu0 %v1992
    %2217 = vmatpush1.msra.mxu0 %v1991
    %2218 = vmatprep.subr.mxu0 %v1988
    %2219 = vmatpush1.msra.mxu0 %v1987
    %2220 = vmatprep.subr.mxu0 %v1984
    %2221 = vmatpush1.msra.mxu0 %v1983
    %2222 = vmatprep.subr.mxu0 %v1980
    %2223 = vmatpush1.msra.mxu0 %v1979
    %2224 = vmatprep.subr.mxu0 %v1976
    %2225 = vmatpush1.msra.mxu0 %v1975
    %2226 = vmatprep.subr.mxu0 %v2100
    %2227 = vmatpush2.msra.mxu0 %v2099
    %2228 = vmatprep.subr.mxu0 %v2096
    %2229 = vmatpush2.msra.mxu0 %v2095
    %2230 = vmatprep.subr.mxu0 %v2092
    %2231 = vmatpush2.msra.mxu0 %v2091
    %2232 = vmatprep.subr.mxu0 %v2088
    %2233 = vmatpush2.msra.mxu0 %v2087
    %2234 = vmatprep.subr.mxu0 %v2084
    %2235 = vmatpush2.msra.mxu0 %v2083
    %2236 = vmatprep.subr.mxu0 %v2080
    %2237 = vmatpush2.msra.mxu0 %v2079
    %2238 = vmatprep.subr.mxu0 %v2076
    %2239 = vmatpush2.msra.mxu0 %v2075
    %2240 = vmatprep.subr.mxu0 %v2072
    %2241 = vmatpush2.msra.mxu0 %v2071
    %2242 = vmatprep.subr.mxu0 %v2068
    %2243 = vmatpush2.msra.mxu0 %v2067
    %2244 = vmatprep.subr.mxu0 %v2064
    %2245 = vmatpush2.msra.mxu0 %v2063
    %2246 = vmatprep.subr.mxu0 %v2060
    %2247 = vmatpush2.msra.mxu0 %v2059
    %2248 = vmatprep.subr.mxu0 %v2056
    %2249 = vmatpush2.msra.mxu0 %v2055
    %2250 = vmatprep.subr.mxu0 %v2052
    %2251 = vmatpush2.msra.mxu0 %v2051
    %2252 = vmatprep.subr.mxu0 %v2048
    %2253 = vmatpush2.msra.mxu0 %v2047
    %2254 = vmatprep.subr.mxu0 %v2044
    %2255 = vmatpush2.msra.mxu0 %v2043
    %2256 = vmatprep.subr.mxu0 %v2040
    %2257 = vmatpush2.msra.mxu0 %v2039
    %2258 = vmatprep.mubr.f32.mxu0 %v1972
    %2259 = vmatmul.mubr.f32.gmra.mxu0 %v1969
    %v2260 = vpop.f32.mrf.mxu0
    %v2261 = vadd.f32 %v2114, %v2260
    %v2262 = vpop.f32.mrf.mxu0
    %v2263 = vadd.f32 %v2118, %v2262
    %2264 = vdwg.mxu0
    %v2265 = vld [vmem:[#allocation5] sm:$0xff]
    %v2266 = vxor.u32 %v2190, 2147483648
    %v2267 = vmul.f32 %v2266, 1.442695
    %v2268 = vpow.pop %v2267
    %v2269 = vadd.f32 %v2268, 1.0
    %v2270 = vrcp.pop %v2269
    %v2271 = vmul.f32 1.0, %v2270
    %v2272 = vxor.u32 %v2192, 2147483648
    %v2273 = vmul.f32 %v2272, 1.442695
    %v2274 = vpow.pop %v2273
    %v2275 = vadd.f32 %v2274, 1.0
    %v2276 = vrcp.pop %v2275
    %v2277 = vmul.f32 1.0, %v2276
    %v2278 = vtanh.pop %v2261
    %v2279 = vxor.u32 %v2263, 2147483648
    %v2280 = vmul.f32 %v2279, 1.442695
    %v2281 = vpow.pop %v2280
    %v2282 = vadd.f32 %v2281, 1.0
    %v2283 = vrcp.pop %v2282
    %v2284 = vmul.f32 1.0, %v2283
    %v2285 = vmul.f32 %v2277, %v2265
    %v2286 = vmul.f32 %v2271, %v2278
    %v2287 = vadd.f32 %v2285, %v2286
    %v2288 = vtanh.pop %v2287
    %v2289 = vmul.f32 %v2284, %v2288
    %2290 = vst [vmem:[#allocation4] sm:$0xff] %v2289
    %2291 = vst [vmem:[#allocation5] sm:$0xff] %v2287
    %s2292 = scalar_lea.vmem %s0, 128
    %v2293 = vld [vmem:[%s2292] sm:$0xff]
    %v2294 = vld [vmem:[%s2292 + $0x8] sm:$0xff]
    %v2295 = vld [vmem:[%s2292 + $0x10] sm:$0xff]
    %v2296 = vld [vmem:[%s2292 + $0x18] sm:$0xff]
    %v2297 = vld [vmem:[#allocation2] sm:$0xff]
    %v2298 = vld [vmem:[%s1] sm:$0xff]
    %v2299 = vld [vmem:[%s1 + $0x8] sm:$0xff]
    %v2300 = vld [vmem:[%s1 + $0x10] sm:$0xff]
    %v2301 = vld [vmem:[%s1 + $0x18] sm:$0xff]
    %v2302 = vld [vmem:[%s1 + $0x20] sm:$0xff]
    %v2303 = vld [vmem:[%s1 + $0x28] sm:$0xff]
    %v2304 = vld [vmem:[%s1 + $0x30] sm:$0xff]
    %v2305 = vld [vmem:[%s1 + $0x38] sm:$0xff]
    %v2306 = vld [vmem:[%s1 + $0x40] sm:$0xff]
    %v2307 = vld [vmem:[%s1 + $0x48] sm:$0xff]
    %v2308 = vld [vmem:[%s1 + $0x50] sm:$0xff]
    %v2309 = vld [vmem:[%s1 + $0x58] sm:$0xff]
    %v2310 = vld [vmem:[%s1 + $0x60] sm:$0xff]
    %v2311 = vld [vmem:[%s1 + $0x68] sm:$0xff]
    %v2312 = vld [vmem:[%s1 + $0x70] sm:$0xff]
    %v2313 = vld [vmem:[%s1 + $0x78] sm:$0xff]
    %v2314 = vld [vmem:[%s1 + $0x80] sm:$0xff]
    %v2315 = vld [vmem:[%s1 + $0x88] sm:$0xff]
    %v2316 = vld [vmem:[%s1 + $0x90] sm:$0xff]
    %v2317 = vld [vmem:[%s1 + $0x98] sm:$0xff]
    %v2318 = vld [vmem:[%s1 + $0xa0] sm:$0xff]
    %v2319 = vld [vmem:[%s1 + $0xa8] sm:$0xff]
    %v2320 = vld [vmem:[%s1 + $0xb0] sm:$0xff]
    %v2321 = vld [vmem:[%s1 + $0xb8] sm:$0xff]
    %v2322 = vld [vmem:[%s1 + $0xc0] sm:$0xff]
    %v2323 = vld [vmem:[%s1 + $0xc8] sm:$0xff]
    %v2324 = vld [vmem:[%s1 + $0xd0] sm:$0xff]
    %v2325 = vld [vmem:[%s1 + $0xd8] sm:$0xff]
    %v2326 = vld [vmem:[%s1 + $0xe0] sm:$0xff]
    %v2327 = vld [vmem:[%s1 + $0xe8] sm:$0xff]
    %v2328 = vld [vmem:[%s1 + $0xf0] sm:$0xff]
    %v2329 = vld [vmem:[%s1 + $0xf8] sm:$0xff]
    %v2330 = vld [vmem:[%s1 + $0x100] sm:$0xff]
    %v2331 = vld [vmem:[%s1 + $0x108] sm:$0xff]
    %v2332 = vld [vmem:[%s1 + $0x110] sm:$0xff]
    %v2333 = vld [vmem:[%s1 + $0x118] sm:$0xff]
    %v2334 = vld [vmem:[%s1 + $0x120] sm:$0xff]
    %v2335 = vld [vmem:[%s1 + $0x128] sm:$0xff]
    %v2336 = vld [vmem:[%s1 + $0x130] sm:$0xff]
    %v2337 = vld [vmem:[%s1 + $0x138] sm:$0xff]
    %v2338 = vld [vmem:[%s1 + $0x140] sm:$0xff]
    %v2339 = vld [vmem:[%s1 + $0x148] sm:$0xff]
    %v2340 = vld [vmem:[%s1 + $0x150] sm:$0xff]
    %v2341 = vld [vmem:[%s1 + $0x158] sm:$0xff]
    %v2342 = vld [vmem:[%s1 + $0x160] sm:$0xff]
    %v2343 = vld [vmem:[%s1 + $0x168] sm:$0xff]
    %v2344 = vld [vmem:[%s1 + $0x170] sm:$0xff]
    %v2345 = vld [vmem:[%s1 + $0x178] sm:$0xff]
    %v2346 = vld [vmem:[%s1 + $0x180] sm:$0xff]
    %v2347 = vld [vmem:[%s1 + $0x188] sm:$0xff]
    %v2348 = vld [vmem:[%s1 + $0x190] sm:$0xff]
    %v2349 = vld [vmem:[%s1 + $0x198] sm:$0xff]
    %v2350 = vld [vmem:[%s1 + $0x1a0] sm:$0xff]
    %v2351 = vld [vmem:[%s1 + $0x1a8] sm:$0xff]
    %v2352 = vld [vmem:[%s1 + $0x1b0] sm:$0xff]
    %v2353 = vld [vmem:[%s1 + $0x1b8] sm:$0xff]
    %v2354 = vld [vmem:[%s1 + $0x1c0] sm:$0xff]
    %v2355 = vld [vmem:[%s1 + $0x1c8] sm:$0xff]
    %v2356 = vld [vmem:[%s1 + $0x1d0] sm:$0xff]
    %v2357 = vld [vmem:[%s1 + $0x1d8] sm:$0xff]
    %v2358 = vld [vmem:[%s1 + $0x1e0] sm:$0xff]
    %v2359 = vld [vmem:[%s1 + $0x1e8] sm:$0xff]
    %v2360 = vld [vmem:[%s1 + $0x1f0] sm:$0xff]
    %v2361 = vld [vmem:[%s1 + $0x1f8] sm:$0xff]
    %2362 = vmatprep.subr.mxu0 %v2359
    %2363 = vmatpush1.msra.mxu0 %v2358
    %2364 = vmatprep.subr.mxu0 %v2355
    %2365 = vmatpush1.msra.mxu0 %v2354
    %2366 = vmatprep.subr.mxu0 %v2351
    %2367 = vmatpush1.msra.mxu0 %v2350
    %2368 = vmatprep.subr.mxu0 %v2347
    %2369 = vmatpush1.msra.mxu0 %v2346
    %2370 = vmatprep.subr.mxu0 %v2343
    %2371 = vmatpush1.msra.mxu0 %v2342
    %2372 = vmatprep.subr.mxu0 %v2339
    %2373 = vmatpush1.msra.mxu0 %v2338
    %2374 = vmatprep.subr.mxu0 %v2335
    %2375 = vmatpush1.msra.mxu0 %v2334
    %2376 = vmatprep.subr.mxu0 %v2331
    %2377 = vmatpush1.msra.mxu0 %v2330
    %2378 = vmatprep.subr.mxu0 %v2327
    %2379 = vmatpush1.msra.mxu0 %v2326
    %2380 = vmatprep.subr.mxu0 %v2323
    %2381 = vmatpush1.msra.mxu0 %v2322
    %2382 = vmatprep.subr.mxu0 %v2319
    %2383 = vmatpush1.msra.mxu0 %v2318
    %2384 = vmatprep.subr.mxu0 %v2315
    %2385 = vmatpush1.msra.mxu0 %v2314
    %2386 = vmatprep.subr.mxu0 %v2311
    %2387 = vmatpush1.msra.mxu0 %v2310
    %2388 = vmatprep.subr.mxu0 %v2307
    %2389 = vmatpush1.msra.mxu0 %v2306
    %2390 = vmatprep.subr.mxu0 %v2303
    %2391 = vmatpush1.msra.mxu0 %v2302
    %2392 = vmatprep.subr.mxu0 %v2299
    %2393 = vmatpush1.msra.mxu0 %v2298
    %2394 = vmatprep.subr.mxu0 0.0
    %2395 = vmatpush2.msra.mxu0 0.0
    %2396 = vmatprep.subr.mxu0 0.0
    %2397 = vmatpush2.msra.mxu0 0.0
    %2398 = vmatprep.subr.mxu0 0.0
    %2399 = vmatpush2.msra.mxu0 0.0
    %2400 = vmatprep.subr.mxu0 0.0
    %2401 = vmatpush2.msra.mxu0 0.0
    %2402 = vmatprep.subr.mxu0 0.0
    %2403 = vmatpush2.msra.mxu0 0.0
    %2404 = vmatprep.subr.mxu0 0.0
    %2405 = vmatpush2.msra.mxu0 0.0
    %2406 = vmatprep.subr.mxu0 0.0
    %2407 = vmatpush2.msra.mxu0 0.0
    %2408 = vmatprep.subr.mxu0 0.0
    %2409 = vmatpush2.msra.mxu0 0.0
    %2410 = vmatprep.subr.mxu0 0.0
    %2411 = vmatpush2.msra.mxu0 0.0
    %2412 = vmatprep.subr.mxu0 0.0
    %2413 = vmatpush2.msra.mxu0 0.0
    %2414 = vmatprep.subr.mxu0 0.0
    %2415 = vmatpush2.msra.mxu0 0.0
    %2416 = vmatprep.subr.mxu0 0.0
    %2417 = vmatpush2.msra.mxu0 0.0
    %2418 = vmatprep.subr.mxu0 0.0
    %2419 = vmatpush2.msra.mxu0 0.0
    %2420 = vmatprep.subr.mxu0 0.0
    %2421 = vmatpush2.msra.mxu0 0.0
    %2422 = vmatprep.subr.mxu0 0.0
    %2423 = vmatpush2.msra.mxu0 0.0
    %2424 = vmatprep.subr.mxu0 0.0
    %2425 = vmatpush2.msra.mxu0 0.0
    %2426 = vmatprep.mubr.f32.mxu0 0.0
    %2427 = vmatmul.mubr.f32.gmra.mxu0 %v2297
    %v2428 = vpop.f32.mrf.mxu0
    %v2429 = vadd.f32 0.0, %v2428
    %v2430 = vpop.f32.mrf.mxu0
    %v2431 = vadd.f32 0.0, %v2430
    %2432 = vdwg.mxu0
    %2433 = vmatprep.subr.mxu0 %v2361
    %2434 = vmatpush1.msra.mxu0 %v2360
    %2435 = vmatprep.subr.mxu0 %v2357
    %2436 = vmatpush1.msra.mxu0 %v2356
    %2437 = vmatprep.subr.mxu0 %v2353
    %2438 = vmatpush1.msra.mxu0 %v2352
    %2439 = vmatprep.subr.mxu0 %v2349
    %2440 = vmatpush1.msra.mxu0 %v2348
    %2441 = vmatprep.subr.mxu0 %v2345
    %2442 = vmatpush1.msra.mxu0 %v2344
    %2443 = vmatprep.subr.mxu0 %v2341
    %2444 = vmatpush1.msra.mxu0 %v2340
    %2445 = vmatprep.subr.mxu0 %v2337
    %2446 = vmatpush1.msra.mxu0 %v2336
    %2447 = vmatprep.subr.mxu0 %v2333
    %2448 = vmatpush1.msra.mxu0 %v2332
    %2449 = vmatprep.subr.mxu0 %v2329
    %2450 = vmatpush1.msra.mxu0 %v2328
    %2451 = vmatprep.subr.mxu0 %v2325
    %2452 = vmatpush1.msra.mxu0 %v2324
    %2453 = vmatprep.subr.mxu0 %v2321
    %2454 = vmatpush1.msra.mxu0 %v2320
    %2455 = vmatprep.subr.mxu0 %v2317
    %2456 = vmatpush1.msra.mxu0 %v2316
    %2457 = vmatprep.subr.mxu0 %v2313
    %2458 = vmatpush1.msra.mxu0 %v2312
    %2459 = vmatprep.subr.mxu0 %v2309
    %2460 = vmatpush1.msra.mxu0 %v2308
    %2461 = vmatprep.subr.mxu0 %v2305
    %2462 = vmatpush1.msra.mxu0 %v2304
    %2463 = vmatprep.subr.mxu0 %v2301
    %2464 = vmatpush1.msra.mxu0 %v2300
    %2465 = vmatprep.subr.mxu0 0.0
    %2466 = vmatpush2.msra.mxu0 0.0
    %2467 = vmatprep.subr.mxu0 0.0
    %2468 = vmatpush2.msra.mxu0 0.0
    %2469 = vmatprep.subr.mxu0 0.0
    %2470 = vmatpush2.msra.mxu0 0.0
    %2471 = vmatprep.subr.mxu0 0.0
    %2472 = vmatpush2.msra.mxu0 0.0
    %2473 = vmatprep.subr.mxu0 0.0
    %2474 = vmatpush2.msra.mxu0 0.0
    %2475 = vmatprep.subr.mxu0 0.0
    %2476 = vmatpush2.msra.mxu0 0.0
    %2477 = vmatprep.subr.mxu0 0.0
    %2478 = vmatpush2.msra.mxu0 0.0
    %2479 = vmatprep.subr.mxu0 0.0
    %2480 = vmatpush2.msra.mxu0 0.0
    %2481 = vmatprep.subr.mxu0 0.0
    %2482 = vmatpush2.msra.mxu0 0.0
    %2483 = vmatprep.subr.mxu0 0.0
    %2484 = vmatpush2.msra.mxu0 0.0
    %2485 = vmatprep.subr.mxu0 0.0
    %2486 = vmatpush2.msra.mxu0 0.0
    %2487 = vmatprep.subr.mxu0 0.0
    %2488 = vmatpush2.msra.mxu0 0.0
    %2489 = vmatprep.subr.mxu0 0.0
    %2490 = vmatpush2.msra.mxu0 0.0
    %2491 = vmatprep.subr.mxu0 0.0
    %2492 = vmatpush2.msra.mxu0 0.0
    %2493 = vmatprep.subr.mxu0 0.0
    %2494 = vmatpush2.msra.mxu0 0.0
    %2495 = vmatprep.subr.mxu0 0.0
    %2496 = vmatpush2.msra.mxu0 0.0
    %2497 = vmatprep.mubr.f32.mxu0 0.0
    %2498 = vmatmul.mubr.f32.gmra.mxu0 %v2297
    %v2499 = vpop.f32.mrf.mxu0
    %v2500 = vadd.f32 0.0, %v2499
    %v2501 = vpop.f32.mrf.mxu0
    %v2502 = vadd.f32 0.0, %v2501
    %2503 = vdwg.mxu0
    %v2504 = vadd.f32 %v2293, %v2429
    %v2505 = vadd.f32 %v2294, %v2431
    %v2506 = vadd.f32 %v2295, %v2500
    %v2507 = vadd.f32 %v2296, %v2502
    %v2508 = vld [vmem:[#allocation3] sm:$0xff]
    %v2509 = vxor.u32 %v2504, 2147483648
    %v2510 = vmul.f32 %v2509, 1.442695
    %v2511 = vpow.pop %v2510
    %v2512 = vadd.f32 %v2511, 1.0
    %v2513 = vrcp.pop %v2512
    %v2514 = vmul.f32 1.0, %v2513
    %v2515 = vxor.u32 %v2505, 2147483648
    %v2516 = vmul.f32 %v2515, 1.442695
    %v2517 = vpow.pop %v2516
    %v2518 = vadd.f32 %v2517, 1.0
    %v2519 = vrcp.pop %v2518
    %v2520 = vmul.f32 1.0, %v2519
    %v2521 = vtanh.pop %v2506
    %v2522 = vxor.u32 %v2507, 2147483648
    %v2523 = vmul.f32 %v2522, 1.442695
    %v2524 = vpow.pop %v2523
    %v2525 = vadd.f32 %v2524, 1.0
    %v2526 = vrcp.pop %v2525
    %v2527 = vmul.f32 1.0, %v2526
    %v2528 = vmul.f32 %v2520, %v2508
    %v2529 = vmul.f32 %v2514, %v2521
    %v2530 = vadd.f32 %v2528, %v2529
    %v2531 = vtanh.pop %v2530
    %v2532 = vmul.f32 %v2527, %v2531
    %2533 = vst [vmem:[#allocation2] sm:$0xff] %v2532
    %2534 = vst [vmem:[#allocation3] sm:$0xff] %v2530
    %v2535 = vld [vmem:[#allocation4] sm:$0xff]
    %v2536 = vld [vmem:[#allocation6] sm:$0xff]
    %v2537 = vld [vmem:[#allocation6 + $0x8] sm:$0xff]
    %v2538 = vld [vmem:[#allocation6 + $0x10] sm:$0xff]
    %v2539 = vld [vmem:[#allocation6 + $0x18] sm:$0xff]
    %v2540 = vld [vmem:[#allocation6 + $0x20] sm:$0xff]
    %v2541 = vld [vmem:[#allocation6 + $0x28] sm:$0xff]
    %v2542 = vld [vmem:[#allocation6 + $0x30] sm:$0xff]
    %v2543 = vld [vmem:[#allocation6 + $0x38] sm:$0xff]
    %v2544 = vld [vmem:[#allocation6 + $0x40] sm:$0xff]
    %v2545 = vld [vmem:[#allocation6 + $0x48] sm:$0xff]
    %v2546 = vld [vmem:[#allocation6 + $0x50] sm:$0xff]
    %v2547 = vld [vmem:[#allocation6 + $0x58] sm:$0xff]
    %v2548 = vld [vmem:[#allocation6 + $0x60] sm:$0xff]
    %v2549 = vld [vmem:[#allocation6 + $0x68] sm:$0xff]
    %v2550 = vld [vmem:[#allocation6 + $0x70] sm:$0xff]
    %v2551 = vld [vmem:[#allocation6 + $0x78] sm:$0xff]
    %v2552 = vld [vmem:[#allocation6 + $0x80] sm:$0xff]
    %v2553 = vld [vmem:[#allocation6 + $0x88] sm:$0xff]
    %v2554 = vld [vmem:[#allocation6 + $0x90] sm:$0xff]
    %v2555 = vld [vmem:[#allocation6 + $0x98] sm:$0xff]
    %v2556 = vld [vmem:[#allocation6 + $0xa0] sm:$0xff]
    %v2557 = vld [vmem:[#allocation6 + $0xa8] sm:$0xff]
    %v2558 = vld [vmem:[#allocation6 + $0xb0] sm:$0xff]
    %v2559 = vld [vmem:[#allocation6 + $0xb8] sm:$0xff]
    %v2560 = vld [vmem:[#allocation6 + $0xc0] sm:$0xff]
    %v2561 = vld [vmem:[#allocation6 + $0xc8] sm:$0xff]
    %v2562 = vld [vmem:[#allocation6 + $0xd0] sm:$0xff]
    %v2563 = vld [vmem:[#allocation6 + $0xd8] sm:$0xff]
    %v2564 = vld [vmem:[#allocation6 + $0xe0] sm:$0xff]
    %v2565 = vld [vmem:[#allocation6 + $0xe8] sm:$0xff]
    %v2566 = vld [vmem:[#allocation6 + $0xf0] sm:$0xff]
    %v2567 = vld [vmem:[#allocation6 + $0xf8] sm:$0xff]
    %v2568 = vld [vmem:[#allocation6 + $0x100] sm:$0xff]
    %v2569 = vld [vmem:[#allocation6 + $0x108] sm:$0xff]
    %v2570 = vld [vmem:[#allocation6 + $0x110] sm:$0xff]
    %v2571 = vld [vmem:[#allocation6 + $0x118] sm:$0xff]
    %v2572 = vld [vmem:[#allocation6 + $0x120] sm:$0xff]
    %v2573 = vld [vmem:[#allocation6 + $0x128] sm:$0xff]
    %v2574 = vld [vmem:[#allocation6 + $0x130] sm:$0xff]
    %v2575 = vld [vmem:[#allocation6 + $0x138] sm:$0xff]
    %v2576 = vld [vmem:[#allocation6 + $0x140] sm:$0xff]
    %v2577 = vld [vmem:[#allocation6 + $0x148] sm:$0xff]
    %v2578 = vld [vmem:[#allocation6 + $0x150] sm:$0xff]
    %v2579 = vld [vmem:[#allocation6 + $0x158] sm:$0xff]
    %v2580 = vld [vmem:[#allocation6 + $0x160] sm:$0xff]
    %v2581 = vld [vmem:[#allocation6 + $0x168] sm:$0xff]
    %v2582 = vld [vmem:[#allocation6 + $0x170] sm:$0xff]
    %v2583 = vld [vmem:[#allocation6 + $0x178] sm:$0xff]
    %v2584 = vld [vmem:[#allocation6 + $0x180] sm:$0xff]
    %v2585 = vld [vmem:[#allocation6 + $0x188] sm:$0xff]
    %v2586 = vld [vmem:[#allocation6 + $0x190] sm:$0xff]
    %v2587 = vld [vmem:[#allocation6 + $0x198] sm:$0xff]
    %v2588 = vld [vmem:[#allocation6 + $0x1a0] sm:$0xff]
    %v2589 = vld [vmem:[#allocation6 + $0x1a8] sm:$0xff]
    %v2590 = vld [vmem:[#allocation6 + $0x1b0] sm:$0xff]
    %v2591 = vld [vmem:[#allocation6 + $0x1b8] sm:$0xff]
    %v2592 = vld [vmem:[#allocation6 + $0x1c0] sm:$0xff]
    %v2593 = vld [vmem:[#allocation6 + $0x1c8] sm:$0xff]
    %v2594 = vld [vmem:[#allocation6 + $0x1d0] sm:$0xff]
    %v2595 = vld [vmem:[#allocation6 + $0x1d8] sm:$0xff]
    %v2596 = vld [vmem:[#allocation6 + $0x1e0] sm:$0xff]
    %v2597 = vld [vmem:[#allocation6 + $0x1e8] sm:$0xff]
    %v2598 = vld [vmem:[#allocation6 + $0x1f0] sm:$0xff]
    %v2599 = vld [vmem:[#allocation6 + $0x1f8] sm:$0xff]
    %v2600 = vld [vmem:[#allocation6 + $0x200] sm:$0xff]
    %v2601 = vld [vmem:[#allocation6 + $0x208] sm:$0xff]
    %v2602 = vld [vmem:[#allocation6 + $0x210] sm:$0xff]
    %v2603 = vld [vmem:[#allocation6 + $0x218] sm:$0xff]
    %v2604 = vld [vmem:[#allocation6 + $0x220] sm:$0xff]
    %v2605 = vld [vmem:[#allocation6 + $0x228] sm:$0xff]
    %v2606 = vld [vmem:[#allocation6 + $0x230] sm:$0xff]
    %v2607 = vld [vmem:[#allocation6 + $0x238] sm:$0xff]
    %v2608 = vld [vmem:[#allocation6 + $0x240] sm:$0xff]
    %v2609 = vld [vmem:[#allocation6 + $0x248] sm:$0xff]
    %v2610 = vld [vmem:[#allocation6 + $0x250] sm:$0xff]
    %v2611 = vld [vmem:[#allocation6 + $0x258] sm:$0xff]
    %v2612 = vld [vmem:[#allocation6 + $0x260] sm:$0xff]
    %v2613 = vld [vmem:[#allocation6 + $0x268] sm:$0xff]
    %v2614 = vld [vmem:[#allocation6 + $0x270] sm:$0xff]
    %v2615 = vld [vmem:[#allocation6 + $0x278] sm:$0xff]
    %v2616 = vld [vmem:[#allocation6 + $0x280] sm:$0xff]
    %v2617 = vld [vmem:[#allocation6 + $0x288] sm:$0xff]
    %v2618 = vld [vmem:[#allocation6 + $0x290] sm:$0xff]
    %v2619 = vld [vmem:[#allocation6 + $0x298] sm:$0xff]
    %v2620 = vld [vmem:[#allocation6 + $0x2a0] sm:$0xff]
    %v2621 = vld [vmem:[#allocation6 + $0x2a8] sm:$0xff]
    %v2622 = vld [vmem:[#allocation6 + $0x2b0] sm:$0xff]
    %v2623 = vld [vmem:[#allocation6 + $0x2b8] sm:$0xff]
    %v2624 = vld [vmem:[#allocation6 + $0x2c0] sm:$0xff]
    %v2625 = vld [vmem:[#allocation6 + $0x2c8] sm:$0xff]
    %v2626 = vld [vmem:[#allocation6 + $0x2d0] sm:$0xff]
    %v2627 = vld [vmem:[#allocation6 + $0x2d8] sm:$0xff]
    %v2628 = vld [vmem:[#allocation6 + $0x2e0] sm:$0xff]
    %v2629 = vld [vmem:[#allocation6 + $0x2e8] sm:$0xff]
    %v2630 = vld [vmem:[#allocation6 + $0x2f0] sm:$0xff]
    %v2631 = vld [vmem:[#allocation6 + $0x2f8] sm:$0xff]
    %v2632 = vld [vmem:[#allocation6 + $0x300] sm:$0xff]
    %v2633 = vld [vmem:[#allocation6 + $0x308] sm:$0xff]
    %v2634 = vld [vmem:[#allocation6 + $0x310] sm:$0xff]
    %v2635 = vld [vmem:[#allocation6 + $0x318] sm:$0xff]
    %v2636 = vld [vmem:[#allocation6 + $0x320] sm:$0xff]
    %v2637 = vld [vmem:[#allocation6 + $0x328] sm:$0xff]
    %v2638 = vld [vmem:[#allocation6 + $0x330] sm:$0xff]
    %v2639 = vld [vmem:[#allocation6 + $0x338] sm:$0xff]
    %v2640 = vld [vmem:[#allocation6 + $0x340] sm:$0xff]
    %v2641 = vld [vmem:[#allocation6 + $0x348] sm:$0xff]
    %v2642 = vld [vmem:[#allocation6 + $0x350] sm:$0xff]
    %v2643 = vld [vmem:[#allocation6 + $0x358] sm:$0xff]
    %v2644 = vld [vmem:[#allocation6 + $0x360] sm:$0xff]
    %v2645 = vld [vmem:[#allocation6 + $0x368] sm:$0xff]
    %v2646 = vld [vmem:[#allocation6 + $0x370] sm:$0xff]
    %v2647 = vld [vmem:[#allocation6 + $0x378] sm:$0xff]
    %v2648 = vld [vmem:[#allocation6 + $0x380] sm:$0xff]
    %v2649 = vld [vmem:[#allocation6 + $0x388] sm:$0xff]
    %v2650 = vld [vmem:[#allocation6 + $0x390] sm:$0xff]
    %v2651 = vld [vmem:[#allocation6 + $0x398] sm:$0xff]
    %v2652 = vld [vmem:[#allocation6 + $0x3a0] sm:$0xff]
    %v2653 = vld [vmem:[#allocation6 + $0x3a8] sm:$0xff]
    %v2654 = vld [vmem:[#allocation6 + $0x3b0] sm:$0xff]
    %v2655 = vld [vmem:[#allocation6 + $0x3b8] sm:$0xff]
    %v2656 = vld [vmem:[#allocation6 + $0x3c0] sm:$0xff]
    %v2657 = vld [vmem:[#allocation6 + $0x3c8] sm:$0xff]
    %v2658 = vld [vmem:[#allocation6 + $0x3d0] sm:$0xff]
    %v2659 = vld [vmem:[#allocation6 + $0x3d8] sm:$0xff]
    %v2660 = vld [vmem:[#allocation6 + $0x3e0] sm:$0xff]
    %v2661 = vld [vmem:[#allocation6 + $0x3e8] sm:$0xff]
    %v2662 = vld [vmem:[#allocation6 + $0x3f0] sm:$0xff]
    %v2663 = vld [vmem:[#allocation6 + $0x3f8] sm:$0xff]
    %v2664 = vld [vmem:[%s3] sm:$0xf]
    %v2666 = vlaneseq
    %v2667 = vshrl.u32 %v2666, 7
    %v2668 = vsub.s32 0, %v2667
    %v2669 = vrot.slane %v2664, %v2668
    %v2670 = vlaneseq
    %v2671 = vshrl.u32 %v2670, 7
    %v2672 = vsub.s32 1, %v2671
    %v2673 = vrot.slane %v2664, %v2672
    %v2674 = vlaneseq
    %v2675 = vshrl.u32 %v2674, 7
    %v2676 = vsub.s32 2, %v2675
    %v2677 = vrot.slane %v2664, %v2676
    %v2678 = vlaneseq
    %v2679 = vshrl.u32 %v2678, 7
    %v2680 = vsub.s32 3, %v2679
    %v2681 = vrot.slane %v2664, %v2680
    %2686 = vmatprep.subr.mxu0 %v2597
    %2687 = vmatpush1.msra.mxu0 %v2596
    %2688 = vmatprep.subr.mxu0 %v2593
    %2689 = vmatpush1.msra.mxu0 %v2592
    %2690 = vmatprep.subr.mxu0 %v2589
    %2691 = vmatpush1.msra.mxu0 %v2588
    %2692 = vmatprep.subr.mxu0 %v2585
    %2693 = vmatpush1.msra.mxu0 %v2584
    %2694 = vmatprep.subr.mxu0 %v2581
    %2695 = vmatpush1.msra.mxu0 %v2580
    %2696 = vmatprep.subr.mxu0 %v2577
    %2697 = vmatpush1.msra.mxu0 %v2576
    %2698 = vmatprep.subr.mxu0 %v2573
    %2699 = vmatpush1.msra.mxu0 %v2572
    %2700 = vmatprep.subr.mxu0 %v2569
    %2701 = vmatpush1.msra.mxu0 %v2568
    %2702 = vmatprep.subr.mxu0 %v2565
    %2703 = vmatpush1.msra.mxu0 %v2564
    %2704 = vmatprep.subr.mxu0 %v2561
    %2705 = vmatpush1.msra.mxu0 %v2560
    %2706 = vmatprep.subr.mxu0 %v2557
    %2707 = vmatpush1.msra.mxu0 %v2556
    %2708 = vmatprep.subr.mxu0 %v2553
    %2709 = vmatpush1.msra.mxu0 %v2552
    %2710 = vmatprep.subr.mxu0 %v2549
    %2711 = vmatpush1.msra.mxu0 %v2548
    %2712 = vmatprep.subr.mxu0 %v2545
    %2713 = vmatpush1.msra.mxu0 %v2544
    %2714 = vmatprep.subr.mxu0 %v2541
    %2715 = vmatpush1.msra.mxu0 %v2540
    %2716 = vmatprep.subr.mxu0 %v2537
    %2717 = vmatpush1.msra.mxu0 %v2536
    %2718 = vmatprep.subr.mxu0 %v2661
    %2719 = vmatpush2.msra.mxu0 %v2660
    %2720 = vmatprep.subr.mxu0 %v2657
    %2721 = vmatpush2.msra.mxu0 %v2656
    %2722 = vmatprep.subr.mxu0 %v2653
    %2723 = vmatpush2.msra.mxu0 %v2652
    %2724 = vmatprep.subr.mxu0 %v2649
    %2725 = vmatpush2.msra.mxu0 %v2648
    %2726 = vmatprep.subr.mxu0 %v2645
    %2727 = vmatpush2.msra.mxu0 %v2644
    %2728 = vmatprep.subr.mxu0 %v2641
    %2729 = vmatpush2.msra.mxu0 %v2640
    %2730 = vmatprep.subr.mxu0 %v2637
    %2731 = vmatpush2.msra.mxu0 %v2636
    %2732 = vmatprep.subr.mxu0 %v2633
    %2733 = vmatpush2.msra.mxu0 %v2632
    %2734 = vmatprep.subr.mxu0 %v2629
    %2735 = vmatpush2.msra.mxu0 %v2628
    %2736 = vmatprep.subr.mxu0 %v2625
    %2737 = vmatpush2.msra.mxu0 %v2624
    %2738 = vmatprep.subr.mxu0 %v2621
    %2739 = vmatpush2.msra.mxu0 %v2620
    %2740 = vmatprep.subr.mxu0 %v2617
    %2741 = vmatpush2.msra.mxu0 %v2616
    %2742 = vmatprep.subr.mxu0 %v2613
    %2743 = vmatpush2.msra.mxu0 %v2612
    %2744 = vmatprep.subr.mxu0 %v2609
    %2745 = vmatpush2.msra.mxu0 %v2608
    %2746 = vmatprep.subr.mxu0 %v2605
    %2747 = vmatpush2.msra.mxu0 %v2604
    %2748 = vmatprep.subr.mxu0 %v2601
    %2749 = vmatpush2.msra.mxu0 %v2600
    %2750 = vmatprep.mubr.f32.mxu0 %v2535
    %2751 = vmatmul.mubr.f32.gmra.mxu0 %v2532
    %v2752 = vpop.f32.mrf.mxu0
    %v2753 = vadd.f32 %v2669, %v2752
    %v2754 = vpop.f32.mrf.mxu0
    %v2755 = vadd.f32 %v2673, %v2754
    %2756 = vdwg.mxu0
    %2757 = vmatprep.subr.mxu0 %v2599
    %2758 = vmatpush1.msra.mxu0 %v2598
    %2759 = vmatprep.subr.mxu0 %v2595
    %2760 = vmatpush1.msra.mxu0 %v2594
    %2761 = vmatprep.subr.mxu0 %v2591
    %2762 = vmatpush1.msra.mxu0 %v2590
    %2763 = vmatprep.subr.mxu0 %v2587
    %2764 = vmatpush1.msra.mxu0 %v2586
    %2765 = vmatprep.subr.mxu0 %v2583
    %2766 = vmatpush1.msra.mxu0 %v2582
    %2767 = vmatprep.subr.mxu0 %v2579
    %2768 = vmatpush1.msra.mxu0 %v2578
    %2769 = vmatprep.subr.mxu0 %v2575
    %2770 = vmatpush1.msra.mxu0 %v2574
    %2771 = vmatprep.subr.mxu0 %v2571
    %2772 = vmatpush1.msra.mxu0 %v2570
    %2773 = vmatprep.subr.mxu0 %v2567
    %2774 = vmatpush1.msra.mxu0 %v2566
    %2775 = vmatprep.subr.mxu0 %v2563
    %2776 = vmatpush1.msra.mxu0 %v2562
    %2777 = vmatprep.subr.mxu0 %v2559
    %2778 = vmatpush1.msra.mxu0 %v2558
    %2779 = vmatprep.subr.mxu0 %v2555
    %2780 = vmatpush1.msra.mxu0 %v2554
    %2781 = vmatprep.subr.mxu0 %v2551
    %2782 = vmatpush1.msra.mxu0 %v2550
    %2783 = vmatprep.subr.mxu0 %v2547
    %2784 = vmatpush1.msra.mxu0 %v2546
    %2785 = vmatprep.subr.mxu0 %v2543
    %2786 = vmatpush1.msra.mxu0 %v2542
    %2787 = vmatprep.subr.mxu0 %v2539
    %2788 = vmatpush1.msra.mxu0 %v2538
    %2789 = vmatprep.subr.mxu0 %v2663
    %2790 = vmatpush2.msra.mxu0 %v2662
    %2791 = vmatprep.subr.mxu0 %v2659
    %2792 = vmatpush2.msra.mxu0 %v2658
    %2793 = vmatprep.subr.mxu0 %v2655
    %2794 = vmatpush2.msra.mxu0 %v2654
    %2795 = vmatprep.subr.mxu0 %v2651
    %2796 = vmatpush2.msra.mxu0 %v2650
    %2797 = vmatprep.subr.mxu0 %v2647
    %2798 = vmatpush2.msra.mxu0 %v2646
    %2799 = vmatprep.subr.mxu0 %v2643
    %2800 = vmatpush2.msra.mxu0 %v2642
    %2801 = vmatprep.subr.mxu0 %v2639
    %2802 = vmatpush2.msra.mxu0 %v2638
    %2803 = vmatprep.subr.mxu0 %v2635
    %2804 = vmatpush2.msra.mxu0 %v2634
    %2805 = vmatprep.subr.mxu0 %v2631
    %2806 = vmatpush2.msra.mxu0 %v2630
    %2807 = vmatprep.subr.mxu0 %v2627
    %2808 = vmatpush2.msra.mxu0 %v2626
    %2809 = vmatprep.subr.mxu0 %v2623
    %2810 = vmatpush2.msra.mxu0 %v2622
    %2811 = vmatprep.subr.mxu0 %v2619
    %2812 = vmatpush2.msra.mxu0 %v2618
    %2813 = vmatprep.subr.mxu0 %v2615
    %2814 = vmatpush2.msra.mxu0 %v2614
    %2815 = vmatprep.subr.mxu0 %v2611
    %2816 = vmatpush2.msra.mxu0 %v2610
    %2817 = vmatprep.subr.mxu0 %v2607
    %2818 = vmatpush2.msra.mxu0 %v2606
    %2819 = vmatprep.subr.mxu0 %v2603
    %2820 = vmatpush2.msra.mxu0 %v2602
    %2821 = vmatprep.mubr.f32.mxu0 %v2535
    %2822 = vmatmul.mubr.f32.gmra.mxu0 %v2532
    %v2823 = vpop.f32.mrf.mxu0
    %v2824 = vadd.f32 %v2677, %v2823
    %v2825 = vpop.f32.mrf.mxu0
    %v2826 = vadd.f32 %v2681, %v2825
    %2827 = vdwg.mxu0
    %v2828 = vld [vmem:[#allocation5] sm:$0xff]
    %v2829 = vxor.u32 %v2753, 2147483648
    %v2830 = vmul.f32 %v2829, 1.442695
    %v2831 = vpow.pop %v2830
    %v2832 = vadd.f32 %v2831, 1.0
    %v2833 = vrcp.pop %v2832
    %v2834 = vmul.f32 1.0, %v2833
    %v2835 = vxor.u32 %v2755, 2147483648
    %v2836 = vmul.f32 %v2835, 1.442695
    %v2837 = vpow.pop %v2836
    %v2838 = vadd.f32 %v2837, 1.0
    %v2839 = vrcp.pop %v2838
    %v2840 = vmul.f32 1.0, %v2839
    %v2841 = vtanh.pop %v2824
    %v2842 = vxor.u32 %v2826, 2147483648
    %v2843 = vmul.f32 %v2842, 1.442695
    %v2844 = vpow.pop %v2843
    %v2845 = vadd.f32 %v2844, 1.0
    %v2846 = vrcp.pop %v2845
    %v2847 = vmul.f32 1.0, %v2846
    %v2848 = vmul.f32 %v2840, %v2828
    %v2849 = vmul.f32 %v2834, %v2841
    %v2850 = vadd.f32 %v2848, %v2849
    %v2851 = vtanh.pop %v2850
    %v2852 = vmul.f32 %v2847, %v2851
    %2853 = vst [vmem:[#allocation4] sm:$0xff] %v2852
    %2854 = vst [vmem:[#allocation5] sm:$0xff] %v2850
    %s2855 = scalar_lea.vmem %s0, 160
    %v2856 = vld [vmem:[%s2855] sm:$0xff]
    %v2857 = vld [vmem:[%s2855 + $0x8] sm:$0xff]
    %v2858 = vld [vmem:[%s2855 + $0x10] sm:$0xff]
    %v2859 = vld [vmem:[%s2855 + $0x18] sm:$0xff]
    %v2860 = vld [vmem:[#allocation2] sm:$0xff]
    %v2861 = vld [vmem:[%s1] sm:$0xff]
    %v2862 = vld [vmem:[%s1 + $0x8] sm:$0xff]
    %v2863 = vld [vmem:[%s1 + $0x10] sm:$0xff]
    %v2864 = vld [vmem:[%s1 + $0x18] sm:$0xff]
    %v2865 = vld [vmem:[%s1 + $0x20] sm:$0xff]
    %v2866 = vld [vmem:[%s1 + $0x28] sm:$0xff]
    %v2867 = vld [vmem:[%s1 + $0x30] sm:$0xff]
    %v2868 = vld [vmem:[%s1 + $0x38] sm:$0xff]
    %v2869 = vld [vmem:[%s1 + $0x40] sm:$0xff]
    %v2870 = vld [vmem:[%s1 + $0x48] sm:$0xff]
    %v2871 = vld [vmem:[%s1 + $0x50] sm:$0xff]
    %v2872 = vld [vmem:[%s1 + $0x58] sm:$0xff]
    %v2873 = vld [vmem:[%s1 + $0x60] sm:$0xff]
    %v2874 = vld [vmem:[%s1 + $0x68] sm:$0xff]
    %v2875 = vld [vmem:[%s1 + $0x70] sm:$0xff]
    %v2876 = vld [vmem:[%s1 + $0x78] sm:$0xff]
    %v2877 = vld [vmem:[%s1 + $0x80] sm:$0xff]
    %v2878 = vld [vmem:[%s1 + $0x88] sm:$0xff]
    %v2879 = vld [vmem:[%s1 + $0x90] sm:$0xff]
    %v2880 = vld [vmem:[%s1 + $0x98] sm:$0xff]
    %v2881 = vld [vmem:[%s1 + $0xa0] sm:$0xff]
    %v2882 = vld [vmem:[%s1 + $0xa8] sm:$0xff]
    %v2883 = vld [vmem:[%s1 + $0xb0] sm:$0xff]
    %v2884 = vld [vmem:[%s1 + $0xb8] sm:$0xff]
    %v2885 = vld [vmem:[%s1 + $0xc0] sm:$0xff]
    %v2886 = vld [vmem:[%s1 + $0xc8] sm:$0xff]
    %v2887 = vld [vmem:[%s1 + $0xd0] sm:$0xff]
    %v2888 = vld [vmem:[%s1 + $0xd8] sm:$0xff]
    %v2889 = vld [vmem:[%s1 + $0xe0] sm:$0xff]
    %v2890 = vld [vmem:[%s1 + $0xe8] sm:$0xff]
    %v2891 = vld [vmem:[%s1 + $0xf0] sm:$0xff]
    %v2892 = vld [vmem:[%s1 + $0xf8] sm:$0xff]
    %v2893 = vld [vmem:[%s1 + $0x100] sm:$0xff]
    %v2894 = vld [vmem:[%s1 + $0x108] sm:$0xff]
    %v2895 = vld [vmem:[%s1 + $0x110] sm:$0xff]
    %v2896 = vld [vmem:[%s1 + $0x118] sm:$0xff]
    %v2897 = vld [vmem:[%s1 + $0x120] sm:$0xff]
    %v2898 = vld [vmem:[%s1 + $0x128] sm:$0xff]
    %v2899 = vld [vmem:[%s1 + $0x130] sm:$0xff]
    %v2900 = vld [vmem:[%s1 + $0x138] sm:$0xff]
    %v2901 = vld [vmem:[%s1 + $0x140] sm:$0xff]
    %v2902 = vld [vmem:[%s1 + $0x148] sm:$0xff]
    %v2903 = vld [vmem:[%s1 + $0x150] sm:$0xff]
    %v2904 = vld [vmem:[%s1 + $0x158] sm:$0xff]
    %v2905 = vld [vmem:[%s1 + $0x160] sm:$0xff]
    %v2906 = vld [vmem:[%s1 + $0x168] sm:$0xff]
    %v2907 = vld [vmem:[%s1 + $0x170] sm:$0xff]
    %v2908 = vld [vmem:[%s1 + $0x178] sm:$0xff]
    %v2909 = vld [vmem:[%s1 + $0x180] sm:$0xff]
    %v2910 = vld [vmem:[%s1 + $0x188] sm:$0xff]
    %v2911 = vld [vmem:[%s1 + $0x190] sm:$0xff]
    %v2912 = vld [vmem:[%s1 + $0x198] sm:$0xff]
    %v2913 = vld [vmem:[%s1 + $0x1a0] sm:$0xff]
    %v2914 = vld [vmem:[%s1 + $0x1a8] sm:$0xff]
    %v2915 = vld [vmem:[%s1 + $0x1b0] sm:$0xff]
    %v2916 = vld [vmem:[%s1 + $0x1b8] sm:$0xff]
    %v2917 = vld [vmem:[%s1 + $0x1c0] sm:$0xff]
    %v2918 = vld [vmem:[%s1 + $0x1c8] sm:$0xff]
    %v2919 = vld [vmem:[%s1 + $0x1d0] sm:$0xff]
    %v2920 = vld [vmem:[%s1 + $0x1d8] sm:$0xff]
    %v2921 = vld [vmem:[%s1 + $0x1e0] sm:$0xff]
    %v2922 = vld [vmem:[%s1 + $0x1e8] sm:$0xff]
    %v2923 = vld [vmem:[%s1 + $0x1f0] sm:$0xff]
    %v2924 = vld [vmem:[%s1 + $0x1f8] sm:$0xff]
    %2925 = vmatprep.subr.mxu0 %v2922
    %2926 = vmatpush1.msra.mxu0 %v2921
    %2927 = vmatprep.subr.mxu0 %v2918
    %2928 = vmatpush1.msra.mxu0 %v2917
    %2929 = vmatprep.subr.mxu0 %v2914
    %2930 = vmatpush1.msra.mxu0 %v2913
    %2931 = vmatprep.subr.mxu0 %v2910
    %2932 = vmatpush1.msra.mxu0 %v2909
    %2933 = vmatprep.subr.mxu0 %v2906
    %2934 = vmatpush1.msra.mxu0 %v2905
    %2935 = vmatprep.subr.mxu0 %v2902
    %2936 = vmatpush1.msra.mxu0 %v2901
    %2937 = vmatprep.subr.mxu0 %v2898
    %2938 = vmatpush1.msra.mxu0 %v2897
    %2939 = vmatprep.subr.mxu0 %v2894
    %2940 = vmatpush1.msra.mxu0 %v2893
    %2941 = vmatprep.subr.mxu0 %v2890
    %2942 = vmatpush1.msra.mxu0 %v2889
    %2943 = vmatprep.subr.mxu0 %v2886
    %2944 = vmatpush1.msra.mxu0 %v2885
    %2945 = vmatprep.subr.mxu0 %v2882
    %2946 = vmatpush1.msra.mxu0 %v2881
    %2947 = vmatprep.subr.mxu0 %v2878
    %2948 = vmatpush1.msra.mxu0 %v2877
    %2949 = vmatprep.subr.mxu0 %v2874
    %2950 = vmatpush1.msra.mxu0 %v2873
    %2951 = vmatprep.subr.mxu0 %v2870
    %2952 = vmatpush1.msra.mxu0 %v2869
    %2953 = vmatprep.subr.mxu0 %v2866
    %2954 = vmatpush1.msra.mxu0 %v2865
    %2955 = vmatprep.subr.mxu0 %v2862
    %2956 = vmatpush1.msra.mxu0 %v2861
    %2957 = vmatprep.subr.mxu0 0.0
    %2958 = vmatpush2.msra.mxu0 0.0
    %2959 = vmatprep.subr.mxu0 0.0
    %2960 = vmatpush2.msra.mxu0 0.0
    %2961 = vmatprep.subr.mxu0 0.0
    %2962 = vmatpush2.msra.mxu0 0.0
    %2963 = vmatprep.subr.mxu0 0.0
    %2964 = vmatpush2.msra.mxu0 0.0
    %2965 = vmatprep.subr.mxu0 0.0
    %2966 = vmatpush2.msra.mxu0 0.0
    %2967 = vmatprep.subr.mxu0 0.0
    %2968 = vmatpush2.msra.mxu0 0.0
    %2969 = vmatprep.subr.mxu0 0.0
    %2970 = vmatpush2.msra.mxu0 0.0
    %2971 = vmatprep.subr.mxu0 0.0
    %2972 = vmatpush2.msra.mxu0 0.0
    %2973 = vmatprep.subr.mxu0 0.0
    %2974 = vmatpush2.msra.mxu0 0.0
    %2975 = vmatprep.subr.mxu0 0.0
    %2976 = vmatpush2.msra.mxu0 0.0
    %2977 = vmatprep.subr.mxu0 0.0
    %2978 = vmatpush2.msra.mxu0 0.0
    %2979 = vmatprep.subr.mxu0 0.0
    %2980 = vmatpush2.msra.mxu0 0.0
    %2981 = vmatprep.subr.mxu0 0.0
    %2982 = vmatpush2.msra.mxu0 0.0
    %2983 = vmatprep.subr.mxu0 0.0
    %2984 = vmatpush2.msra.mxu0 0.0
    %2985 = vmatprep.subr.mxu0 0.0
    %2986 = vmatpush2.msra.mxu0 0.0
    %2987 = vmatprep.subr.mxu0 0.0
    %2988 = vmatpush2.msra.mxu0 0.0
    %2989 = vmatprep.mubr.f32.mxu0 0.0
    %2990 = vmatmul.mubr.f32.gmra.mxu0 %v2860
    %v2991 = vpop.f32.mrf.mxu0
    %v2992 = vadd.f32 0.0, %v2991
    %v2993 = vpop.f32.mrf.mxu0
    %v2994 = vadd.f32 0.0, %v2993
    %2995 = vdwg.mxu0
    %2996 = vmatprep.subr.mxu0 %v2924
    %2997 = vmatpush1.msra.mxu0 %v2923
    %2998 = vmatprep.subr.mxu0 %v2920
    %2999 = vmatpush1.msra.mxu0 %v2919
    %3000 = vmatprep.subr.mxu0 %v2916
    %3001 = vmatpush1.msra.mxu0 %v2915
    %3002 = vmatprep.subr.mxu0 %v2912
    %3003 = vmatpush1.msra.mxu0 %v2911
    %3004 = vmatprep.subr.mxu0 %v2908
    %3005 = vmatpush1.msra.mxu0 %v2907
    %3006 = vmatprep.subr.mxu0 %v2904
    %3007 = vmatpush1.msra.mxu0 %v2903
    %3008 = vmatprep.subr.mxu0 %v2900
    %3009 = vmatpush1.msra.mxu0 %v2899
    %3010 = vmatprep.subr.mxu0 %v2896
    %3011 = vmatpush1.msra.mxu0 %v2895
    %3012 = vmatprep.subr.mxu0 %v2892
    %3013 = vmatpush1.msra.mxu0 %v2891
    %3014 = vmatprep.subr.mxu0 %v2888
    %3015 = vmatpush1.msra.mxu0 %v2887
    %3016 = vmatprep.subr.mxu0 %v2884
    %3017 = vmatpush1.msra.mxu0 %v2883
    %3018 = vmatprep.subr.mxu0 %v2880
    %3019 = vmatpush1.msra.mxu0 %v2879
    %3020 = vmatprep.subr.mxu0 %v2876
    %3021 = vmatpush1.msra.mxu0 %v2875
    %3022 = vmatprep.subr.mxu0 %v2872
    %3023 = vmatpush1.msra.mxu0 %v2871
    %3024 = vmatprep.subr.mxu0 %v2868
    %3025 = vmatpush1.msra.mxu0 %v2867
    %3026 = vmatprep.subr.mxu0 %v2864
    %3027 = vmatpush1.msra.mxu0 %v2863
    %3028 = vmatprep.subr.mxu0 0.0
    %3029 = vmatpush2.msra.mxu0 0.0
    %3030 = vmatprep.subr.mxu0 0.0
    %3031 = vmatpush2.msra.mxu0 0.0
    %3032 = vmatprep.subr.mxu0 0.0
    %3033 = vmatpush2.msra.mxu0 0.0
    %3034 = vmatprep.subr.mxu0 0.0
    %3035 = vmatpush2.msra.mxu0 0.0
    %3036 = vmatprep.subr.mxu0 0.0
    %3037 = vmatpush2.msra.mxu0 0.0
    %3038 = vmatprep.subr.mxu0 0.0
    %3039 = vmatpush2.msra.mxu0 0.0
    %3040 = vmatprep.subr.mxu0 0.0
    %3041 = vmatpush2.msra.mxu0 0.0
    %3042 = vmatprep.subr.mxu0 0.0
    %3043 = vmatpush2.msra.mxu0 0.0
    %3044 = vmatprep.subr.mxu0 0.0
    %3045 = vmatpush2.msra.mxu0 0.0
    %3046 = vmatprep.subr.mxu0 0.0
    %3047 = vmatpush2.msra.mxu0 0.0
    %3048 = vmatprep.subr.mxu0 0.0
    %3049 = vmatpush2.msra.mxu0 0.0
    %3050 = vmatprep.subr.mxu0 0.0
    %3051 = vmatpush2.msra.mxu0 0.0
    %3052 = vmatprep.subr.mxu0 0.0
    %3053 = vmatpush2.msra.mxu0 0.0
    %3054 = vmatprep.subr.mxu0 0.0
    %3055 = vmatpush2.msra.mxu0 0.0
    %3056 = vmatprep.subr.mxu0 0.0
    %3057 = vmatpush2.msra.mxu0 0.0
    %3058 = vmatprep.subr.mxu0 0.0
    %3059 = vmatpush2.msra.mxu0 0.0
    %3060 = vmatprep.mubr.f32.mxu0 0.0
    %3061 = vmatmul.mubr.f32.gmra.mxu0 %v2860
    %v3062 = vpop.f32.mrf.mxu0
    %v3063 = vadd.f32 0.0, %v3062
    %v3064 = vpop.f32.mrf.mxu0
    %v3065 = vadd.f32 0.0, %v3064
    %3066 = vdwg.mxu0
    %v3067 = vadd.f32 %v2856, %v2992
    %v3068 = vadd.f32 %v2857, %v2994
    %v3069 = vadd.f32 %v2858, %v3063
    %v3070 = vadd.f32 %v2859, %v3065
    %v3071 = vld [vmem:[#allocation3] sm:$0xff]
    %v3072 = vxor.u32 %v3067, 2147483648
    %v3073 = vmul.f32 %v3072, 1.442695
    %v3074 = vpow.pop %v3073
    %v3075 = vadd.f32 %v3074, 1.0
    %v3076 = vrcp.pop %v3075
    %v3077 = vmul.f32 1.0, %v3076
    %v3078 = vxor.u32 %v3068, 2147483648
    %v3079 = vmul.f32 %v3078, 1.442695
    %v3080 = vpow.pop %v3079
    %v3081 = vadd.f32 %v3080, 1.0
    %v3082 = vrcp.pop %v3081
    %v3083 = vmul.f32 1.0, %v3082
    %v3084 = vtanh.pop %v3069
    %v3085 = vxor.u32 %v3070, 2147483648
    %v3086 = vmul.f32 %v3085, 1.442695
    %v3087 = vpow.pop %v3086
    %v3088 = vadd.f32 %v3087, 1.0
    %v3089 = vrcp.pop %v3088
    %v3090 = vmul.f32 1.0, %v3089
    %v3091 = vmul.f32 %v3083, %v3071
    %v3092 = vmul.f32 %v3077, %v3084
    %v3093 = vadd.f32 %v3091, %v3092
    %v3094 = vtanh.pop %v3093
    %v3095 = vmul.f32 %v3090, %v3094
    %3096 = vst [vmem:[#allocation2] sm:$0xff] %v3095
    %3097 = vst [vmem:[#allocation3] sm:$0xff] %v3093
    %v3098 = vld [vmem:[#allocation4] sm:$0xff]
    %v3099 = vld [vmem:[#allocation6] sm:$0xff]
    %v3100 = vld [vmem:[#allocation6 + $0x8] sm:$0xff]
    %v3101 = vld [vmem:[#allocation6 + $0x10] sm:$0xff]
    %v3102 = vld [vmem:[#allocation6 + $0x18] sm:$0xff]
    %v3103 = vld [vmem:[#allocation6 + $0x20] sm:$0xff]
    %v3104 = vld [vmem:[#allocation6 + $0x28] sm:$0xff]
    %v3105 = vld [vmem:[#allocation6 + $0x30] sm:$0xff]
    %v3106 = vld [vmem:[#allocation6 + $0x38] sm:$0xff]
    %v3107 = vld [vmem:[#allocation6 + $0x40] sm:$0xff]
    %v3108 = vld [vmem:[#allocation6 + $0x48] sm:$0xff]
    %v3109 = vld [vmem:[#allocation6 + $0x50] sm:$0xff]
    %v3110 = vld [vmem:[#allocation6 + $0x58] sm:$0xff]
    %v3111 = vld [vmem:[#allocation6 + $0x60] sm:$0xff]
    %v3112 = vld [vmem:[#allocation6 + $0x68] sm:$0xff]
    %v3113 = vld [vmem:[#allocation6 + $0x70] sm:$0xff]
    %v3114 = vld [vmem:[#allocation6 + $0x78] sm:$0xff]
    %v3115 = vld [vmem:[#allocation6 + $0x80] sm:$0xff]
    %v3116 = vld [vmem:[#allocation6 + $0x88] sm:$0xff]
    %v3117 = vld [vmem:[#allocation6 + $0x90] sm:$0xff]
    %v3118 = vld [vmem:[#allocation6 + $0x98] sm:$0xff]
    %v3119 = vld [vmem:[#allocation6 + $0xa0] sm:$0xff]
    %v3120 = vld [vmem:[#allocation6 + $0xa8] sm:$0xff]
    %v3121 = vld [vmem:[#allocation6 + $0xb0] sm:$0xff]
    %v3122 = vld [vmem:[#allocation6 + $0xb8] sm:$0xff]
    %v3123 = vld [vmem:[#allocation6 + $0xc0] sm:$0xff]
    %v3124 = vld [vmem:[#allocation6 + $0xc8] sm:$0xff]
    %v3125 = vld [vmem:[#allocation6 + $0xd0] sm:$0xff]
    %v3126 = vld [vmem:[#allocation6 + $0xd8] sm:$0xff]
    %v3127 = vld [vmem:[#allocation6 + $0xe0] sm:$0xff]
    %v3128 = vld [vmem:[#allocation6 + $0xe8] sm:$0xff]
    %v3129 = vld [vmem:[#allocation6 + $0xf0] sm:$0xff]
    %v3130 = vld [vmem:[#allocation6 + $0xf8] sm:$0xff]
    %v3131 = vld [vmem:[#allocation6 + $0x100] sm:$0xff]
    %v3132 = vld [vmem:[#allocation6 + $0x108] sm:$0xff]
    %v3133 = vld [vmem:[#allocation6 + $0x110] sm:$0xff]
    %v3134 = vld [vmem:[#allocation6 + $0x118] sm:$0xff]
    %v3135 = vld [vmem:[#allocation6 + $0x120] sm:$0xff]
    %v3136 = vld [vmem:[#allocation6 + $0x128] sm:$0xff]
    %v3137 = vld [vmem:[#allocation6 + $0x130] sm:$0xff]
    %v3138 = vld [vmem:[#allocation6 + $0x138] sm:$0xff]
    %v3139 = vld [vmem:[#allocation6 + $0x140] sm:$0xff]
    %v3140 = vld [vmem:[#allocation6 + $0x148] sm:$0xff]
    %v3141 = vld [vmem:[#allocation6 + $0x150] sm:$0xff]
    %v3142 = vld [vmem:[#allocation6 + $0x158] sm:$0xff]
    %v3143 = vld [vmem:[#allocation6 + $0x160] sm:$0xff]
    %v3144 = vld [vmem:[#allocation6 + $0x168] sm:$0xff]
    %v3145 = vld [vmem:[#allocation6 + $0x170] sm:$0xff]
    %v3146 = vld [vmem:[#allocation6 + $0x178] sm:$0xff]
    %v3147 = vld [vmem:[#allocation6 + $0x180] sm:$0xff]
    %v3148 = vld [vmem:[#allocation6 + $0x188] sm:$0xff]
    %v3149 = vld [vmem:[#allocation6 + $0x190] sm:$0xff]
    %v3150 = vld [vmem:[#allocation6 + $0x198] sm:$0xff]
    %v3151 = vld [vmem:[#allocation6 + $0x1a0] sm:$0xff]
    %v3152 = vld [vmem:[#allocation6 + $0x1a8] sm:$0xff]
    %v3153 = vld [vmem:[#allocation6 + $0x1b0] sm:$0xff]
    %v3154 = vld [vmem:[#allocation6 + $0x1b8] sm:$0xff]
    %v3155 = vld [vmem:[#allocation6 + $0x1c0] sm:$0xff]
    %v3156 = vld [vmem:[#allocation6 + $0x1c8] sm:$0xff]
    %v3157 = vld [vmem:[#allocation6 + $0x1d0] sm:$0xff]
    %v3158 = vld [vmem:[#allocation6 + $0x1d8] sm:$0xff]
    %v3159 = vld [vmem:[#allocation6 + $0x1e0] sm:$0xff]
    %v3160 = vld [vmem:[#allocation6 + $0x1e8] sm:$0xff]
    %v3161 = vld [vmem:[#allocation6 + $0x1f0] sm:$0xff]
    %v3162 = vld [vmem:[#allocation6 + $0x1f8] sm:$0xff]
    %v3163 = vld [vmem:[#allocation6 + $0x200] sm:$0xff]
    %v3164 = vld [vmem:[#allocation6 + $0x208] sm:$0xff]
    %v3165 = vld [vmem:[#allocation6 + $0x210] sm:$0xff]
    %v3166 = vld [vmem:[#allocation6 + $0x218] sm:$0xff]
    %v3167 = vld [vmem:[#allocation6 + $0x220] sm:$0xff]
    %v3168 = vld [vmem:[#allocation6 + $0x228] sm:$0xff]
    %v3169 = vld [vmem:[#allocation6 + $0x230] sm:$0xff]
    %v3170 = vld [vmem:[#allocation6 + $0x238] sm:$0xff]
    %v3171 = vld [vmem:[#allocation6 + $0x240] sm:$0xff]
    %v3172 = vld [vmem:[#allocation6 + $0x248] sm:$0xff]
    %v3173 = vld [vmem:[#allocation6 + $0x250] sm:$0xff]
    %v3174 = vld [vmem:[#allocation6 + $0x258] sm:$0xff]
    %v3175 = vld [vmem:[#allocation6 + $0x260] sm:$0xff]
    %v3176 = vld [vmem:[#allocation6 + $0x268] sm:$0xff]
    %v3177 = vld [vmem:[#allocation6 + $0x270] sm:$0xff]
    %v3178 = vld [vmem:[#allocation6 + $0x278] sm:$0xff]
    %v3179 = vld [vmem:[#allocation6 + $0x280] sm:$0xff]
    %v3180 = vld [vmem:[#allocation6 + $0x288] sm:$0xff]
    %v3181 = vld [vmem:[#allocation6 + $0x290] sm:$0xff]
    %v3182 = vld [vmem:[#allocation6 + $0x298] sm:$0xff]
    %v3183 = vld [vmem:[#allocation6 + $0x2a0] sm:$0xff]
    %v3184 = vld [vmem:[#allocation6 + $0x2a8] sm:$0xff]
    %v3185 = vld [vmem:[#allocation6 + $0x2b0] sm:$0xff]
    %v3186 = vld [vmem:[#allocation6 + $0x2b8] sm:$0xff]
    %v3187 = vld [vmem:[#allocation6 + $0x2c0] sm:$0xff]
    %v3188 = vld [vmem:[#allocation6 + $0x2c8] sm:$0xff]
    %v3189 = vld [vmem:[#allocation6 + $0x2d0] sm:$0xff]
    %v3190 = vld [vmem:[#allocation6 + $0x2d8] sm:$0xff]
    %v3191 = vld [vmem:[#allocation6 + $0x2e0] sm:$0xff]
    %v3192 = vld [vmem:[#allocation6 + $0x2e8] sm:$0xff]
    %v3193 = vld [vmem:[#allocation6 + $0x2f0] sm:$0xff]
    %v3194 = vld [vmem:[#allocation6 + $0x2f8] sm:$0xff]
    %v3195 = vld [vmem:[#allocation6 + $0x300] sm:$0xff]
    %v3196 = vld [vmem:[#allocation6 + $0x308] sm:$0xff]
    %v3197 = vld [vmem:[#allocation6 + $0x310] sm:$0xff]
    %v3198 = vld [vmem:[#allocation6 + $0x318] sm:$0xff]
    %v3199 = vld [vmem:[#allocation6 + $0x320] sm:$0xff]
    %v3200 = vld [vmem:[#allocation6 + $0x328] sm:$0xff]
    %v3201 = vld [vmem:[#allocation6 + $0x330] sm:$0xff]
    %v3202 = vld [vmem:[#allocation6 + $0x338] sm:$0xff]
    %v3203 = vld [vmem:[#allocation6 + $0x340] sm:$0xff]
    %v3204 = vld [vmem:[#allocation6 + $0x348] sm:$0xff]
    %v3205 = vld [vmem:[#allocation6 + $0x350] sm:$0xff]
    %v3206 = vld [vmem:[#allocation6 + $0x358] sm:$0xff]
    %v3207 = vld [vmem:[#allocation6 + $0x360] sm:$0xff]
    %v3208 = vld [vmem:[#allocation6 + $0x368] sm:$0xff]
    %v3209 = vld [vmem:[#allocation6 + $0x370] sm:$0xff]
    %v3210 = vld [vmem:[#allocation6 + $0x378] sm:$0xff]
    %v3211 = vld [vmem:[#allocation6 + $0x380] sm:$0xff]
    %v3212 = vld [vmem:[#allocation6 + $0x388] sm:$0xff]
    %v3213 = vld [vmem:[#allocation6 + $0x390] sm:$0xff]
    %v3214 = vld [vmem:[#allocation6 + $0x398] sm:$0xff]
    %v3215 = vld [vmem:[#allocation6 + $0x3a0] sm:$0xff]
    %v3216 = vld [vmem:[#allocation6 + $0x3a8] sm:$0xff]
    %v3217 = vld [vmem:[#allocation6 + $0x3b0] sm:$0xff]
    %v3218 = vld [vmem:[#allocation6 + $0x3b8] sm:$0xff]
    %v3219 = vld [vmem:[#allocation6 + $0x3c0] sm:$0xff]
    %v3220 = vld [vmem:[#allocation6 + $0x3c8] sm:$0xff]
    %v3221 = vld [vmem:[#allocation6 + $0x3d0] sm:$0xff]
    %v3222 = vld [vmem:[#allocation6 + $0x3d8] sm:$0xff]
    %v3223 = vld [vmem:[#allocation6 + $0x3e0] sm:$0xff]
    %v3224 = vld [vmem:[#allocation6 + $0x3e8] sm:$0xff]
    %v3225 = vld [vmem:[#allocation6 + $0x3f0] sm:$0xff]
    %v3226 = vld [vmem:[#allocation6 + $0x3f8] sm:$0xff]
    %v3227 = vld [vmem:[%s3] sm:$0xf]
    %v3229 = vlaneseq
    %v3230 = vshrl.u32 %v3229, 7
    %v3231 = vsub.s32 0, %v3230
    %v3232 = vrot.slane %v3227, %v3231
    %v3233 = vlaneseq
    %v3234 = vshrl.u32 %v3233, 7
    %v3235 = vsub.s32 1, %v3234
    %v3236 = vrot.slane %v3227, %v3235
    %v3237 = vlaneseq
    %v3238 = vshrl.u32 %v3237, 7
    %v3239 = vsub.s32 2, %v3238
    %v3240 = vrot.slane %v3227, %v3239
    %v3241 = vlaneseq
    %v3242 = vshrl.u32 %v3241, 7
    %v3243 = vsub.s32 3, %v3242
    %v3244 = vrot.slane %v3227, %v3243
    %3249 = vmatprep.subr.mxu0 %v3160
    %3250 = vmatpush1.msra.mxu0 %v3159
    %3251 = vmatprep.subr.mxu0 %v3156
    %3252 = vmatpush1.msra.mxu0 %v3155
    %3253 = vmatprep.subr.mxu0 %v3152
    %3254 = vmatpush1.msra.mxu0 %v3151
    %3255 = vmatprep.subr.mxu0 %v3148
    %3256 = vmatpush1.msra.mxu0 %v3147
    %3257 = vmatprep.subr.mxu0 %v3144
    %3258 = vmatpush1.msra.mxu0 %v3143
    %3259 = vmatprep.subr.mxu0 %v3140
    %3260 = vmatpush1.msra.mxu0 %v3139
    %3261 = vmatprep.subr.mxu0 %v3136
    %3262 = vmatpush1.msra.mxu0 %v3135
    %3263 = vmatprep.subr.mxu0 %v3132
    %3264 = vmatpush1.msra.mxu0 %v3131
    %3265 = vmatprep.subr.mxu0 %v3128
    %3266 = vmatpush1.msra.mxu0 %v3127
    %3267 = vmatprep.subr.mxu0 %v3124
    %3268 = vmatpush1.msra.mxu0 %v3123
    %3269 = vmatprep.subr.mxu0 %v3120
    %3270 = vmatpush1.msra.mxu0 %v3119
    %3271 = vmatprep.subr.mxu0 %v3116
    %3272 = vmatpush1.msra.mxu0 %v3115
    %3273 = vmatprep.subr.mxu0 %v3112
    %3274 = vmatpush1.msra.mxu0 %v3111
    %3275 = vmatprep.subr.mxu0 %v3108
    %3276 = vmatpush1.msra.mxu0 %v3107
    %3277 = vmatprep.subr.mxu0 %v3104
    %3278 = vmatpush1.msra.mxu0 %v3103
    %3279 = vmatprep.subr.mxu0 %v3100
    %3280 = vmatpush1.msra.mxu0 %v3099
    %3281 = vmatprep.subr.mxu0 %v3224
    %3282 = vmatpush2.msra.mxu0 %v3223
    %3283 = vmatprep.subr.mxu0 %v3220
    %3284 = vmatpush2.msra.mxu0 %v3219
    %3285 = vmatprep.subr.mxu0 %v3216
    %3286 = vmatpush2.msra.mxu0 %v3215
    %3287 = vmatprep.subr.mxu0 %v3212
    %3288 = vmatpush2.msra.mxu0 %v3211
    %3289 = vmatprep.subr.mxu0 %v3208
    %3290 = vmatpush2.msra.mxu0 %v3207
    %3291 = vmatprep.subr.mxu0 %v3204
    %3292 = vmatpush2.msra.mxu0 %v3203
    %3293 = vmatprep.subr.mxu0 %v3200
    %3294 = vmatpush2.msra.mxu0 %v3199
    %3295 = vmatprep.subr.mxu0 %v3196
    %3296 = vmatpush2.msra.mxu0 %v3195
    %3297 = vmatprep.subr.mxu0 %v3192
    %3298 = vmatpush2.msra.mxu0 %v3191
    %3299 = vmatprep.subr.mxu0 %v3188
    %3300 = vmatpush2.msra.mxu0 %v3187
    %3301 = vmatprep.subr.mxu0 %v3184
    %3302 = vmatpush2.msra.mxu0 %v3183
    %3303 = vmatprep.subr.mxu0 %v3180
    %3304 = vmatpush2.msra.mxu0 %v3179
    %3305 = vmatprep.subr.mxu0 %v3176
    %3306 = vmatpush2.msra.mxu0 %v3175
    %3307 = vmatprep.subr.mxu0 %v3172
    %3308 = vmatpush2.msra.mxu0 %v3171
    %3309 = vmatprep.subr.mxu0 %v3168
    %3310 = vmatpush2.msra.mxu0 %v3167
    %3311 = vmatprep.subr.mxu0 %v3164
    %3312 = vmatpush2.msra.mxu0 %v3163
    %3313 = vmatprep.mubr.f32.mxu0 %v3098
    %3314 = vmatmul.mubr.f32.gmra.mxu0 %v3095
    %v3315 = vpop.f32.mrf.mxu0
    %v3316 = vadd.f32 %v3232, %v3315
    %v3317 = vpop.f32.mrf.mxu0
    %v3318 = vadd.f32 %v3236, %v3317
    %3319 = vdwg.mxu0
    %3320 = vmatprep.subr.mxu0 %v3162
    %3321 = vmatpush1.msra.mxu0 %v3161
    %3322 = vmatprep.subr.mxu0 %v3158
    %3323 = vmatpush1.msra.mxu0 %v3157
    %3324 = vmatprep.subr.mxu0 %v3154
    %3325 = vmatpush1.msra.mxu0 %v3153
    %3326 = vmatprep.subr.mxu0 %v3150
    %3327 = vmatpush1.msra.mxu0 %v3149
    %3328 = vmatprep.subr.mxu0 %v3146
    %3329 = vmatpush1.msra.mxu0 %v3145
    %3330 = vmatprep.subr.mxu0 %v3142
    %3331 = vmatpush1.msra.mxu0 %v3141
    %3332 = vmatprep.subr.mxu0 %v3138
    %3333 = vmatpush1.msra.mxu0 %v3137
    %3334 = vmatprep.subr.mxu0 %v3134
    %3335 = vmatpush1.msra.mxu0 %v3133
    %3336 = vmatprep.subr.mxu0 %v3130
    %3337 = vmatpush1.msra.mxu0 %v3129
    %3338 = vmatprep.subr.mxu0 %v3126
    %3339 = vmatpush1.msra.mxu0 %v3125
    %3340 = vmatprep.subr.mxu0 %v3122
    %3341 = vmatpush1.msra.mxu0 %v3121
    %3342 = vmatprep.subr.mxu0 %v3118
    %3343 = vmatpush1.msra.mxu0 %v3117
    %3344 = vmatprep.subr.mxu0 %v3114
    %3345 = vmatpush1.msra.mxu0 %v3113
    %3346 = vmatprep.subr.mxu0 %v3110
    %3347 = vmatpush1.msra.mxu0 %v3109
    %3348 = vmatprep.subr.mxu0 %v3106
    %3349 = vmatpush1.msra.mxu0 %v3105
    %3350 = vmatprep.subr.mxu0 %v3102
    %3351 = vmatpush1.msra.mxu0 %v3101
    %3352 = vmatprep.subr.mxu0 %v3226
    %3353 = vmatpush2.msra.mxu0 %v3225
    %3354 = vmatprep.subr.mxu0 %v3222
    %3355 = vmatpush2.msra.mxu0 %v3221
    %3356 = vmatprep.subr.mxu0 %v3218
    %3357 = vmatpush2.msra.mxu0 %v3217
    %3358 = vmatprep.subr.mxu0 %v3214
    %3359 = vmatpush2.msra.mxu0 %v3213
    %3360 = vmatprep.subr.mxu0 %v3210
    %3361 = vmatpush2.msra.mxu0 %v3209
    %3362 = vmatprep.subr.mxu0 %v3206
    %3363 = vmatpush2.msra.mxu0 %v3205
    %3364 = vmatprep.subr.mxu0 %v3202
    %3365 = vmatpush2.msra.mxu0 %v3201
    %3366 = vmatprep.subr.mxu0 %v3198
    %3367 = vmatpush2.msra.mxu0 %v3197
    %3368 = vmatprep.subr.mxu0 %v3194
    %3369 = vmatpush2.msra.mxu0 %v3193
    %3370 = vmatprep.subr.mxu0 %v3190
    %3371 = vmatpush2.msra.mxu0 %v3189
    %3372 = vmatprep.subr.mxu0 %v3186
    %3373 = vmatpush2.msra.mxu0 %v3185
    %3374 = vmatprep.subr.mxu0 %v3182
    %3375 = vmatpush2.msra.mxu0 %v3181
    %3376 = vmatprep.subr.mxu0 %v3178
    %3377 = vmatpush2.msra.mxu0 %v3177
    %3378 = vmatprep.subr.mxu0 %v3174
    %3379 = vmatpush2.msra.mxu0 %v3173
    %3380 = vmatprep.subr.mxu0 %v3170
    %3381 = vmatpush2.msra.mxu0 %v3169
    %3382 = vmatprep.subr.mxu0 %v3166
    %3383 = vmatpush2.msra.mxu0 %v3165
    %3384 = vmatprep.mubr.f32.mxu0 %v3098
    %3385 = vmatmul.mubr.f32.gmra.mxu0 %v3095
    %v3386 = vpop.f32.mrf.mxu0
    %v3387 = vadd.f32 %v3240, %v3386
    %v3388 = vpop.f32.mrf.mxu0
    %v3389 = vadd.f32 %v3244, %v3388
    %3390 = vdwg.mxu0
    %v3391 = vld [vmem:[#allocation5] sm:$0xff]
    %v3392 = vxor.u32 %v3316, 2147483648
    %v3393 = vmul.f32 %v3392, 1.442695
    %v3394 = vpow.pop %v3393
    %v3395 = vadd.f32 %v3394, 1.0
    %v3396 = vrcp.pop %v3395
    %v3397 = vmul.f32 1.0, %v3396
    %v3398 = vxor.u32 %v3318, 2147483648
    %v3399 = vmul.f32 %v3398, 1.442695
    %v3400 = vpow.pop %v3399
    %v3401 = vadd.f32 %v3400, 1.0
    %v3402 = vrcp.pop %v3401
    %v3403 = vmul.f32 1.0, %v3402
    %v3404 = vtanh.pop %v3387
    %v3405 = vxor.u32 %v3389, 2147483648
    %v3406 = vmul.f32 %v3405, 1.442695
    %v3407 = vpow.pop %v3406
    %v3408 = vadd.f32 %v3407, 1.0
    %v3409 = vrcp.pop %v3408
    %v3410 = vmul.f32 1.0, %v3409
    %v3411 = vmul.f32 %v3403, %v3391
    %v3412 = vmul.f32 %v3397, %v3404
    %v3413 = vadd.f32 %v3411, %v3412
    %v3414 = vtanh.pop %v3413
    %v3415 = vmul.f32 %v3410, %v3414
    %3416 = vst [vmem:[#allocation4] sm:$0xff] %v3415
    %3417 = vst [vmem:[#allocation5] sm:$0xff] %v3413
    %s3418 = scalar_lea.vmem %s0, 192
    %v3419 = vld [vmem:[%s3418] sm:$0xff]
    %v3420 = vld [vmem:[%s3418 + $0x8] sm:$0xff]
    %v3421 = vld [vmem:[%s3418 + $0x10] sm:$0xff]
    %v3422 = vld [vmem:[%s3418 + $0x18] sm:$0xff]
    %v3423 = vld [vmem:[#allocation2] sm:$0xff]
    %v3424 = vld [vmem:[%s1] sm:$0xff]
    %v3425 = vld [vmem:[%s1 + $0x8] sm:$0xff]
    %v3426 = vld [vmem:[%s1 + $0x10] sm:$0xff]
    %v3427 = vld [vmem:[%s1 + $0x18] sm:$0xff]
    %v3428 = vld [vmem:[%s1 + $0x20] sm:$0xff]
    %v3429 = vld [vmem:[%s1 + $0x28] sm:$0xff]
    %v3430 = vld [vmem:[%s1 + $0x30] sm:$0xff]
    %v3431 = vld [vmem:[%s1 + $0x38] sm:$0xff]
    %v3432 = vld [vmem:[%s1 + $0x40] sm:$0xff]
    %v3433 = vld [vmem:[%s1 + $0x48] sm:$0xff]
    %v3434 = vld [vmem:[%s1 + $0x50] sm:$0xff]
    %v3435 = vld [vmem:[%s1 + $0x58] sm:$0xff]
    %v3436 = vld [vmem:[%s1 + $0x60] sm:$0xff]
    %v3437 = vld [vmem:[%s1 + $0x68] sm:$0xff]
    %v3438 = vld [vmem:[%s1 + $0x70] sm:$0xff]
    %v3439 = vld [vmem:[%s1 + $0x78] sm:$0xff]
    %v3440 = vld [vmem:[%s1 + $0x80] sm:$0xff]
    %v3441 = vld [vmem:[%s1 + $0x88] sm:$0xff]
    %v3442 = vld [vmem:[%s1 + $0x90] sm:$0xff]
    %v3443 = vld [vmem:[%s1 + $0x98] sm:$0xff]
    %v3444 = vld [vmem:[%s1 + $0xa0] sm:$0xff]
    %v3445 = vld [vmem:[%s1 + $0xa8] sm:$0xff]
    %v3446 = vld [vmem:[%s1 + $0xb0] sm:$0xff]
    %v3447 = vld [vmem:[%s1 + $0xb8] sm:$0xff]
    %v3448 = vld [vmem:[%s1 + $0xc0] sm:$0xff]
    %v3449 = vld [vmem:[%s1 + $0xc8] sm:$0xff]
    %v3450 = vld [vmem:[%s1 + $0xd0] sm:$0xff]
    %v3451 = vld [vmem:[%s1 + $0xd8] sm:$0xff]
    %v3452 = vld [vmem:[%s1 + $0xe0] sm:$0xff]
    %v3453 = vld [vmem:[%s1 + $0xe8] sm:$0xff]
    %v3454 = vld [vmem:[%s1 + $0xf0] sm:$0xff]
    %v3455 = vld [vmem:[%s1 + $0xf8] sm:$0xff]
    %v3456 = vld [vmem:[%s1 + $0x100] sm:$0xff]
    %v3457 = vld [vmem:[%s1 + $0x108] sm:$0xff]
    %v3458 = vld [vmem:[%s1 + $0x110] sm:$0xff]
    %v3459 = vld [vmem:[%s1 + $0x118] sm:$0xff]
    %v3460 = vld [vmem:[%s1 + $0x120] sm:$0xff]
    %v3461 = vld [vmem:[%s1 + $0x128] sm:$0xff]
    %v3462 = vld [vmem:[%s1 + $0x130] sm:$0xff]
    %v3463 = vld [vmem:[%s1 + $0x138] sm:$0xff]
    %v3464 = vld [vmem:[%s1 + $0x140] sm:$0xff]
    %v3465 = vld [vmem:[%s1 + $0x148] sm:$0xff]
    %v3466 = vld [vmem:[%s1 + $0x150] sm:$0xff]
    %v3467 = vld [vmem:[%s1 + $0x158] sm:$0xff]
    %v3468 = vld [vmem:[%s1 + $0x160] sm:$0xff]
    %v3469 = vld [vmem:[%s1 + $0x168] sm:$0xff]
    %v3470 = vld [vmem:[%s1 + $0x170] sm:$0xff]
    %v3471 = vld [vmem:[%s1 + $0x178] sm:$0xff]
    %v3472 = vld [vmem:[%s1 + $0x180] sm:$0xff]
    %v3473 = vld [vmem:[%s1 + $0x188] sm:$0xff]
    %v3474 = vld [vmem:[%s1 + $0x190] sm:$0xff]
    %v3475 = vld [vmem:[%s1 + $0x198] sm:$0xff]
    %v3476 = vld [vmem:[%s1 + $0x1a0] sm:$0xff]
    %v3477 = vld [vmem:[%s1 + $0x1a8] sm:$0xff]
    %v3478 = vld [vmem:[%s1 + $0x1b0] sm:$0xff]
    %v3479 = vld [vmem:[%s1 + $0x1b8] sm:$0xff]
    %v3480 = vld [vmem:[%s1 + $0x1c0] sm:$0xff]
    %v3481 = vld [vmem:[%s1 + $0x1c8] sm:$0xff]
    %v3482 = vld [vmem:[%s1 + $0x1d0] sm:$0xff]
    %v3483 = vld [vmem:[%s1 + $0x1d8] sm:$0xff]
    %v3484 = vld [vmem:[%s1 + $0x1e0] sm:$0xff]
    %v3485 = vld [vmem:[%s1 + $0x1e8] sm:$0xff]
    %v3486 = vld [vmem:[%s1 + $0x1f0] sm:$0xff]
    %v3487 = vld [vmem:[%s1 + $0x1f8] sm:$0xff]
    %3488 = vmatprep.subr.mxu0 %v3485
    %3489 = vmatpush1.msra.mxu0 %v3484
    %3490 = vmatprep.subr.mxu0 %v3481
    %3491 = vmatpush1.msra.mxu0 %v3480
    %3492 = vmatprep.subr.mxu0 %v3477
    %3493 = vmatpush1.msra.mxu0 %v3476
    %3494 = vmatprep.subr.mxu0 %v3473
    %3495 = vmatpush1.msra.mxu0 %v3472
    %3496 = vmatprep.subr.mxu0 %v3469
    %3497 = vmatpush1.msra.mxu0 %v3468
    %3498 = vmatprep.subr.mxu0 %v3465
    %3499 = vmatpush1.msra.mxu0 %v3464
    %3500 = vmatprep.subr.mxu0 %v3461
    %3501 = vmatpush1.msra.mxu0 %v3460
    %3502 = vmatprep.subr.mxu0 %v3457
    %3503 = vmatpush1.msra.mxu0 %v3456
    %3504 = vmatprep.subr.mxu0 %v3453
    %3505 = vmatpush1.msra.mxu0 %v3452
    %3506 = vmatprep.subr.mxu0 %v3449
    %3507 = vmatpush1.msra.mxu0 %v3448
    %3508 = vmatprep.subr.mxu0 %v3445
    %3509 = vmatpush1.msra.mxu0 %v3444
    %3510 = vmatprep.subr.mxu0 %v3441
    %3511 = vmatpush1.msra.mxu0 %v3440
    %3512 = vmatprep.subr.mxu0 %v3437
    %3513 = vmatpush1.msra.mxu0 %v3436
    %3514 = vmatprep.subr.mxu0 %v3433
    %3515 = vmatpush1.msra.mxu0 %v3432
    %3516 = vmatprep.subr.mxu0 %v3429
    %3517 = vmatpush1.msra.mxu0 %v3428
    %3518 = vmatprep.subr.mxu0 %v3425
    %3519 = vmatpush1.msra.mxu0 %v3424
    %3520 = vmatprep.subr.mxu0 0.0
    %3521 = vmatpush2.msra.mxu0 0.0
    %3522 = vmatprep.subr.mxu0 0.0
    %3523 = vmatpush2.msra.mxu0 0.0
    %3524 = vmatprep.subr.mxu0 0.0
    %3525 = vmatpush2.msra.mxu0 0.0
    %3526 = vmatprep.subr.mxu0 0.0
    %3527 = vmatpush2.msra.mxu0 0.0
    %3528 = vmatprep.subr.mxu0 0.0
    %3529 = vmatpush2.msra.mxu0 0.0
    %3530 = vmatprep.subr.mxu0 0.0
    %3531 = vmatpush2.msra.mxu0 0.0
    %3532 = vmatprep.subr.mxu0 0.0
    %3533 = vmatpush2.msra.mxu0 0.0
    %3534 = vmatprep.subr.mxu0 0.0
    %3535 = vmatpush2.msra.mxu0 0.0
    %3536 = vmatprep.subr.mxu0 0.0
    %3537 = vmatpush2.msra.mxu0 0.0
    %3538 = vmatprep.subr.mxu0 0.0
    %3539 = vmatpush2.msra.mxu0 0.0
    %3540 = vmatprep.subr.mxu0 0.0
    %3541 = vmatpush2.msra.mxu0 0.0
    %3542 = vmatprep.subr.mxu0 0.0
    %3543 = vmatpush2.msra.mxu0 0.0
    %3544 = vmatprep.subr.mxu0 0.0
    %3545 = vmatpush2.msra.mxu0 0.0
    %3546 = vmatprep.subr.mxu0 0.0
    %3547 = vmatpush2.msra.mxu0 0.0
    %3548 = vmatprep.subr.mxu0 0.0
    %3549 = vmatpush2.msra.mxu0 0.0
    %3550 = vmatprep.subr.mxu0 0.0
    %3551 = vmatpush2.msra.mxu0 0.0
    %3552 = vmatprep.mubr.f32.mxu0 0.0
    %3553 = vmatmul.mubr.f32.gmra.mxu0 %v3423
    %v3554 = vpop.f32.mrf.mxu0
    %v3555 = vadd.f32 0.0, %v3554
    %v3556 = vpop.f32.mrf.mxu0
    %v3557 = vadd.f32 0.0, %v3556
    %3558 = vdwg.mxu0
    %3559 = vmatprep.subr.mxu0 %v3487
    %3560 = vmatpush1.msra.mxu0 %v3486
    %3561 = vmatprep.subr.mxu0 %v3483
    %3562 = vmatpush1.msra.mxu0 %v3482
    %3563 = vmatprep.subr.mxu0 %v3479
    %3564 = vmatpush1.msra.mxu0 %v3478
    %3565 = vmatprep.subr.mxu0 %v3475
    %3566 = vmatpush1.msra.mxu0 %v3474
    %3567 = vmatprep.subr.mxu0 %v3471
    %3568 = vmatpush1.msra.mxu0 %v3470
    %3569 = vmatprep.subr.mxu0 %v3467
    %3570 = vmatpush1.msra.mxu0 %v3466
    %3571 = vmatprep.subr.mxu0 %v3463
    %3572 = vmatpush1.msra.mxu0 %v3462
    %3573 = vmatprep.subr.mxu0 %v3459
    %3574 = vmatpush1.msra.mxu0 %v3458
    %3575 = vmatprep.subr.mxu0 %v3455
    %3576 = vmatpush1.msra.mxu0 %v3454
    %3577 = vmatprep.subr.mxu0 %v3451
    %3578 = vmatpush1.msra.mxu0 %v3450
    %3579 = vmatprep.subr.mxu0 %v3447
    %3580 = vmatpush1.msra.mxu0 %v3446
    %3581 = vmatprep.subr.mxu0 %v3443
    %3582 = vmatpush1.msra.mxu0 %v3442
    %3583 = vmatprep.subr.mxu0 %v3439
    %3584 = vmatpush1.msra.mxu0 %v3438
    %3585 = vmatprep.subr.mxu0 %v3435
    %3586 = vmatpush1.msra.mxu0 %v3434
    %3587 = vmatprep.subr.mxu0 %v3431
    %3588 = vmatpush1.msra.mxu0 %v3430
    %3589 = vmatprep.subr.mxu0 %v3427
    %3590 = vmatpush1.msra.mxu0 %v3426
    %3591 = vmatprep.subr.mxu0 0.0
    %3592 = vmatpush2.msra.mxu0 0.0
    %3593 = vmatprep.subr.mxu0 0.0
    %3594 = vmatpush2.msra.mxu0 0.0
    %3595 = vmatprep.subr.mxu0 0.0
    %3596 = vmatpush2.msra.mxu0 0.0
    %3597 = vmatprep.subr.mxu0 0.0
    %3598 = vmatpush2.msra.mxu0 0.0
    %3599 = vmatprep.subr.mxu0 0.0
    %3600 = vmatpush2.msra.mxu0 0.0
    %3601 = vmatprep.subr.mxu0 0.0
    %3602 = vmatpush2.msra.mxu0 0.0
    %3603 = vmatprep.subr.mxu0 0.0
    %3604 = vmatpush2.msra.mxu0 0.0
    %3605 = vmatprep.subr.mxu0 0.0
    %3606 = vmatpush2.msra.mxu0 0.0
    %3607 = vmatprep.subr.mxu0 0.0
    %3608 = vmatpush2.msra.mxu0 0.0
    %3609 = vmatprep.subr.mxu0 0.0
    %3610 = vmatpush2.msra.mxu0 0.0
    %3611 = vmatprep.subr.mxu0 0.0
    %3612 = vmatpush2.msra.mxu0 0.0
    %3613 = vmatprep.subr.mxu0 0.0
    %3614 = vmatpush2.msra.mxu0 0.0
    %3615 = vmatprep.subr.mxu0 0.0
    %3616 = vmatpush2.msra.mxu0 0.0
    %3617 = vmatprep.subr.mxu0 0.0
    %3618 = vmatpush2.msra.mxu0 0.0
    %3619 = vmatprep.subr.mxu0 0.0
    %3620 = vmatpush2.msra.mxu0 0.0
    %3621 = vmatprep.subr.mxu0 0.0
    %3622 = vmatpush2.msra.mxu0 0.0
    %3623 = vmatprep.mubr.f32.mxu0 0.0
    %3624 = vmatmul.mubr.f32.gmra.mxu0 %v3423
    %v3625 = vpop.f32.mrf.mxu0
    %v3626 = vadd.f32 0.0, %v3625
    %v3627 = vpop.f32.mrf.mxu0
    %v3628 = vadd.f32 0.0, %v3627
    %3629 = vdwg.mxu0
    %v3630 = vadd.f32 %v3419, %v3555
    %v3631 = vadd.f32 %v3420, %v3557
    %v3632 = vadd.f32 %v3421, %v3626
    %v3633 = vadd.f32 %v3422, %v3628
    %v3634 = vld [vmem:[#allocation3] sm:$0xff]
    %v3635 = vxor.u32 %v3630, 2147483648
    %v3636 = vmul.f32 %v3635, 1.442695
    %v3637 = vpow.pop %v3636
    %v3638 = vadd.f32 %v3637, 1.0
    %v3639 = vrcp.pop %v3638
    %v3640 = vmul.f32 1.0, %v3639
    %v3641 = vxor.u32 %v3631, 2147483648
    %v3642 = vmul.f32 %v3641, 1.442695
    %v3643 = vpow.pop %v3642
    %v3644 = vadd.f32 %v3643, 1.0
    %v3645 = vrcp.pop %v3644
    %v3646 = vmul.f32 1.0, %v3645
    %v3647 = vtanh.pop %v3632
    %v3648 = vxor.u32 %v3633, 2147483648
    %v3649 = vmul.f32 %v3648, 1.442695
    %v3650 = vpow.pop %v3649
    %v3651 = vadd.f32 %v3650, 1.0
    %v3652 = vrcp.pop %v3651
    %v3653 = vmul.f32 1.0, %v3652
    %v3654 = vmul.f32 %v3646, %v3634
    %v3655 = vmul.f32 %v3640, %v3647
    %v3656 = vadd.f32 %v3654, %v3655
    %v3657 = vtanh.pop %v3656
    %v3658 = vmul.f32 %v3653, %v3657
    %3659 = vst [vmem:[#allocation2] sm:$0xff] %v3658
    %3660 = vst [vmem:[#allocation3] sm:$0xff] %v3656
    %v3661 = vld [vmem:[#allocation4] sm:$0xff]
    %v3662 = vld [vmem:[#allocation6] sm:$0xff]
    %v3663 = vld [vmem:[#allocation6 + $0x8] sm:$0xff]
    %v3664 = vld [vmem:[#allocation6 + $0x10] sm:$0xff]
    %v3665 = vld [vmem:[#allocation6 + $0x18] sm:$0xff]
    %v3666 = vld [vmem:[#allocation6 + $0x20] sm:$0xff]
    %v3667 = vld [vmem:[#allocation6 + $0x28] sm:$0xff]
    %v3668 = vld [vmem:[#allocation6 + $0x30] sm:$0xff]
    %v3669 = vld [vmem:[#allocation6 + $0x38] sm:$0xff]
    %v3670 = vld [vmem:[#allocation6 + $0x40] sm:$0xff]
    %v3671 = vld [vmem:[#allocation6 + $0x48] sm:$0xff]
    %v3672 = vld [vmem:[#allocation6 + $0x50] sm:$0xff]
    %v3673 = vld [vmem:[#allocation6 + $0x58] sm:$0xff]
    %v3674 = vld [vmem:[#allocation6 + $0x60] sm:$0xff]
    %v3675 = vld [vmem:[#allocation6 + $0x68] sm:$0xff]
    %v3676 = vld [vmem:[#allocation6 + $0x70] sm:$0xff]
    %v3677 = vld [vmem:[#allocation6 + $0x78] sm:$0xff]
    %v3678 = vld [vmem:[#allocation6 + $0x80] sm:$0xff]
    %v3679 = vld [vmem:[#allocation6 + $0x88] sm:$0xff]
    %v3680 = vld [vmem:[#allocation6 + $0x90] sm:$0xff]
    %v3681 = vld [vmem:[#allocation6 + $0x98] sm:$0xff]
    %v3682 = vld [vmem:[#allocation6 + $0xa0] sm:$0xff]
    %v3683 = vld [vmem:[#allocation6 + $0xa8] sm:$0xff]
    %v3684 = vld [vmem:[#allocation6 + $0xb0] sm:$0xff]
    %v3685 = vld [vmem:[#allocation6 + $0xb8] sm:$0xff]
    %v3686 = vld [vmem:[#allocation6 + $0xc0] sm:$0xff]
    %v3687 = vld [vmem:[#allocation6 + $0xc8] sm:$0xff]
    %v3688 = vld [vmem:[#allocation6 + $0xd0] sm:$0xff]
    %v3689 = vld [vmem:[#allocation6 + $0xd8] sm:$0xff]
    %v3690 = vld [vmem:[#allocation6 + $0xe0] sm:$0xff]
    %v3691 = vld [vmem:[#allocation6 + $0xe8] sm:$0xff]
    %v3692 = vld [vmem:[#allocation6 + $0xf0] sm:$0xff]
    %v3693 = vld [vmem:[#allocation6 + $0xf8] sm:$0xff]
    %v3694 = vld [vmem:[#allocation6 + $0x100] sm:$0xff]
    %v3695 = vld [vmem:[#allocation6 + $0x108] sm:$0xff]
    %v3696 = vld [vmem:[#allocation6 + $0x110] sm:$0xff]
    %v3697 = vld [vmem:[#allocation6 + $0x118] sm:$0xff]
    %v3698 = vld [vmem:[#allocation6 + $0x120] sm:$0xff]
    %v3699 = vld [vmem:[#allocation6 + $0x128] sm:$0xff]
    %v3700 = vld [vmem:[#allocation6 + $0x130] sm:$0xff]
    %v3701 = vld [vmem:[#allocation6 + $0x138] sm:$0xff]
    %v3702 = vld [vmem:[#allocation6 + $0x140] sm:$0xff]
    %v3703 = vld [vmem:[#allocation6 + $0x148] sm:$0xff]
    %v3704 = vld [vmem:[#allocation6 + $0x150] sm:$0xff]
    %v3705 = vld [vmem:[#allocation6 + $0x158] sm:$0xff]
    %v3706 = vld [vmem:[#allocation6 + $0x160] sm:$0xff]
    %v3707 = vld [vmem:[#allocation6 + $0x168] sm:$0xff]
    %v3708 = vld [vmem:[#allocation6 + $0x170] sm:$0xff]
    %v3709 = vld [vmem:[#allocation6 + $0x178] sm:$0xff]
    %v3710 = vld [vmem:[#allocation6 + $0x180] sm:$0xff]
    %v3711 = vld [vmem:[#allocation6 + $0x188] sm:$0xff]
    %v3712 = vld [vmem:[#allocation6 + $0x190] sm:$0xff]
    %v3713 = vld [vmem:[#allocation6 + $0x198] sm:$0xff]
    %v3714 = vld [vmem:[#allocation6 + $0x1a0] sm:$0xff]
    %v3715 = vld [vmem:[#allocation6 + $0x1a8] sm:$0xff]
    %v3716 = vld [vmem:[#allocation6 + $0x1b0] sm:$0xff]
    %v3717 = vld [vmem:[#allocation6 + $0x1b8] sm:$0xff]
    %v3718 = vld [vmem:[#allocation6 + $0x1c0] sm:$0xff]
    %v3719 = vld [vmem:[#allocation6 + $0x1c8] sm:$0xff]
    %v3720 = vld [vmem:[#allocation6 + $0x1d0] sm:$0xff]
    %v3721 = vld [vmem:[#allocation6 + $0x1d8] sm:$0xff]
    %v3722 = vld [vmem:[#allocation6 + $0x1e0] sm:$0xff]
    %v3723 = vld [vmem:[#allocation6 + $0x1e8] sm:$0xff]
    %v3724 = vld [vmem:[#allocation6 + $0x1f0] sm:$0xff]
    %v3725 = vld [vmem:[#allocation6 + $0x1f8] sm:$0xff]
    %v3726 = vld [vmem:[#allocation6 + $0x200] sm:$0xff]
    %v3727 = vld [vmem:[#allocation6 + $0x208] sm:$0xff]
    %v3728 = vld [vmem:[#allocation6 + $0x210] sm:$0xff]
    %v3729 = vld [vmem:[#allocation6 + $0x218] sm:$0xff]
    %v3730 = vld [vmem:[#allocation6 + $0x220] sm:$0xff]
    %v3731 = vld [vmem:[#allocation6 + $0x228] sm:$0xff]
    %v3732 = vld [vmem:[#allocation6 + $0x230] sm:$0xff]
    %v3733 = vld [vmem:[#allocation6 + $0x238] sm:$0xff]
    %v3734 = vld [vmem:[#allocation6 + $0x240] sm:$0xff]
    %v3735 = vld [vmem:[#allocation6 + $0x248] sm:$0xff]
    %v3736 = vld [vmem:[#allocation6 + $0x250] sm:$0xff]
    %v3737 = vld [vmem:[#allocation6 + $0x258] sm:$0xff]
    %v3738 = vld [vmem:[#allocation6 + $0x260] sm:$0xff]
    %v3739 = vld [vmem:[#allocation6 + $0x268] sm:$0xff]
    %v3740 = vld [vmem:[#allocation6 + $0x270] sm:$0xff]
    %v3741 = vld [vmem:[#allocation6 + $0x278] sm:$0xff]
    %v3742 = vld [vmem:[#allocation6 + $0x280] sm:$0xff]
    %v3743 = vld [vmem:[#allocation6 + $0x288] sm:$0xff]
    %v3744 = vld [vmem:[#allocation6 + $0x290] sm:$0xff]
    %v3745 = vld [vmem:[#allocation6 + $0x298] sm:$0xff]
    %v3746 = vld [vmem:[#allocation6 + $0x2a0] sm:$0xff]
    %v3747 = vld [vmem:[#allocation6 + $0x2a8] sm:$0xff]
    %v3748 = vld [vmem:[#allocation6 + $0x2b0] sm:$0xff]
    %v3749 = vld [vmem:[#allocation6 + $0x2b8] sm:$0xff]
    %v3750 = vld [vmem:[#allocation6 + $0x2c0] sm:$0xff]
    %v3751 = vld [vmem:[#allocation6 + $0x2c8] sm:$0xff]
    %v3752 = vld [vmem:[#allocation6 + $0x2d0] sm:$0xff]
    %v3753 = vld [vmem:[#allocation6 + $0x2d8] sm:$0xff]
    %v3754 = vld [vmem:[#allocation6 + $0x2e0] sm:$0xff]
    %v3755 = vld [vmem:[#allocation6 + $0x2e8] sm:$0xff]
    %v3756 = vld [vmem:[#allocation6 + $0x2f0] sm:$0xff]
    %v3757 = vld [vmem:[#allocation6 + $0x2f8] sm:$0xff]
    %v3758 = vld [vmem:[#allocation6 + $0x300] sm:$0xff]
    %v3759 = vld [vmem:[#allocation6 + $0x308] sm:$0xff]
    %v3760 = vld [vmem:[#allocation6 + $0x310] sm:$0xff]
    %v3761 = vld [vmem:[#allocation6 + $0x318] sm:$0xff]
    %v3762 = vld [vmem:[#allocation6 + $0x320] sm:$0xff]
    %v3763 = vld [vmem:[#allocation6 + $0x328] sm:$0xff]
    %v3764 = vld [vmem:[#allocation6 + $0x330] sm:$0xff]
    %v3765 = vld [vmem:[#allocation6 + $0x338] sm:$0xff]
    %v3766 = vld [vmem:[#allocation6 + $0x340] sm:$0xff]
    %v3767 = vld [vmem:[#allocation6 + $0x348] sm:$0xff]
    %v3768 = vld [vmem:[#allocation6 + $0x350] sm:$0xff]
    %v3769 = vld [vmem:[#allocation6 + $0x358] sm:$0xff]
    %v3770 = vld [vmem:[#allocation6 + $0x360] sm:$0xff]
    %v3771 = vld [vmem:[#allocation6 + $0x368] sm:$0xff]
    %v3772 = vld [vmem:[#allocation6 + $0x370] sm:$0xff]
    %v3773 = vld [vmem:[#allocation6 + $0x378] sm:$0xff]
    %v3774 = vld [vmem:[#allocation6 + $0x380] sm:$0xff]
    %v3775 = vld [vmem:[#allocation6 + $0x388] sm:$0xff]
    %v3776 = vld [vmem:[#allocation6 + $0x390] sm:$0xff]
    %v3777 = vld [vmem:[#allocation6 + $0x398] sm:$0xff]
    %v3778 = vld [vmem:[#allocation6 + $0x3a0] sm:$0xff]
    %v3779 = vld [vmem:[#allocation6 + $0x3a8] sm:$0xff]
    %v3780 = vld [vmem:[#allocation6 + $0x3b0] sm:$0xff]
    %v3781 = vld [vmem:[#allocation6 + $0x3b8] sm:$0xff]
    %v3782 = vld [vmem:[#allocation6 + $0x3c0] sm:$0xff]
    %v3783 = vld [vmem:[#allocation6 + $0x3c8] sm:$0xff]
    %v3784 = vld [vmem:[#allocation6 + $0x3d0] sm:$0xff]
    %v3785 = vld [vmem:[#allocation6 + $0x3d8] sm:$0xff]
    %v3786 = vld [vmem:[#allocation6 + $0x3e0] sm:$0xff]
    %v3787 = vld [vmem:[#allocation6 + $0x3e8] sm:$0xff]
    %v3788 = vld [vmem:[#allocation6 + $0x3f0] sm:$0xff]
    %v3789 = vld [vmem:[#allocation6 + $0x3f8] sm:$0xff]
    %v3790 = vld [vmem:[%s3] sm:$0xf]
    %v3792 = vlaneseq
    %v3793 = vshrl.u32 %v3792, 7
    %v3794 = vsub.s32 0, %v3793
    %v3795 = vrot.slane %v3790, %v3794
    %v3796 = vlaneseq
    %v3797 = vshrl.u32 %v3796, 7
    %v3798 = vsub.s32 1, %v3797
    %v3799 = vrot.slane %v3790, %v3798
    %v3800 = vlaneseq
    %v3801 = vshrl.u32 %v3800, 7
    %v3802 = vsub.s32 2, %v3801
    %v3803 = vrot.slane %v3790, %v3802
    %v3804 = vlaneseq
    %v3805 = vshrl.u32 %v3804, 7
    %v3806 = vsub.s32 3, %v3805
    %v3807 = vrot.slane %v3790, %v3806
    %3812 = vmatprep.subr.mxu0 %v3723
    %3813 = vmatpush1.msra.mxu0 %v3722
    %3814 = vmatprep.subr.mxu0 %v3719
    %3815 = vmatpush1.msra.mxu0 %v3718
    %3816 = vmatprep.subr.mxu0 %v3715
    %3817 = vmatpush1.msra.mxu0 %v3714
    %3818 = vmatprep.subr.mxu0 %v3711
    %3819 = vmatpush1.msra.mxu0 %v3710
    %3820 = vmatprep.subr.mxu0 %v3707
    %3821 = vmatpush1.msra.mxu0 %v3706
    %3822 = vmatprep.subr.mxu0 %v3703
    %3823 = vmatpush1.msra.mxu0 %v3702
    %3824 = vmatprep.subr.mxu0 %v3699
    %3825 = vmatpush1.msra.mxu0 %v3698
    %3826 = vmatprep.subr.mxu0 %v3695
    %3827 = vmatpush1.msra.mxu0 %v3694
    %3828 = vmatprep.subr.mxu0 %v3691
    %3829 = vmatpush1.msra.mxu0 %v3690
    %3830 = vmatprep.subr.mxu0 %v3687
    %3831 = vmatpush1.msra.mxu0 %v3686
    %3832 = vmatprep.subr.mxu0 %v3683
    %3833 = vmatpush1.msra.mxu0 %v3682
    %3834 = vmatprep.subr.mxu0 %v3679
    %3835 = vmatpush1.msra.mxu0 %v3678
    %3836 = vmatprep.subr.mxu0 %v3675
    %3837 = vmatpush1.msra.mxu0 %v3674
    %3838 = vmatprep.subr.mxu0 %v3671
    %3839 = vmatpush1.msra.mxu0 %v3670
    %3840 = vmatprep.subr.mxu0 %v3667
    %3841 = vmatpush1.msra.mxu0 %v3666
    %3842 = vmatprep.subr.mxu0 %v3663
    %3843 = vmatpush1.msra.mxu0 %v3662
    %3844 = vmatprep.subr.mxu0 %v3787
    %3845 = vmatpush2.msra.mxu0 %v3786
    %3846 = vmatprep.subr.mxu0 %v3783
    %3847 = vmatpush2.msra.mxu0 %v3782
    %3848 = vmatprep.subr.mxu0 %v3779
    %3849 = vmatpush2.msra.mxu0 %v3778
    %3850 = vmatprep.subr.mxu0 %v3775
    %3851 = vmatpush2.msra.mxu0 %v3774
    %3852 = vmatprep.subr.mxu0 %v3771
    %3853 = vmatpush2.msra.mxu0 %v3770
    %3854 = vmatprep.subr.mxu0 %v3767
    %3855 = vmatpush2.msra.mxu0 %v3766
    %3856 = vmatprep.subr.mxu0 %v3763
    %3857 = vmatpush2.msra.mxu0 %v3762
    %3858 = vmatprep.subr.mxu0 %v3759
    %3859 = vmatpush2.msra.mxu0 %v3758
    %3860 = vmatprep.subr.mxu0 %v3755
    %3861 = vmatpush2.msra.mxu0 %v3754
    %3862 = vmatprep.subr.mxu0 %v3751
    %3863 = vmatpush2.msra.mxu0 %v3750
    %3864 = vmatprep.subr.mxu0 %v3747
    %3865 = vmatpush2.msra.mxu0 %v3746
    %3866 = vmatprep.subr.mxu0 %v3743
    %3867 = vmatpush2.msra.mxu0 %v3742
    %3868 = vmatprep.subr.mxu0 %v3739
    %3869 = vmatpush2.msra.mxu0 %v3738
    %3870 = vmatprep.subr.mxu0 %v3735
    %3871 = vmatpush2.msra.mxu0 %v3734
    %3872 = vmatprep.subr.mxu0 %v3731
    %3873 = vmatpush2.msra.mxu0 %v3730
    %3874 = vmatprep.subr.mxu0 %v3727
    %3875 = vmatpush2.msra.mxu0 %v3726
    %3876 = vmatprep.mubr.f32.mxu0 %v3661
    %3877 = vmatmul.mubr.f32.gmra.mxu0 %v3658
    %v3878 = vpop.f32.mrf.mxu0
    %v3879 = vadd.f32 %v3795, %v3878
    %v3880 = vpop.f32.mrf.mxu0
    %v3881 = vadd.f32 %v3799, %v3880
    %3882 = vdwg.mxu0
    %3883 = vmatprep.subr.mxu0 %v3725
    %3884 = vmatpush1.msra.mxu0 %v3724
    %3885 = vmatprep.subr.mxu0 %v3721
    %3886 = vmatpush1.msra.mxu0 %v3720
    %3887 = vmatprep.subr.mxu0 %v3717
    %3888 = vmatpush1.msra.mxu0 %v3716
    %3889 = vmatprep.subr.mxu0 %v3713
    %3890 = vmatpush1.msra.mxu0 %v3712
    %3891 = vmatprep.subr.mxu0 %v3709
    %3892 = vmatpush1.msra.mxu0 %v3708
    %3893 = vmatprep.subr.mxu0 %v3705
    %3894 = vmatpush1.msra.mxu0 %v3704
    %3895 = vmatprep.subr.mxu0 %v3701
    %3896 = vmatpush1.msra.mxu0 %v3700
    %3897 = vmatprep.subr.mxu0 %v3697
    %3898 = vmatpush1.msra.mxu0 %v3696
    %3899 = vmatprep.subr.mxu0 %v3693
    %3900 = vmatpush1.msra.mxu0 %v3692
    %3901 = vmatprep.subr.mxu0 %v3689
    %3902 = vmatpush1.msra.mxu0 %v3688
    %3903 = vmatprep.subr.mxu0 %v3685
    %3904 = vmatpush1.msra.mxu0 %v3684
    %3905 = vmatprep.subr.mxu0 %v3681
    %3906 = vmatpush1.msra.mxu0 %v3680
    %3907 = vmatprep.subr.mxu0 %v3677
    %3908 = vmatpush1.msra.mxu0 %v3676
    %3909 = vmatprep.subr.mxu0 %v3673
    %3910 = vmatpush1.msra.mxu0 %v3672
    %3911 = vmatprep.subr.mxu0 %v3669
    %3912 = vmatpush1.msra.mxu0 %v3668
    %3913 = vmatprep.subr.mxu0 %v3665
    %3914 = vmatpush1.msra.mxu0 %v3664
    %3915 = vmatprep.subr.mxu0 %v3789
    %3916 = vmatpush2.msra.mxu0 %v3788
    %3917 = vmatprep.subr.mxu0 %v3785
    %3918 = vmatpush2.msra.mxu0 %v3784
    %3919 = vmatprep.subr.mxu0 %v3781
    %3920 = vmatpush2.msra.mxu0 %v3780
    %3921 = vmatprep.subr.mxu0 %v3777
    %3922 = vmatpush2.msra.mxu0 %v3776
    %3923 = vmatprep.subr.mxu0 %v3773
    %3924 = vmatpush2.msra.mxu0 %v3772
    %3925 = vmatprep.subr.mxu0 %v3769
    %3926 = vmatpush2.msra.mxu0 %v3768
    %3927 = vmatprep.subr.mxu0 %v3765
    %3928 = vmatpush2.msra.mxu0 %v3764
    %3929 = vmatprep.subr.mxu0 %v3761
    %3930 = vmatpush2.msra.mxu0 %v3760
    %3931 = vmatprep.subr.mxu0 %v3757
    %3932 = vmatpush2.msra.mxu0 %v3756
    %3933 = vmatprep.subr.mxu0 %v3753
    %3934 = vmatpush2.msra.mxu0 %v3752
    %3935 = vmatprep.subr.mxu0 %v3749
    %3936 = vmatpush2.msra.mxu0 %v3748
    %3937 = vmatprep.subr.mxu0 %v3745
    %3938 = vmatpush2.msra.mxu0 %v3744
    %3939 = vmatprep.subr.mxu0 %v3741
    %3940 = vmatpush2.msra.mxu0 %v3740
    %3941 = vmatprep.subr.mxu0 %v3737
    %3942 = vmatpush2.msra.mxu0 %v3736
    %3943 = vmatprep.subr.mxu0 %v3733
    %3944 = vmatpush2.msra.mxu0 %v3732
    %3945 = vmatprep.subr.mxu0 %v3729
    %3946 = vmatpush2.msra.mxu0 %v3728
    %3947 = vmatprep.mubr.f32.mxu0 %v3661
    %3948 = vmatmul.mubr.f32.gmra.mxu0 %v3658
    %v3949 = vpop.f32.mrf.mxu0
    %v3950 = vadd.f32 %v3803, %v3949
    %v3951 = vpop.f32.mrf.mxu0
    %v3952 = vadd.f32 %v3807, %v3951
    %3953 = vdwg.mxu0
    %v3954 = vld [vmem:[#allocation5] sm:$0xff]
    %v3955 = vxor.u32 %v3879, 2147483648
    %v3956 = vmul.f32 %v3955, 1.442695
    %v3957 = vpow.pop %v3956
    %v3958 = vadd.f32 %v3957, 1.0
    %v3959 = vrcp.pop %v3958
    %v3960 = vmul.f32 1.0, %v3959
    %v3961 = vxor.u32 %v3881, 2147483648
    %v3962 = vmul.f32 %v3961, 1.442695
    %v3963 = vpow.pop %v3962
    %v3964 = vadd.f32 %v3963, 1.0
    %v3965 = vrcp.pop %v3964
    %v3966 = vmul.f32 1.0, %v3965
    %v3967 = vtanh.pop %v3950
    %v3968 = vxor.u32 %v3952, 2147483648
    %v3969 = vmul.f32 %v3968, 1.442695
    %v3970 = vpow.pop %v3969
    %v3971 = vadd.f32 %v3970, 1.0
    %v3972 = vrcp.pop %v3971
    %v3973 = vmul.f32 1.0, %v3972
    %v3974 = vmul.f32 %v3966, %v3954
    %v3975 = vmul.f32 %v3960, %v3967
    %v3976 = vadd.f32 %v3974, %v3975
    %v3977 = vtanh.pop %v3976
    %v3978 = vmul.f32 %v3973, %v3977
    %3979 = vst [vmem:[#allocation4] sm:$0xff] %v3978
    %3980 = vst [vmem:[#allocation5] sm:$0xff] %v3976
    %s3981 = scalar_lea.vmem %s0, 224
    %v3982 = vld [vmem:[%s3981] sm:$0xff]
    %v3983 = vld [vmem:[%s3981 + $0x8] sm:$0xff]
    %v3984 = vld [vmem:[%s3981 + $0x10] sm:$0xff]
    %v3985 = vld [vmem:[%s3981 + $0x18] sm:$0xff]
    %v3986 = vld [vmem:[#allocation2] sm:$0xff]
    %v3987 = vld [vmem:[%s1] sm:$0xff]
    %v3988 = vld [vmem:[%s1 + $0x8] sm:$0xff]
    %v3989 = vld [vmem:[%s1 + $0x10] sm:$0xff]
    %v3990 = vld [vmem:[%s1 + $0x18] sm:$0xff]
    %v3991 = vld [vmem:[%s1 + $0x20] sm:$0xff]
    %v3992 = vld [vmem:[%s1 + $0x28] sm:$0xff]
    %v3993 = vld [vmem:[%s1 + $0x30] sm:$0xff]
    %v3994 = vld [vmem:[%s1 + $0x38] sm:$0xff]
    %v3995 = vld [vmem:[%s1 + $0x40] sm:$0xff]
    %v3996 = vld [vmem:[%s1 + $0x48] sm:$0xff]
    %v3997 = vld [vmem:[%s1 + $0x50] sm:$0xff]
    %v3998 = vld [vmem:[%s1 + $0x58] sm:$0xff]
    %v3999 = vld [vmem:[%s1 + $0x60] sm:$0xff]
    %v4000 = vld [vmem:[%s1 + $0x68] sm:$0xff]
    %v4001 = vld [vmem:[%s1 + $0x70] sm:$0xff]
    %v4002 = vld [vmem:[%s1 + $0x78] sm:$0xff]
    %v4003 = vld [vmem:[%s1 + $0x80] sm:$0xff]
    %v4004 = vld [vmem:[%s1 + $0x88] sm:$0xff]
    %v4005 = vld [vmem:[%s1 + $0x90] sm:$0xff]
    %v4006 = vld [vmem:[%s1 + $0x98] sm:$0xff]
    %v4007 = vld [vmem:[%s1 + $0xa0] sm:$0xff]
    %v4008 = vld [vmem:[%s1 + $0xa8] sm:$0xff]
    %v4009 = vld [vmem:[%s1 + $0xb0] sm:$0xff]
    %v4010 = vld [vmem:[%s1 + $0xb8] sm:$0xff]
    %v4011 = vld [vmem:[%s1 + $0xc0] sm:$0xff]
    %v4012 = vld [vmem:[%s1 + $0xc8] sm:$0xff]
    %v4013 = vld [vmem:[%s1 + $0xd0] sm:$0xff]
    %v4014 = vld [vmem:[%s1 + $0xd8] sm:$0xff]
    %v4015 = vld [vmem:[%s1 + $0xe0] sm:$0xff]
    %v4016 = vld [vmem:[%s1 + $0xe8] sm:$0xff]
    %v4017 = vld [vmem:[%s1 + $0xf0] sm:$0xff]
    %v4018 = vld [vmem:[%s1 + $0xf8] sm:$0xff]
    %v4019 = vld [vmem:[%s1 + $0x100] sm:$0xff]
    %v4020 = vld [vmem:[%s1 + $0x108] sm:$0xff]
    %v4021 = vld [vmem:[%s1 + $0x110] sm:$0xff]
    %v4022 = vld [vmem:[%s1 + $0x118] sm:$0xff]
    %v4023 = vld [vmem:[%s1 + $0x120] sm:$0xff]
    %v4024 = vld [vmem:[%s1 + $0x128] sm:$0xff]
    %v4025 = vld [vmem:[%s1 + $0x130] sm:$0xff]
    %v4026 = vld [vmem:[%s1 + $0x138] sm:$0xff]
    %v4027 = vld [vmem:[%s1 + $0x140] sm:$0xff]
    %v4028 = vld [vmem:[%s1 + $0x148] sm:$0xff]
    %v4029 = vld [vmem:[%s1 + $0x150] sm:$0xff]
    %v4030 = vld [vmem:[%s1 + $0x158] sm:$0xff]
    %v4031 = vld [vmem:[%s1 + $0x160] sm:$0xff]
    %v4032 = vld [vmem:[%s1 + $0x168] sm:$0xff]
    %v4033 = vld [vmem:[%s1 + $0x170] sm:$0xff]
    %v4034 = vld [vmem:[%s1 + $0x178] sm:$0xff]
    %v4035 = vld [vmem:[%s1 + $0x180] sm:$0xff]
    %v4036 = vld [vmem:[%s1 + $0x188] sm:$0xff]
    %v4037 = vld [vmem:[%s1 + $0x190] sm:$0xff]
    %v4038 = vld [vmem:[%s1 + $0x198] sm:$0xff]
    %v4039 = vld [vmem:[%s1 + $0x1a0] sm:$0xff]
    %v4040 = vld [vmem:[%s1 + $0x1a8] sm:$0xff]
    %v4041 = vld [vmem:[%s1 + $0x1b0] sm:$0xff]
    %v4042 = vld [vmem:[%s1 + $0x1b8] sm:$0xff]
    %v4043 = vld [vmem:[%s1 + $0x1c0] sm:$0xff]
    %v4044 = vld [vmem:[%s1 + $0x1c8] sm:$0xff]
    %v4045 = vld [vmem:[%s1 + $0x1d0] sm:$0xff]
    %v4046 = vld [vmem:[%s1 + $0x1d8] sm:$0xff]
    %v4047 = vld [vmem:[%s1 + $0x1e0] sm:$0xff]
    %v4048 = vld [vmem:[%s1 + $0x1e8] sm:$0xff]
    %v4049 = vld [vmem:[%s1 + $0x1f0] sm:$0xff]
    %v4050 = vld [vmem:[%s1 + $0x1f8] sm:$0xff]
    %4051 = vmatprep.subr.mxu0 %v4048
    %4052 = vmatpush1.msra.mxu0 %v4047
    %4053 = vmatprep.subr.mxu0 %v4044
    %4054 = vmatpush1.msra.mxu0 %v4043
    %4055 = vmatprep.subr.mxu0 %v4040
    %4056 = vmatpush1.msra.mxu0 %v4039
    %4057 = vmatprep.subr.mxu0 %v4036
    %4058 = vmatpush1.msra.mxu0 %v4035
    %4059 = vmatprep.subr.mxu0 %v4032
    %4060 = vmatpush1.msra.mxu0 %v4031
    %4061 = vmatprep.subr.mxu0 %v4028
    %4062 = vmatpush1.msra.mxu0 %v4027
    %4063 = vmatprep.subr.mxu0 %v4024
    %4064 = vmatpush1.msra.mxu0 %v4023
    %4065 = vmatprep.subr.mxu0 %v4020
    %4066 = vmatpush1.msra.mxu0 %v4019
    %4067 = vmatprep.subr.mxu0 %v4016
    %4068 = vmatpush1.msra.mxu0 %v4015
    %4069 = vmatprep.subr.mxu0 %v4012
    %4070 = vmatpush1.msra.mxu0 %v4011
    %4071 = vmatprep.subr.mxu0 %v4008
    %4072 = vmatpush1.msra.mxu0 %v4007
    %4073 = vmatprep.subr.mxu0 %v4004
    %4074 = vmatpush1.msra.mxu0 %v4003
    %4075 = vmatprep.subr.mxu0 %v4000
    %4076 = vmatpush1.msra.mxu0 %v3999
    %4077 = vmatprep.subr.mxu0 %v3996
    %4078 = vmatpush1.msra.mxu0 %v3995
    %4079 = vmatprep.subr.mxu0 %v3992
    %4080 = vmatpush1.msra.mxu0 %v3991
    %4081 = vmatprep.subr.mxu0 %v3988
    %4082 = vmatpush1.msra.mxu0 %v3987
    %4083 = vmatprep.subr.mxu0 0.0
    %4084 = vmatpush2.msra.mxu0 0.0
    %4085 = vmatprep.subr.mxu0 0.0
    %4086 = vmatpush2.msra.mxu0 0.0
    %4087 = vmatprep.subr.mxu0 0.0
    %4088 = vmatpush2.msra.mxu0 0.0
    %4089 = vmatprep.subr.mxu0 0.0
    %4090 = vmatpush2.msra.mxu0 0.0
    %4091 = vmatprep.subr.mxu0 0.0
    %4092 = vmatpush2.msra.mxu0 0.0
    %4093 = vmatprep.subr.mxu0 0.0
    %4094 = vmatpush2.msra.mxu0 0.0
    %4095 = vmatprep.subr.mxu0 0.0
    %4096 = vmatpush2.msra.mxu0 0.0
    %4097 = vmatprep.subr.mxu0 0.0
    %4098 = vmatpush2.msra.mxu0 0.0
    %4099 = vmatprep.subr.mxu0 0.0
    %4100 = vmatpush2.msra.mxu0 0.0
    %4101 = vmatprep.subr.mxu0 0.0
    %4102 = vmatpush2.msra.mxu0 0.0
    %4103 = vmatprep.subr.mxu0 0.0
    %4104 = vmatpush2.msra.mxu0 0.0
    %4105 = vmatprep.subr.mxu0 0.0
    %4106 = vmatpush2.msra.mxu0 0.0
    %4107 = vmatprep.subr.mxu0 0.0
    %4108 = vmatpush2.msra.mxu0 0.0
    %4109 = vmatprep.subr.mxu0 0.0
    %4110 = vmatpush2.msra.mxu0 0.0
    %4111 = vmatprep.subr.mxu0 0.0
    %4112 = vmatpush2.msra.mxu0 0.0
    %4113 = vmatprep.subr.mxu0 0.0
    %4114 = vmatpush2.msra.mxu0 0.0
    %4115 = vmatprep.mubr.f32.mxu0 0.0
    %4116 = vmatmul.mubr.f32.gmra.mxu0 %v3986
    %v4117 = vpop.f32.mrf.mxu0
    %v4118 = vadd.f32 0.0, %v4117
    %v4119 = vpop.f32.mrf.mxu0
    %v4120 = vadd.f32 0.0, %v4119
    %4121 = vdwg.mxu0
    %4122 = vmatprep.subr.mxu0 %v4050
    %4123 = vmatpush1.msra.mxu0 %v4049
    %4124 = vmatprep.subr.mxu0 %v4046
    %4125 = vmatpush1.msra.mxu0 %v4045
    %4126 = vmatprep.subr.mxu0 %v4042
    %4127 = vmatpush1.msra.mxu0 %v4041
    %4128 = vmatprep.subr.mxu0 %v4038
    %4129 = vmatpush1.msra.mxu0 %v4037
    %4130 = vmatprep.subr.mxu0 %v4034
    %4131 = vmatpush1.msra.mxu0 %v4033
    %4132 = vmatprep.subr.mxu0 %v4030
    %4133 = vmatpush1.msra.mxu0 %v4029
    %4134 = vmatprep.subr.mxu0 %v4026
    %4135 = vmatpush1.msra.mxu0 %v4025
    %4136 = vmatprep.subr.mxu0 %v4022
    %4137 = vmatpush1.msra.mxu0 %v4021
    %4138 = vmatprep.subr.mxu0 %v4018
    %4139 = vmatpush1.msra.mxu0 %v4017
    %4140 = vmatprep.subr.mxu0 %v4014
    %4141 = vmatpush1.msra.mxu0 %v4013
    %4142 = vmatprep.subr.mxu0 %v4010
    %4143 = vmatpush1.msra.mxu0 %v4009
    %4144 = vmatprep.subr.mxu0 %v4006
    %4145 = vmatpush1.msra.mxu0 %v4005
    %4146 = vmatprep.subr.mxu0 %v4002
    %4147 = vmatpush1.msra.mxu0 %v4001
    %4148 = vmatprep.subr.mxu0 %v3998
    %4149 = vmatpush1.msra.mxu0 %v3997
    %4150 = vmatprep.subr.mxu0 %v3994
    %4151 = vmatpush1.msra.mxu0 %v3993
    %4152 = vmatprep.subr.mxu0 %v3990
    %4153 = vmatpush1.msra.mxu0 %v3989
    %4154 = vmatprep.subr.mxu0 0.0
    %4155 = vmatpush2.msra.mxu0 0.0
    %4156 = vmatprep.subr.mxu0 0.0
    %4157 = vmatpush2.msra.mxu0 0.0
    %4158 = vmatprep.subr.mxu0 0.0
    %4159 = vmatpush2.msra.mxu0 0.0
    %4160 = vmatprep.subr.mxu0 0.0
    %4161 = vmatpush2.msra.mxu0 0.0
    %4162 = vmatprep.subr.mxu0 0.0
    %4163 = vmatpush2.msra.mxu0 0.0
    %4164 = vmatprep.subr.mxu0 0.0
    %4165 = vmatpush2.msra.mxu0 0.0
    %4166 = vmatprep.subr.mxu0 0.0
    %4167 = vmatpush2.msra.mxu0 0.0
    %4168 = vmatprep.subr.mxu0 0.0
    %4169 = vmatpush2.msra.mxu0 0.0
    %4170 = vmatprep.subr.mxu0 0.0
    %4171 = vmatpush2.msra.mxu0 0.0
    %4172 = vmatprep.subr.mxu0 0.0
    %4173 = vmatpush2.msra.mxu0 0.0
    %4174 = vmatprep.subr.mxu0 0.0
    %4175 = vmatpush2.msra.mxu0 0.0
    %4176 = vmatprep.subr.mxu0 0.0
    %4177 = vmatpush2.msra.mxu0 0.0
    %4178 = vmatprep.subr.mxu0 0.0
    %4179 = vmatpush2.msra.mxu0 0.0
    %4180 = vmatprep.subr.mxu0 0.0
    %4181 = vmatpush2.msra.mxu0 0.0
    %4182 = vmatprep.subr.mxu0 0.0
    %4183 = vmatpush2.msra.mxu0 0.0
    %4184 = vmatprep.subr.mxu0 0.0
    %4185 = vmatpush2.msra.mxu0 0.0
    %4186 = vmatprep.mubr.f32.mxu0 0.0
    %4187 = vmatmul.mubr.f32.gmra.mxu0 %v3986
    %v4188 = vpop.f32.mrf.mxu0
    %v4189 = vadd.f32 0.0, %v4188
    %v4190 = vpop.f32.mrf.mxu0
    %v4191 = vadd.f32 0.0, %v4190
    %4192 = vdwg.mxu0
    %v4193 = vadd.f32 %v3982, %v4118
    %v4194 = vadd.f32 %v3983, %v4120
    %v4195 = vadd.f32 %v3984, %v4189
    %v4196 = vadd.f32 %v3985, %v4191
    %v4197 = vld [vmem:[#allocation3] sm:$0xff]
    %v4198 = vxor.u32 %v4193, 2147483648
    %v4199 = vmul.f32 %v4198, 1.442695
    %v4200 = vpow.pop %v4199
    %v4201 = vadd.f32 %v4200, 1.0
    %v4202 = vrcp.pop %v4201
    %v4203 = vmul.f32 1.0, %v4202
    %v4204 = vxor.u32 %v4194, 2147483648
    %v4205 = vmul.f32 %v4204, 1.442695
    %v4206 = vpow.pop %v4205
    %v4207 = vadd.f32 %v4206, 1.0
    %v4208 = vrcp.pop %v4207
    %v4209 = vmul.f32 1.0, %v4208
    %v4210 = vtanh.pop %v4195
    %v4211 = vxor.u32 %v4196, 2147483648
    %v4212 = vmul.f32 %v4211, 1.442695
    %v4213 = vpow.pop %v4212
    %v4214 = vadd.f32 %v4213, 1.0
    %v4215 = vrcp.pop %v4214
    %v4216 = vmul.f32 1.0, %v4215
    %v4217 = vmul.f32 %v4209, %v4197
    %v4218 = vmul.f32 %v4203, %v4210
    %v4219 = vadd.f32 %v4217, %v4218
    %v4220 = vtanh.pop %v4219
    %v4221 = vmul.f32 %v4216, %v4220
    %4222 = vst [vmem:[#allocation2] sm:$0xff] %v4221
    %4223 = vst [vmem:[#allocation3] sm:$0xff] %v4219
    %v4224 = vld [vmem:[#allocation4] sm:$0xff]
    %v4225 = vld [vmem:[#allocation6] sm:$0xff]
    %v4226 = vld [vmem:[#allocation6 + $0x8] sm:$0xff]
    %v4227 = vld [vmem:[#allocation6 + $0x10] sm:$0xff]
    %v4228 = vld [vmem:[#allocation6 + $0x18] sm:$0xff]
    %v4229 = vld [vmem:[#allocation6 + $0x20] sm:$0xff]
    %v4230 = vld [vmem:[#allocation6 + $0x28] sm:$0xff]
    %v4231 = vld [vmem:[#allocation6 + $0x30] sm:$0xff]
    %v4232 = vld [vmem:[#allocation6 + $0x38] sm:$0xff]
    %v4233 = vld [vmem:[#allocation6 + $0x40] sm:$0xff]
    %v4234 = vld [vmem:[#allocation6 + $0x48] sm:$0xff]
    %v4235 = vld [vmem:[#allocation6 + $0x50] sm:$0xff]
    %v4236 = vld [vmem:[#allocation6 + $0x58] sm:$0xff]
    %v4237 = vld [vmem:[#allocation6 + $0x60] sm:$0xff]
    %v4238 = vld [vmem:[#allocation6 + $0x68] sm:$0xff]
    %v4239 = vld [vmem:[#allocation6 + $0x70] sm:$0xff]
    %v4240 = vld [vmem:[#allocation6 + $0x78] sm:$0xff]
    %v4241 = vld [vmem:[#allocation6 + $0x80] sm:$0xff]
    %v4242 = vld [vmem:[#allocation6 + $0x88] sm:$0xff]
    %v4243 = vld [vmem:[#allocation6 + $0x90] sm:$0xff]
    %v4244 = vld [vmem:[#allocation6 + $0x98] sm:$0xff]
    %v4245 = vld [vmem:[#allocation6 + $0xa0] sm:$0xff]
    %v4246 = vld [vmem:[#allocation6 + $0xa8] sm:$0xff]
    %v4247 = vld [vmem:[#allocation6 + $0xb0] sm:$0xff]
    %v4248 = vld [vmem:[#allocation6 + $0xb8] sm:$0xff]
    %v4249 = vld [vmem:[#allocation6 + $0xc0] sm:$0xff]
    %v4250 = vld [vmem:[#allocation6 + $0xc8] sm:$0xff]
    %v4251 = vld [vmem:[#allocation6 + $0xd0] sm:$0xff]
    %v4252 = vld [vmem:[#allocation6 + $0xd8] sm:$0xff]
    %v4253 = vld [vmem:[#allocation6 + $0xe0] sm:$0xff]
    %v4254 = vld [vmem:[#allocation6 + $0xe8] sm:$0xff]
    %v4255 = vld [vmem:[#allocation6 + $0xf0] sm:$0xff]
    %v4256 = vld [vmem:[#allocation6 + $0xf8] sm:$0xff]
    %v4257 = vld [vmem:[#allocation6 + $0x100] sm:$0xff]
    %v4258 = vld [vmem:[#allocation6 + $0x108] sm:$0xff]
    %v4259 = vld [vmem:[#allocation6 + $0x110] sm:$0xff]
    %v4260 = vld [vmem:[#allocation6 + $0x118] sm:$0xff]
    %v4261 = vld [vmem:[#allocation6 + $0x120] sm:$0xff]
    %v4262 = vld [vmem:[#allocation6 + $0x128] sm:$0xff]
    %v4263 = vld [vmem:[#allocation6 + $0x130] sm:$0xff]
    %v4264 = vld [vmem:[#allocation6 + $0x138] sm:$0xff]
    %v4265 = vld [vmem:[#allocation6 + $0x140] sm:$0xff]
    %v4266 = vld [vmem:[#allocation6 + $0x148] sm:$0xff]
    %v4267 = vld [vmem:[#allocation6 + $0x150] sm:$0xff]
    %v4268 = vld [vmem:[#allocation6 + $0x158] sm:$0xff]
    %v4269 = vld [vmem:[#allocation6 + $0x160] sm:$0xff]
    %v4270 = vld [vmem:[#allocation6 + $0x168] sm:$0xff]
    %v4271 = vld [vmem:[#allocation6 + $0x170] sm:$0xff]
    %v4272 = vld [vmem:[#allocation6 + $0x178] sm:$0xff]
    %v4273 = vld [vmem:[#allocation6 + $0x180] sm:$0xff]
    %v4274 = vld [vmem:[#allocation6 + $0x188] sm:$0xff]
    %v4275 = vld [vmem:[#allocation6 + $0x190] sm:$0xff]
    %v4276 = vld [vmem:[#allocation6 + $0x198] sm:$0xff]
    %v4277 = vld [vmem:[#allocation6 + $0x1a0] sm:$0xff]
    %v4278 = vld [vmem:[#allocation6 + $0x1a8] sm:$0xff]
    %v4279 = vld [vmem:[#allocation6 + $0x1b0] sm:$0xff]
    %v4280 = vld [vmem:[#allocation6 + $0x1b8] sm:$0xff]
    %v4281 = vld [vmem:[#allocation6 + $0x1c0] sm:$0xff]
    %v4282 = vld [vmem:[#allocation6 + $0x1c8] sm:$0xff]
    %v4283 = vld [vmem:[#allocation6 + $0x1d0] sm:$0xff]
    %v4284 = vld [vmem:[#allocation6 + $0x1d8] sm:$0xff]
    %v4285 = vld [vmem:[#allocation6 + $0x1e0] sm:$0xff]
    %v4286 = vld [vmem:[#allocation6 + $0x1e8] sm:$0xff]
    %v4287 = vld [vmem:[#allocation6 + $0x1f0] sm:$0xff]
    %v4288 = vld [vmem:[#allocation6 + $0x1f8] sm:$0xff]
    %v4289 = vld [vmem:[#allocation6 + $0x200] sm:$0xff]
    %v4290 = vld [vmem:[#allocation6 + $0x208] sm:$0xff]
    %v4291 = vld [vmem:[#allocation6 + $0x210] sm:$0xff]
    %v4292 = vld [vmem:[#allocation6 + $0x218] sm:$0xff]
    %v4293 = vld [vmem:[#allocation6 + $0x220] sm:$0xff]
    %v4294 = vld [vmem:[#allocation6 + $0x228] sm:$0xff]
    %v4295 = vld [vmem:[#allocation6 + $0x230] sm:$0xff]
    %v4296 = vld [vmem:[#allocation6 + $0x238] sm:$0xff]
    %v4297 = vld [vmem:[#allocation6 + $0x240] sm:$0xff]
    %v4298 = vld [vmem:[#allocation6 + $0x248] sm:$0xff]
    %v4299 = vld [vmem:[#allocation6 + $0x250] sm:$0xff]
    %v4300 = vld [vmem:[#allocation6 + $0x258] sm:$0xff]
    %v4301 = vld [vmem:[#allocation6 + $0x260] sm:$0xff]
    %v4302 = vld [vmem:[#allocation6 + $0x268] sm:$0xff]
    %v4303 = vld [vmem:[#allocation6 + $0x270] sm:$0xff]
    %v4304 = vld [vmem:[#allocation6 + $0x278] sm:$0xff]
    %v4305 = vld [vmem:[#allocation6 + $0x280] sm:$0xff]
    %v4306 = vld [vmem:[#allocation6 + $0x288] sm:$0xff]
    %v4307 = vld [vmem:[#allocation6 + $0x290] sm:$0xff]
    %v4308 = vld [vmem:[#allocation6 + $0x298] sm:$0xff]
    %v4309 = vld [vmem:[#allocation6 + $0x2a0] sm:$0xff]
    %v4310 = vld [vmem:[#allocation6 + $0x2a8] sm:$0xff]
    %v4311 = vld [vmem:[#allocation6 + $0x2b0] sm:$0xff]
    %v4312 = vld [vmem:[#allocation6 + $0x2b8] sm:$0xff]
    %v4313 = vld [vmem:[#allocation6 + $0x2c0] sm:$0xff]
    %v4314 = vld [vmem:[#allocation6 + $0x2c8] sm:$0xff]
    %v4315 = vld [vmem:[#allocation6 + $0x2d0] sm:$0xff]
    %v4316 = vld [vmem:[#allocation6 + $0x2d8] sm:$0xff]
    %v4317 = vld [vmem:[#allocation6 + $0x2e0] sm:$0xff]
    %v4318 = vld [vmem:[#allocation6 + $0x2e8] sm:$0xff]
    %v4319 = vld [vmem:[#allocation6 + $0x2f0] sm:$0xff]
    %v4320 = vld [vmem:[#allocation6 + $0x2f8] sm:$0xff]
    %v4321 = vld [vmem:[#allocation6 + $0x300] sm:$0xff]
    %v4322 = vld [vmem:[#allocation6 + $0x308] sm:$0xff]
    %v4323 = vld [vmem:[#allocation6 + $0x310] sm:$0xff]
    %v4324 = vld [vmem:[#allocation6 + $0x318] sm:$0xff]
    %v4325 = vld [vmem:[#allocation6 + $0x320] sm:$0xff]
    %v4326 = vld [vmem:[#allocation6 + $0x328] sm:$0xff]
    %v4327 = vld [vmem:[#allocation6 + $0x330] sm:$0xff]
    %v4328 = vld [vmem:[#allocation6 + $0x338] sm:$0xff]
    %v4329 = vld [vmem:[#allocation6 + $0x340] sm:$0xff]
    %v4330 = vld [vmem:[#allocation6 + $0x348] sm:$0xff]
    %v4331 = vld [vmem:[#allocation6 + $0x350] sm:$0xff]
    %v4332 = vld [vmem:[#allocation6 + $0x358] sm:$0xff]
    %v4333 = vld [vmem:[#allocation6 + $0x360] sm:$0xff]
    %v4334 = vld [vmem:[#allocation6 + $0x368] sm:$0xff]
    %v4335 = vld [vmem:[#allocation6 + $0x370] sm:$0xff]
    %v4336 = vld [vmem:[#allocation6 + $0x378] sm:$0xff]
    %v4337 = vld [vmem:[#allocation6 + $0x380] sm:$0xff]
    %v4338 = vld [vmem:[#allocation6 + $0x388] sm:$0xff]
    %v4339 = vld [vmem:[#allocation6 + $0x390] sm:$0xff]
    %v4340 = vld [vmem:[#allocation6 + $0x398] sm:$0xff]
    %v4341 = vld [vmem:[#allocation6 + $0x3a0] sm:$0xff]
    %v4342 = vld [vmem:[#allocation6 + $0x3a8] sm:$0xff]
    %v4343 = vld [vmem:[#allocation6 + $0x3b0] sm:$0xff]
    %v4344 = vld [vmem:[#allocation6 + $0x3b8] sm:$0xff]
    %v4345 = vld [vmem:[#allocation6 + $0x3c0] sm:$0xff]
    %v4346 = vld [vmem:[#allocation6 + $0x3c8] sm:$0xff]
    %v4347 = vld [vmem:[#allocation6 + $0x3d0] sm:$0xff]
    %v4348 = vld [vmem:[#allocation6 + $0x3d8] sm:$0xff]
    %v4349 = vld [vmem:[#allocation6 + $0x3e0] sm:$0xff]
    %v4350 = vld [vmem:[#allocation6 + $0x3e8] sm:$0xff]
    %v4351 = vld [vmem:[#allocation6 + $0x3f0] sm:$0xff]
    %v4352 = vld [vmem:[#allocation6 + $0x3f8] sm:$0xff]
    %v4353 = vld [vmem:[%s3] sm:$0xf]
    %v4355 = vlaneseq
    %v4356 = vshrl.u32 %v4355, 7
    %v4357 = vsub.s32 0, %v4356
    %v4358 = vrot.slane %v4353, %v4357
    %v4359 = vlaneseq
    %v4360 = vshrl.u32 %v4359, 7
    %v4361 = vsub.s32 1, %v4360
    %v4362 = vrot.slane %v4353, %v4361
    %v4363 = vlaneseq
    %v4364 = vshrl.u32 %v4363, 7
    %v4365 = vsub.s32 2, %v4364
    %v4366 = vrot.slane %v4353, %v4365
    %v4367 = vlaneseq
    %v4368 = vshrl.u32 %v4367, 7
    %v4369 = vsub.s32 3, %v4368
    %v4370 = vrot.slane %v4353, %v4369
    %4375 = vmatprep.subr.mxu0 %v4286
    %4376 = vmatpush1.msra.mxu0 %v4285
    %4377 = vmatprep.subr.mxu0 %v4282
    %4378 = vmatpush1.msra.mxu0 %v4281
    %4379 = vmatprep.subr.mxu0 %v4278
    %4380 = vmatpush1.msra.mxu0 %v4277
    %4381 = vmatprep.subr.mxu0 %v4274
    %4382 = vmatpush1.msra.mxu0 %v4273
    %4383 = vmatprep.subr.mxu0 %v4270
    %4384 = vmatpush1.msra.mxu0 %v4269
    %4385 = vmatprep.subr.mxu0 %v4266
    %4386 = vmatpush1.msra.mxu0 %v4265
    %4387 = vmatprep.subr.mxu0 %v4262
    %4388 = vmatpush1.msra.mxu0 %v4261
    %4389 = vmatprep.subr.mxu0 %v4258
    %4390 = vmatpush1.msra.mxu0 %v4257
    %4391 = vmatprep.subr.mxu0 %v4254
    %4392 = vmatpush1.msra.mxu0 %v4253
    %4393 = vmatprep.subr.mxu0 %v4250
    %4394 = vmatpush1.msra.mxu0 %v4249
    %4395 = vmatprep.subr.mxu0 %v4246
    %4396 = vmatpush1.msra.mxu0 %v4245
    %4397 = vmatprep.subr.mxu0 %v4242
    %4398 = vmatpush1.msra.mxu0 %v4241
    %4399 = vmatprep.subr.mxu0 %v4238
    %4400 = vmatpush1.msra.mxu0 %v4237
    %4401 = vmatprep.subr.mxu0 %v4234
    %4402 = vmatpush1.msra.mxu0 %v4233
    %4403 = vmatprep.subr.mxu0 %v4230
    %4404 = vmatpush1.msra.mxu0 %v4229
    %4405 = vmatprep.subr.mxu0 %v4226
    %4406 = vmatpush1.msra.mxu0 %v4225
    %4407 = vmatprep.subr.mxu0 %v4350
    %4408 = vmatpush2.msra.mxu0 %v4349
    %4409 = vmatprep.subr.mxu0 %v4346
    %4410 = vmatpush2.msra.mxu0 %v4345
    %4411 = vmatprep.subr.mxu0 %v4342
    %4412 = vmatpush2.msra.mxu0 %v4341
    %4413 = vmatprep.subr.mxu0 %v4338
    %4414 = vmatpush2.msra.mxu0 %v4337
    %4415 = vmatprep.subr.mxu0 %v4334
    %4416 = vmatpush2.msra.mxu0 %v4333
    %4417 = vmatprep.subr.mxu0 %v4330
    %4418 = vmatpush2.msra.mxu0 %v4329
    %4419 = vmatprep.subr.mxu0 %v4326
    %4420 = vmatpush2.msra.mxu0 %v4325
    %4421 = vmatprep.subr.mxu0 %v4322
    %4422 = vmatpush2.msra.mxu0 %v4321
    %4423 = vmatprep.subr.mxu0 %v4318
    %4424 = vmatpush2.msra.mxu0 %v4317
    %4425 = vmatprep.subr.mxu0 %v4314
    %4426 = vmatpush2.msra.mxu0 %v4313
    %4427 = vmatprep.subr.mxu0 %v4310
    %4428 = vmatpush2.msra.mxu0 %v4309
    %4429 = vmatprep.subr.mxu0 %v4306
    %4430 = vmatpush2.msra.mxu0 %v4305
    %4431 = vmatprep.subr.mxu0 %v4302
    %4432 = vmatpush2.msra.mxu0 %v4301
    %4433 = vmatprep.subr.mxu0 %v4298
    %4434 = vmatpush2.msra.mxu0 %v4297
    %4435 = vmatprep.subr.mxu0 %v4294
    %4436 = vmatpush2.msra.mxu0 %v4293
    %4437 = vmatprep.subr.mxu0 %v4290
    %4438 = vmatpush2.msra.mxu0 %v4289
    %4439 = vmatprep.mubr.f32.mxu0 %v4224
    %4440 = vmatmul.mubr.f32.gmra.mxu0 %v4221
    %v4441 = vpop.f32.mrf.mxu0
    %v4442 = vadd.f32 %v4358, %v4441
    %v4443 = vpop.f32.mrf.mxu0
    %v4444 = vadd.f32 %v4362, %v4443
    %4445 = vdwg.mxu0
    %4446 = vmatprep.subr.mxu0 %v4288
    %4447 = vmatpush1.msra.mxu0 %v4287
    %4448 = vmatprep.subr.mxu0 %v4284
    %4449 = vmatpush1.msra.mxu0 %v4283
    %4450 = vmatprep.subr.mxu0 %v4280
    %4451 = vmatpush1.msra.mxu0 %v4279
    %4452 = vmatprep.subr.mxu0 %v4276
    %4453 = vmatpush1.msra.mxu0 %v4275
    %4454 = vmatprep.subr.mxu0 %v4272
    %4455 = vmatpush1.msra.mxu0 %v4271
    %4456 = vmatprep.subr.mxu0 %v4268
    %4457 = vmatpush1.msra.mxu0 %v4267
    %4458 = vmatprep.subr.mxu0 %v4264
    %4459 = vmatpush1.msra.mxu0 %v4263
    %4460 = vmatprep.subr.mxu0 %v4260
    %4461 = vmatpush1.msra.mxu0 %v4259
    %4462 = vmatprep.subr.mxu0 %v4256
    %4463 = vmatpush1.msra.mxu0 %v4255
    %4464 = vmatprep.subr.mxu0 %v4252
    %4465 = vmatpush1.msra.mxu0 %v4251
    %4466 = vmatprep.subr.mxu0 %v4248
    %4467 = vmatpush1.msra.mxu0 %v4247
    %4468 = vmatprep.subr.mxu0 %v4244
    %4469 = vmatpush1.msra.mxu0 %v4243
    %4470 = vmatprep.subr.mxu0 %v4240
    %4471 = vmatpush1.msra.mxu0 %v4239
    %4472 = vmatprep.subr.mxu0 %v4236
    %4473 = vmatpush1.msra.mxu0 %v4235
    %4474 = vmatprep.subr.mxu0 %v4232
    %4475 = vmatpush1.msra.mxu0 %v4231
    %4476 = vmatprep.subr.mxu0 %v4228
    %4477 = vmatpush1.msra.mxu0 %v4227
    %4478 = vmatprep.subr.mxu0 %v4352
    %4479 = vmatpush2.msra.mxu0 %v4351
    %4480 = vmatprep.subr.mxu0 %v4348
    %4481 = vmatpush2.msra.mxu0 %v4347
    %4482 = vmatprep.subr.mxu0 %v4344
    %4483 = vmatpush2.msra.mxu0 %v4343
    %4484 = vmatprep.subr.mxu0 %v4340
    %4485 = vmatpush2.msra.mxu0 %v4339
    %4486 = vmatprep.subr.mxu0 %v4336
    %4487 = vmatpush2.msra.mxu0 %v4335
    %4488 = vmatprep.subr.mxu0 %v4332
    %4489 = vmatpush2.msra.mxu0 %v4331
    %4490 = vmatprep.subr.mxu0 %v4328
    %4491 = vmatpush2.msra.mxu0 %v4327
    %4492 = vmatprep.subr.mxu0 %v4324
    %4493 = vmatpush2.msra.mxu0 %v4323
    %4494 = vmatprep.subr.mxu0 %v4320
    %4495 = vmatpush2.msra.mxu0 %v4319
    %4496 = vmatprep.subr.mxu0 %v4316
    %4497 = vmatpush2.msra.mxu0 %v4315
    %4498 = vmatprep.subr.mxu0 %v4312
    %4499 = vmatpush2.msra.mxu0 %v4311
    %4500 = vmatprep.subr.mxu0 %v4308
    %4501 = vmatpush2.msra.mxu0 %v4307
    %4502 = vmatprep.subr.mxu0 %v4304
    %4503 = vmatpush2.msra.mxu0 %v4303
    %4504 = vmatprep.subr.mxu0 %v4300
    %4505 = vmatpush2.msra.mxu0 %v4299
    %4506 = vmatprep.subr.mxu0 %v4296
    %4507 = vmatpush2.msra.mxu0 %v4295
    %4508 = vmatprep.subr.mxu0 %v4292
    %4509 = vmatpush2.msra.mxu0 %v4291
    %4510 = vmatprep.mubr.f32.mxu0 %v4224
    %4511 = vmatmul.mubr.f32.gmra.mxu0 %v4221
    %v4512 = vpop.f32.mrf.mxu0
    %v4513 = vadd.f32 %v4366, %v4512
    %v4514 = vpop.f32.mrf.mxu0
    %v4515 = vadd.f32 %v4370, %v4514
    %4516 = vdwg.mxu0
    %v4517 = vld [vmem:[#allocation5] sm:$0xff]
    %v4518 = vxor.u32 %v4442, 2147483648
    %v4519 = vmul.f32 %v4518, 1.442695
    %v4520 = vpow.pop %v4519
    %v4521 = vadd.f32 %v4520, 1.0
    %v4522 = vrcp.pop %v4521
    %v4523 = vmul.f32 1.0, %v4522
    %v4524 = vxor.u32 %v4444, 2147483648
    %v4525 = vmul.f32 %v4524, 1.442695
    %v4526 = vpow.pop %v4525
    %v4527 = vadd.f32 %v4526, 1.0
    %v4528 = vrcp.pop %v4527
    %v4529 = vmul.f32 1.0, %v4528
    %v4530 = vtanh.pop %v4513
    %v4531 = vxor.u32 %v4515, 2147483648
    %v4532 = vmul.f32 %v4531, 1.442695
    %v4533 = vpow.pop %v4532
    %v4534 = vadd.f32 %v4533, 1.0
    %v4535 = vrcp.pop %v4534
    %v4536 = vmul.f32 1.0, %v4535
    %v4537 = vmul.f32 %v4529, %v4517
    %v4538 = vmul.f32 %v4523, %v4530
    %v4539 = vadd.f32 %v4537, %v4538
    %v4540 = vtanh.pop %v4539
    %v4541 = vmul.f32 %v4536, %v4540
    %4542 = vst [vmem:[#allocation4] sm:$0xff] %v4541
    %4543 = vst [vmem:[#allocation5] sm:$0xff] %v4539
    %v4544 = vld [vmem:[#allocation4] sm:$0xff]
    %v4545 = vld [vmem:[%s4] sm:$0xff]
    %v4546 = vld [vmem:[%s4 + $0x8] sm:$0xff]
    %v4547 = vld [vmem:[%s4 + $0x10] sm:$0xff]
    %v4548 = vld [vmem:[%s4 + $0x18] sm:$0xff]
    %v4549 = vld [vmem:[%s4 + $0x20] sm:$0xff]
    %v4550 = vld [vmem:[%s4 + $0x28] sm:$0xff]
    %v4551 = vld [vmem:[%s4 + $0x30] sm:$0xff]
    %v4552 = vld [vmem:[%s4 + $0x38] sm:$0xff]
    %v4553 = vld [vmem:[%s4 + $0x40] sm:$0xff]
    %v4554 = vld [vmem:[%s4 + $0x48] sm:$0xff]
    %v4555 = vld [vmem:[%s4 + $0x50] sm:$0xff]
    %v4556 = vld [vmem:[%s4 + $0x58] sm:$0xff]
    %v4557 = vld [vmem:[%s4 + $0x60] sm:$0xff]
    %v4558 = vld [vmem:[%s4 + $0x68] sm:$0xff]
    %v4559 = vld [vmem:[%s4 + $0x70] sm:$0xff]
    %v4560 = vld [vmem:[%s4 + $0x78] sm:$0xff]
    %v4561 = vld [vmem:[%s5] sm:$0x1]
    %v4563 = vlaneseq
    %v4564 = vshrl.u32 %v4563, 7
    %v4565 = vsub.s32 0, %v4564
    %v4566 = vrot.slane %v4561, %v4565
    %4568 = vmatprep.subr.mxu0 0.0
    %4569 = vmatpush1.msra.mxu0 %v4560
    %4570 = vmatprep.subr.mxu0 0.0
    %4571 = vmatpush1.msra.mxu0 %v4559
    %4572 = vmatprep.subr.mxu0 0.0
    %4573 = vmatpush1.msra.mxu0 %v4558
    %4574 = vmatprep.subr.mxu0 0.0
    %4575 = vmatpush1.msra.mxu0 %v4557
    %4576 = vmatprep.subr.mxu0 0.0
    %4577 = vmatpush1.msra.mxu0 %v4556
    %4578 = vmatprep.subr.mxu0 0.0
    %4579 = vmatpush1.msra.mxu0 %v4555
    %4580 = vmatprep.subr.mxu0 0.0
    %4581 = vmatpush1.msra.mxu0 %v4554
    %4582 = vmatprep.subr.mxu0 0.0
    %4583 = vmatpush1.msra.mxu0 %v4553
    %4584 = vmatprep.subr.mxu0 0.0
    %4585 = vmatpush1.msra.mxu0 %v4552
    %4586 = vmatprep.subr.mxu0 0.0
    %4587 = vmatpush1.msra.mxu0 %v4551
    %4588 = vmatprep.subr.mxu0 0.0
    %4589 = vmatpush1.msra.mxu0 %v4550
    %4590 = vmatprep.subr.mxu0 0.0
    %4591 = vmatpush1.msra.mxu0 %v4549
    %4592 = vmatprep.subr.mxu0 0.0
    %4593 = vmatpush1.msra.mxu0 %v4548
    %4594 = vmatprep.subr.mxu0 0.0
    %4595 = vmatpush1.msra.mxu0 %v4547
    %4596 = vmatprep.subr.mxu0 0.0
    %4597 = vmatpush1.msra.mxu0 %v4546
    %4598 = vmatprep.subr.mxu0 0.0
    %4599 = vmatpush1.msra.mxu0 %v4545
    %4600 = vmatprep.subr.mxu0 0.0
    %4601 = vmatpush2.msra.mxu0 0.0
    %4602 = vmatprep.subr.mxu0 0.0
    %4603 = vmatpush2.msra.mxu0 0.0
    %4604 = vmatprep.subr.mxu0 0.0
    %4605 = vmatpush2.msra.mxu0 0.0
    %4606 = vmatprep.subr.mxu0 0.0
    %4607 = vmatpush2.msra.mxu0 0.0
    %4608 = vmatprep.subr.mxu0 0.0
    %4609 = vmatpush2.msra.mxu0 0.0
    %4610 = vmatprep.subr.mxu0 0.0
    %4611 = vmatpush2.msra.mxu0 0.0
    %4612 = vmatprep.subr.mxu0 0.0
    %4613 = vmatpush2.msra.mxu0 0.0
    %4614 = vmatprep.subr.mxu0 0.0
    %4615 = vmatpush2.msra.mxu0 0.0
    %4616 = vmatprep.subr.mxu0 0.0
    %4617 = vmatpush2.msra.mxu0 0.0
    %4618 = vmatprep.subr.mxu0 0.0
    %4619 = vmatpush2.msra.mxu0 0.0
    %4620 = vmatprep.subr.mxu0 0.0
    %4621 = vmatpush2.msra.mxu0 0.0
    %4622 = vmatprep.subr.mxu0 0.0
    %4623 = vmatpush2.msra.mxu0 0.0
    %4624 = vmatprep.subr.mxu0 0.0
    %4625 = vmatpush2.msra.mxu0 0.0
    %4626 = vmatprep.subr.mxu0 0.0
    %4627 = vmatpush2.msra.mxu0 0.0
    %4628 = vmatprep.subr.mxu0 0.0
    %4629 = vmatpush2.msra.mxu0 0.0
    %4630 = vmatprep.subr.mxu0 0.0
    %4631 = vmatpush2.msra.mxu0 0.0
    %4632 = vmatprep.mubr.f32.mxu0 0.0
    %4633 = vmatmul.mubr.f32.gmra.mxu0 %v4544
    %v4634 = vpop.f32.mrf.mxu0
    %v4635 = vadd.f32 %v4566, %v4634
    %v4636 = vpop.f32.mrf.mxu0
    %4637 = vdwg.mxu0
    %4638 = vst [vmem:[%s6] sm:$0xff] %v4635
    // Predicated region
    $region30: #{char_lstm_forward.1} parent=1 // pred_check
      _
    $region31: #{char_lstm_forward.1} parent=1 // pred_check_branch
      %4640 = sbr.rel (0) target = $region33
    $region32: #{char_lstm_forward.1} parent=1 // pred_region
      _
    $region33: #{char_lstm_forward.1} parent=1 // pred_fallthru
      _
    // Predicated region
    $region34: #{char_lstm_forward.1} parent=1 // pred_check
      _
    $region35: #{char_lstm_forward.1} parent=1 // pred_check_branch
      %4642 = sbr.rel (0) target = $region37
    $region36: #{char_lstm_forward.1} parent=1 // pred_region
      _
    $region37: #{char_lstm_forward.1} parent=1 // pred_fallthru
      _
    %4643 = vsyncpa [#allocation7], 1

</llo_original>
